<compile_context>
chip_gen: v5e
topology: v5e:2x2
jax: 0.10.0
libtpu: 0.0.40
codegen_flags: <defaults>
</compile_context>

<pallas_src>
import functools

import numpy as np
import jax
import jax.numpy as jnp
from jax.experimental import pallas as pl
from jax.experimental.pallas import tpu as pltpu


def egat_kernel(x_ref, ef_ref, adj_ref, wnode_ref, wfij_ref, attn_ref, bias_ref,
                hnode_ref, hedge_ref, ascore_ref, *, gb, n, hde, hdn):
    """One grid step processes `gb` dense graphs of `n` nodes each.

    x_ref     : [gb*n , Fn]      bf16  node features (graphs stacked on rows)
    ef_ref    : [gb*n*n, Fe]     bf16  dense temporal-edge features
    adj_ref   : [gb*n , n]       f32   adjacency (1.0 where edge u->v)
    wnode_ref : [Fn, hdn+2*hde]  bf16  fused [W_src | W_ni | W_nj]
    wfij_ref  : [Fe, hde]        bf16
    attn_ref  : [hde, hdn]       bf16  attn[h,:] replicated into head-h lanes
    bias_ref  : [1, hde]         f32
    hnode_ref : [gb*n , hdn]     f32   relu(flatten) node output (128-lane dense)
    hedge_ref : [gb*n*n, hde]    f32   relu edge output, masked, edge-row layout
    ascore_ref: [gb, n, n]       f32   sigmoid(mean-head attention), masked
    """
    nn = n * n

    # ---- fused node-side projection: ONE MXU matmul, bf16 in / f32 acc ----
    node_proj = jnp.dot(x_ref[...], wnode_ref[...],
                        preferred_element_type=jnp.float32)    # [gb*n, hdn+2hde]
    h_src = node_proj[:, :hdn].reshape(gb, n, hdn)             # tile-aligned slice
    f_ni = (node_proj[:, hdn:hdn + hde] + bias_ref[...]).reshape(gb, n, hde)
    f_nj = node_proj[:, hdn + hde:].reshape(gb, n, hde)

    # ---- edge-feature projection over all gb*n*n edge slots at once ----
    f_fij = jnp.dot(ef_ref[...], wfij_ref[...],
                    preferred_element_type=jnp.float32)        # [gb*nn, hde]
    f_pre = (f_fij.reshape(gb, n, n, hde)
             + f_ni[:, :, None, :]                             # src node u
             + f_nj[:, None, :, :])                            # dst node v

    adj = adj_ref[...].reshape(gb, n, n)                       # [gb, n, n]

    # h_edge = relu(leaky_relu(f_pre)) == relu(f_pre), masked to real edges.
    hedge_ref[...] = (jnp.maximum(f_pre, 0.0)
                      * adj[:, :, :, None]).reshape(gb * nn, hde)

    # leaky_relu (negative_slope=0.01, matching DGL EGATConv) for the logits.
    f_out = jnp.where(f_pre > 0, f_pre, 0.01 * f_pre)

    # ---- attention logits, each head value replicated across its Dn lanes ---
    # attn_ref is block-expanded so e_wide[(u,v), h*Dn+j] == e[u,v,h]; every
    # downstream softmax vreg is 128-lane dense and the aggregation needs no
    # per-head slicing or extra matmul.
    e_wide = jnp.dot(f_out.reshape(gb * nn, hde).astype(jnp.bfloat16),
                     attn_ref[...],
                     preferred_element_type=jnp.float32)       # [gb*nn, hdn]
    e_wide = e_wide.reshape(gb, n, n, hdn)                     # [gb, u, v, hdn]

    # ---- masked edge-softmax over incoming edges (src axis), all heads ----
    addmask = ((adj - 1.0) * 1e30)[:, :, :, None]              # 0 / -1e30
    mulmask = adj[:, :, :, None]                               # 1 / 0
    e_m = e_wide + addmask
    e_max = jnp.max(e_m, axis=1, keepdims=True)                # [gb,1,v,hdn]
    p = jnp.exp(e_m - e_max) * mulmask
    denom = jnp.sum(p, axis=1, keepdims=True)
    inv = pl.reciprocal(jnp.maximum(denom, 1e-30), approx=True)
    a_exp = p * inv                                            # [gb, u, v, hdn]

    # ---- DyEGATConv edge score: sigmoid(mean over heads of a) ----
    # Each head value is replicated hdn/H times, so lane-sum / hdn == head mean.
    ascore_ref[...] = jax.nn.sigmoid(jnp.sum(a_exp, axis=-1) * (1.0 / hdn)) * adj

    # ---- neighbour aggregation: elementwise mul + sum over src (VPU) ----
    # h_out[g, v, h*Dn+d] = sum_u a[g,u,v,h] * h_src[g,u,h*Dn+d]
    h_out = jnp.sum(a_exp * h_src[:, :, None, :], axis=1)      # [gb, n, hdn]
    hnode_ref[...] = jnp.maximum(h_out, 0.0).reshape(gb * n, hdn)


def dyegat_forward(x, efeat, adj, params, *, gb=None):
    """EGATConv hot path of DyEGATConv on G dense graphs in one pallas_call."""
    G, N, Fn = x.shape
    Fe = efeat.shape[-1]
    H, De = params["attn"].shape
    HDe = H * De
    HDn = params["w_src"].shape[1]
    Dn = HDn // H
    NN = N * N
    f32, bf16 = jnp.float32, jnp.bfloat16

    # --- graphs per grid step: batch as much as comfortably fits VMEM, but
    #     keep >= 2 grid steps so v7x's two TensorCores both get work.
    if gb is None:
        gb = 1 if G == 1 else max(1, G // 2)
        # ~6 live [gb,N,N,HDn] f32 intermediates; keep them under a few MiB.
        vmem_cap = max(1, (8 << 20) // max(1, 6 * NN * HDn * 4))
        gb = max(1, min(gb, vmem_cap))
    while G % gb:
        gb -= 1

    # --- wrapper-side (XLA, cheap) layout & constant prep ---
    # Fused node weight [W_src | W_ni | W_nj] so the 128-wide h_src slice is
    # lane-tile aligned.
    w_node = jnp.concatenate(
        [params["w_src"], params["w_ni"], params["w_nj"]], axis=1).astype(bf16)
    w_fij = params["w_fij"].astype(bf16)
    # attn_exp[h*De+d, h*Dn+j] = attn[h, d]  (head logit replicated on Dn lanes)
    attn_exp = (params["attn"][:, :, None, None]
                * jnp.eye(H, dtype=f32)[:, None, :, None])          # [H,De,H,1]
    attn_exp = jnp.broadcast_to(attn_exp, (H, De, H, Dn)).reshape(HDe, HDn)
    attn_exp = attn_exp.astype(bf16)
    bias2d = params["bias"].reshape(1, HDe).astype(f32)

    x_flat = x.reshape(G * N, Fn).astype(bf16)
    ef_flat = efeat.reshape(G * NN, Fe).astype(bf16)
    adj_flat = adj.reshape(G * N, N).astype(f32)

    out_shapes = (
        jax.ShapeDtypeStruct((G * N, HDn), f32),     # h_node, rows = (g, v)
        jax.ShapeDtypeStruct((G * NN, HDe), f32),    # h_edge, rows = (g, u, v)
        jax.ShapeDtypeStruct((G, N, N), f32),        # edge attention score
    )

    in_specs = [
        pl.BlockSpec((gb * N, Fn), lambda g: (g, 0)),
        pl.BlockSpec((gb * NN, Fe), lambda g: (g, 0)),
        pl.BlockSpec((gb * N, N), lambda g: (g, 0)),
        pl.BlockSpec((Fn, HDn + 2 * HDe), lambda g: (0, 0)),
        pl.BlockSpec((Fe, HDe), lambda g: (0, 0)),
        pl.BlockSpec((HDe, HDn), lambda g: (0, 0)),
        pl.BlockSpec((1, HDe), lambda g: (0, 0)),
    ]
    out_specs = (
        pl.BlockSpec((gb * N, HDn), lambda g: (g, 0)),
        pl.BlockSpec((gb * NN, HDe), lambda g: (g, 0)),
        pl.BlockSpec((gb, N, N), lambda g: (g, 0, 0)),
    )

    flops = (2 * G * N * Fn * (HDn + 2 * HDe)        # fused node projection
             + 2 * G * NN * Fe * HDe                 # edge-feature projection
             + 2 * G * NN * HDe * HDn                # lane-replicated logits
             + 2 * G * NN * HDn)                     # aggregation (VPU)
    transcend = G * (NN * HDn + N * HDn + NN)
    bytes_accessed = int(
        2 * (G * N * Fn + G * NN * Fe)
        + 4 * G * N * N
        + 2 * (Fn * (HDn + 2 * HDe) + Fe * HDe + HDe * HDn) + 4 * HDe
        + 4 * (G * N * HDn + G * NN * HDe + G * NN))
    cost = pl.CostEstimate(flops=int(flops), transcendentals=int(transcend),
                           bytes_accessed=bytes_accessed)

    fn = pl.pallas_call(
        functools.partial(egat_kernel, gb=gb, n=N, hde=HDe, hdn=HDn),
        out_shape=out_shapes,
        grid=(G // gb,),
        in_specs=in_specs,
        out_specs=out_specs,
        compiler_params=pltpu.CompilerParams(
            dimension_semantics=("parallel",),
            vmem_limit_bytes=32 * 1024 * 1024,   # footprint ~4 MiB/step at gb=4
        ),
        cost_estimate=cost,
    )
    h_node, h_edge, score = fn(x_flat, ef_flat, adj_flat,
                               w_node, w_fij, attn_exp, bias2d)
    return (h_node.reshape(G, N, HDn),
            h_edge.reshape(G, N, N, HDe),
            score)


def reference_forward(x, efeat, adj, params):
    """Pure-jnp single-graph reference (matmul operands rounded to bf16 like
    the kernel, accumulation in f32)."""
    N, _ = x.shape
    H, De = params["attn"].shape
    HDe = H * De
    HDn = params["w_src"].shape[1]
    Dn = HDn // H
    bf = lambda t: t.astype(jnp.bfloat16).astype(jnp.float32)
    xb, efb = bf(x), bf(efeat)

    f_ni = xb @ bf(params["w_ni"])
    f_nj = xb @ bf(params["w_nj"])
    f_fij = efb.reshape(N * N, -1) @ bf(params["w_fij"])
    f_pre = (f_fij.reshape(N, N, HDe) + f_ni[:, None, :] + f_nj[None, :, :]
             + params["bias"][None, None, :])
    f_out = jnp.where(f_pre > 0, f_pre, 0.01 * f_pre)
    # kernel computes logits from bf16(f_out) / bf16(attn) with f32 accumulate
    e = (bf(f_out).reshape(N, N, H, De) * bf(params["attn"])[None, None]).sum(-1)
    mask = adj[:, :, None] > 0
    e_m = jnp.where(mask, e, -1e30)
    p = jnp.where(mask, jnp.exp(e_m - e_m.max(0, keepdims=True)), 0.0)
    a = p / jnp.maximum(p.sum(0, keepdims=True), 1e-30)
    h_src = (xb @ bf(params["w_src"])).reshape(N, H, Dn)
    h_out = jnp.einsum("uvh,uhd->vhd", a, h_src).reshape(N, HDn)
    h_node = jnp.maximum(h_out, 0.0)
    h_edge = jnp.maximum(f_pre, 0.0) * adj[:, :, None]
    score = jax.nn.sigmoid(a.mean(-1)) * adj
    return h_node, h_edge, score


# TODO(synk): DyEGATConv's graph surgery (dgl.unbatch, scipy negative-graph
# construction, edge sorting, remove_edges/add_edges, my_transform) is dynamic
# host-side graph restructuring with no Pallas equivalent; only the EGATConv
# compute + relu / sigmoid(mean) hot path is implemented here.

if __name__ == "__main__":
    G = 8             # graphs per batch
    N = 16            # nodes per graph
    IN_NODE = 32      # in_node_dim
    IN_EDGE = 16      # in_edge_dim
    OUT_NODE = 32     # out_node_dim
    OUT_EDGE = 16     # out_edge_dim
    H = 4             # num_heads

    key = jax.random.PRNGKey(0)
    ks = jax.random.split(key, 8)

    # Deterministic per-graph adjacency; every node has incoming edges.
    adj_np = np.zeros((G, N, N), np.float32)
    for g in range(G):
        for u in range(N):
            adj_np[g, u, (u + 1 + g) % N] = 1.0
            adj_np[g, u, (u + 3) % N] = 1.0
            adj_np[g, (u + 5 + g) % N, u] = 1.0
    adj = jnp.asarray(adj_np)

    x = jax.random.normal(ks[0], (G, N, IN_NODE), jnp.float32)
    efeat = jax.random.normal(ks[1], (G, N, N, IN_EDGE), jnp.float32) * adj[..., None]

    def glorot(k, shape):
        fan_in, fan_out = shape[0], shape[1]
        s = jnp.sqrt(6.0 / (fan_in + fan_out))
        return jax.random.uniform(k, shape, jnp.float32, -s, s)

    params = {
        "w_ni":  glorot(ks[2], (IN_NODE, H * OUT_EDGE)),   # fc_ni
        "w_nj":  glorot(ks[3], (IN_NODE, H * OUT_EDGE)),   # fc_nj
        "w_fij": glorot(ks[4], (IN_EDGE, H * OUT_EDGE)),   # fc_fij
        "w_src": glorot(ks[5], (IN_NODE, H * OUT_NODE)),   # fc_node_src
        "attn":  jax.random.normal(ks[6], (H, OUT_EDGE), jnp.float32) * 0.1,
        "bias":  jax.random.normal(ks[7], (H * OUT_EDGE,), jnp.float32) * 0.1,
    }

    h_node, h_edge, score = dyegat_forward(x, efeat, adj, params)
    jax.block_until_ready((h_node, h_edge, score))

    r_node, r_edge, r_score = jax.vmap(
        lambda xx, ee, aa: reference_forward(xx, ee, aa, params))(x, efeat, adj)

    np.testing.assert_allclose(np.asarray(h_node), np.asarray(r_node), rtol=2e-2, atol=2e-2)
    np.testing.assert_allclose(np.asarray(h_edge), np.asarray(r_edge), rtol=2e-2, atol=2e-2)
    np.testing.assert_allclose(np.asarray(score), np.asarray(r_score), rtol=2e-2, atol=2e-2)

    print("KERNEL_OK")
</pallas_src>

<mosaic_0001>
module attributes {stable_mosaic.version = 11 : i64} {
  func.func @egat_kernel(%arg0: i32, %arg1: memref<64x32xbf16, #tpu.memory_space<vmem>>, %arg2: memref<1024x16xbf16, #tpu.memory_space<vmem>>, %arg3: memref<64x16xf32, #tpu.memory_space<vmem>>, %arg4: memref<32x256xbf16, #tpu.memory_space<vmem>>, %arg5: memref<16x64xbf16, #tpu.memory_space<vmem>>, %arg6: memref<64x128xbf16, #tpu.memory_space<vmem>>, %arg7: memref<1x64xf32, #tpu.memory_space<vmem>>, %arg8: memref<64x128xf32, #tpu.memory_space<vmem>>, %arg9: memref<1024x64xf32, #tpu.memory_space<vmem>>, %arg10: memref<4x16x16xf32, #tpu.memory_space<vmem>>) attributes {dimension_semantics = [#tpu.dimension_semantics<parallel>], iteration_bounds = array<i64: 2>, scalar_prefetch = 0 : i64, scratch_operands = 0 : i64, tpu.core_type = #tpu.core_type<tc>, window_params = [{transform_indices = @transform_0, window_bounds = array<i64: 64, 32>}, {transform_indices = @transform_1, window_bounds = array<i64: 1024, 16>}, {transform_indices = @transform_2, window_bounds = array<i64: 64, 16>}, {pipeline_mode = #tpu.pipeline_mode<synchronous>, transform_indices = @transform_3, window_bounds = array<i64: 32, 256>}, {pipeline_mode = #tpu.pipeline_mode<synchronous>, transform_indices = @transform_4, window_bounds = array<i64: 16, 64>}, {pipeline_mode = #tpu.pipeline_mode<synchronous>, transform_indices = @transform_5, window_bounds = array<i64: 64, 128>}, {pipeline_mode = #tpu.pipeline_mode<synchronous>, transform_indices = @transform_6, window_bounds = array<i64: 1, 64>}, {transform_indices = @transform_7, window_bounds = array<i64: 64, 128>}, {transform_indices = @transform_8, window_bounds = array<i64: 1024, 64>}, {transform_indices = @transform_9, window_bounds = array<i64: 4, 16, 16>}]} {
    %c0 = arith.constant 0 : index
    %c0_0 = arith.constant 0 : index
    %0 = vector.load %arg1[%c0, %c0_0] : memref<64x32xbf16, #tpu.memory_space<vmem>>, vector<64x32xbf16>
    %c0_1 = arith.constant 0 : index
    %c0_2 = arith.constant 0 : index
    %1 = vector.load %arg4[%c0_1, %c0_2] : memref<32x256xbf16, #tpu.memory_space<vmem>>, vector<32x256xbf16>
    %cst = arith.constant dense<0.000000e+00> : vector<64x256xf32>
    %2 = tpu.matmul %0, %1, %cst {dimension_numbers = #tpu.dot_dimension_numbers<[1], [0], [0], [1], [0, 0, 1, 1], [], []>} : vector<64x32xbf16>, vector<32x256xbf16>, vector<64x256xf32> -> vector<64x256xf32>
    %3 = vector.extract_strided_slice %2 {offsets = [0, 0], sizes = [64, 128], strides = [1, 1]} : vector<64x256xf32> to vector<64x128xf32>
    %4 = vector.shape_cast %3 : vector<64x128xf32> to vector<4x16x128xf32>
    %5 = vector.extract_strided_slice %2 {offsets = [0, 128], sizes = [64, 64], strides = [1, 1]} : vector<64x256xf32> to vector<64x64xf32>
    %c0_3 = arith.constant 0 : index
    %c0_4 = arith.constant 0 : index
    %6 = vector.load %arg7[%c0_3, %c0_4] : memref<1x64xf32, #tpu.memory_space<vmem>>, vector<1x64xf32>
    %7 = vector.broadcast %6 : vector<1x64xf32> to vector<64x64xf32>
    %8 = arith.addf %5, %7 : vector<64x64xf32>
    %9 = vector.shape_cast %8 : vector<64x64xf32> to vector<4x16x64xf32>
    %10 = vector.extract_strided_slice %2 {offsets = [0, 192], sizes = [64, 64], strides = [1, 1]} : vector<64x256xf32> to vector<64x64xf32>
    %11 = vector.shape_cast %10 : vector<64x64xf32> to vector<4x16x64xf32>
    %c0_5 = arith.constant 0 : index
    %c0_6 = arith.constant 0 : index
    %12 = vector.load %arg2[%c0_5, %c0_6] : memref<1024x16xbf16, #tpu.memory_space<vmem>>, vector<1024x16xbf16>
    %c0_7 = arith.constant 0 : index
    %c0_8 = arith.constant 0 : index
    %13 = vector.load %arg5[%c0_7, %c0_8] : memref<16x64xbf16, #tpu.memory_space<vmem>>, vector<16x64xbf16>
    %cst_9 = arith.constant dense<0.000000e+00> : vector<1024x64xf32>
    %14 = tpu.matmul %12, %13, %cst_9 {dimension_numbers = #tpu.dot_dimension_numbers<[1], [0], [0], [1], [0, 0, 1, 1], [], []>} : vector<1024x16xbf16>, vector<16x64xbf16>, vector<1024x64xf32> -> vector<1024x64xf32>
    %15 = vector.shape_cast %14 : vector<1024x64xf32> to vector<4x16x16x64xf32>
    %16 = vector.shape_cast %9 : vector<4x16x64xf32> to vector<4x16x1x64xf32>
    %17 = vector.broadcast %16 : vector<4x16x1x64xf32> to vector<4x16x16x64xf32>
    %18 = arith.addf %15, %17 : vector<4x16x16x64xf32>
    %19 = vector.shape_cast %11 : vector<4x16x64xf32> to vector<4x1x16x64xf32>
    %20 = vector.broadcast %19 : vector<4x1x16x64xf32> to vector<4x16x16x64xf32>
    %21 = arith.addf %18, %20 : vector<4x16x16x64xf32>
    %c0_10 = arith.constant 0 : index
    %c0_11 = arith.constant 0 : index
    %22 = vector.load %arg3[%c0_10, %c0_11] : memref<64x16xf32, #tpu.memory_space<vmem>>, vector<64x16xf32>
    %23 = vector.shape_cast %22 : vector<64x16xf32> to vector<4x16x16xf32>
    %cst_12 = arith.constant 0.000000e+00 : f32
    %24 = vector.broadcast %cst_12 : f32 to vector<4x16x16x64xf32>
    %25 = arith.maximumf %21, %24 : vector<4x16x16x64xf32>
    %26 = vector.shape_cast %23 : vector<4x16x16xf32> to vector<4x16x16x1xf32>
    %27 = vector.broadcast %26 : vector<4x16x16x1xf32> to vector<4x16x16x64xf32>
    %28 = arith.mulf %25, %27 : vector<4x16x16x64xf32>
    %29 = vector.shape_cast %28 : vector<4x16x16x64xf32> to vector<1024x64xf32>
    %c0_13 = arith.constant 0 : index
    %c0_14 = arith.constant 0 : index
    %30 = vector.load %arg9[%c0_13, %c0_14] : memref<1024x64xf32, #tpu.memory_space<vmem>>, vector<1024x64xf32>
    tpu.vector_store %arg9[%c0_13, %c0_14], %29 {strides = array<i32>} : memref<1024x64xf32, #tpu.memory_space<vmem>>, vector<1024x64xf32>,
    %cst_15 = arith.constant 0.000000e+00 : f32
    %31 = vector.broadcast %cst_15 : f32 to vector<4x16x16x64xf32>
    %32 = arith.cmpf ogt, %21, %31 : vector<4x16x16x64xf32>
    %cst_16 = arith.constant 0.00999999977 : f32
    %33 = vector.broadcast %cst_16 : f32 to vector<4x16x16x64xf32>
    %34 = arith.mulf %33, %21 : vector<4x16x16x64xf32>
    %35 = arith.select %32, %21, %34 : vector<4x16x16x64xi1>, vector<4x16x16x64xf32>
    %36 = vector.shape_cast %35 : vector<4x16x16x64xf32> to vector<1024x64xf32>
    %37 = arith.truncf %36 : vector<1024x64xf32> to vector<1024x64xbf16>
    %c0_17 = arith.constant 0 : index
    %c0_18 = arith.constant 0 : index
    %38 = vector.load %arg6[%c0_17, %c0_18] : memref<64x128xbf16, #tpu.memory_space<vmem>>, vector<64x128xbf16>
    %cst_19 = arith.constant dense<0.000000e+00> : vector<1024x128xf32>
    %39 = tpu.matmul %37, %38, %cst_19 {dimension_numbers = #tpu.dot_dimension_numbers<[1], [0], [0], [1], [0, 0, 1, 1], [], []>} : vector<1024x64xbf16>, vector<64x128xbf16>, vector<1024x128xf32> -> vector<1024x128xf32>
    %40 = vector.shape_cast %39 : vector<1024x128xf32> to vector<4x16x16x128xf32>
    %cst_20 = arith.constant 1.000000e+00 : f32
    %41 = vector.broadcast %cst_20 : f32 to vector<4x16x16xf32>
    %42 = arith.subf %23, %41 : vector<4x16x16xf32>
    %cst_21 = arith.constant 1.000000e+30 : f32
    %43 = vector.broadcast %cst_21 : f32 to vector<4x16x16xf32>
    %44 = arith.mulf %42, %43 : vector<4x16x16xf32>
    %45 = vector.shape_cast %44 : vector<4x16x16xf32> to vector<4x16x16x1xf32>
    %46 = vector.shape_cast %23 : vector<4x16x16xf32> to vector<4x16x16x1xf32>
    %47 = vector.broadcast %45 : vector<4x16x16x1xf32> to vector<4x16x16x128xf32>
    %48 = arith.addf %40, %47 : vector<4x16x16x128xf32>
    %cst_22 = arith.constant dense<0xFF800000> : vector<4x16x128xf32>
    %49 = vector.multi_reduction <maximumf>, %48, %cst_22 [1] : vector<4x16x16x128xf32> to vector<4x16x128xf32>
    %50 = vector.shape_cast %49 : vector<4x16x128xf32> to vector<4x1x16x128xf32>
    %51 = vector.broadcast %50 : vector<4x1x16x128xf32> to vector<4x16x16x128xf32>
    %52 = arith.subf %48, %51 : vector<4x16x16x128xf32>
    %53 = math.exp %52 : vector<4x16x16x128xf32>
    %54 = vector.broadcast %46 : vector<4x16x16x1xf32> to vector<4x16x16x128xf32>
    %55 = arith.mulf %53, %54 : vector<4x16x16x128xf32>
    %cst_23 = arith.constant dense<0.000000e+00> : vector<4x16x128xf32>
    %56 = vector.multi_reduction <add>, %55, %cst_23 [1] : vector<4x16x16x128xf32> to vector<4x16x128xf32>
    %57 = vector.shape_cast %56 : vector<4x16x128xf32> to vector<4x1x16x128xf32>
    %cst_24 = arith.constant 1.000000e-30 : f32
    %58 = vector.broadcast %cst_24 : f32 to vector<4x1x16x128xf32>
    %59 = arith.maximumf %57, %58 : vector<4x1x16x128xf32>
    %60 = tpu.reciprocal %59 {approx = true} : vector<4x1x16x128xf32> -> vector<4x1x16x128xf32>
    %61 = vector.broadcast %60 : vector<4x1x16x128xf32> to vector<4x16x16x128xf32>
    %62 = arith.mulf %55, %61 : vector<4x16x16x128xf32>
    %cst_25 = arith.constant dense<0.000000e+00> : vector<4x16x16xf32>
    %63 = vector.multi_reduction <add>, %62, %cst_25 [3] : vector<4x16x16x128xf32> to vector<4x16x16xf32>
    %cst_26 = arith.constant 7.812500e-03 : f32
    %64 = vector.broadcast %cst_26 : f32 to vector<4x16x16xf32>
    %65 = arith.mulf %63, %64 : vector<4x16x16xf32>
    %66 = arith.negf %65 : vector<4x16x16xf32>
    %67 = math.exp %66 : vector<4x16x16xf32>
    %cst_27 = arith.constant 1.000000e+00 : f32
    %68 = vector.broadcast %cst_27 : f32 to vector<4x16x16xf32>
    %69 = arith.addf %68, %67 : vector<4x16x16xf32>
    %70 = arith.divf %68, %69 : vector<4x16x16xf32>
    %71 = arith.mulf %70, %23 : vector<4x16x16xf32>
    %c0_28 = arith.constant 0 : index
    %c0_29 = arith.constant 0 : index
    %c0_30 = arith.constant 0 : index
    %72 = vector.load %arg10[%c0_28, %c0_29, %c0_30] : memref<4x16x16xf32, #tpu.memory_space<vmem>>, vector<4x16x16xf32>
    tpu.vector_store %arg10[%c0_28, %c0_29, %c0_30], %71 {strides = array<i32>} : memref<4x16x16xf32, #tpu.memory_space<vmem>>, vector<4x16x16xf32>,
    %73 = vector.shape_cast %4 : vector<4x16x128xf32> to vector<4x16x1x128xf32>
    %74 = vector.broadcast %73 : vector<4x16x1x128xf32> to vector<4x16x16x128xf32>
    %75 = arith.mulf %62, %74 : vector<4x16x16x128xf32>
    %cst_31 = arith.constant dense<0.000000e+00> : vector<4x16x128xf32>
    %76 = vector.multi_reduction <add>, %75, %cst_31 [1] : vector<4x16x16x128xf32> to vector<4x16x128xf32>
    %cst_32 = arith.constant 0.000000e+00 : f32
    %77 = vector.broadcast %cst_32 : f32 to vector<4x16x128xf32>
    %78 = arith.maximumf %76, %77 : vector<4x16x128xf32>
    %79 = vector.shape_cast %78 : vector<4x16x128xf32> to vector<64x128xf32>
    %c0_33 = arith.constant 0 : index
    %c0_34 = arith.constant 0 : index
    %80 = vector.load %arg8[%c0_33, %c0_34] : memref<64x128xf32, #tpu.memory_space<vmem>>, vector<64x128xf32>
    tpu.vector_store %arg8[%c0_33, %c0_34], %79 {strides = array<i32>} : memref<64x128xf32, #tpu.memory_space<vmem>>, vector<64x128xf32>,
    return
  }
  func.func @transform_0(%arg0: i32) -> (i32, i32) {
    %c0_i32 = arith.constant 0 : i32
    %c0_i32_0 = arith.constant 0 : i32
    return %arg0, %c0_i32 : i32, i32
  }
  func.func @transform_1(%arg0: i32) -> (i32, i32) {
    %c0_i32 = arith.constant 0 : i32
    %c0_i32_0 = arith.constant 0 : i32
    return %arg0, %c0_i32 : i32, i32
  }
  func.func @transform_2(%arg0: i32) -> (i32, i32) {
    %c0_i32 = arith.constant 0 : i32
    %c0_i32_0 = arith.constant 0 : i32
    return %arg0, %c0_i32 : i32, i32
  }
  func.func @transform_3(%arg0: i32) -> (i32, i32) {
    %c0_i32 = arith.constant 0 : i32
    %c0_i32_0 = arith.constant 0 : i32
    %c0_i32_1 = arith.constant 0 : i32
    return %c0_i32, %c0_i32_0 : i32, i32
  }
  func.func @transform_4(%arg0: i32) -> (i32, i32) {
    %c0_i32 = arith.constant 0 : i32
    %c0_i32_0 = arith.constant 0 : i32
    %c0_i32_1 = arith.constant 0 : i32
    return %c0_i32, %c0_i32_0 : i32, i32
  }
  func.func @transform_5(%arg0: i32) -> (i32, i32) {
    %c0_i32 = arith.constant 0 : i32
    %c0_i32_0 = arith.constant 0 : i32
    %c0_i32_1 = arith.constant 0 : i32
    return %c0_i32, %c0_i32_0 : i32, i32
  }
  func.func @transform_6(%arg0: i32) -> (i32, i32) {
    %c0_i32 = arith.constant 0 : i32
    %c0_i32_0 = arith.constant 0 : i32
    %c0_i32_1 = arith.constant 0 : i32
    return %c0_i32, %c0_i32_0 : i32, i32
  }
  func.func @transform_7(%arg0: i32) -> (i32, i32) {
    %c0_i32 = arith.constant 0 : i32
    %c0_i32_0 = arith.constant 0 : i32
    return %arg0, %c0_i32 : i32, i32
  }
  func.func @transform_8(%arg0: i32) -> (i32, i32) {
    %c0_i32 = arith.constant 0 : i32
    %c0_i32_0 = arith.constant 0 : i32
    return %arg0, %c0_i32 : i32, i32
  }
  func.func @transform_9(%arg0: i32) -> (i32, i32, i32) {
    %c0_i32 = arith.constant 0 : i32
    %c0_i32_0 = arith.constant 0 : i32
    %c0_i32_1 = arith.constant 0 : i32
    return %arg0, %c0_i32, %c0_i32_0 : i32, i32, i32
  }
}

</mosaic_0001>

<llo_original>
// kernel: tpu_custom_call.1
$region0: #{tpu_custom_call.1}
  #allocation0 [shape = 'u32[]', space=smem, size = 0x4, offset = 0x4, fixed_abs, tag = 'smem constant byte address 0x4 - core index']
  #allocation1 [shape = 'u32[72,128]{1,0:T(1,128)}', space=vmem, size = 0x9000, scoped, tag = 'internal scratch']
  %s0 = inlined_call_operand.vmem [shape: bf16[128,32], index: 0, kind: input, shape index: {}]
  %s1 = inlined_call_operand.vmem [shape: bf16[2048,16], index: 1, kind: input, shape index: {}]
  %s2 = inlined_call_operand.vmem [shape: f32[128,16], index: 2, kind: input, shape index: {}]
  %s3 = inlined_call_operand.vmem [shape: bf16[32,256], index: 3, kind: input, shape index: {}]
  %s4 = inlined_call_operand.vmem [shape: bf16[16,64], index: 4, kind: input, shape index: {}]
  %s5 = inlined_call_operand.vmem [shape: bf16[64,128], index: 5, kind: input, shape index: {}]
  %s6 = inlined_call_operand.vmem [shape: f32[1,64], index: 6, kind: input, shape index: {}]
  %s7 = inlined_call_operand.hbm [shape: f32[128,128], index: 7, kind: output, shape index: {0}]
  %s8 = inlined_call_operand.vmem [shape: f32[2048,64], index: 8, kind: output, shape index: {1}]
  %s9 = inlined_call_operand.hbm [shape: f32[8,16,16], index: 9, kind: output, shape index: {2}]
  %10 = xla_tuple %s7, %s8, %s9
  %s11 = sld [smem:[#allocation0]]
  $region77: #{tpu_custom_call.1} parent=0
    _
  %s13 = ssub.s32 1, %s11
  %s14 = scalar_select 0, %s13, %s11
  $region1: #{tpu_custom_call.1} parent=0
    #allocation2 [shape = 'u8[65536]{0}', space=vmem, size = 0x10000, scoped, tag = 'output window, operand 0']
    #allocation3 [shape = 's32[2]{0}', space=sflag, size = 0x8, scoped, tag = 'scoped memory for tpu_custom_call.1']
    #allocation4 [shape = 'u8[65536]{0}', space=vmem, size = 0x10000, scoped, tag = 'output window, operand 2']
    #allocation5 [shape = 's32[2]{0}', space=sflag, size = 0x8, scoped, tag = 'scoped memory for tpu_custom_call.1']
    %15 = vsyncpa [#allocation3], 0
    %s16 = scalar_lea.sflag [#allocation3], 1
    %17 = vsyncpa %s16, 0
    %18 = vsyncpa [#allocation5], 0
    %s19 = scalar_lea.sflag [#allocation5], 1
    %20 = vsyncpa %s19, 0
    loop: start=0, step=1, limit=4
    $region2: #{tpu_custom_call.1} parent=1 // loop_pre_header
      _
    $region3: #{tpu_custom_call.1} parent=1 // loop_header
      %s22 = sphi 0, %s26
      %p23 = scmp.ge.s32.totalorder %s22, 4
      %s32 = sphi 0, %s34
      %s35 = sphi 0, %s32
      %s36 = sphi 0, %s35
      %s52 = sphi 0, %s36
      %s58 = sphi 0, %s60
      %s61 = sphi 0, %s58
      %s62 = sphi 0, %s61
      %s78 = sphi 0, %s62
      %s84 = sphi 0, %s86
      %s87 = sphi 0, %s84
      %s88 = sphi 0, %s87
      %s104 = sphi 0, %s88
      %s108 = sphi 0, %s108
      %s110 = sphi 0, %s108
      %s111 = sphi 0, %s110
      %s125 = sphi 0, %s111
      %s129 = sphi 0, %s129
      %s131 = sphi 0, %s129
      %s132 = sphi 0, %s131
      %s146 = sphi 0, %s132
      %s150 = sphi 0, %s150
      %s152 = sphi 0, %s150
      %s153 = sphi 0, %s152
      %s167 = sphi 0, %s153
      %s171 = sphi 0, %s171
      %s173 = sphi 0, %s171
      %s174 = sphi 0, %s173
      %s188 = sphi 0, %s174
      %s194 = sphi 0, %s196
      %s197 = sphi 0, %s194
      %s198 = sphi 0, %s197
      %s214 = sphi 0, %s198
      %s220 = sphi 0, %s222
      %s223 = sphi 0, %s220
      %s224 = sphi 0, %s223
      %s240 = sphi 0, %s224
      %s246 = sphi 0, %s248
      %s249 = sphi 0, %s246
      %s250 = sphi 0, %s249
      %s266 = sphi 0, %s250
    $region4: #{tpu_custom_call.1} parent=1 // loop_header_branch
      %25 = sbr.rel (%p23) target = $region8
    $region5: #{tpu_custom_call.1} parent=1 // loop_body
      %s27 = ssub.s32 %s22, 1
      %s28 = ssub.s32 %s22, 2
      %s29 = sadd.s32 %s22, 1
      %s30 = ssub.s32 %s22, %s29
      %p31 = scmp.eq.s32.totalorder %s30, 0
      %s33 = sadd.s32 %s32, 1
      %s34 = scalar_select %p31, %s32, %s33
      %p37 = pneg %p31
      %p38 = scmp.eq.s32.totalorder %s22, 1
      %p39 = por %p37, %p38
      %p40 = scmp.ne.s32.totalorder %s32, %s35
      %p41 = scmp.eq.s32.totalorder %s22, 0
      %p42 = por %p40, %p41
      %p43 = scmp.ne.s32.totalorder %s32, %s35
      %p44 = scmp.eq.s32.totalorder %s27, 1
      %p45 = por %p43, %p44
      %p46 = scmp.ne.s32.totalorder %s35, %s36
      %p47 = scmp.eq.s32.totalorder %s27, 0
      %p48 = por %p46, %p47
      %p49 = scmp.ne.s32.totalorder %s35, %s36
      %p50 = scmp.eq.s32.totalorder %s28, 1
      %p51 = por %p49, %p50
      %p53 = scmp.ne.s32.totalorder %s36, %s52
      %p54 = scmp.eq.s32.totalorder %s28, 0
      %p55 = por %p53, %p54
      %s56 = ssub.s32 %s22, %s29
      %p57 = scmp.eq.s32.totalorder %s56, 0
      %s59 = sadd.s32 %s58, 1
      %s60 = scalar_select %p57, %s58, %s59
      %p63 = pneg %p57
      %p64 = scmp.eq.s32.totalorder %s22, 1
      %p65 = por %p63, %p64
      %p66 = scmp.ne.s32.totalorder %s58, %s61
      %p67 = scmp.eq.s32.totalorder %s22, 0
      %p68 = por %p66, %p67
      %p69 = scmp.ne.s32.totalorder %s58, %s61
      %p70 = scmp.eq.s32.totalorder %s27, 1
      %p71 = por %p69, %p70
      %p72 = scmp.ne.s32.totalorder %s61, %s62
      %p73 = scmp.eq.s32.totalorder %s27, 0
      %p74 = por %p72, %p73
      %p75 = scmp.ne.s32.totalorder %s61, %s62
      %p76 = scmp.eq.s32.totalorder %s28, 1
      %p77 = por %p75, %p76
      %p79 = scmp.ne.s32.totalorder %s62, %s78
      %p80 = scmp.eq.s32.totalorder %s28, 0
      %p81 = por %p79, %p80
      %s82 = ssub.s32 %s22, %s29
      %p83 = scmp.eq.s32.totalorder %s82, 0
      %s85 = sadd.s32 %s84, 1
      %s86 = scalar_select %p83, %s84, %s85
      %p89 = pneg %p83
      %p90 = scmp.eq.s32.totalorder %s22, 1
      %p91 = por %p89, %p90
      %p92 = scmp.ne.s32.totalorder %s84, %s87
      %p93 = scmp.eq.s32.totalorder %s22, 0
      %p94 = por %p92, %p93
      %p95 = scmp.ne.s32.totalorder %s84, %s87
      %p96 = scmp.eq.s32.totalorder %s27, 1
      %p97 = por %p95, %p96
      %p98 = scmp.ne.s32.totalorder %s87, %s88
      %p99 = scmp.eq.s32.totalorder %s27, 0
      %p100 = por %p98, %p99
      %p101 = scmp.ne.s32.totalorder %s87, %s88
      %p102 = scmp.eq.s32.totalorder %s28, 1
      %p103 = por %p101, %p102
      %p105 = scmp.ne.s32.totalorder %s88, %s104
      %p106 = scmp.eq.s32.totalorder %s28, 0
      %p107 = por %p105, %p106
      %s109 = sadd.s32 %s108, 1
      %p112 = scmp.eq.s32.totalorder %s22, 1
      %p113 = scmp.ne.s32.totalorder %s108, %s110
      %p114 = scmp.eq.s32.totalorder %s22, 0
      %p115 = por %p113, %p114
      %p116 = scmp.ne.s32.totalorder %s108, %s110
      %p117 = scmp.eq.s32.totalorder %s27, 1
      %p118 = por %p116, %p117
      %p119 = scmp.ne.s32.totalorder %s110, %s111
      %p120 = scmp.eq.s32.totalorder %s27, 0
      %p121 = por %p119, %p120
      %p122 = scmp.ne.s32.totalorder %s110, %s111
      %p123 = scmp.eq.s32.totalorder %s28, 1
      %p124 = por %p122, %p123
      %p126 = scmp.ne.s32.totalorder %s111, %s125
      %p127 = scmp.eq.s32.totalorder %s28, 0
      %p128 = por %p126, %p127
      %s130 = sadd.s32 %s129, 1
      %p133 = scmp.eq.s32.totalorder %s22, 1
      %p134 = scmp.ne.s32.totalorder %s129, %s131
      %p135 = scmp.eq.s32.totalorder %s22, 0
      %p136 = por %p134, %p135
      %p137 = scmp.ne.s32.totalorder %s129, %s131
      %p138 = scmp.eq.s32.totalorder %s27, 1
      %p139 = por %p137, %p138
      %p140 = scmp.ne.s32.totalorder %s131, %s132
      %p141 = scmp.eq.s32.totalorder %s27, 0
      %p142 = por %p140, %p141
      %p143 = scmp.ne.s32.totalorder %s131, %s132
      %p144 = scmp.eq.s32.totalorder %s28, 1
      %p145 = por %p143, %p144
      %p147 = scmp.ne.s32.totalorder %s132, %s146
      %p148 = scmp.eq.s32.totalorder %s28, 0
      %p149 = por %p147, %p148
      %s151 = sadd.s32 %s150, 1
      %p154 = scmp.eq.s32.totalorder %s22, 1
      %p155 = scmp.ne.s32.totalorder %s150, %s152
      %p156 = scmp.eq.s32.totalorder %s22, 0
      %p157 = por %p155, %p156
      %p158 = scmp.ne.s32.totalorder %s150, %s152
      %p159 = scmp.eq.s32.totalorder %s27, 1
      %p160 = por %p158, %p159
      %p161 = scmp.ne.s32.totalorder %s152, %s153
      %p162 = scmp.eq.s32.totalorder %s27, 0
      %p163 = por %p161, %p162
      %p164 = scmp.ne.s32.totalorder %s152, %s153
      %p165 = scmp.eq.s32.totalorder %s28, 1
      %p166 = por %p164, %p165
      %p168 = scmp.ne.s32.totalorder %s153, %s167
      %p169 = scmp.eq.s32.totalorder %s28, 0
      %p170 = por %p168, %p169
      %s172 = sadd.s32 %s171, 1
      %p175 = scmp.eq.s32.totalorder %s22, 1
      %p176 = scmp.ne.s32.totalorder %s171, %s173
      %p177 = scmp.eq.s32.totalorder %s22, 0
      %p178 = por %p176, %p177
      %p179 = scmp.ne.s32.totalorder %s171, %s173
      %p180 = scmp.eq.s32.totalorder %s27, 1
      %p181 = por %p179, %p180
      %p182 = scmp.ne.s32.totalorder %s173, %s174
      %p183 = scmp.eq.s32.totalorder %s27, 0
      %p184 = por %p182, %p183
      %p185 = scmp.ne.s32.totalorder %s173, %s174
      %p186 = scmp.eq.s32.totalorder %s28, 1
      %p187 = por %p185, %p186
      %p189 = scmp.ne.s32.totalorder %s174, %s188
      %p190 = scmp.eq.s32.totalorder %s28, 0
      %p191 = por %p189, %p190
      %s192 = ssub.s32 %s22, %s29
      %p193 = scmp.eq.s32.totalorder %s192, 0
      %s195 = sadd.s32 %s194, 1
      %s196 = scalar_select %p193, %s194, %s195
      %p199 = pneg %p193
      %p200 = scmp.eq.s32.totalorder %s22, 1
      %p201 = por %p199, %p200
      %p202 = scmp.ne.s32.totalorder %s194, %s197
      %p203 = scmp.eq.s32.totalorder %s22, 0
      %p204 = por %p202, %p203
      %p205 = scmp.ne.s32.totalorder %s194, %s197
      %p206 = scmp.eq.s32.totalorder %s27, 1
      %p207 = por %p205, %p206
      %p208 = scmp.ne.s32.totalorder %s197, %s198
      %p209 = scmp.eq.s32.totalorder %s27, 0
      %p210 = por %p208, %p209
      %p211 = scmp.ne.s32.totalorder %s197, %s198
      %p212 = scmp.eq.s32.totalorder %s28, 1
      %p213 = por %p211, %p212
      %p215 = scmp.ne.s32.totalorder %s198, %s214
      %p216 = scmp.eq.s32.totalorder %s28, 0
      %p217 = por %p215, %p216
      %s218 = ssub.s32 %s22, %s29
      %p219 = scmp.eq.s32.totalorder %s218, 0
      %s221 = sadd.s32 %s220, 1
      %s222 = scalar_select %p219, %s220, %s221
      %p225 = pneg %p219
      %p226 = scmp.eq.s32.totalorder %s22, 1
      %p227 = por %p225, %p226
      %p228 = scmp.ne.s32.totalorder %s220, %s223
      %p229 = scmp.eq.s32.totalorder %s22, 0
      %p230 = por %p228, %p229
      %p231 = scmp.ne.s32.totalorder %s220, %s223
      %p232 = scmp.eq.s32.totalorder %s27, 1
      %p233 = por %p231, %p232
      %p234 = scmp.ne.s32.totalorder %s223, %s224
      %p235 = scmp.eq.s32.totalorder %s27, 0
      %p236 = por %p234, %p235
      %p237 = scmp.ne.s32.totalorder %s223, %s224
      %p238 = scmp.eq.s32.totalorder %s28, 1
      %p239 = por %p237, %p238
      %p241 = scmp.ne.s32.totalorder %s224, %s240
      %p242 = scmp.eq.s32.totalorder %s28, 0
      %p243 = por %p241, %p242
      %s244 = ssub.s32 %s22, %s29
      %p245 = scmp.eq.s32.totalorder %s244, 0
      %s247 = sadd.s32 %s246, 1
      %s248 = scalar_select %p245, %s246, %s247
      %p251 = pneg %p245
      %p252 = scmp.eq.s32.totalorder %s22, 1
      %p253 = por %p251, %p252
      %p254 = scmp.ne.s32.totalorder %s246, %s249
      %p255 = scmp.eq.s32.totalorder %s22, 0
      %p256 = por %p254, %p255
      %p257 = scmp.ne.s32.totalorder %s246, %s249
      %p258 = scmp.eq.s32.totalorder %s27, 1
      %p259 = por %p257, %p258
      %p260 = scmp.ne.s32.totalorder %s249, %s250
      %p261 = scmp.eq.s32.totalorder %s27, 0
      %p262 = por %p260, %p261
      %p263 = scmp.ne.s32.totalorder %s249, %s250
      %p264 = scmp.eq.s32.totalorder %s28, 1
      %p265 = por %p263, %p264
      %p267 = scmp.ne.s32.totalorder %s250, %s266
      %p268 = scmp.eq.s32.totalorder %s28, 0
      %p269 = por %p267, %p268
      %p270 = scmp.le.s32.totalorder 1, %s22
      %p271 = scmp.lt.s32.totalorder %s22, 3
      %p272 = pnand %p270, %p271
      %p273 = pneg %p272
      // Predicated region
      $region9: #{tpu_custom_call.1} parent=5 // pred_check
        _
      $region10: #{tpu_custom_call.1} parent=5 // pred_check_branch
        %275 = sbr.rel (%p272) target = $region12
      $region11: #{tpu_custom_call.1} parent=5 // pred_region
        %s276 = ssub.s32 %s22, 1
        // Predicated region
        $region13: #{tpu_custom_call.1} parent=11 // pred_check
          %p277 = pneg %p121
        $region14: #{tpu_custom_call.1} parent=11 // pred_check_branch
          %279 = sbr.rel (%p277) target = $region16
        $region15: #{tpu_custom_call.1} parent=11 // pred_region
          _
        $region16: #{tpu_custom_call.1} parent=11 // pred_fallthru
          _
        // Predicated region
        $region17: #{tpu_custom_call.1} parent=11 // pred_check
          %p280 = pneg %p142
        $region18: #{tpu_custom_call.1} parent=11 // pred_check_branch
          %282 = sbr.rel (%p280) target = $region20
        $region19: #{tpu_custom_call.1} parent=11 // pred_region
          _
        $region20: #{tpu_custom_call.1} parent=11 // pred_fallthru
          _
        // Predicated region
        $region21: #{tpu_custom_call.1} parent=11 // pred_check
          %p283 = pneg %p163
        $region22: #{tpu_custom_call.1} parent=11 // pred_check_branch
          %285 = sbr.rel (%p283) target = $region24
        $region23: #{tpu_custom_call.1} parent=11 // pred_region
          _
        $region24: #{tpu_custom_call.1} parent=11 // pred_fallthru
          _
        // Predicated region
        $region25: #{tpu_custom_call.1} parent=11 // pred_check
          %p286 = pneg %p184
        $region26: #{tpu_custom_call.1} parent=11 // pred_check_branch
          %288 = sbr.rel (%p286) target = $region28
        $region27: #{tpu_custom_call.1} parent=11 // pred_region
          _
        $region28: #{tpu_custom_call.1} parent=11 // pred_fallthru
          _
      $region12: #{tpu_custom_call.1} parent=5 // pred_fallthru
        _
      %p289 = scmp.lt.s32.totalorder %s22, 2
      // Predicated region
      $region29: #{tpu_custom_call.1} parent=5 // pred_check
        %p290 = pneg %p289
      $region30: #{tpu_custom_call.1} parent=5 // pred_check_branch
        %292 = sbr.rel (%p290) target = $region32
      $region31: #{tpu_custom_call.1} parent=5 // pred_region
        // Predicated region
        $region33: #{tpu_custom_call.1} parent=31 // pred_check
          %p293 = pneg %p42
        $region34: #{tpu_custom_call.1} parent=31 // pred_check_branch
          %295 = sbr.rel (%p293) target = $region36
        $region35: #{tpu_custom_call.1} parent=31 // pred_region
          %s296 = smul.u32 8, %s22
          %p297 = scmp.lt.s32.totalorder %s296, 15
          %s298 = scalar_select %p297, %s296, 15
          %s299 = smul.addr %s298, 4
          %s300 = scalar_lea.vmem %s0, %s299
          %s301 = smul.u32 8, %s22
        $region36: #{tpu_custom_call.1} parent=31 // pred_fallthru
          _
        // Predicated region
        $region37: #{tpu_custom_call.1} parent=31 // pred_check
          %p302 = pneg %p68
        $region38: #{tpu_custom_call.1} parent=31 // pred_check_branch
          %304 = sbr.rel (%p302) target = $region40
        $region39: #{tpu_custom_call.1} parent=31 // pred_region
          %s305 = smul.u32 128, %s22
          %p306 = scmp.lt.s32.totalorder %s305, 255
          %s307 = scalar_select %p306, %s305, 255
          %s308 = smul.addr %s307, 4
          %s309 = scalar_lea.vmem %s1, %s308
          %s310 = smul.u32 128, %s22
        $region40: #{tpu_custom_call.1} parent=31 // pred_fallthru
          _
        // Predicated region
        $region41: #{tpu_custom_call.1} parent=31 // pred_check
          %p311 = pneg %p94
        $region42: #{tpu_custom_call.1} parent=31 // pred_check_branch
          %313 = sbr.rel (%p311) target = $region44
        $region43: #{tpu_custom_call.1} parent=31 // pred_region
          %s314 = smul.u32 8, %s22
          %p315 = scmp.lt.s32.totalorder %s314, 15
          %s316 = scalar_select %p315, %s314, 15
          %s317 = smul.addr %s316, 8
          %s318 = scalar_lea.vmem %s2, %s317
          %s319 = smul.u32 8, %s22
        $region44: #{tpu_custom_call.1} parent=31 // pred_fallthru
          _
      $region32: #{tpu_custom_call.1} parent=5 // pred_fallthru
        _
      %p320 = scmp.le.s32.totalorder 1, %s22
      %p321 = scmp.lt.s32.totalorder %s22, 3
      %p322 = pnand %p320, %p321
      %p323 = pneg %p322
      // Predicated region
      $region45: #{tpu_custom_call.1} parent=5 // pred_check
        _
      $region46: #{tpu_custom_call.1} parent=5 // pred_check_branch
        %325 = sbr.rel (%p322) target = $region48
      $region47: #{tpu_custom_call.1} parent=5 // pred_region
        %s326 = ssub.s32 %s22, 1
        %s327 = smul.u32 8, %s27
        %p328 = scmp.lt.s32.totalorder %s327, 15
        %s329 = scalar_select %p328, %s327, 15
        %s330 = smul.addr %s329, 4
        %s331 = scalar_lea.vmem %s0, %s330
        %p332 = pneg %p48
        %p333 = pneg %p45
        %s334 = smul.u32 128, %s27
        %p335 = scmp.lt.s32.totalorder %s334, 255
        %s336 = scalar_select %p335, %s334, 255
        %s337 = smul.addr %s336, 4
        %s338 = scalar_lea.vmem %s1, %s337
        %p339 = pneg %p74
        %p340 = pneg %p71
        %s341 = smul.u32 8, %s27
        %p342 = scmp.lt.s32.totalorder %s341, 15
        %s343 = scalar_select %p342, %s341, 15
        %s344 = smul.addr %s343, 8
        %s345 = scalar_lea.vmem %s2, %s344
        %p346 = pneg %p100
        %p347 = pneg %p97
        %p348 = pneg %p121
        %p349 = pneg %p118
        %p350 = pneg %p142
        %p351 = pneg %p139
        %p352 = pneg %p163
        %p353 = pneg %p160
        %p354 = pneg %p184
        %p355 = pneg %p181
        %p356 = pneg %p210
        %p357 = pneg %p207
        %s358 = sand.u32 %s197, 1
        %s359 = scalar_lea.sflag [#allocation3], %s358
        %s360 = sand.u32 %s197, 1
        %s361 = smul.addr %s360, 64
        %s362 = scalar_lea.vmem [#allocation2], %s361
        %p363 = pneg %p236
        %p364 = pneg %p233
        %s365 = smul.u32 128, %s27
        %p366 = scmp.lt.s32.totalorder %s365, 255
        %s367 = scalar_select %p366, %s365, 255
        %s368 = smul.addr %s367, 8
        %s369 = scalar_lea.vmem %s8, %s368
        %p370 = pneg %p262
        %p371 = pneg %p259
        %s372 = sand.u32 %s249, 1
        %s373 = scalar_lea.sflag [#allocation5], %s372
        %s374 = sand.u32 %s249, 1
        %s375 = smul.addr %s374, 64
        %s376 = scalar_lea.vmem [#allocation4], %s375
        %s377 = smul.u32 8, %s27
        %p378 = scmp.lt.s32.totalorder %s377, 15
        %s379 = scalar_select %p378, %s377, 15
        %s380 = smul.addr %s379, 4
        %s381 = scalar_lea.vmem %s0, %s380
        %s382 = smul.u32 8, %s27
        %s383 = smul.u32 128, %s27
        %p384 = scmp.lt.s32.totalorder %s383, 255
        %s385 = scalar_select %p384, %s383, 255
        %s386 = smul.addr %s385, 4
        %s387 = scalar_lea.vmem %s1, %s386
        %s388 = smul.u32 128, %s27
        %s389 = smul.u32 8, %s27
        %p390 = scmp.lt.s32.totalorder %s389, 15
        %s391 = scalar_select %p390, %s389, 15
        %s392 = smul.addr %s391, 8
        %s393 = scalar_lea.vmem %s2, %s392
        %s394 = smul.u32 8, %s27
        %s395 = smul.u32 8, %s27
        %s396 = smul.u32 128, %s27
        %p397 = scmp.lt.s32.totalorder %s396, 255
        %s398 = scalar_select %p397, %s396, 255
        %s399 = smul.addr %s398, 8
        %s400 = scalar_lea.vmem %s8, %s399
        %s401 = smul.u32 128, %s27
        %s402 = smul.u32 4, %s27
        %v404 = vld [vmem:[%s381] sm:$0xf]
        %v405 = vld [vmem:[%s381 + $0x4] sm:$0xf]
        %v406 = vld [vmem:[%s381 + $0x8] sm:$0xf]
        %v407 = vld [vmem:[%s381 + $0xc] sm:$0xf]
        %v408 = vld [vmem:[%s381 + $0x10] sm:$0xf]
        %v409 = vld [vmem:[%s381 + $0x14] sm:$0xf]
        %v410 = vld [vmem:[%s381 + $0x18] sm:$0xf]
        %v411 = vld [vmem:[%s381 + $0x1c] sm:$0xf]
        %v412 = vld [vmem:[%s3] sm:$0xff]
        %v413 = vld [vmem:[%s3 + $0x8] sm:$0xff]
        %v414 = vld [vmem:[%s3 + $0x10] sm:$0xff]
        %v415 = vld [vmem:[%s3 + $0x18] sm:$0xff]
        %v424 = vunpack.c.l.b16 %v404
        %v425 = vunpack.c.l.b16 %v405
        %v426 = vunpack.c.l.b16 %v406
        %v427 = vunpack.c.l.b16 %v407
        %v428 = vunpack.c.l.b16 %v408
        %v429 = vunpack.c.l.b16 %v409
        %v430 = vunpack.c.l.b16 %v410
        %v431 = vunpack.c.l.b16 %v411
        %v432 = vpack.c.b16 %v425, %v424
        %v433 = vpack.c.b16 %v427, %v426
        %v434 = vpack.c.b16 %v429, %v428
        %v435 = vpack.c.b16 %v431, %v430
        %v440 = vunpack.c.l.b16 %v412
        %v441 = vunpack.c.h.b16 %v412
        %v442 = vunpack.c.l.b16 %v413
        %v443 = vunpack.c.h.b16 %v413
        %v444 = vunpack.c.l.b16 %v414
        %v445 = vunpack.c.h.b16 %v414
        %v446 = vunpack.c.l.b16 %v415
        %v447 = vunpack.c.h.b16 %v415
        %v448 = vpack.c.b16 %v442, %v440
        %v449 = vpack.c.b16 %v443, %v441
        %v450 = vpack.c.b16 %v446, %v444
        %v451 = vpack.c.b16 %v447, %v445
        %vm456 = vcmask 261120
        %v458 = vsel %vm456, %v432, 0
        %v461 = vsel %vm456, %v433, 0
        %v464 = vsel %vm456, %v434, 0
        %v467 = vsel %vm456, %v435, 0
        %469 = vmatpush.bf16.msra.mxu0 0
        %470 = vmatpush.bf16.msra.mxu0 0
        %471 = vmatpush.bf16.msra.mxu0 0
        %472 = vmatpush.bf16.msra.mxu0 0
        %473 = vmatpush.bf16.msra.mxu0 0
        %474 = vmatpush.bf16.msra.mxu0 0
        %475 = vmatpush.bf16.msra.mxu0 %v450
        %476 = vmatpush.bf16.msra.mxu0 %v448
        %477 = vmatmul.bf16.gmra.mxu0 %v458
        %v478 = vpop.f32.mrf.mxu0
        %v479 = vadd.f32 0.0, %v478
        %v480 = vpop.f32.mrf.mxu0
        %v481 = vadd.f32 0.0, %v480
        %482 = vmatmul.bf16.gmra.mxu0 %v461
        %v483 = vpop.f32.mrf.mxu0
        %v484 = vadd.f32 0.0, %v483
        %v485 = vpop.f32.mrf.mxu0
        %v486 = vadd.f32 0.0, %v485
        %487 = vmatmul.bf16.gmra.mxu0 %v464
        %v488 = vpop.f32.mrf.mxu0
        %v489 = vadd.f32 0.0, %v488
        %v490 = vpop.f32.mrf.mxu0
        %v491 = vadd.f32 0.0, %v490
        %492 = vmatmul.bf16.gmra.mxu0 %v467
        %v493 = vpop.f32.mrf.mxu0
        %v494 = vadd.f32 0.0, %v493
        %v495 = vpop.f32.mrf.mxu0
        %v496 = vadd.f32 0.0, %v495
        %497 = vdwg.mxu0
        %498 = vmatpush.bf16.msra.mxu0 0
        %499 = vmatpush.bf16.msra.mxu0 0
        %500 = vmatpush.bf16.msra.mxu0 0
        %501 = vmatpush.bf16.msra.mxu0 0
        %502 = vmatpush.bf16.msra.mxu0 0
        %503 = vmatpush.bf16.msra.mxu0 0
        %504 = vmatpush.bf16.msra.mxu0 %v451
        %505 = vmatpush.bf16.msra.mxu0 %v449
        %506 = vmatmul.bf16.gmra.mxu0 %v458
        %v507 = vpop.f32.mrf.mxu0
        %v508 = vadd.f32 0.0, %v507
        %v509 = vpop.f32.mrf.mxu0
        %v510 = vadd.f32 0.0, %v509
        %511 = vmatmul.bf16.gmra.mxu0 %v461
        %v512 = vpop.f32.mrf.mxu0
        %v513 = vadd.f32 0.0, %v512
        %v514 = vpop.f32.mrf.mxu0
        %v515 = vadd.f32 0.0, %v514
        %516 = vmatmul.bf16.gmra.mxu0 %v464
        %v517 = vpop.f32.mrf.mxu0
        %v518 = vadd.f32 0.0, %v517
        %v519 = vpop.f32.mrf.mxu0
        %v520 = vadd.f32 0.0, %v519
        %521 = vmatmul.bf16.gmra.mxu0 %v467
        %v522 = vpop.f32.mrf.mxu0
        %v523 = vadd.f32 0.0, %v522
        %v524 = vpop.f32.mrf.mxu0
        %v525 = vadd.f32 0.0, %v524
        %526 = vdwg.mxu0
        %v527 = vld [vmem:[%s6] sm:$0x1]
        %v529 = vperm.slane %v527, 0
        %v531 = vadd.f32 %v508, %v529
        %v532 = vadd.f32 %v510, %v529
        %v533 = vadd.f32 %v513, %v529
        %v534 = vadd.f32 %v515, %v529
        %v535 = vadd.f32 %v518, %v529
        %v536 = vadd.f32 %v520, %v529
        %v537 = vadd.f32 %v523, %v529
        %v538 = vadd.f32 %v525, %v529
        %v539 = vld [vmem:[%s387] sm:$0xf]
        %v540 = vld [vmem:[%s387 + $0x4] sm:$0xf]
        %v541 = vld [vmem:[%s387 + $0x8] sm:$0xf]
        %v542 = vld [vmem:[%s387 + $0xc] sm:$0xf]
        %v543 = vld [vmem:[%s387 + $0x10] sm:$0xf]
        %v544 = vld [vmem:[%s387 + $0x14] sm:$0xf]
        %v545 = vld [vmem:[%s387 + $0x18] sm:$0xf]
        %v546 = vld [vmem:[%s387 + $0x1c] sm:$0xf]
        %v547 = vld [vmem:[%s387 + $0x20] sm:$0xf]
        %v548 = vld [vmem:[%s387 + $0x24] sm:$0xf]
        %v549 = vld [vmem:[%s387 + $0x28] sm:$0xf]
        %v550 = vld [vmem:[%s387 + $0x2c] sm:$0xf]
        %v551 = vld [vmem:[%s387 + $0x30] sm:$0xf]
        %v552 = vld [vmem:[%s387 + $0x34] sm:$0xf]
        %v553 = vld [vmem:[%s387 + $0x38] sm:$0xf]
        %v554 = vld [vmem:[%s387 + $0x3c] sm:$0xf]
        %v555 = vld [vmem:[%s387 + $0x40] sm:$0xf]
        %v556 = vld [vmem:[%s387 + $0x44] sm:$0xf]
        %v557 = vld [vmem:[%s387 + $0x48] sm:$0xf]
        %v558 = vld [vmem:[%s387 + $0x4c] sm:$0xf]
        %v559 = vld [vmem:[%s387 + $0x50] sm:$0xf]
        %v560 = vld [vmem:[%s387 + $0x54] sm:$0xf]
        %v561 = vld [vmem:[%s387 + $0x58] sm:$0xf]
        %v562 = vld [vmem:[%s387 + $0x5c] sm:$0xf]
        %v563 = vld [vmem:[%s387 + $0x60] sm:$0xf]
        %v564 = vld [vmem:[%s387 + $0x64] sm:$0xf]
        %v565 = vld [vmem:[%s387 + $0x68] sm:$0xf]
        %v566 = vld [vmem:[%s387 + $0x6c] sm:$0xf]
        %v567 = vld [vmem:[%s387 + $0x70] sm:$0xf]
        %v568 = vld [vmem:[%s387 + $0x74] sm:$0xf]
        %v569 = vld [vmem:[%s387 + $0x78] sm:$0xf]
        %v570 = vld [vmem:[%s387 + $0x7c] sm:$0xf]
        %v571 = vld [vmem:[%s387 + $0x80] sm:$0xf]
        %v572 = vld [vmem:[%s387 + $0x84] sm:$0xf]
        %v573 = vld [vmem:[%s387 + $0x88] sm:$0xf]
        %v574 = vld [vmem:[%s387 + $0x8c] sm:$0xf]
        %v575 = vld [vmem:[%s387 + $0x90] sm:$0xf]
        %v576 = vld [vmem:[%s387 + $0x94] sm:$0xf]
        %v577 = vld [vmem:[%s387 + $0x98] sm:$0xf]
        %v578 = vld [vmem:[%s387 + $0x9c] sm:$0xf]
        %v579 = vld [vmem:[%s387 + $0xa0] sm:$0xf]
        %v580 = vld [vmem:[%s387 + $0xa4] sm:$0xf]
        %v581 = vld [vmem:[%s387 + $0xa8] sm:$0xf]
        %v582 = vld [vmem:[%s387 + $0xac] sm:$0xf]
        %v583 = vld [vmem:[%s387 + $0xb0] sm:$0xf]
        %v584 = vld [vmem:[%s387 + $0xb4] sm:$0xf]
        %v585 = vld [vmem:[%s387 + $0xb8] sm:$0xf]
        %v586 = vld [vmem:[%s387 + $0xbc] sm:$0xf]
        %v587 = vld [vmem:[%s387 + $0xc0] sm:$0xf]
        %v588 = vld [vmem:[%s387 + $0xc4] sm:$0xf]
        %v589 = vld [vmem:[%s387 + $0xc8] sm:$0xf]
        %v590 = vld [vmem:[%s387 + $0xcc] sm:$0xf]
        %v591 = vld [vmem:[%s387 + $0xd0] sm:$0xf]
        %v592 = vld [vmem:[%s387 + $0xd4] sm:$0xf]
        %v593 = vld [vmem:[%s387 + $0xd8] sm:$0xf]
        %v594 = vld [vmem:[%s387 + $0xdc] sm:$0xf]
        %v595 = vld [vmem:[%s387 + $0xe0] sm:$0xf]
        %v596 = vld [vmem:[%s387 + $0xe4] sm:$0xf]
        %v597 = vld [vmem:[%s387 + $0xe8] sm:$0xf]
        %v598 = vld [vmem:[%s387 + $0xec] sm:$0xf]
        %v599 = vld [vmem:[%s387 + $0xf0] sm:$0xf]
        %v600 = vld [vmem:[%s387 + $0xf4] sm:$0xf]
        %v601 = vld [vmem:[%s387 + $0xf8] sm:$0xf]
        %v602 = vld [vmem:[%s387 + $0xfc] sm:$0xf]
        %v603 = vld [vmem:[%s387 + $0x100] sm:$0xf]
        %v604 = vld [vmem:[%s387 + $0x104] sm:$0xf]
        %v605 = vld [vmem:[%s387 + $0x108] sm:$0xf]
        %v606 = vld [vmem:[%s387 + $0x10c] sm:$0xf]
        %v607 = vld [vmem:[%s387 + $0x110] sm:$0xf]
        %v608 = vld [vmem:[%s387 + $0x114] sm:$0xf]
        %v609 = vld [vmem:[%s387 + $0x118] sm:$0xf]
        %v610 = vld [vmem:[%s387 + $0x11c] sm:$0xf]
        %v611 = vld [vmem:[%s387 + $0x120] sm:$0xf]
        %v612 = vld [vmem:[%s387 + $0x124] sm:$0xf]
        %v613 = vld [vmem:[%s387 + $0x128] sm:$0xf]
        %v614 = vld [vmem:[%s387 + $0x12c] sm:$0xf]
        %v615 = vld [vmem:[%s387 + $0x130] sm:$0xf]
        %v616 = vld [vmem:[%s387 + $0x134] sm:$0xf]
        %v617 = vld [vmem:[%s387 + $0x138] sm:$0xf]
        %v618 = vld [vmem:[%s387 + $0x13c] sm:$0xf]
        %v619 = vld [vmem:[%s387 + $0x140] sm:$0xf]
        %v620 = vld [vmem:[%s387 + $0x144] sm:$0xf]
        %v621 = vld [vmem:[%s387 + $0x148] sm:$0xf]
        %v622 = vld [vmem:[%s387 + $0x14c] sm:$0xf]
        %v623 = vld [vmem:[%s387 + $0x150] sm:$0xf]
        %v624 = vld [vmem:[%s387 + $0x154] sm:$0xf]
        %v625 = vld [vmem:[%s387 + $0x158] sm:$0xf]
        %v626 = vld [vmem:[%s387 + $0x15c] sm:$0xf]
        %v627 = vld [vmem:[%s387 + $0x160] sm:$0xf]
        %v628 = vld [vmem:[%s387 + $0x164] sm:$0xf]
        %v629 = vld [vmem:[%s387 + $0x168] sm:$0xf]
        %v630 = vld [vmem:[%s387 + $0x16c] sm:$0xf]
        %v631 = vld [vmem:[%s387 + $0x170] sm:$0xf]
        %v632 = vld [vmem:[%s387 + $0x174] sm:$0xf]
        %v633 = vld [vmem:[%s387 + $0x178] sm:$0xf]
        %v634 = vld [vmem:[%s387 + $0x17c] sm:$0xf]
        %v635 = vld [vmem:[%s387 + $0x180] sm:$0xf]
        %v636 = vld [vmem:[%s387 + $0x184] sm:$0xf]
        %v637 = vld [vmem:[%s387 + $0x188] sm:$0xf]
        %v638 = vld [vmem:[%s387 + $0x18c] sm:$0xf]
        %v639 = vld [vmem:[%s387 + $0x190] sm:$0xf]
        %v640 = vld [vmem:[%s387 + $0x194] sm:$0xf]
        %v641 = vld [vmem:[%s387 + $0x198] sm:$0xf]
        %v642 = vld [vmem:[%s387 + $0x19c] sm:$0xf]
        %v643 = vld [vmem:[%s387 + $0x1a0] sm:$0xf]
        %v644 = vld [vmem:[%s387 + $0x1a4] sm:$0xf]
        %v645 = vld [vmem:[%s387 + $0x1a8] sm:$0xf]
        %v646 = vld [vmem:[%s387 + $0x1ac] sm:$0xf]
        %v647 = vld [vmem:[%s387 + $0x1b0] sm:$0xf]
        %v648 = vld [vmem:[%s387 + $0x1b4] sm:$0xf]
        %v649 = vld [vmem:[%s387 + $0x1b8] sm:$0xf]
        %v650 = vld [vmem:[%s387 + $0x1bc] sm:$0xf]
        %v651 = vld [vmem:[%s387 + $0x1c0] sm:$0xf]
        %v652 = vld [vmem:[%s387 + $0x1c4] sm:$0xf]
        %v653 = vld [vmem:[%s387 + $0x1c8] sm:$0xf]
        %v654 = vld [vmem:[%s387 + $0x1cc] sm:$0xf]
        %v655 = vld [vmem:[%s387 + $0x1d0] sm:$0xf]
        %v656 = vld [vmem:[%s387 + $0x1d4] sm:$0xf]
        %v657 = vld [vmem:[%s387 + $0x1d8] sm:$0xf]
        %v658 = vld [vmem:[%s387 + $0x1dc] sm:$0xf]
        %v659 = vld [vmem:[%s387 + $0x1e0] sm:$0xf]
        %v660 = vld [vmem:[%s387 + $0x1e4] sm:$0xf]
        %v661 = vld [vmem:[%s387 + $0x1e8] sm:$0xf]
        %v662 = vld [vmem:[%s387 + $0x1ec] sm:$0xf]
        %v663 = vld [vmem:[%s387 + $0x1f0] sm:$0xf]
        %v664 = vld [vmem:[%s387 + $0x1f4] sm:$0xf]
        %v665 = vld [vmem:[%s387 + $0x1f8] sm:$0xf]
        %v666 = vld [vmem:[%s387 + $0x1fc] sm:$0xf]
        %v667 = vld [vmem:[%s4] sm:$0xf]
        %v668 = vld [vmem:[%s4 + $0x4] sm:$0xf]
        %v797 = vunpack.c.l.b16 %v539
        %v798 = vunpack.c.l.b16 %v540
        %v799 = vunpack.c.l.b16 %v541
        %v800 = vunpack.c.l.b16 %v542
        %v801 = vunpack.c.l.b16 %v543
        %v802 = vunpack.c.l.b16 %v544
        %v803 = vunpack.c.l.b16 %v545
        %v804 = vunpack.c.l.b16 %v546
        %v805 = vunpack.c.l.b16 %v547
        %v806 = vunpack.c.l.b16 %v548
        %v807 = vunpack.c.l.b16 %v549
        %v808 = vunpack.c.l.b16 %v550
        %v809 = vunpack.c.l.b16 %v551
        %v810 = vunpack.c.l.b16 %v552
        %v811 = vunpack.c.l.b16 %v553
        %v812 = vunpack.c.l.b16 %v554
        %v813 = vunpack.c.l.b16 %v555
        %v814 = vunpack.c.l.b16 %v556
        %v815 = vunpack.c.l.b16 %v557
        %v816 = vunpack.c.l.b16 %v558
        %v817 = vunpack.c.l.b16 %v559
        %v818 = vunpack.c.l.b16 %v560
        %v819 = vunpack.c.l.b16 %v561
        %v820 = vunpack.c.l.b16 %v562
        %v821 = vunpack.c.l.b16 %v563
        %v822 = vunpack.c.l.b16 %v564
        %v823 = vunpack.c.l.b16 %v565
        %v824 = vunpack.c.l.b16 %v566
        %v825 = vunpack.c.l.b16 %v567
        %v826 = vunpack.c.l.b16 %v568
        %v827 = vunpack.c.l.b16 %v569
        %v828 = vunpack.c.l.b16 %v570
        %v829 = vunpack.c.l.b16 %v571
        %v830 = vunpack.c.l.b16 %v572
        %v831 = vunpack.c.l.b16 %v573
        %v832 = vunpack.c.l.b16 %v574
        %v833 = vunpack.c.l.b16 %v575
        %v834 = vunpack.c.l.b16 %v576
        %v835 = vunpack.c.l.b16 %v577
        %v836 = vunpack.c.l.b16 %v578
        %v837 = vunpack.c.l.b16 %v579
        %v838 = vunpack.c.l.b16 %v580
        %v839 = vunpack.c.l.b16 %v581
        %v840 = vunpack.c.l.b16 %v582
        %v841 = vunpack.c.l.b16 %v583
        %v842 = vunpack.c.l.b16 %v584
        %v843 = vunpack.c.l.b16 %v585
        %v844 = vunpack.c.l.b16 %v586
        %v845 = vunpack.c.l.b16 %v587
        %v846 = vunpack.c.l.b16 %v588
        %v847 = vunpack.c.l.b16 %v589
        %v848 = vunpack.c.l.b16 %v590
        %v849 = vunpack.c.l.b16 %v591
        %v850 = vunpack.c.l.b16 %v592
        %v851 = vunpack.c.l.b16 %v593
        %v852 = vunpack.c.l.b16 %v594
        %v853 = vunpack.c.l.b16 %v595
        %v854 = vunpack.c.l.b16 %v596
        %v855 = vunpack.c.l.b16 %v597
        %v856 = vunpack.c.l.b16 %v598
        %v857 = vunpack.c.l.b16 %v599
        %v858 = vunpack.c.l.b16 %v600
        %v859 = vunpack.c.l.b16 %v601
        %v860 = vunpack.c.l.b16 %v602
        %v861 = vunpack.c.l.b16 %v603
        %v862 = vunpack.c.l.b16 %v604
        %v863 = vunpack.c.l.b16 %v605
        %v864 = vunpack.c.l.b16 %v606
        %v865 = vunpack.c.l.b16 %v607
        %v866 = vunpack.c.l.b16 %v608
        %v867 = vunpack.c.l.b16 %v609
        %v868 = vunpack.c.l.b16 %v610
        %v869 = vunpack.c.l.b16 %v611
        %v870 = vunpack.c.l.b16 %v612
        %v871 = vunpack.c.l.b16 %v613
        %v872 = vunpack.c.l.b16 %v614
        %v873 = vunpack.c.l.b16 %v615
        %v874 = vunpack.c.l.b16 %v616
        %v875 = vunpack.c.l.b16 %v617
        %v876 = vunpack.c.l.b16 %v618
        %v877 = vunpack.c.l.b16 %v619
        %v878 = vunpack.c.l.b16 %v620
        %v879 = vunpack.c.l.b16 %v621
        %v880 = vunpack.c.l.b16 %v622
        %v881 = vunpack.c.l.b16 %v623
        %v882 = vunpack.c.l.b16 %v624
        %v883 = vunpack.c.l.b16 %v625
        %v884 = vunpack.c.l.b16 %v626
        %v885 = vunpack.c.l.b16 %v627
        %v886 = vunpack.c.l.b16 %v628
        %v887 = vunpack.c.l.b16 %v629
        %v888 = vunpack.c.l.b16 %v630
        %v889 = vunpack.c.l.b16 %v631
        %v890 = vunpack.c.l.b16 %v632
        %v891 = vunpack.c.l.b16 %v633
        %v892 = vunpack.c.l.b16 %v634
        %v893 = vunpack.c.l.b16 %v635
        %v894 = vunpack.c.l.b16 %v636
        %v895 = vunpack.c.l.b16 %v637
        %v896 = vunpack.c.l.b16 %v638
        %v897 = vunpack.c.l.b16 %v639
        %v898 = vunpack.c.l.b16 %v640
        %v899 = vunpack.c.l.b16 %v641
        %v900 = vunpack.c.l.b16 %v642
        %v901 = vunpack.c.l.b16 %v643
        %v902 = vunpack.c.l.b16 %v644
        %v903 = vunpack.c.l.b16 %v645
        %v904 = vunpack.c.l.b16 %v646
        %v905 = vunpack.c.l.b16 %v647
        %v906 = vunpack.c.l.b16 %v648
        %v907 = vunpack.c.l.b16 %v649
        %v908 = vunpack.c.l.b16 %v650
        %v909 = vunpack.c.l.b16 %v651
        %v910 = vunpack.c.l.b16 %v652
        %v911 = vunpack.c.l.b16 %v653
        %v912 = vunpack.c.l.b16 %v654
        %v913 = vunpack.c.l.b16 %v655
        %v914 = vunpack.c.l.b16 %v656
        %v915 = vunpack.c.l.b16 %v657
        %v916 = vunpack.c.l.b16 %v658
        %v917 = vunpack.c.l.b16 %v659
        %v918 = vunpack.c.l.b16 %v660
        %v919 = vunpack.c.l.b16 %v661
        %v920 = vunpack.c.l.b16 %v662
        %v921 = vunpack.c.l.b16 %v663
        %v922 = vunpack.c.l.b16 %v664
        %v923 = vunpack.c.l.b16 %v665
        %v924 = vunpack.c.l.b16 %v666
        %v925 = vpack.c.b16 %v798, %v797
        %v926 = vpack.c.b16 %v800, %v799
        %v927 = vpack.c.b16 %v802, %v801
        %v928 = vpack.c.b16 %v804, %v803
        %v929 = vpack.c.b16 %v806, %v805
        %v930 = vpack.c.b16 %v808, %v807
        %v931 = vpack.c.b16 %v810, %v809
        %v932 = vpack.c.b16 %v812, %v811
        %v933 = vpack.c.b16 %v814, %v813
        %v934 = vpack.c.b16 %v816, %v815
        %v935 = vpack.c.b16 %v818, %v817
        %v936 = vpack.c.b16 %v820, %v819
        %v937 = vpack.c.b16 %v822, %v821
        %v938 = vpack.c.b16 %v824, %v823
        %v939 = vpack.c.b16 %v826, %v825
        %v940 = vpack.c.b16 %v828, %v827
        %v941 = vpack.c.b16 %v830, %v829
        %v942 = vpack.c.b16 %v832, %v831
        %v943 = vpack.c.b16 %v834, %v833
        %v944 = vpack.c.b16 %v836, %v835
        %v945 = vpack.c.b16 %v838, %v837
        %v946 = vpack.c.b16 %v840, %v839
        %v947 = vpack.c.b16 %v842, %v841
        %v948 = vpack.c.b16 %v844, %v843
        %v949 = vpack.c.b16 %v846, %v845
        %v950 = vpack.c.b16 %v848, %v847
        %v951 = vpack.c.b16 %v850, %v849
        %v952 = vpack.c.b16 %v852, %v851
        %v953 = vpack.c.b16 %v854, %v853
        %v954 = vpack.c.b16 %v856, %v855
        %v955 = vpack.c.b16 %v858, %v857
        %v956 = vpack.c.b16 %v860, %v859
        %v957 = vpack.c.b16 %v862, %v861
        %v958 = vpack.c.b16 %v864, %v863
        %v959 = vpack.c.b16 %v866, %v865
        %v960 = vpack.c.b16 %v868, %v867
        %v961 = vpack.c.b16 %v870, %v869
        %v962 = vpack.c.b16 %v872, %v871
        %v963 = vpack.c.b16 %v874, %v873
        %v964 = vpack.c.b16 %v876, %v875
        %v965 = vpack.c.b16 %v878, %v877
        %v966 = vpack.c.b16 %v880, %v879
        %v967 = vpack.c.b16 %v882, %v881
        %v968 = vpack.c.b16 %v884, %v883
        %v969 = vpack.c.b16 %v886, %v885
        %v970 = vpack.c.b16 %v888, %v887
        %v971 = vpack.c.b16 %v890, %v889
        %v972 = vpack.c.b16 %v892, %v891
        %v973 = vpack.c.b16 %v894, %v893
        %v974 = vpack.c.b16 %v896, %v895
        %v975 = vpack.c.b16 %v898, %v897
        %v976 = vpack.c.b16 %v900, %v899
        %v977 = vpack.c.b16 %v902, %v901
        %v978 = vpack.c.b16 %v904, %v903
        %v979 = vpack.c.b16 %v906, %v905
        %v980 = vpack.c.b16 %v908, %v907
        %v981 = vpack.c.b16 %v910, %v909
        %v982 = vpack.c.b16 %v912, %v911
        %v983 = vpack.c.b16 %v914, %v913
        %v984 = vpack.c.b16 %v916, %v915
        %v985 = vpack.c.b16 %v918, %v917
        %v986 = vpack.c.b16 %v920, %v919
        %v987 = vpack.c.b16 %v922, %v921
        %v988 = vpack.c.b16 %v924, %v923
        %v991 = vunpack.c.l.b16 %v667
        %v992 = vunpack.c.l.b16 %v668
        %v993 = vpack.c.b16 %v992, %v991
        %vm995 = vcmask 130048
        %v997 = vsel %vm995, %v925, 0
        %v1000 = vsel %vm995, %v926, 0
        %v1003 = vsel %vm995, %v927, 0
        %v1006 = vsel %vm995, %v928, 0
        %v1009 = vsel %vm995, %v929, 0
        %v1012 = vsel %vm995, %v930, 0
        %v1015 = vsel %vm995, %v931, 0
        %v1018 = vsel %vm995, %v932, 0
        %v1021 = vsel %vm995, %v933, 0
        %v1024 = vsel %vm995, %v934, 0
        %v1027 = vsel %vm995, %v935, 0
        %v1030 = vsel %vm995, %v936, 0
        %v1033 = vsel %vm995, %v937, 0
        %v1036 = vsel %vm995, %v938, 0
        %v1039 = vsel %vm995, %v939, 0
        %v1042 = vsel %vm995, %v940, 0
        %v1045 = vsel %vm995, %v941, 0
        %v1048 = vsel %vm995, %v942, 0
        %v1051 = vsel %vm995, %v943, 0
        %v1054 = vsel %vm995, %v944, 0
        %v1057 = vsel %vm995, %v945, 0
        %v1060 = vsel %vm995, %v946, 0
        %v1063 = vsel %vm995, %v947, 0
        %v1066 = vsel %vm995, %v948, 0
        %v1069 = vsel %vm995, %v949, 0
        %v1072 = vsel %vm995, %v950, 0
        %v1075 = vsel %vm995, %v951, 0
        %v1078 = vsel %vm995, %v952, 0
        %v1081 = vsel %vm995, %v953, 0
        %v1084 = vsel %vm995, %v954, 0
        %v1087 = vsel %vm995, %v955, 0
        %v1090 = vsel %vm995, %v956, 0
        %v1093 = vsel %vm995, %v957, 0
        %v1096 = vsel %vm995, %v958, 0
        %v1099 = vsel %vm995, %v959, 0
        %v1102 = vsel %vm995, %v960, 0
        %v1105 = vsel %vm995, %v961, 0
        %v1108 = vsel %vm995, %v962, 0
        %v1111 = vsel %vm995, %v963, 0
        %v1114 = vsel %vm995, %v964, 0
        %v1117 = vsel %vm995, %v965, 0
        %v1120 = vsel %vm995, %v966, 0
        %v1123 = vsel %vm995, %v967, 0
        %v1126 = vsel %vm995, %v968, 0
        %v1129 = vsel %vm995, %v969, 0
        %v1132 = vsel %vm995, %v970, 0
        %v1135 = vsel %vm995, %v971, 0
        %v1138 = vsel %vm995, %v972, 0
        %v1141 = vsel %vm995, %v973, 0
        %v1144 = vsel %vm995, %v974, 0
        %v1147 = vsel %vm995, %v975, 0
        %v1150 = vsel %vm995, %v976, 0
        %v1153 = vsel %vm995, %v977, 0
        %v1156 = vsel %vm995, %v978, 0
        %v1159 = vsel %vm995, %v979, 0
        %v1162 = vsel %vm995, %v980, 0
        %v1165 = vsel %vm995, %v981, 0
        %v1168 = vsel %vm995, %v982, 0
        %v1171 = vsel %vm995, %v983, 0
        %v1174 = vsel %vm995, %v984, 0
        %v1177 = vsel %vm995, %v985, 0
        %v1180 = vsel %vm995, %v986, 0
        %v1183 = vsel %vm995, %v987, 0
        %v1186 = vsel %vm995, %v988, 0
        %1188 = vmatpush.bf16.msra.mxu0 0
        %1189 = vmatpush.bf16.msra.mxu0 0
        %1190 = vmatpush.bf16.msra.mxu0 0
        %1191 = vmatpush.bf16.msra.mxu0 0
        %1192 = vmatpush.bf16.msra.mxu0 0
        %1193 = vmatpush.bf16.msra.mxu0 0
        %1194 = vmatpush.bf16.msra.mxu0 0
        %1195 = vmatpush.bf16.msra.mxu0 %v993
        %1196 = vmatmul.bf16.gmra.mxu0 %v997
        %v1197 = vpop.f32.mrf.mxu0
        %v1198 = vadd.f32 0.0, %v1197
        %v1199 = vpop.f32.mrf.mxu0
        %v1200 = vadd.f32 0.0, %v1199
        %1201 = vmatmul.bf16.gmra.mxu0 %v1000
        %v1202 = vpop.f32.mrf.mxu0
        %v1203 = vadd.f32 0.0, %v1202
        %v1204 = vpop.f32.mrf.mxu0
        %v1205 = vadd.f32 0.0, %v1204
        %1206 = vmatmul.bf16.gmra.mxu0 %v1003
        %v1207 = vpop.f32.mrf.mxu0
        %v1208 = vadd.f32 0.0, %v1207
        %v1209 = vpop.f32.mrf.mxu0
        %v1210 = vadd.f32 0.0, %v1209
        %1211 = vmatmul.bf16.gmra.mxu0 %v1006
        %v1212 = vpop.f32.mrf.mxu0
        %v1213 = vadd.f32 0.0, %v1212
        %v1214 = vpop.f32.mrf.mxu0
        %v1215 = vadd.f32 0.0, %v1214
        %1216 = vmatmul.bf16.gmra.mxu0 %v1009
        %v1217 = vpop.f32.mrf.mxu0
        %v1218 = vadd.f32 0.0, %v1217
        %v1219 = vpop.f32.mrf.mxu0
        %v1220 = vadd.f32 0.0, %v1219
        %1221 = vmatmul.bf16.gmra.mxu0 %v1012
        %v1222 = vpop.f32.mrf.mxu0
        %v1223 = vadd.f32 0.0, %v1222
        %v1224 = vpop.f32.mrf.mxu0
        %v1225 = vadd.f32 0.0, %v1224
        %1226 = vmatmul.bf16.gmra.mxu0 %v1015
        %v1227 = vpop.f32.mrf.mxu0
        %v1228 = vadd.f32 0.0, %v1227
        %v1229 = vpop.f32.mrf.mxu0
        %v1230 = vadd.f32 0.0, %v1229
        %1231 = vmatmul.bf16.gmra.mxu0 %v1018
        %v1232 = vpop.f32.mrf.mxu0
        %v1233 = vadd.f32 0.0, %v1232
        %v1234 = vpop.f32.mrf.mxu0
        %v1235 = vadd.f32 0.0, %v1234
        %1236 = vmatmul.bf16.gmra.mxu0 %v1021
        %v1237 = vpop.f32.mrf.mxu0
        %v1238 = vadd.f32 0.0, %v1237
        %v1239 = vpop.f32.mrf.mxu0
        %v1240 = vadd.f32 0.0, %v1239
        %1241 = vmatmul.bf16.gmra.mxu0 %v1024
        %v1242 = vpop.f32.mrf.mxu0
        %v1243 = vadd.f32 0.0, %v1242
        %v1244 = vpop.f32.mrf.mxu0
        %v1245 = vadd.f32 0.0, %v1244
        %1246 = vmatmul.bf16.gmra.mxu0 %v1027
        %v1247 = vpop.f32.mrf.mxu0
        %v1248 = vadd.f32 0.0, %v1247
        %v1249 = vpop.f32.mrf.mxu0
        %v1250 = vadd.f32 0.0, %v1249
        %1251 = vmatmul.bf16.gmra.mxu0 %v1030
        %v1252 = vpop.f32.mrf.mxu0
        %v1253 = vadd.f32 0.0, %v1252
        %v1254 = vpop.f32.mrf.mxu0
        %v1255 = vadd.f32 0.0, %v1254
        %1256 = vmatmul.bf16.gmra.mxu0 %v1033
        %v1257 = vpop.f32.mrf.mxu0
        %v1258 = vadd.f32 0.0, %v1257
        %v1259 = vpop.f32.mrf.mxu0
        %v1260 = vadd.f32 0.0, %v1259
        %1261 = vmatmul.bf16.gmra.mxu0 %v1036
        %v1262 = vpop.f32.mrf.mxu0
        %v1263 = vadd.f32 0.0, %v1262
        %v1264 = vpop.f32.mrf.mxu0
        %v1265 = vadd.f32 0.0, %v1264
        %1266 = vmatmul.bf16.gmra.mxu0 %v1039
        %v1267 = vpop.f32.mrf.mxu0
        %v1268 = vadd.f32 0.0, %v1267
        %v1269 = vpop.f32.mrf.mxu0
        %v1270 = vadd.f32 0.0, %v1269
        %1271 = vmatmul.bf16.gmra.mxu0 %v1042
        %v1272 = vpop.f32.mrf.mxu0
        %v1273 = vadd.f32 0.0, %v1272
        %v1274 = vpop.f32.mrf.mxu0
        %v1275 = vadd.f32 0.0, %v1274
        %1276 = vmatmul.bf16.gmra.mxu0 %v1045
        %v1277 = vpop.f32.mrf.mxu0
        %v1278 = vadd.f32 0.0, %v1277
        %v1279 = vpop.f32.mrf.mxu0
        %v1280 = vadd.f32 0.0, %v1279
        %1281 = vmatmul.bf16.gmra.mxu0 %v1048
        %v1282 = vpop.f32.mrf.mxu0
        %v1283 = vadd.f32 0.0, %v1282
        %v1284 = vpop.f32.mrf.mxu0
        %v1285 = vadd.f32 0.0, %v1284
        %1286 = vmatmul.bf16.gmra.mxu0 %v1051
        %v1287 = vpop.f32.mrf.mxu0
        %v1288 = vadd.f32 0.0, %v1287
        %v1289 = vpop.f32.mrf.mxu0
        %v1290 = vadd.f32 0.0, %v1289
        %1291 = vmatmul.bf16.gmra.mxu0 %v1054
        %v1292 = vpop.f32.mrf.mxu0
        %v1293 = vadd.f32 0.0, %v1292
        %v1294 = vpop.f32.mrf.mxu0
        %v1295 = vadd.f32 0.0, %v1294
        %1296 = vmatmul.bf16.gmra.mxu0 %v1057
        %v1297 = vpop.f32.mrf.mxu0
        %v1298 = vadd.f32 0.0, %v1297
        %v1299 = vpop.f32.mrf.mxu0
        %v1300 = vadd.f32 0.0, %v1299
        %1301 = vmatmul.bf16.gmra.mxu0 %v1060
        %v1302 = vpop.f32.mrf.mxu0
        %v1303 = vadd.f32 0.0, %v1302
        %v1304 = vpop.f32.mrf.mxu0
        %v1305 = vadd.f32 0.0, %v1304
        %1306 = vmatmul.bf16.gmra.mxu0 %v1063
        %v1307 = vpop.f32.mrf.mxu0
        %v1308 = vadd.f32 0.0, %v1307
        %v1309 = vpop.f32.mrf.mxu0
        %v1310 = vadd.f32 0.0, %v1309
        %1311 = vmatmul.bf16.gmra.mxu0 %v1066
        %v1312 = vpop.f32.mrf.mxu0
        %v1313 = vadd.f32 0.0, %v1312
        %v1314 = vpop.f32.mrf.mxu0
        %v1315 = vadd.f32 0.0, %v1314
        %1316 = vmatmul.bf16.gmra.mxu0 %v1069
        %v1317 = vpop.f32.mrf.mxu0
        %v1318 = vadd.f32 0.0, %v1317
        %v1319 = vpop.f32.mrf.mxu0
        %v1320 = vadd.f32 0.0, %v1319
        %1321 = vmatmul.bf16.gmra.mxu0 %v1072
        %v1322 = vpop.f32.mrf.mxu0
        %v1323 = vadd.f32 0.0, %v1322
        %v1324 = vpop.f32.mrf.mxu0
        %v1325 = vadd.f32 0.0, %v1324
        %1326 = vmatmul.bf16.gmra.mxu0 %v1075
        %v1327 = vpop.f32.mrf.mxu0
        %v1328 = vadd.f32 0.0, %v1327
        %v1329 = vpop.f32.mrf.mxu0
        %v1330 = vadd.f32 0.0, %v1329
        %1331 = vmatmul.bf16.gmra.mxu0 %v1078
        %v1332 = vpop.f32.mrf.mxu0
        %v1333 = vadd.f32 0.0, %v1332
        %v1334 = vpop.f32.mrf.mxu0
        %v1335 = vadd.f32 0.0, %v1334
        %1336 = vmatmul.bf16.gmra.mxu0 %v1081
        %v1337 = vpop.f32.mrf.mxu0
        %v1338 = vadd.f32 0.0, %v1337
        %v1339 = vpop.f32.mrf.mxu0
        %v1340 = vadd.f32 0.0, %v1339
        %1341 = vmatmul.bf16.gmra.mxu0 %v1084
        %v1342 = vpop.f32.mrf.mxu0
        %v1343 = vadd.f32 0.0, %v1342
        %v1344 = vpop.f32.mrf.mxu0
        %v1345 = vadd.f32 0.0, %v1344
        %1346 = vmatmul.bf16.gmra.mxu0 %v1087
        %v1347 = vpop.f32.mrf.mxu0
        %v1348 = vadd.f32 0.0, %v1347
        %v1349 = vpop.f32.mrf.mxu0
        %v1350 = vadd.f32 0.0, %v1349
        %1351 = vmatmul.bf16.gmra.mxu0 %v1090
        %v1352 = vpop.f32.mrf.mxu0
        %v1353 = vadd.f32 0.0, %v1352
        %v1354 = vpop.f32.mrf.mxu0
        %v1355 = vadd.f32 0.0, %v1354
        %1356 = vmatmul.bf16.gmra.mxu0 %v1093
        %v1357 = vpop.f32.mrf.mxu0
        %v1358 = vadd.f32 0.0, %v1357
        %v1359 = vpop.f32.mrf.mxu0
        %v1360 = vadd.f32 0.0, %v1359
        %1361 = vmatmul.bf16.gmra.mxu0 %v1096
        %v1362 = vpop.f32.mrf.mxu0
        %v1363 = vadd.f32 0.0, %v1362
        %v1364 = vpop.f32.mrf.mxu0
        %v1365 = vadd.f32 0.0, %v1364
        %1366 = vmatmul.bf16.gmra.mxu0 %v1099
        %v1367 = vpop.f32.mrf.mxu0
        %v1368 = vadd.f32 0.0, %v1367
        %v1369 = vpop.f32.mrf.mxu0
        %v1370 = vadd.f32 0.0, %v1369
        %1371 = vmatmul.bf16.gmra.mxu0 %v1102
        %v1372 = vpop.f32.mrf.mxu0
        %v1373 = vadd.f32 0.0, %v1372
        %v1374 = vpop.f32.mrf.mxu0
        %v1375 = vadd.f32 0.0, %v1374
        %1376 = vmatmul.bf16.gmra.mxu0 %v1105
        %v1377 = vpop.f32.mrf.mxu0
        %v1378 = vadd.f32 0.0, %v1377
        %v1379 = vpop.f32.mrf.mxu0
        %v1380 = vadd.f32 0.0, %v1379
        %1381 = vmatmul.bf16.gmra.mxu0 %v1108
        %v1382 = vpop.f32.mrf.mxu0
        %v1383 = vadd.f32 0.0, %v1382
        %v1384 = vpop.f32.mrf.mxu0
        %v1385 = vadd.f32 0.0, %v1384
        %1386 = vmatmul.bf16.gmra.mxu0 %v1111
        %v1387 = vpop.f32.mrf.mxu0
        %v1388 = vadd.f32 0.0, %v1387
        %v1389 = vpop.f32.mrf.mxu0
        %v1390 = vadd.f32 0.0, %v1389
        %1391 = vmatmul.bf16.gmra.mxu0 %v1114
        %v1392 = vpop.f32.mrf.mxu0
        %v1393 = vadd.f32 0.0, %v1392
        %v1394 = vpop.f32.mrf.mxu0
        %v1395 = vadd.f32 0.0, %v1394
        %1396 = vmatmul.bf16.gmra.mxu0 %v1117
        %v1397 = vpop.f32.mrf.mxu0
        %v1398 = vadd.f32 0.0, %v1397
        %v1399 = vpop.f32.mrf.mxu0
        %v1400 = vadd.f32 0.0, %v1399
        %1401 = vmatmul.bf16.gmra.mxu0 %v1120
        %v1402 = vpop.f32.mrf.mxu0
        %v1403 = vadd.f32 0.0, %v1402
        %v1404 = vpop.f32.mrf.mxu0
        %v1405 = vadd.f32 0.0, %v1404
        %1406 = vmatmul.bf16.gmra.mxu0 %v1123
        %v1407 = vpop.f32.mrf.mxu0
        %v1408 = vadd.f32 0.0, %v1407
        %v1409 = vpop.f32.mrf.mxu0
        %v1410 = vadd.f32 0.0, %v1409
        %1411 = vmatmul.bf16.gmra.mxu0 %v1126
        %v1412 = vpop.f32.mrf.mxu0
        %v1413 = vadd.f32 0.0, %v1412
        %v1414 = vpop.f32.mrf.mxu0
        %v1415 = vadd.f32 0.0, %v1414
        %1416 = vmatmul.bf16.gmra.mxu0 %v1129
        %v1417 = vpop.f32.mrf.mxu0
        %v1418 = vadd.f32 0.0, %v1417
        %v1419 = vpop.f32.mrf.mxu0
        %v1420 = vadd.f32 0.0, %v1419
        %1421 = vmatmul.bf16.gmra.mxu0 %v1132
        %v1422 = vpop.f32.mrf.mxu0
        %v1423 = vadd.f32 0.0, %v1422
        %v1424 = vpop.f32.mrf.mxu0
        %v1425 = vadd.f32 0.0, %v1424
        %1426 = vmatmul.bf16.gmra.mxu0 %v1135
        %v1427 = vpop.f32.mrf.mxu0
        %v1428 = vadd.f32 0.0, %v1427
        %v1429 = vpop.f32.mrf.mxu0
        %v1430 = vadd.f32 0.0, %v1429
        %1431 = vmatmul.bf16.gmra.mxu0 %v1138
        %v1432 = vpop.f32.mrf.mxu0
        %v1433 = vadd.f32 0.0, %v1432
        %v1434 = vpop.f32.mrf.mxu0
        %v1435 = vadd.f32 0.0, %v1434
        %1436 = vmatmul.bf16.gmra.mxu0 %v1141
        %v1437 = vpop.f32.mrf.mxu0
        %v1438 = vadd.f32 0.0, %v1437
        %v1439 = vpop.f32.mrf.mxu0
        %v1440 = vadd.f32 0.0, %v1439
        %1441 = vmatmul.bf16.gmra.mxu0 %v1144
        %v1442 = vpop.f32.mrf.mxu0
        %v1443 = vadd.f32 0.0, %v1442
        %v1444 = vpop.f32.mrf.mxu0
        %v1445 = vadd.f32 0.0, %v1444
        %1446 = vmatmul.bf16.gmra.mxu0 %v1147
        %v1447 = vpop.f32.mrf.mxu0
        %v1448 = vadd.f32 0.0, %v1447
        %v1449 = vpop.f32.mrf.mxu0
        %v1450 = vadd.f32 0.0, %v1449
        %1451 = vmatmul.bf16.gmra.mxu0 %v1150
        %v1452 = vpop.f32.mrf.mxu0
        %v1453 = vadd.f32 0.0, %v1452
        %v1454 = vpop.f32.mrf.mxu0
        %v1455 = vadd.f32 0.0, %v1454
        %1456 = vmatmul.bf16.gmra.mxu0 %v1153
        %v1457 = vpop.f32.mrf.mxu0
        %v1458 = vadd.f32 0.0, %v1457
        %v1459 = vpop.f32.mrf.mxu0
        %v1460 = vadd.f32 0.0, %v1459
        %1461 = vmatmul.bf16.gmra.mxu0 %v1156
        %v1462 = vpop.f32.mrf.mxu0
        %v1463 = vadd.f32 0.0, %v1462
        %v1464 = vpop.f32.mrf.mxu0
        %v1465 = vadd.f32 0.0, %v1464
        %1466 = vmatmul.bf16.gmra.mxu0 %v1159
        %v1467 = vpop.f32.mrf.mxu0
        %v1468 = vadd.f32 0.0, %v1467
        %v1469 = vpop.f32.mrf.mxu0
        %v1470 = vadd.f32 0.0, %v1469
        %1471 = vmatmul.bf16.gmra.mxu0 %v1162
        %v1472 = vpop.f32.mrf.mxu0
        %v1473 = vadd.f32 0.0, %v1472
        %v1474 = vpop.f32.mrf.mxu0
        %v1475 = vadd.f32 0.0, %v1474
        %1476 = vmatmul.bf16.gmra.mxu0 %v1165
        %v1477 = vpop.f32.mrf.mxu0
        %v1478 = vadd.f32 0.0, %v1477
        %v1479 = vpop.f32.mrf.mxu0
        %v1480 = vadd.f32 0.0, %v1479
        %1481 = vmatmul.bf16.gmra.mxu0 %v1168
        %v1482 = vpop.f32.mrf.mxu0
        %v1483 = vadd.f32 0.0, %v1482
        %v1484 = vpop.f32.mrf.mxu0
        %v1485 = vadd.f32 0.0, %v1484
        %1486 = vmatmul.bf16.gmra.mxu0 %v1171
        %v1487 = vpop.f32.mrf.mxu0
        %v1488 = vadd.f32 0.0, %v1487
        %v1489 = vpop.f32.mrf.mxu0
        %v1490 = vadd.f32 0.0, %v1489
        %1491 = vmatmul.bf16.gmra.mxu0 %v1174
        %v1492 = vpop.f32.mrf.mxu0
        %v1493 = vadd.f32 0.0, %v1492
        %v1494 = vpop.f32.mrf.mxu0
        %v1495 = vadd.f32 0.0, %v1494
        %1496 = vmatmul.bf16.gmra.mxu0 %v1177
        %v1497 = vpop.f32.mrf.mxu0
        %v1498 = vadd.f32 0.0, %v1497
        %v1499 = vpop.f32.mrf.mxu0
        %v1500 = vadd.f32 0.0, %v1499
        %1501 = vmatmul.bf16.gmra.mxu0 %v1180
        %v1502 = vpop.f32.mrf.mxu0
        %v1503 = vadd.f32 0.0, %v1502
        %v1504 = vpop.f32.mrf.mxu0
        %v1505 = vadd.f32 0.0, %v1504
        %1506 = vmatmul.bf16.gmra.mxu0 %v1183
        %v1507 = vpop.f32.mrf.mxu0
        %v1508 = vadd.f32 0.0, %v1507
        %v1509 = vpop.f32.mrf.mxu0
        %v1510 = vadd.f32 0.0, %v1509
        %1511 = vmatmul.bf16.gmra.mxu0 %v1186
        %v1512 = vpop.f32.mrf.mxu0
        %v1513 = vadd.f32 0.0, %v1512
        %v1514 = vpop.f32.mrf.mxu0
        %v1515 = vadd.f32 0.0, %v1514
        %1516 = vdwg.mxu0
        %v1525 = vrot.slane %v531, 1
        %v1526 = vrot.slane %v531, 2
        %v1527 = vrot.slane %v531, 3
        %v1528 = vrot.slane %v531, 4
        %v1529 = vrot.slane %v531, 5
        %v1530 = vrot.slane %v531, 6
        %v1531 = vrot.slane %v531, 7
        %v1532 = vrot.slane %v532, 1
        %v1533 = vrot.slane %v532, 2
        %v1534 = vrot.slane %v532, 3
        %v1535 = vrot.slane %v532, 4
        %v1536 = vrot.slane %v532, 5
        %v1537 = vrot.slane %v532, 6
        %v1538 = vrot.slane %v532, 7
        %v1539 = vrot.slane %v533, 1
        %v1540 = vrot.slane %v533, 2
        %v1541 = vrot.slane %v533, 3
        %v1542 = vrot.slane %v533, 4
        %v1543 = vrot.slane %v533, 5
        %v1544 = vrot.slane %v533, 6
        %v1545 = vrot.slane %v533, 7
        %v1546 = vrot.slane %v534, 1
        %v1547 = vrot.slane %v534, 2
        %v1548 = vrot.slane %v534, 3
        %v1549 = vrot.slane %v534, 4
        %v1550 = vrot.slane %v534, 5
        %v1551 = vrot.slane %v534, 6
        %v1552 = vrot.slane %v534, 7
        %v1553 = vrot.slane %v535, 1
        %v1554 = vrot.slane %v535, 2
        %v1555 = vrot.slane %v535, 3
        %v1556 = vrot.slane %v535, 4
        %v1557 = vrot.slane %v535, 5
        %v1558 = vrot.slane %v535, 6
        %v1559 = vrot.slane %v535, 7
        %v1560 = vrot.slane %v536, 1
        %v1561 = vrot.slane %v536, 2
        %v1562 = vrot.slane %v536, 3
        %v1563 = vrot.slane %v536, 4
        %v1564 = vrot.slane %v536, 5
        %v1565 = vrot.slane %v536, 6
        %v1566 = vrot.slane %v536, 7
        %v1567 = vrot.slane %v537, 1
        %v1568 = vrot.slane %v537, 2
        %v1569 = vrot.slane %v537, 3
        %v1570 = vrot.slane %v537, 4
        %v1571 = vrot.slane %v537, 5
        %v1572 = vrot.slane %v537, 6
        %v1573 = vrot.slane %v537, 7
        %v1574 = vrot.slane %v538, 1
        %v1575 = vrot.slane %v538, 2
        %v1576 = vrot.slane %v538, 3
        %v1577 = vrot.slane %v538, 4
        %v1578 = vrot.slane %v538, 5
        %v1579 = vrot.slane %v538, 6
        %v1580 = vrot.slane %v538, 7
        %v1581 = vperm.slane %v531, 0
        %v1582 = vperm.slane %v1525, 0
        %v1583 = vperm.slane %v1526, 0
        %v1584 = vperm.slane %v1527, 0
        %v1585 = vperm.slane %v1528, 0
        %v1586 = vperm.slane %v1529, 0
        %v1587 = vperm.slane %v1530, 0
        %v1588 = vperm.slane %v1531, 0
        %v1589 = vperm.slane %v532, 0
        %v1590 = vperm.slane %v1532, 0
        %v1591 = vperm.slane %v1533, 0
        %v1592 = vperm.slane %v1534, 0
        %v1593 = vperm.slane %v1535, 0
        %v1594 = vperm.slane %v1536, 0
        %v1595 = vperm.slane %v1537, 0
        %v1596 = vperm.slane %v1538, 0
        %v1597 = vperm.slane %v533, 0
        %v1598 = vperm.slane %v1539, 0
        %v1599 = vperm.slane %v1540, 0
        %v1600 = vperm.slane %v1541, 0
        %v1601 = vperm.slane %v1542, 0
        %v1602 = vperm.slane %v1543, 0
        %v1603 = vperm.slane %v1544, 0
        %v1604 = vperm.slane %v1545, 0
        %v1605 = vperm.slane %v534, 0
        %v1606 = vperm.slane %v1546, 0
        %v1607 = vperm.slane %v1547, 0
        %v1608 = vperm.slane %v1548, 0
        %v1609 = vperm.slane %v1549, 0
        %v1610 = vperm.slane %v1550, 0
        %v1611 = vperm.slane %v1551, 0
        %v1612 = vperm.slane %v1552, 0
        %v1613 = vperm.slane %v535, 0
        %v1614 = vperm.slane %v1553, 0
        %v1615 = vperm.slane %v1554, 0
        %v1616 = vperm.slane %v1555, 0
        %v1617 = vperm.slane %v1556, 0
        %v1618 = vperm.slane %v1557, 0
        %v1619 = vperm.slane %v1558, 0
        %v1620 = vperm.slane %v1559, 0
        %v1621 = vperm.slane %v536, 0
        %v1622 = vperm.slane %v1560, 0
        %v1623 = vperm.slane %v1561, 0
        %v1624 = vperm.slane %v1562, 0
        %v1625 = vperm.slane %v1563, 0
        %v1626 = vperm.slane %v1564, 0
        %v1627 = vperm.slane %v1565, 0
        %v1628 = vperm.slane %v1566, 0
        %v1629 = vperm.slane %v537, 0
        %v1630 = vperm.slane %v1567, 0
        %v1631 = vperm.slane %v1568, 0
        %v1632 = vperm.slane %v1569, 0
        %v1633 = vperm.slane %v1570, 0
        %v1634 = vperm.slane %v1571, 0
        %v1635 = vperm.slane %v1572, 0
        %v1636 = vperm.slane %v1573, 0
        %v1637 = vperm.slane %v538, 0
        %v1638 = vperm.slane %v1574, 0
        %v1639 = vperm.slane %v1575, 0
        %v1640 = vperm.slane %v1576, 0
        %v1641 = vperm.slane %v1577, 0
        %v1642 = vperm.slane %v1578, 0
        %v1643 = vperm.slane %v1579, 0
        %v1644 = vperm.slane %v1580, 0
        %v1709 = vadd.f32 %v1198, %v1581
        %v1710 = vadd.f32 %v1200, %v1581
        %v1711 = vadd.f32 %v1203, %v1582
        %v1712 = vadd.f32 %v1205, %v1582
        %v1713 = vadd.f32 %v1208, %v1583
        %v1714 = vadd.f32 %v1210, %v1583
        %v1715 = vadd.f32 %v1213, %v1584
        %v1716 = vadd.f32 %v1215, %v1584
        %v1717 = vadd.f32 %v1218, %v1585
        %v1718 = vadd.f32 %v1220, %v1585
        %v1719 = vadd.f32 %v1223, %v1586
        %v1720 = vadd.f32 %v1225, %v1586
        %v1721 = vadd.f32 %v1228, %v1587
        %v1722 = vadd.f32 %v1230, %v1587
        %v1723 = vadd.f32 %v1233, %v1588
        %v1724 = vadd.f32 %v1235, %v1588
        %v1725 = vadd.f32 %v1238, %v1589
        %v1726 = vadd.f32 %v1240, %v1589
        %v1727 = vadd.f32 %v1243, %v1590
        %v1728 = vadd.f32 %v1245, %v1590
        %v1729 = vadd.f32 %v1248, %v1591
        %v1730 = vadd.f32 %v1250, %v1591
        %v1731 = vadd.f32 %v1253, %v1592
        %v1732 = vadd.f32 %v1255, %v1592
        %v1733 = vadd.f32 %v1258, %v1593
        %v1734 = vadd.f32 %v1260, %v1593
        %v1735 = vadd.f32 %v1263, %v1594
        %v1736 = vadd.f32 %v1265, %v1594
        %v1737 = vadd.f32 %v1268, %v1595
        %v1738 = vadd.f32 %v1270, %v1595
        %v1739 = vadd.f32 %v1273, %v1596
        %v1740 = vadd.f32 %v1275, %v1596
        %v1741 = vadd.f32 %v1278, %v1597
        %v1742 = vadd.f32 %v1280, %v1597
        %v1743 = vadd.f32 %v1283, %v1598
        %v1744 = vadd.f32 %v1285, %v1598
        %v1745 = vadd.f32 %v1288, %v1599
        %v1746 = vadd.f32 %v1290, %v1599
        %v1747 = vadd.f32 %v1293, %v1600
        %v1748 = vadd.f32 %v1295, %v1600
        %v1749 = vadd.f32 %v1298, %v1601
        %v1750 = vadd.f32 %v1300, %v1601
        %v1751 = vadd.f32 %v1303, %v1602
        %v1752 = vadd.f32 %v1305, %v1602
        %v1753 = vadd.f32 %v1308, %v1603
        %v1754 = vadd.f32 %v1310, %v1603
        %v1755 = vadd.f32 %v1313, %v1604
        %v1756 = vadd.f32 %v1315, %v1604
        %v1757 = vadd.f32 %v1318, %v1605
        %v1758 = vadd.f32 %v1320, %v1605
        %v1759 = vadd.f32 %v1323, %v1606
        %v1760 = vadd.f32 %v1325, %v1606
        %v1761 = vadd.f32 %v1328, %v1607
        %v1762 = vadd.f32 %v1330, %v1607
        %v1763 = vadd.f32 %v1333, %v1608
        %v1764 = vadd.f32 %v1335, %v1608
        %v1765 = vadd.f32 %v1338, %v1609
        %v1766 = vadd.f32 %v1340, %v1609
        %v1767 = vadd.f32 %v1343, %v1610
        %v1768 = vadd.f32 %v1345, %v1610
        %v1769 = vadd.f32 %v1348, %v1611
        %v1770 = vadd.f32 %v1350, %v1611
        %v1771 = vadd.f32 %v1353, %v1612
        %v1772 = vadd.f32 %v1355, %v1612
        %v1773 = vadd.f32 %v1358, %v1613
        %v1774 = vadd.f32 %v1360, %v1613
        %v1775 = vadd.f32 %v1363, %v1614
        %v1776 = vadd.f32 %v1365, %v1614
        %v1777 = vadd.f32 %v1368, %v1615
        %v1778 = vadd.f32 %v1370, %v1615
        %v1779 = vadd.f32 %v1373, %v1616
        %v1780 = vadd.f32 %v1375, %v1616
        %v1781 = vadd.f32 %v1378, %v1617
        %v1782 = vadd.f32 %v1380, %v1617
        %v1783 = vadd.f32 %v1383, %v1618
        %v1784 = vadd.f32 %v1385, %v1618
        %v1785 = vadd.f32 %v1388, %v1619
        %v1786 = vadd.f32 %v1390, %v1619
        %v1787 = vadd.f32 %v1393, %v1620
        %v1788 = vadd.f32 %v1395, %v1620
        %v1789 = vadd.f32 %v1398, %v1621
        %v1790 = vadd.f32 %v1400, %v1621
        %v1791 = vadd.f32 %v1403, %v1622
        %v1792 = vadd.f32 %v1405, %v1622
        %v1793 = vadd.f32 %v1408, %v1623
        %v1794 = vadd.f32 %v1410, %v1623
        %v1795 = vadd.f32 %v1413, %v1624
        %v1796 = vadd.f32 %v1415, %v1624
        %v1797 = vadd.f32 %v1418, %v1625
        %v1798 = vadd.f32 %v1420, %v1625
        %v1799 = vadd.f32 %v1423, %v1626
        %v1800 = vadd.f32 %v1425, %v1626
        %v1801 = vadd.f32 %v1428, %v1627
        %v1802 = vadd.f32 %v1430, %v1627
        %v1803 = vadd.f32 %v1433, %v1628
        %v1804 = vadd.f32 %v1435, %v1628
        %v1805 = vadd.f32 %v1438, %v1629
        %v1806 = vadd.f32 %v1440, %v1629
        %v1807 = vadd.f32 %v1443, %v1630
        %v1808 = vadd.f32 %v1445, %v1630
        %v1809 = vadd.f32 %v1448, %v1631
        %v1810 = vadd.f32 %v1450, %v1631
        %v1811 = vadd.f32 %v1453, %v1632
        %v1812 = vadd.f32 %v1455, %v1632
        %v1813 = vadd.f32 %v1458, %v1633
        %v1814 = vadd.f32 %v1460, %v1633
        %v1815 = vadd.f32 %v1463, %v1634
        %v1816 = vadd.f32 %v1465, %v1634
        %v1817 = vadd.f32 %v1468, %v1635
        %v1818 = vadd.f32 %v1470, %v1635
        %v1819 = vadd.f32 %v1473, %v1636
        %v1820 = vadd.f32 %v1475, %v1636
        %v1821 = vadd.f32 %v1478, %v1637
        %v1822 = vadd.f32 %v1480, %v1637
        %v1823 = vadd.f32 %v1483, %v1638
        %v1824 = vadd.f32 %v1485, %v1638
        %v1825 = vadd.f32 %v1488, %v1639
        %v1826 = vadd.f32 %v1490, %v1639
        %v1827 = vadd.f32 %v1493, %v1640
        %v1828 = vadd.f32 %v1495, %v1640
        %v1829 = vadd.f32 %v1498, %v1641
        %v1830 = vadd.f32 %v1500, %v1641
        %v1831 = vadd.f32 %v1503, %v1642
        %v1832 = vadd.f32 %v1505, %v1642
        %v1833 = vadd.f32 %v1508, %v1643
        %v1834 = vadd.f32 %v1510, %v1643
        %v1835 = vadd.f32 %v1513, %v1644
        %v1836 = vadd.f32 %v1515, %v1644
        %1845 = vrot.lane.b32.xlu0 %v508, 64
        %v1846 = vpop.permute.xlu0 %1845
        %1847 = vrot.lane.b32.xlu0 %v510, 64
        %v1848 = vpop.permute.xlu0 %1847
        %1849 = vrot.lane.b32.xlu0 %v513, 64
        %v1850 = vpop.permute.xlu0 %1849
        %1851 = vrot.lane.b32.xlu0 %v515, 64
        %v1852 = vpop.permute.xlu0 %1851
        %1853 = vrot.lane.b32.xlu0 %v518, 64
        %v1854 = vpop.permute.xlu0 %1853
        %1855 = vrot.lane.b32.xlu0 %v520, 64
        %v1856 = vpop.permute.xlu0 %1855
        %1857 = vrot.lane.b32.xlu0 %v523, 64
        %v1858 = vpop.permute.xlu0 %1857
        %1859 = vrot.lane.b32.xlu0 %v525, 64
        %v1860 = vpop.permute.xlu0 %1859
        %v1869 = vadd.f32 %v1709, %v1846
        %v1870 = vadd.f32 %v1710, %v1848
        %v1871 = vadd.f32 %v1711, %v1846
        %v1872 = vadd.f32 %v1712, %v1848
        %v1873 = vadd.f32 %v1713, %v1846
        %v1874 = vadd.f32 %v1714, %v1848
        %v1875 = vadd.f32 %v1715, %v1846
        %v1876 = vadd.f32 %v1716, %v1848
        %v1877 = vadd.f32 %v1717, %v1846
        %v1878 = vadd.f32 %v1718, %v1848
        %v1879 = vadd.f32 %v1719, %v1846
        %v1880 = vadd.f32 %v1720, %v1848
        %v1881 = vadd.f32 %v1721, %v1846
        %v1882 = vadd.f32 %v1722, %v1848
        %v1883 = vadd.f32 %v1723, %v1846
        %v1884 = vadd.f32 %v1724, %v1848
        %v1885 = vadd.f32 %v1725, %v1846
        %v1886 = vadd.f32 %v1726, %v1848
        %v1887 = vadd.f32 %v1727, %v1846
        %v1888 = vadd.f32 %v1728, %v1848
        %v1889 = vadd.f32 %v1729, %v1846
        %v1890 = vadd.f32 %v1730, %v1848
        %v1891 = vadd.f32 %v1731, %v1846
        %v1892 = vadd.f32 %v1732, %v1848
        %v1893 = vadd.f32 %v1733, %v1846
        %v1894 = vadd.f32 %v1734, %v1848
        %v1895 = vadd.f32 %v1735, %v1846
        %v1896 = vadd.f32 %v1736, %v1848
        %v1897 = vadd.f32 %v1737, %v1846
        %v1898 = vadd.f32 %v1738, %v1848
        %v1899 = vadd.f32 %v1739, %v1846
        %v1900 = vadd.f32 %v1740, %v1848
        %v1901 = vadd.f32 %v1741, %v1850
        %v1902 = vadd.f32 %v1742, %v1852
        %v1903 = vadd.f32 %v1743, %v1850
        %v1904 = vadd.f32 %v1744, %v1852
        %v1905 = vadd.f32 %v1745, %v1850
        %v1906 = vadd.f32 %v1746, %v1852
        %v1907 = vadd.f32 %v1747, %v1850
        %v1908 = vadd.f32 %v1748, %v1852
        %v1909 = vadd.f32 %v1749, %v1850
        %v1910 = vadd.f32 %v1750, %v1852
        %v1911 = vadd.f32 %v1751, %v1850
        %v1912 = vadd.f32 %v1752, %v1852
        %v1913 = vadd.f32 %v1753, %v1850
        %v1914 = vadd.f32 %v1754, %v1852
        %v1915 = vadd.f32 %v1755, %v1850
        %v1916 = vadd.f32 %v1756, %v1852
        %v1917 = vadd.f32 %v1757, %v1850
        %v1918 = vadd.f32 %v1758, %v1852
        %v1919 = vadd.f32 %v1759, %v1850
        %v1920 = vadd.f32 %v1760, %v1852
        %v1921 = vadd.f32 %v1761, %v1850
        %v1922 = vadd.f32 %v1762, %v1852
        %v1923 = vadd.f32 %v1763, %v1850
        %v1924 = vadd.f32 %v1764, %v1852
        %v1925 = vadd.f32 %v1765, %v1850
        %v1926 = vadd.f32 %v1766, %v1852
        %v1927 = vadd.f32 %v1767, %v1850
        %v1928 = vadd.f32 %v1768, %v1852
        %v1929 = vadd.f32 %v1769, %v1850
        %v1930 = vadd.f32 %v1770, %v1852
        %v1931 = vadd.f32 %v1771, %v1850
        %v1932 = vadd.f32 %v1772, %v1852
        %v1933 = vadd.f32 %v1773, %v1854
        %v1934 = vadd.f32 %v1774, %v1856
        %v1935 = vadd.f32 %v1775, %v1854
        %v1936 = vadd.f32 %v1776, %v1856
        %v1937 = vadd.f32 %v1777, %v1854
        %v1938 = vadd.f32 %v1778, %v1856
        %v1939 = vadd.f32 %v1779, %v1854
        %v1940 = vadd.f32 %v1780, %v1856
        %v1941 = vadd.f32 %v1781, %v1854
        %v1942 = vadd.f32 %v1782, %v1856
        %v1943 = vadd.f32 %v1783, %v1854
        %v1944 = vadd.f32 %v1784, %v1856
        %v1945 = vadd.f32 %v1785, %v1854
        %v1946 = vadd.f32 %v1786, %v1856
        %v1947 = vadd.f32 %v1787, %v1854
        %v1948 = vadd.f32 %v1788, %v1856
        %v1949 = vadd.f32 %v1789, %v1854
        %v1950 = vadd.f32 %v1790, %v1856
        %v1951 = vadd.f32 %v1791, %v1854
        %v1952 = vadd.f32 %v1792, %v1856
        %v1953 = vadd.f32 %v1793, %v1854
        %v1954 = vadd.f32 %v1794, %v1856
        %v1955 = vadd.f32 %v1795, %v1854
        %v1956 = vadd.f32 %v1796, %v1856
        %v1957 = vadd.f32 %v1797, %v1854
        %v1958 = vadd.f32 %v1798, %v1856
        %v1959 = vadd.f32 %v1799, %v1854
        %v1960 = vadd.f32 %v1800, %v1856
        %v1961 = vadd.f32 %v1801, %v1854
        %v1962 = vadd.f32 %v1802, %v1856
        %v1963 = vadd.f32 %v1803, %v1854
        %v1964 = vadd.f32 %v1804, %v1856
        %v1965 = vadd.f32 %v1805, %v1858
        %v1966 = vadd.f32 %v1806, %v1860
        %v1967 = vadd.f32 %v1807, %v1858
        %v1968 = vadd.f32 %v1808, %v1860
        %v1969 = vadd.f32 %v1809, %v1858
        %v1970 = vadd.f32 %v1810, %v1860
        %v1971 = vadd.f32 %v1811, %v1858
        %v1972 = vadd.f32 %v1812, %v1860
        %v1973 = vadd.f32 %v1813, %v1858
        %v1974 = vadd.f32 %v1814, %v1860
        %v1975 = vadd.f32 %v1815, %v1858
        %v1976 = vadd.f32 %v1816, %v1860
        %v1977 = vadd.f32 %v1817, %v1858
        %v1978 = vadd.f32 %v1818, %v1860
        %v1979 = vadd.f32 %v1819, %v1858
        %v1980 = vadd.f32 %v1820, %v1860
        %v1981 = vadd.f32 %v1821, %v1858
        %v1982 = vadd.f32 %v1822, %v1860
        %v1983 = vadd.f32 %v1823, %v1858
        %v1984 = vadd.f32 %v1824, %v1860
        %v1985 = vadd.f32 %v1825, %v1858
        %v1986 = vadd.f32 %v1826, %v1860
        %v1987 = vadd.f32 %v1827, %v1858
        %v1988 = vadd.f32 %v1828, %v1860
        %v1989 = vadd.f32 %v1829, %v1858
        %v1990 = vadd.f32 %v1830, %v1860
        %v1991 = vadd.f32 %v1831, %v1858
        %v1992 = vadd.f32 %v1832, %v1860
        %v1993 = vadd.f32 %v1833, %v1858
        %v1994 = vadd.f32 %v1834, %v1860
        %v1995 = vadd.f32 %v1835, %v1858
        %v1996 = vadd.f32 %v1836, %v1860
        %v1997 = vld [vmem:[%s393] sm:$0xff]
        %v1998 = vld [vmem:[%s393 + $0x8] sm:$0xff]
        %v1999 = vld [vmem:[%s393 + $0x10] sm:$0xff]
        %v2000 = vld [vmem:[%s393 + $0x18] sm:$0xff]
        %v2001 = vld [vmem:[%s393 + $0x20] sm:$0xff]
        %v2002 = vld [vmem:[%s393 + $0x28] sm:$0xff]
        %v2003 = vld [vmem:[%s393 + $0x30] sm:$0xff]
        %v2004 = vld [vmem:[%s393 + $0x38] sm:$0xff]
        %v2005 = vmax.f32 %v1869, 0.0
        %v2006 = vmax.f32 %v1870, 0.0
        %v2007 = vmax.f32 %v1871, 0.0
        %v2008 = vmax.f32 %v1872, 0.0
        %v2009 = vmax.f32 %v1873, 0.0
        %v2010 = vmax.f32 %v1874, 0.0
        %v2011 = vmax.f32 %v1875, 0.0
        %v2012 = vmax.f32 %v1876, 0.0
        %v2013 = vmax.f32 %v1877, 0.0
        %v2014 = vmax.f32 %v1878, 0.0
        %v2015 = vmax.f32 %v1879, 0.0
        %v2016 = vmax.f32 %v1880, 0.0
        %v2017 = vmax.f32 %v1881, 0.0
        %v2018 = vmax.f32 %v1882, 0.0
        %v2019 = vmax.f32 %v1883, 0.0
        %v2020 = vmax.f32 %v1884, 0.0
        %v2021 = vmax.f32 %v1885, 0.0
        %v2022 = vmax.f32 %v1886, 0.0
        %v2023 = vmax.f32 %v1887, 0.0
        %v2024 = vmax.f32 %v1888, 0.0
        %v2025 = vmax.f32 %v1889, 0.0
        %v2026 = vmax.f32 %v1890, 0.0
        %v2027 = vmax.f32 %v1891, 0.0
        %v2028 = vmax.f32 %v1892, 0.0
        %v2029 = vmax.f32 %v1893, 0.0
        %v2030 = vmax.f32 %v1894, 0.0
        %v2031 = vmax.f32 %v1895, 0.0
        %v2032 = vmax.f32 %v1896, 0.0
        %v2033 = vmax.f32 %v1897, 0.0
        %v2034 = vmax.f32 %v1898, 0.0
        %v2035 = vmax.f32 %v1899, 0.0
        %v2036 = vmax.f32 %v1900, 0.0
        %v2037 = vmax.f32 %v1901, 0.0
        %v2038 = vmax.f32 %v1902, 0.0
        %v2039 = vmax.f32 %v1903, 0.0
        %v2040 = vmax.f32 %v1904, 0.0
        %v2041 = vmax.f32 %v1905, 0.0
        %v2042 = vmax.f32 %v1906, 0.0
        %v2043 = vmax.f32 %v1907, 0.0
        %v2044 = vmax.f32 %v1908, 0.0
        %v2045 = vmax.f32 %v1909, 0.0
        %v2046 = vmax.f32 %v1910, 0.0
        %v2047 = vmax.f32 %v1911, 0.0
        %v2048 = vmax.f32 %v1912, 0.0
        %v2049 = vmax.f32 %v1913, 0.0
        %v2050 = vmax.f32 %v1914, 0.0
        %v2051 = vmax.f32 %v1915, 0.0
        %v2052 = vmax.f32 %v1916, 0.0
        %v2053 = vmax.f32 %v1917, 0.0
        %v2054 = vmax.f32 %v1918, 0.0
        %v2055 = vmax.f32 %v1919, 0.0
        %v2056 = vmax.f32 %v1920, 0.0
        %v2057 = vmax.f32 %v1921, 0.0
        %v2058 = vmax.f32 %v1922, 0.0
        %v2059 = vmax.f32 %v1923, 0.0
        %v2060 = vmax.f32 %v1924, 0.0
        %v2061 = vmax.f32 %v1925, 0.0
        %v2062 = vmax.f32 %v1926, 0.0
        %v2063 = vmax.f32 %v1927, 0.0
        %v2064 = vmax.f32 %v1928, 0.0
        %v2065 = vmax.f32 %v1929, 0.0
        %v2066 = vmax.f32 %v1930, 0.0
        %v2067 = vmax.f32 %v1931, 0.0
        %v2068 = vmax.f32 %v1932, 0.0
        %v2069 = vmax.f32 %v1933, 0.0
        %v2070 = vmax.f32 %v1934, 0.0
        %v2071 = vmax.f32 %v1935, 0.0
        %v2072 = vmax.f32 %v1936, 0.0
        %v2073 = vmax.f32 %v1937, 0.0
        %v2074 = vmax.f32 %v1938, 0.0
        %v2075 = vmax.f32 %v1939, 0.0
        %v2076 = vmax.f32 %v1940, 0.0
        %v2077 = vmax.f32 %v1941, 0.0
        %v2078 = vmax.f32 %v1942, 0.0
        %v2079 = vmax.f32 %v1943, 0.0
        %v2080 = vmax.f32 %v1944, 0.0
        %v2081 = vmax.f32 %v1945, 0.0
        %v2082 = vmax.f32 %v1946, 0.0
        %v2083 = vmax.f32 %v1947, 0.0
        %v2084 = vmax.f32 %v1948, 0.0
        %v2085 = vmax.f32 %v1949, 0.0
        %v2086 = vmax.f32 %v1950, 0.0
        %v2087 = vmax.f32 %v1951, 0.0
        %v2088 = vmax.f32 %v1952, 0.0
        %v2089 = vmax.f32 %v1953, 0.0
        %v2090 = vmax.f32 %v1954, 0.0
        %v2091 = vmax.f32 %v1955, 0.0
        %v2092 = vmax.f32 %v1956, 0.0
        %v2093 = vmax.f32 %v1957, 0.0
        %v2094 = vmax.f32 %v1958, 0.0
        %v2095 = vmax.f32 %v1959, 0.0
        %v2096 = vmax.f32 %v1960, 0.0
        %v2097 = vmax.f32 %v1961, 0.0
        %v2098 = vmax.f32 %v1962, 0.0
        %v2099 = vmax.f32 %v1963, 0.0
        %v2100 = vmax.f32 %v1964, 0.0
        %v2101 = vmax.f32 %v1965, 0.0
        %v2102 = vmax.f32 %v1966, 0.0
        %v2103 = vmax.f32 %v1967, 0.0
        %v2104 = vmax.f32 %v1968, 0.0
        %v2105 = vmax.f32 %v1969, 0.0
        %v2106 = vmax.f32 %v1970, 0.0
        %v2107 = vmax.f32 %v1971, 0.0
        %v2108 = vmax.f32 %v1972, 0.0
        %v2109 = vmax.f32 %v1973, 0.0
        %v2110 = vmax.f32 %v1974, 0.0
        %v2111 = vmax.f32 %v1975, 0.0
        %v2112 = vmax.f32 %v1976, 0.0
        %v2113 = vmax.f32 %v1977, 0.0
        %v2114 = vmax.f32 %v1978, 0.0
        %v2115 = vmax.f32 %v1979, 0.0
        %v2116 = vmax.f32 %v1980, 0.0
        %v2117 = vmax.f32 %v1981, 0.0
        %v2118 = vmax.f32 %v1982, 0.0
        %v2119 = vmax.f32 %v1983, 0.0
        %v2120 = vmax.f32 %v1984, 0.0
        %v2121 = vmax.f32 %v1985, 0.0
        %v2122 = vmax.f32 %v1986, 0.0
        %v2123 = vmax.f32 %v1987, 0.0
        %v2124 = vmax.f32 %v1988, 0.0
        %v2125 = vmax.f32 %v1989, 0.0
        %v2126 = vmax.f32 %v1990, 0.0
        %v2127 = vmax.f32 %v1991, 0.0
        %v2128 = vmax.f32 %v1992, 0.0
        %v2129 = vmax.f32 %v1993, 0.0
        %v2130 = vmax.f32 %v1994, 0.0
        %v2131 = vmax.f32 %v1995, 0.0
        %v2132 = vmax.f32 %v1996, 0.0
        %v2133 = vperm.slane %v1997, 0
        %v2134 = vlaneseq
        %v2135 = vshrl.u32 %v2134, 7
        %2137 = vset.pattern.permute.xlu0 %v2135
        %2138 = vperm.xlu0 %2137, %v2133
        %v2139 = vpop.permute.xlu0 %2138
        %v2140 = vlaneseq
        %v2141 = vshrl.u32 %v2140, 7
        %v2142 = vadd.s32 %v2141, 8
        %2143 = vset.pattern.permute.xlu0 %v2142
        %2144 = vperm.xlu0 %2143, %v2133
        %v2145 = vpop.permute.xlu0 %2144
        %v2146 = vperm.slane %v1997, 1
        %v2147 = vlaneseq
        %v2148 = vshrl.u32 %v2147, 7
        %2150 = vset.pattern.permute.xlu0 %v2148
        %2151 = vperm.xlu0 %2150, %v2146
        %v2152 = vpop.permute.xlu0 %2151
        %v2153 = vlaneseq
        %v2154 = vshrl.u32 %v2153, 7
        %v2155 = vadd.s32 %v2154, 8
        %2156 = vset.pattern.permute.xlu0 %v2155
        %2157 = vperm.xlu0 %2156, %v2146
        %v2158 = vpop.permute.xlu0 %2157
        %v2159 = vperm.slane %v1997, 2
        %v2160 = vlaneseq
        %v2161 = vshrl.u32 %v2160, 7
        %2163 = vset.pattern.permute.xlu0 %v2161
        %2164 = vperm.xlu0 %2163, %v2159
        %v2165 = vpop.permute.xlu0 %2164
        %v2166 = vlaneseq
        %v2167 = vshrl.u32 %v2166, 7
        %v2168 = vadd.s32 %v2167, 8
        %2169 = vset.pattern.permute.xlu0 %v2168
        %2170 = vperm.xlu0 %2169, %v2159
        %v2171 = vpop.permute.xlu0 %2170
        %v2172 = vperm.slane %v1997, 3
        %v2173 = vlaneseq
        %v2174 = vshrl.u32 %v2173, 7
        %2176 = vset.pattern.permute.xlu0 %v2174
        %2177 = vperm.xlu0 %2176, %v2172
        %v2178 = vpop.permute.xlu0 %2177
        %v2179 = vlaneseq
        %v2180 = vshrl.u32 %v2179, 7
        %v2181 = vadd.s32 %v2180, 8
        %2182 = vset.pattern.permute.xlu0 %v2181
        %2183 = vperm.xlu0 %2182, %v2172
        %v2184 = vpop.permute.xlu0 %2183
        %v2185 = vperm.slane %v1997, 4
        %v2186 = vlaneseq
        %v2187 = vshrl.u32 %v2186, 7
        %2189 = vset.pattern.permute.xlu0 %v2187
        %2190 = vperm.xlu0 %2189, %v2185
        %v2191 = vpop.permute.xlu0 %2190
        %v2192 = vlaneseq
        %v2193 = vshrl.u32 %v2192, 7
        %v2194 = vadd.s32 %v2193, 8
        %2195 = vset.pattern.permute.xlu0 %v2194
        %2196 = vperm.xlu0 %2195, %v2185
        %v2197 = vpop.permute.xlu0 %2196
        %v2198 = vperm.slane %v1997, 5
        %v2199 = vlaneseq
        %v2200 = vshrl.u32 %v2199, 7
        %2202 = vset.pattern.permute.xlu0 %v2200
        %2203 = vperm.xlu0 %2202, %v2198
        %v2204 = vpop.permute.xlu0 %2203
        %v2205 = vlaneseq
        %v2206 = vshrl.u32 %v2205, 7
        %v2207 = vadd.s32 %v2206, 8
        %2208 = vset.pattern.permute.xlu0 %v2207
        %2209 = vperm.xlu0 %2208, %v2198
        %v2210 = vpop.permute.xlu0 %2209
        %v2211 = vperm.slane %v1997, 6
        %v2212 = vlaneseq
        %v2213 = vshrl.u32 %v2212, 7
        %2215 = vset.pattern.permute.xlu0 %v2213
        %2216 = vperm.xlu0 %2215, %v2211
        %v2217 = vpop.permute.xlu0 %2216
        %v2218 = vlaneseq
        %v2219 = vshrl.u32 %v2218, 7
        %v2220 = vadd.s32 %v2219, 8
        %2221 = vset.pattern.permute.xlu0 %v2220
        %2222 = vperm.xlu0 %2221, %v2211
        %v2223 = vpop.permute.xlu0 %2222
        %v2224 = vperm.slane %v1997, 7
        %v2225 = vlaneseq
        %v2226 = vshrl.u32 %v2225, 7
        %2228 = vset.pattern.permute.xlu0 %v2226
        %2229 = vperm.xlu0 %2228, %v2224
        %v2230 = vpop.permute.xlu0 %2229
        %v2231 = vlaneseq
        %v2232 = vshrl.u32 %v2231, 7
        %v2233 = vadd.s32 %v2232, 8
        %2234 = vset.pattern.permute.xlu0 %v2233
        %2235 = vperm.xlu0 %2234, %v2224
        %v2236 = vpop.permute.xlu0 %2235
        %v2237 = vperm.slane %v1998, 0
        %v2238 = vlaneseq
        %v2239 = vshrl.u32 %v2238, 7
        %2241 = vset.pattern.permute.xlu0 %v2239
        %2242 = vperm.xlu0 %2241, %v2237
        %v2243 = vpop.permute.xlu0 %2242
        %v2244 = vlaneseq
        %v2245 = vshrl.u32 %v2244, 7
        %v2246 = vadd.s32 %v2245, 8
        %2247 = vset.pattern.permute.xlu0 %v2246
        %2248 = vperm.xlu0 %2247, %v2237
        %v2249 = vpop.permute.xlu0 %2248
        %v2250 = vperm.slane %v1998, 1
        %v2251 = vlaneseq
        %v2252 = vshrl.u32 %v2251, 7
        %2254 = vset.pattern.permute.xlu0 %v2252
        %2255 = vperm.xlu0 %2254, %v2250
        %v2256 = vpop.permute.xlu0 %2255
        %v2257 = vlaneseq
        %v2258 = vshrl.u32 %v2257, 7
        %v2259 = vadd.s32 %v2258, 8
        %2260 = vset.pattern.permute.xlu0 %v2259
        %2261 = vperm.xlu0 %2260, %v2250
        %v2262 = vpop.permute.xlu0 %2261
        %v2263 = vperm.slane %v1998, 2
        %v2264 = vlaneseq
        %v2265 = vshrl.u32 %v2264, 7
        %2267 = vset.pattern.permute.xlu0 %v2265
        %2268 = vperm.xlu0 %2267, %v2263
        %v2269 = vpop.permute.xlu0 %2268
        %v2270 = vlaneseq
        %v2271 = vshrl.u32 %v2270, 7
        %v2272 = vadd.s32 %v2271, 8
        %2273 = vset.pattern.permute.xlu0 %v2272
        %2274 = vperm.xlu0 %2273, %v2263
        %v2275 = vpop.permute.xlu0 %2274
        %v2276 = vperm.slane %v1998, 3
        %v2277 = vlaneseq
        %v2278 = vshrl.u32 %v2277, 7
        %2280 = vset.pattern.permute.xlu0 %v2278
        %2281 = vperm.xlu0 %2280, %v2276
        %v2282 = vpop.permute.xlu0 %2281
        %v2283 = vlaneseq
        %v2284 = vshrl.u32 %v2283, 7
        %v2285 = vadd.s32 %v2284, 8
        %2286 = vset.pattern.permute.xlu0 %v2285
        %2287 = vperm.xlu0 %2286, %v2276
        %v2288 = vpop.permute.xlu0 %2287
        %v2289 = vperm.slane %v1998, 4
        %v2290 = vlaneseq
        %v2291 = vshrl.u32 %v2290, 7
        %2293 = vset.pattern.permute.xlu0 %v2291
        %2294 = vperm.xlu0 %2293, %v2289
        %v2295 = vpop.permute.xlu0 %2294
        %v2296 = vlaneseq
        %v2297 = vshrl.u32 %v2296, 7
        %v2298 = vadd.s32 %v2297, 8
        %2299 = vset.pattern.permute.xlu0 %v2298
        %2300 = vperm.xlu0 %2299, %v2289
        %v2301 = vpop.permute.xlu0 %2300
        %v2302 = vperm.slane %v1998, 5
        %v2303 = vlaneseq
        %v2304 = vshrl.u32 %v2303, 7
        %2306 = vset.pattern.permute.xlu0 %v2304
        %2307 = vperm.xlu0 %2306, %v2302
        %v2308 = vpop.permute.xlu0 %2307
        %v2309 = vlaneseq
        %v2310 = vshrl.u32 %v2309, 7
        %v2311 = vadd.s32 %v2310, 8
        %2312 = vset.pattern.permute.xlu0 %v2311
        %2313 = vperm.xlu0 %2312, %v2302
        %v2314 = vpop.permute.xlu0 %2313
        %v2315 = vperm.slane %v1998, 6
        %v2316 = vlaneseq
        %v2317 = vshrl.u32 %v2316, 7
        %2319 = vset.pattern.permute.xlu0 %v2317
        %2320 = vperm.xlu0 %2319, %v2315
        %v2321 = vpop.permute.xlu0 %2320
        %v2322 = vlaneseq
        %v2323 = vshrl.u32 %v2322, 7
        %v2324 = vadd.s32 %v2323, 8
        %2325 = vset.pattern.permute.xlu0 %v2324
        %2326 = vperm.xlu0 %2325, %v2315
        %v2327 = vpop.permute.xlu0 %2326
        %v2328 = vperm.slane %v1998, 7
        %v2329 = vlaneseq
        %v2330 = vshrl.u32 %v2329, 7
        %2332 = vset.pattern.permute.xlu0 %v2330
        %2333 = vperm.xlu0 %2332, %v2328
        %v2334 = vpop.permute.xlu0 %2333
        %v2335 = vlaneseq
        %v2336 = vshrl.u32 %v2335, 7
        %v2337 = vadd.s32 %v2336, 8
        %2338 = vset.pattern.permute.xlu0 %v2337
        %2339 = vperm.xlu0 %2338, %v2328
        %v2340 = vpop.permute.xlu0 %2339
        %v2341 = vperm.slane %v1999, 0
        %v2342 = vlaneseq
        %v2343 = vshrl.u32 %v2342, 7
        %2345 = vset.pattern.permute.xlu0 %v2343
        %2346 = vperm.xlu0 %2345, %v2341
        %v2347 = vpop.permute.xlu0 %2346
        %v2348 = vlaneseq
        %v2349 = vshrl.u32 %v2348, 7
        %v2350 = vadd.s32 %v2349, 8
        %2351 = vset.pattern.permute.xlu0 %v2350
        %2352 = vperm.xlu0 %2351, %v2341
        %v2353 = vpop.permute.xlu0 %2352
        %v2354 = vperm.slane %v1999, 1
        %v2355 = vlaneseq
        %v2356 = vshrl.u32 %v2355, 7
        %2358 = vset.pattern.permute.xlu0 %v2356
        %2359 = vperm.xlu0 %2358, %v2354
        %v2360 = vpop.permute.xlu0 %2359
        %v2361 = vlaneseq
        %v2362 = vshrl.u32 %v2361, 7
        %v2363 = vadd.s32 %v2362, 8
        %2364 = vset.pattern.permute.xlu0 %v2363
        %2365 = vperm.xlu0 %2364, %v2354
        %v2366 = vpop.permute.xlu0 %2365
        %v2367 = vperm.slane %v1999, 2
        %v2368 = vlaneseq
        %v2369 = vshrl.u32 %v2368, 7
        %2371 = vset.pattern.permute.xlu0 %v2369
        %2372 = vperm.xlu0 %2371, %v2367
        %v2373 = vpop.permute.xlu0 %2372
        %v2374 = vlaneseq
        %v2375 = vshrl.u32 %v2374, 7
        %v2376 = vadd.s32 %v2375, 8
        %2377 = vset.pattern.permute.xlu0 %v2376
        %2378 = vperm.xlu0 %2377, %v2367
        %v2379 = vpop.permute.xlu0 %2378
        %v2380 = vperm.slane %v1999, 3
        %v2381 = vlaneseq
        %v2382 = vshrl.u32 %v2381, 7
        %2384 = vset.pattern.permute.xlu0 %v2382
        %2385 = vperm.xlu0 %2384, %v2380
        %v2386 = vpop.permute.xlu0 %2385
        %v2387 = vlaneseq
        %v2388 = vshrl.u32 %v2387, 7
        %v2389 = vadd.s32 %v2388, 8
        %2390 = vset.pattern.permute.xlu0 %v2389
        %2391 = vperm.xlu0 %2390, %v2380
        %v2392 = vpop.permute.xlu0 %2391
        %v2393 = vperm.slane %v1999, 4
        %v2394 = vlaneseq
        %v2395 = vshrl.u32 %v2394, 7
        %2397 = vset.pattern.permute.xlu0 %v2395
        %2398 = vperm.xlu0 %2397, %v2393
        %v2399 = vpop.permute.xlu0 %2398
        %v2400 = vlaneseq
        %v2401 = vshrl.u32 %v2400, 7
        %v2402 = vadd.s32 %v2401, 8
        %2403 = vset.pattern.permute.xlu0 %v2402
        %2404 = vperm.xlu0 %2403, %v2393
        %v2405 = vpop.permute.xlu0 %2404
        %v2406 = vperm.slane %v1999, 5
        %v2407 = vlaneseq
        %v2408 = vshrl.u32 %v2407, 7
        %2410 = vset.pattern.permute.xlu0 %v2408
        %2411 = vperm.xlu0 %2410, %v2406
        %v2412 = vpop.permute.xlu0 %2411
        %v2413 = vlaneseq
        %v2414 = vshrl.u32 %v2413, 7
        %v2415 = vadd.s32 %v2414, 8
        %2416 = vset.pattern.permute.xlu0 %v2415
        %2417 = vperm.xlu0 %2416, %v2406
        %v2418 = vpop.permute.xlu0 %2417
        %v2419 = vperm.slane %v1999, 6
        %v2420 = vlaneseq
        %v2421 = vshrl.u32 %v2420, 7
        %2423 = vset.pattern.permute.xlu0 %v2421
        %2424 = vperm.xlu0 %2423, %v2419
        %v2425 = vpop.permute.xlu0 %2424
        %v2426 = vlaneseq
        %v2427 = vshrl.u32 %v2426, 7
        %v2428 = vadd.s32 %v2427, 8
        %2429 = vset.pattern.permute.xlu0 %v2428
        %2430 = vperm.xlu0 %2429, %v2419
        %v2431 = vpop.permute.xlu0 %2430
        %v2432 = vperm.slane %v1999, 7
        %v2433 = vlaneseq
        %v2434 = vshrl.u32 %v2433, 7
        %2436 = vset.pattern.permute.xlu0 %v2434
        %2437 = vperm.xlu0 %2436, %v2432
        %v2438 = vpop.permute.xlu0 %2437
        %v2439 = vlaneseq
        %v2440 = vshrl.u32 %v2439, 7
        %v2441 = vadd.s32 %v2440, 8
        %2442 = vset.pattern.permute.xlu0 %v2441
        %2443 = vperm.xlu0 %2442, %v2432
        %v2444 = vpop.permute.xlu0 %2443
        %v2445 = vperm.slane %v2000, 0
        %v2446 = vlaneseq
        %v2447 = vshrl.u32 %v2446, 7
        %2449 = vset.pattern.permute.xlu0 %v2447
        %2450 = vperm.xlu0 %2449, %v2445
        %v2451 = vpop.permute.xlu0 %2450
        %v2452 = vlaneseq
        %v2453 = vshrl.u32 %v2452, 7
        %v2454 = vadd.s32 %v2453, 8
        %2455 = vset.pattern.permute.xlu0 %v2454
        %2456 = vperm.xlu0 %2455, %v2445
        %v2457 = vpop.permute.xlu0 %2456
        %v2458 = vperm.slane %v2000, 1
        %v2459 = vlaneseq
        %v2460 = vshrl.u32 %v2459, 7
        %2462 = vset.pattern.permute.xlu0 %v2460
        %2463 = vperm.xlu0 %2462, %v2458
        %v2464 = vpop.permute.xlu0 %2463
        %v2465 = vlaneseq
        %v2466 = vshrl.u32 %v2465, 7
        %v2467 = vadd.s32 %v2466, 8
        %2468 = vset.pattern.permute.xlu0 %v2467
        %2469 = vperm.xlu0 %2468, %v2458
        %v2470 = vpop.permute.xlu0 %2469
        %v2471 = vperm.slane %v2000, 2
        %v2472 = vlaneseq
        %v2473 = vshrl.u32 %v2472, 7
        %2475 = vset.pattern.permute.xlu0 %v2473
        %2476 = vperm.xlu0 %2475, %v2471
        %v2477 = vpop.permute.xlu0 %2476
        %v2478 = vlaneseq
        %v2479 = vshrl.u32 %v2478, 7
        %v2480 = vadd.s32 %v2479, 8
        %2481 = vset.pattern.permute.xlu0 %v2480
        %2482 = vperm.xlu0 %2481, %v2471
        %v2483 = vpop.permute.xlu0 %2482
        %v2484 = vperm.slane %v2000, 3
        %v2485 = vlaneseq
        %v2486 = vshrl.u32 %v2485, 7
        %2488 = vset.pattern.permute.xlu0 %v2486
        %2489 = vperm.xlu0 %2488, %v2484
        %v2490 = vpop.permute.xlu0 %2489
        %v2491 = vlaneseq
        %v2492 = vshrl.u32 %v2491, 7
        %v2493 = vadd.s32 %v2492, 8
        %2494 = vset.pattern.permute.xlu0 %v2493
        %2495 = vperm.xlu0 %2494, %v2484
        %v2496 = vpop.permute.xlu0 %2495
        %v2497 = vperm.slane %v2000, 4
        %v2498 = vlaneseq
        %v2499 = vshrl.u32 %v2498, 7
        %2501 = vset.pattern.permute.xlu0 %v2499
        %2502 = vperm.xlu0 %2501, %v2497
        %v2503 = vpop.permute.xlu0 %2502
        %v2504 = vlaneseq
        %v2505 = vshrl.u32 %v2504, 7
        %v2506 = vadd.s32 %v2505, 8
        %2507 = vset.pattern.permute.xlu0 %v2506
        %2508 = vperm.xlu0 %2507, %v2497
        %v2509 = vpop.permute.xlu0 %2508
        %v2510 = vperm.slane %v2000, 5
        %v2511 = vlaneseq
        %v2512 = vshrl.u32 %v2511, 7
        %2514 = vset.pattern.permute.xlu0 %v2512
        %2515 = vperm.xlu0 %2514, %v2510
        %v2516 = vpop.permute.xlu0 %2515
        %v2517 = vlaneseq
        %v2518 = vshrl.u32 %v2517, 7
        %v2519 = vadd.s32 %v2518, 8
        %2520 = vset.pattern.permute.xlu0 %v2519
        %2521 = vperm.xlu0 %2520, %v2510
        %v2522 = vpop.permute.xlu0 %2521
        %v2523 = vperm.slane %v2000, 6
        %v2524 = vlaneseq
        %v2525 = vshrl.u32 %v2524, 7
        %2527 = vset.pattern.permute.xlu0 %v2525
        %2528 = vperm.xlu0 %2527, %v2523
        %v2529 = vpop.permute.xlu0 %2528
        %v2530 = vlaneseq
        %v2531 = vshrl.u32 %v2530, 7
        %v2532 = vadd.s32 %v2531, 8
        %2533 = vset.pattern.permute.xlu0 %v2532
        %2534 = vperm.xlu0 %2533, %v2523
        %v2535 = vpop.permute.xlu0 %2534
        %v2536 = vperm.slane %v2000, 7
        %v2537 = vlaneseq
        %v2538 = vshrl.u32 %v2537, 7
        %2540 = vset.pattern.permute.xlu0 %v2538
        %2541 = vperm.xlu0 %2540, %v2536
        %v2542 = vpop.permute.xlu0 %2541
        %v2543 = vlaneseq
        %v2544 = vshrl.u32 %v2543, 7
        %v2545 = vadd.s32 %v2544, 8
        %2546 = vset.pattern.permute.xlu0 %v2545
        %2547 = vperm.xlu0 %2546, %v2536
        %v2548 = vpop.permute.xlu0 %2547
        %v2549 = vperm.slane %v2001, 0
        %v2550 = vlaneseq
        %v2551 = vshrl.u32 %v2550, 7
        %2553 = vset.pattern.permute.xlu0 %v2551
        %2554 = vperm.xlu0 %2553, %v2549
        %v2555 = vpop.permute.xlu0 %2554
        %v2556 = vlaneseq
        %v2557 = vshrl.u32 %v2556, 7
        %v2558 = vadd.s32 %v2557, 8
        %2559 = vset.pattern.permute.xlu0 %v2558
        %2560 = vperm.xlu0 %2559, %v2549
        %v2561 = vpop.permute.xlu0 %2560
        %v2562 = vperm.slane %v2001, 1
        %v2563 = vlaneseq
        %v2564 = vshrl.u32 %v2563, 7
        %2566 = vset.pattern.permute.xlu0 %v2564
        %2567 = vperm.xlu0 %2566, %v2562
        %v2568 = vpop.permute.xlu0 %2567
        %v2569 = vlaneseq
        %v2570 = vshrl.u32 %v2569, 7
        %v2571 = vadd.s32 %v2570, 8
        %2572 = vset.pattern.permute.xlu0 %v2571
        %2573 = vperm.xlu0 %2572, %v2562
        %v2574 = vpop.permute.xlu0 %2573
        %v2575 = vperm.slane %v2001, 2
        %v2576 = vlaneseq
        %v2577 = vshrl.u32 %v2576, 7
        %2579 = vset.pattern.permute.xlu0 %v2577
        %2580 = vperm.xlu0 %2579, %v2575
        %v2581 = vpop.permute.xlu0 %2580
        %v2582 = vlaneseq
        %v2583 = vshrl.u32 %v2582, 7
        %v2584 = vadd.s32 %v2583, 8
        %2585 = vset.pattern.permute.xlu0 %v2584
        %2586 = vperm.xlu0 %2585, %v2575
        %v2587 = vpop.permute.xlu0 %2586
        %v2588 = vperm.slane %v2001, 3
        %v2589 = vlaneseq
        %v2590 = vshrl.u32 %v2589, 7
        %2592 = vset.pattern.permute.xlu0 %v2590
        %2593 = vperm.xlu0 %2592, %v2588
        %v2594 = vpop.permute.xlu0 %2593
        %v2595 = vlaneseq
        %v2596 = vshrl.u32 %v2595, 7
        %v2597 = vadd.s32 %v2596, 8
        %2598 = vset.pattern.permute.xlu0 %v2597
        %2599 = vperm.xlu0 %2598, %v2588
        %v2600 = vpop.permute.xlu0 %2599
        %v2601 = vperm.slane %v2001, 4
        %v2602 = vlaneseq
        %v2603 = vshrl.u32 %v2602, 7
        %2605 = vset.pattern.permute.xlu0 %v2603
        %2606 = vperm.xlu0 %2605, %v2601
        %v2607 = vpop.permute.xlu0 %2606
        %v2608 = vlaneseq
        %v2609 = vshrl.u32 %v2608, 7
        %v2610 = vadd.s32 %v2609, 8
        %2611 = vset.pattern.permute.xlu0 %v2610
        %2612 = vperm.xlu0 %2611, %v2601
        %v2613 = vpop.permute.xlu0 %2612
        %v2614 = vperm.slane %v2001, 5
        %v2615 = vlaneseq
        %v2616 = vshrl.u32 %v2615, 7
        %2618 = vset.pattern.permute.xlu0 %v2616
        %2619 = vperm.xlu0 %2618, %v2614
        %v2620 = vpop.permute.xlu0 %2619
        %v2621 = vlaneseq
        %v2622 = vshrl.u32 %v2621, 7
        %v2623 = vadd.s32 %v2622, 8
        %2624 = vset.pattern.permute.xlu0 %v2623
        %2625 = vperm.xlu0 %2624, %v2614
        %v2626 = vpop.permute.xlu0 %2625
        %v2627 = vperm.slane %v2001, 6
        %v2628 = vlaneseq
        %v2629 = vshrl.u32 %v2628, 7
        %2631 = vset.pattern.permute.xlu0 %v2629
        %2632 = vperm.xlu0 %2631, %v2627
        %v2633 = vpop.permute.xlu0 %2632
        %v2634 = vlaneseq
        %v2635 = vshrl.u32 %v2634, 7
        %v2636 = vadd.s32 %v2635, 8
        %2637 = vset.pattern.permute.xlu0 %v2636
        %2638 = vperm.xlu0 %2637, %v2627
        %v2639 = vpop.permute.xlu0 %2638
        %v2640 = vperm.slane %v2001, 7
        %v2641 = vlaneseq
        %v2642 = vshrl.u32 %v2641, 7
        %2644 = vset.pattern.permute.xlu0 %v2642
        %2645 = vperm.xlu0 %2644, %v2640
        %v2646 = vpop.permute.xlu0 %2645
        %v2647 = vlaneseq
        %v2648 = vshrl.u32 %v2647, 7
        %v2649 = vadd.s32 %v2648, 8
        %2650 = vset.pattern.permute.xlu0 %v2649
        %2651 = vperm.xlu0 %2650, %v2640
        %v2652 = vpop.permute.xlu0 %2651
        %v2653 = vperm.slane %v2002, 0
        %v2654 = vlaneseq
        %v2655 = vshrl.u32 %v2654, 7
        %2657 = vset.pattern.permute.xlu0 %v2655
        %2658 = vperm.xlu0 %2657, %v2653
        %v2659 = vpop.permute.xlu0 %2658
        %v2660 = vlaneseq
        %v2661 = vshrl.u32 %v2660, 7
        %v2662 = vadd.s32 %v2661, 8
        %2663 = vset.pattern.permute.xlu0 %v2662
        %2664 = vperm.xlu0 %2663, %v2653
        %v2665 = vpop.permute.xlu0 %2664
        %v2666 = vperm.slane %v2002, 1
        %v2667 = vlaneseq
        %v2668 = vshrl.u32 %v2667, 7
        %2670 = vset.pattern.permute.xlu0 %v2668
        %2671 = vperm.xlu0 %2670, %v2666
        %v2672 = vpop.permute.xlu0 %2671
        %v2673 = vlaneseq
        %v2674 = vshrl.u32 %v2673, 7
        %v2675 = vadd.s32 %v2674, 8
        %2676 = vset.pattern.permute.xlu0 %v2675
        %2677 = vperm.xlu0 %2676, %v2666
        %v2678 = vpop.permute.xlu0 %2677
        %v2679 = vperm.slane %v2002, 2
        %v2680 = vlaneseq
        %v2681 = vshrl.u32 %v2680, 7
        %2683 = vset.pattern.permute.xlu0 %v2681
        %2684 = vperm.xlu0 %2683, %v2679
        %v2685 = vpop.permute.xlu0 %2684
        %v2686 = vlaneseq
        %v2687 = vshrl.u32 %v2686, 7
        %v2688 = vadd.s32 %v2687, 8
        %2689 = vset.pattern.permute.xlu0 %v2688
        %2690 = vperm.xlu0 %2689, %v2679
        %v2691 = vpop.permute.xlu0 %2690
        %v2692 = vperm.slane %v2002, 3
        %v2693 = vlaneseq
        %v2694 = vshrl.u32 %v2693, 7
        %2696 = vset.pattern.permute.xlu0 %v2694
        %2697 = vperm.xlu0 %2696, %v2692
        %v2698 = vpop.permute.xlu0 %2697
        %v2699 = vlaneseq
        %v2700 = vshrl.u32 %v2699, 7
        %v2701 = vadd.s32 %v2700, 8
        %2702 = vset.pattern.permute.xlu0 %v2701
        %2703 = vperm.xlu0 %2702, %v2692
        %v2704 = vpop.permute.xlu0 %2703
        %v2705 = vperm.slane %v2002, 4
        %v2706 = vlaneseq
        %v2707 = vshrl.u32 %v2706, 7
        %2709 = vset.pattern.permute.xlu0 %v2707
        %2710 = vperm.xlu0 %2709, %v2705
        %v2711 = vpop.permute.xlu0 %2710
        %v2712 = vlaneseq
        %v2713 = vshrl.u32 %v2712, 7
        %v2714 = vadd.s32 %v2713, 8
        %2715 = vset.pattern.permute.xlu0 %v2714
        %2716 = vperm.xlu0 %2715, %v2705
        %v2717 = vpop.permute.xlu0 %2716
        %v2718 = vperm.slane %v2002, 5
        %v2719 = vlaneseq
        %v2720 = vshrl.u32 %v2719, 7
        %2722 = vset.pattern.permute.xlu0 %v2720
        %2723 = vperm.xlu0 %2722, %v2718
        %v2724 = vpop.permute.xlu0 %2723
        %v2725 = vlaneseq
        %v2726 = vshrl.u32 %v2725, 7
        %v2727 = vadd.s32 %v2726, 8
        %2728 = vset.pattern.permute.xlu0 %v2727
        %2729 = vperm.xlu0 %2728, %v2718
        %v2730 = vpop.permute.xlu0 %2729
        %v2731 = vperm.slane %v2002, 6
        %v2732 = vlaneseq
        %v2733 = vshrl.u32 %v2732, 7
        %2735 = vset.pattern.permute.xlu0 %v2733
        %2736 = vperm.xlu0 %2735, %v2731
        %v2737 = vpop.permute.xlu0 %2736
        %v2738 = vlaneseq
        %v2739 = vshrl.u32 %v2738, 7
        %v2740 = vadd.s32 %v2739, 8
        %2741 = vset.pattern.permute.xlu0 %v2740
        %2742 = vperm.xlu0 %2741, %v2731
        %v2743 = vpop.permute.xlu0 %2742
        %v2744 = vperm.slane %v2002, 7
        %v2745 = vlaneseq
        %v2746 = vshrl.u32 %v2745, 7
        %2748 = vset.pattern.permute.xlu0 %v2746
        %2749 = vperm.xlu0 %2748, %v2744
        %v2750 = vpop.permute.xlu0 %2749
        %v2751 = vlaneseq
        %v2752 = vshrl.u32 %v2751, 7
        %v2753 = vadd.s32 %v2752, 8
        %2754 = vset.pattern.permute.xlu0 %v2753
        %2755 = vperm.xlu0 %2754, %v2744
        %v2756 = vpop.permute.xlu0 %2755
        %v2757 = vperm.slane %v2003, 0
        %v2758 = vlaneseq
        %v2759 = vshrl.u32 %v2758, 7
        %2761 = vset.pattern.permute.xlu0 %v2759
        %2762 = vperm.xlu0 %2761, %v2757
        %v2763 = vpop.permute.xlu0 %2762
        %v2764 = vlaneseq
        %v2765 = vshrl.u32 %v2764, 7
        %v2766 = vadd.s32 %v2765, 8
        %2767 = vset.pattern.permute.xlu0 %v2766
        %2768 = vperm.xlu0 %2767, %v2757
        %v2769 = vpop.permute.xlu0 %2768
        %v2770 = vperm.slane %v2003, 1
        %v2771 = vlaneseq
        %v2772 = vshrl.u32 %v2771, 7
        %2774 = vset.pattern.permute.xlu0 %v2772
        %2775 = vperm.xlu0 %2774, %v2770
        %v2776 = vpop.permute.xlu0 %2775
        %v2777 = vlaneseq
        %v2778 = vshrl.u32 %v2777, 7
        %v2779 = vadd.s32 %v2778, 8
        %2780 = vset.pattern.permute.xlu0 %v2779
        %2781 = vperm.xlu0 %2780, %v2770
        %v2782 = vpop.permute.xlu0 %2781
        %v2783 = vperm.slane %v2003, 2
        %v2784 = vlaneseq
        %v2785 = vshrl.u32 %v2784, 7
        %2787 = vset.pattern.permute.xlu0 %v2785
        %2788 = vperm.xlu0 %2787, %v2783
        %v2789 = vpop.permute.xlu0 %2788
        %v2790 = vlaneseq
        %v2791 = vshrl.u32 %v2790, 7
        %v2792 = vadd.s32 %v2791, 8
        %2793 = vset.pattern.permute.xlu0 %v2792
        %2794 = vperm.xlu0 %2793, %v2783
        %v2795 = vpop.permute.xlu0 %2794
        %v2796 = vperm.slane %v2003, 3
        %v2797 = vlaneseq
        %v2798 = vshrl.u32 %v2797, 7
        %2800 = vset.pattern.permute.xlu0 %v2798
        %2801 = vperm.xlu0 %2800, %v2796
        %v2802 = vpop.permute.xlu0 %2801
        %v2803 = vlaneseq
        %v2804 = vshrl.u32 %v2803, 7
        %v2805 = vadd.s32 %v2804, 8
        %2806 = vset.pattern.permute.xlu0 %v2805
        %2807 = vperm.xlu0 %2806, %v2796
        %v2808 = vpop.permute.xlu0 %2807
        %v2809 = vperm.slane %v2003, 4
        %v2810 = vlaneseq
        %v2811 = vshrl.u32 %v2810, 7
        %2813 = vset.pattern.permute.xlu0 %v2811
        %2814 = vperm.xlu0 %2813, %v2809
        %v2815 = vpop.permute.xlu0 %2814
        %v2816 = vlaneseq
        %v2817 = vshrl.u32 %v2816, 7
        %v2818 = vadd.s32 %v2817, 8
        %2819 = vset.pattern.permute.xlu0 %v2818
        %2820 = vperm.xlu0 %2819, %v2809
        %v2821 = vpop.permute.xlu0 %2820
        %v2822 = vperm.slane %v2003, 5
        %v2823 = vlaneseq
        %v2824 = vshrl.u32 %v2823, 7
        %2826 = vset.pattern.permute.xlu0 %v2824
        %2827 = vperm.xlu0 %2826, %v2822
        %v2828 = vpop.permute.xlu0 %2827
        %v2829 = vlaneseq
        %v2830 = vshrl.u32 %v2829, 7
        %v2831 = vadd.s32 %v2830, 8
        %2832 = vset.pattern.permute.xlu0 %v2831
        %2833 = vperm.xlu0 %2832, %v2822
        %v2834 = vpop.permute.xlu0 %2833
        %v2835 = vperm.slane %v2003, 6
        %v2836 = vlaneseq
        %v2837 = vshrl.u32 %v2836, 7
        %2839 = vset.pattern.permute.xlu0 %v2837
        %2840 = vperm.xlu0 %2839, %v2835
        %v2841 = vpop.permute.xlu0 %2840
        %v2842 = vlaneseq
        %v2843 = vshrl.u32 %v2842, 7
        %v2844 = vadd.s32 %v2843, 8
        %2845 = vset.pattern.permute.xlu0 %v2844
        %2846 = vperm.xlu0 %2845, %v2835
        %v2847 = vpop.permute.xlu0 %2846
        %v2848 = vperm.slane %v2003, 7
        %v2849 = vlaneseq
        %v2850 = vshrl.u32 %v2849, 7
        %2852 = vset.pattern.permute.xlu0 %v2850
        %2853 = vperm.xlu0 %2852, %v2848
        %v2854 = vpop.permute.xlu0 %2853
        %v2855 = vlaneseq
        %v2856 = vshrl.u32 %v2855, 7
        %v2857 = vadd.s32 %v2856, 8
        %2858 = vset.pattern.permute.xlu0 %v2857
        %2859 = vperm.xlu0 %2858, %v2848
        %v2860 = vpop.permute.xlu0 %2859
        %v2861 = vperm.slane %v2004, 0
        %v2862 = vlaneseq
        %v2863 = vshrl.u32 %v2862, 7
        %2865 = vset.pattern.permute.xlu0 %v2863
        %2866 = vperm.xlu0 %2865, %v2861
        %v2867 = vpop.permute.xlu0 %2866
        %v2868 = vlaneseq
        %v2869 = vshrl.u32 %v2868, 7
        %v2870 = vadd.s32 %v2869, 8
        %2871 = vset.pattern.permute.xlu0 %v2870
        %2872 = vperm.xlu0 %2871, %v2861
        %v2873 = vpop.permute.xlu0 %2872
        %v2874 = vperm.slane %v2004, 1
        %v2875 = vlaneseq
        %v2876 = vshrl.u32 %v2875, 7
        %2878 = vset.pattern.permute.xlu0 %v2876
        %2879 = vperm.xlu0 %2878, %v2874
        %v2880 = vpop.permute.xlu0 %2879
        %v2881 = vlaneseq
        %v2882 = vshrl.u32 %v2881, 7
        %v2883 = vadd.s32 %v2882, 8
        %2884 = vset.pattern.permute.xlu0 %v2883
        %2885 = vperm.xlu0 %2884, %v2874
        %v2886 = vpop.permute.xlu0 %2885
        %v2887 = vperm.slane %v2004, 2
        %v2888 = vlaneseq
        %v2889 = vshrl.u32 %v2888, 7
        %2891 = vset.pattern.permute.xlu0 %v2889
        %2892 = vperm.xlu0 %2891, %v2887
        %v2893 = vpop.permute.xlu0 %2892
        %v2894 = vlaneseq
        %v2895 = vshrl.u32 %v2894, 7
        %v2896 = vadd.s32 %v2895, 8
        %2897 = vset.pattern.permute.xlu0 %v2896
        %2898 = vperm.xlu0 %2897, %v2887
        %v2899 = vpop.permute.xlu0 %2898
        %v2900 = vperm.slane %v2004, 3
        %v2901 = vlaneseq
        %v2902 = vshrl.u32 %v2901, 7
        %2904 = vset.pattern.permute.xlu0 %v2902
        %2905 = vperm.xlu0 %2904, %v2900
        %v2906 = vpop.permute.xlu0 %2905
        %v2907 = vlaneseq
        %v2908 = vshrl.u32 %v2907, 7
        %v2909 = vadd.s32 %v2908, 8
        %2910 = vset.pattern.permute.xlu0 %v2909
        %2911 = vperm.xlu0 %2910, %v2900
        %v2912 = vpop.permute.xlu0 %2911
        %v2913 = vperm.slane %v2004, 4
        %v2914 = vlaneseq
        %v2915 = vshrl.u32 %v2914, 7
        %2917 = vset.pattern.permute.xlu0 %v2915
        %2918 = vperm.xlu0 %2917, %v2913
        %v2919 = vpop.permute.xlu0 %2918
        %v2920 = vlaneseq
        %v2921 = vshrl.u32 %v2920, 7
        %v2922 = vadd.s32 %v2921, 8
        %2923 = vset.pattern.permute.xlu0 %v2922
        %2924 = vperm.xlu0 %2923, %v2913
        %v2925 = vpop.permute.xlu0 %2924
        %v2926 = vperm.slane %v2004, 5
        %v2927 = vlaneseq
        %v2928 = vshrl.u32 %v2927, 7
        %2930 = vset.pattern.permute.xlu0 %v2928
        %2931 = vperm.xlu0 %2930, %v2926
        %v2932 = vpop.permute.xlu0 %2931
        %v2933 = vlaneseq
        %v2934 = vshrl.u32 %v2933, 7
        %v2935 = vadd.s32 %v2934, 8
        %2936 = vset.pattern.permute.xlu0 %v2935
        %2937 = vperm.xlu0 %2936, %v2926
        %v2938 = vpop.permute.xlu0 %2937
        %v2939 = vperm.slane %v2004, 6
        %v2940 = vlaneseq
        %v2941 = vshrl.u32 %v2940, 7
        %2943 = vset.pattern.permute.xlu0 %v2941
        %2944 = vperm.xlu0 %2943, %v2939
        %v2945 = vpop.permute.xlu0 %2944
        %v2946 = vlaneseq
        %v2947 = vshrl.u32 %v2946, 7
        %v2948 = vadd.s32 %v2947, 8
        %2949 = vset.pattern.permute.xlu0 %v2948
        %2950 = vperm.xlu0 %2949, %v2939
        %v2951 = vpop.permute.xlu0 %2950
        %v2952 = vperm.slane %v2004, 7
        %v2953 = vlaneseq
        %v2954 = vshrl.u32 %v2953, 7
        %2956 = vset.pattern.permute.xlu0 %v2954
        %2957 = vperm.xlu0 %2956, %v2952
        %v2958 = vpop.permute.xlu0 %2957
        %v2959 = vlaneseq
        %v2960 = vshrl.u32 %v2959, 7
        %v2961 = vadd.s32 %v2960, 8
        %2962 = vset.pattern.permute.xlu0 %v2961
        %2963 = vperm.xlu0 %2962, %v2952
        %v2964 = vpop.permute.xlu0 %2963
        %v2965 = vmul.f32 %v2005, %v2139
        %v2966 = vmul.f32 %v2006, %v2145
        %v2967 = vmul.f32 %v2007, %v2152
        %v2968 = vmul.f32 %v2008, %v2158
        %v2969 = vmul.f32 %v2009, %v2165
        %v2970 = vmul.f32 %v2010, %v2171
        %v2971 = vmul.f32 %v2011, %v2178
        %v2972 = vmul.f32 %v2012, %v2184
        %v2973 = vmul.f32 %v2013, %v2191
        %v2974 = vmul.f32 %v2014, %v2197
        %v2975 = vmul.f32 %v2015, %v2204
        %v2976 = vmul.f32 %v2016, %v2210
        %v2977 = vmul.f32 %v2017, %v2217
        %v2978 = vmul.f32 %v2018, %v2223
        %v2979 = vmul.f32 %v2019, %v2230
        %v2980 = vmul.f32 %v2020, %v2236
        %v2981 = vmul.f32 %v2021, %v2243
        %v2982 = vmul.f32 %v2022, %v2249
        %v2983 = vmul.f32 %v2023, %v2256
        %v2984 = vmul.f32 %v2024, %v2262
        %v2985 = vmul.f32 %v2025, %v2269
        %v2986 = vmul.f32 %v2026, %v2275
        %v2987 = vmul.f32 %v2027, %v2282
        %v2988 = vmul.f32 %v2028, %v2288
        %v2989 = vmul.f32 %v2029, %v2295
        %v2990 = vmul.f32 %v2030, %v2301
        %v2991 = vmul.f32 %v2031, %v2308
        %v2992 = vmul.f32 %v2032, %v2314
        %v2993 = vmul.f32 %v2033, %v2321
        %v2994 = vmul.f32 %v2034, %v2327
        %v2995 = vmul.f32 %v2035, %v2334
        %v2996 = vmul.f32 %v2036, %v2340
        %v2997 = vmul.f32 %v2037, %v2347
        %v2998 = vmul.f32 %v2038, %v2353
        %v2999 = vmul.f32 %v2039, %v2360
        %v3000 = vmul.f32 %v2040, %v2366
        %v3001 = vmul.f32 %v2041, %v2373
        %v3002 = vmul.f32 %v2042, %v2379
        %v3003 = vmul.f32 %v2043, %v2386
        %v3004 = vmul.f32 %v2044, %v2392
        %v3005 = vmul.f32 %v2045, %v2399
        %v3006 = vmul.f32 %v2046, %v2405
        %v3007 = vmul.f32 %v2047, %v2412
        %v3008 = vmul.f32 %v2048, %v2418
        %v3009 = vmul.f32 %v2049, %v2425
        %v3010 = vmul.f32 %v2050, %v2431
        %v3011 = vmul.f32 %v2051, %v2438
        %v3012 = vmul.f32 %v2052, %v2444
        %v3013 = vmul.f32 %v2053, %v2451
        %v3014 = vmul.f32 %v2054, %v2457
        %v3015 = vmul.f32 %v2055, %v2464
        %v3016 = vmul.f32 %v2056, %v2470
        %v3017 = vmul.f32 %v2057, %v2477
        %v3018 = vmul.f32 %v2058, %v2483
        %v3019 = vmul.f32 %v2059, %v2490
        %v3020 = vmul.f32 %v2060, %v2496
        %v3021 = vmul.f32 %v2061, %v2503
        %v3022 = vmul.f32 %v2062, %v2509
        %v3023 = vmul.f32 %v2063, %v2516
        %v3024 = vmul.f32 %v2064, %v2522
        %v3025 = vmul.f32 %v2065, %v2529
        %v3026 = vmul.f32 %v2066, %v2535
        %v3027 = vmul.f32 %v2067, %v2542
        %v3028 = vmul.f32 %v2068, %v2548
        %v3029 = vmul.f32 %v2069, %v2555
        %v3030 = vmul.f32 %v2070, %v2561
        %v3031 = vmul.f32 %v2071, %v2568
        %v3032 = vmul.f32 %v2072, %v2574
        %v3033 = vmul.f32 %v2073, %v2581
        %v3034 = vmul.f32 %v2074, %v2587
        %v3035 = vmul.f32 %v2075, %v2594
        %v3036 = vmul.f32 %v2076, %v2600
        %v3037 = vmul.f32 %v2077, %v2607
        %v3038 = vmul.f32 %v2078, %v2613
        %v3039 = vmul.f32 %v2079, %v2620
        %v3040 = vmul.f32 %v2080, %v2626
        %v3041 = vmul.f32 %v2081, %v2633
        %v3042 = vmul.f32 %v2082, %v2639
        %v3043 = vmul.f32 %v2083, %v2646
        %v3044 = vmul.f32 %v2084, %v2652
        %v3045 = vmul.f32 %v2085, %v2659
        %v3046 = vmul.f32 %v2086, %v2665
        %v3047 = vmul.f32 %v2087, %v2672
        %v3048 = vmul.f32 %v2088, %v2678
        %v3049 = vmul.f32 %v2089, %v2685
        %v3050 = vmul.f32 %v2090, %v2691
        %v3051 = vmul.f32 %v2091, %v2698
        %v3052 = vmul.f32 %v2092, %v2704
        %v3053 = vmul.f32 %v2093, %v2711
        %v3054 = vmul.f32 %v2094, %v2717
        %v3055 = vmul.f32 %v2095, %v2724
        %v3056 = vmul.f32 %v2096, %v2730
        %v3057 = vmul.f32 %v2097, %v2737
        %v3058 = vmul.f32 %v2098, %v2743
        %v3059 = vmul.f32 %v2099, %v2750
        %v3060 = vmul.f32 %v2100, %v2756
        %v3061 = vmul.f32 %v2101, %v2763
        %v3062 = vmul.f32 %v2102, %v2769
        %v3063 = vmul.f32 %v2103, %v2776
        %v3064 = vmul.f32 %v2104, %v2782
        %v3065 = vmul.f32 %v2105, %v2789
        %v3066 = vmul.f32 %v2106, %v2795
        %v3067 = vmul.f32 %v2107, %v2802
        %v3068 = vmul.f32 %v2108, %v2808
        %v3069 = vmul.f32 %v2109, %v2815
        %v3070 = vmul.f32 %v2110, %v2821
        %v3071 = vmul.f32 %v2111, %v2828
        %v3072 = vmul.f32 %v2112, %v2834
        %v3073 = vmul.f32 %v2113, %v2841
        %v3074 = vmul.f32 %v2114, %v2847
        %v3075 = vmul.f32 %v2115, %v2854
        %v3076 = vmul.f32 %v2116, %v2860
        %v3077 = vmul.f32 %v2117, %v2867
        %v3078 = vmul.f32 %v2118, %v2873
        %v3079 = vmul.f32 %v2119, %v2880
        %v3080 = vmul.f32 %v2120, %v2886
        %v3081 = vmul.f32 %v2121, %v2893
        %v3082 = vmul.f32 %v2122, %v2899
        %v3083 = vmul.f32 %v2123, %v2906
        %v3084 = vmul.f32 %v2124, %v2912
        %v3085 = vmul.f32 %v2125, %v2919
        %v3086 = vmul.f32 %v2126, %v2925
        %v3087 = vmul.f32 %v2127, %v2932
        %v3088 = vmul.f32 %v2128, %v2938
        %v3089 = vmul.f32 %v2129, %v2945
        %v3090 = vmul.f32 %v2130, %v2951
        %v3091 = vmul.f32 %v2131, %v2958
        %v3092 = vmul.f32 %v2132, %v2964
        %vm3093 = vcmask 523264
        %3094 = vst.msk [vmem:[%s400] sm:$0xff] %vm3093, %v2965
        %3095 = vst.msk [vmem:[%s400 + $0x8] sm:$0xff] %vm3093, %v2966
        %3096 = vst.msk [vmem:[%s400 + $0x10] sm:$0xff] %vm3093, %v2967
        %3097 = vst.msk [vmem:[%s400 + $0x18] sm:$0xff] %vm3093, %v2968
        %3098 = vst.msk [vmem:[%s400 + $0x20] sm:$0xff] %vm3093, %v2969
        %3099 = vst.msk [vmem:[%s400 + $0x28] sm:$0xff] %vm3093, %v2970
        %3100 = vst.msk [vmem:[%s400 + $0x30] sm:$0xff] %vm3093, %v2971
        %3101 = vst.msk [vmem:[%s400 + $0x38] sm:$0xff] %vm3093, %v2972
        %3102 = vst.msk [vmem:[%s400 + $0x40] sm:$0xff] %vm3093, %v2973
        %3103 = vst.msk [vmem:[%s400 + $0x48] sm:$0xff] %vm3093, %v2974
        %3104 = vst.msk [vmem:[%s400 + $0x50] sm:$0xff] %vm3093, %v2975
        %3105 = vst.msk [vmem:[%s400 + $0x58] sm:$0xff] %vm3093, %v2976
        %3106 = vst.msk [vmem:[%s400 + $0x60] sm:$0xff] %vm3093, %v2977
        %3107 = vst.msk [vmem:[%s400 + $0x68] sm:$0xff] %vm3093, %v2978
        %3108 = vst.msk [vmem:[%s400 + $0x70] sm:$0xff] %vm3093, %v2979
        %3109 = vst.msk [vmem:[%s400 + $0x78] sm:$0xff] %vm3093, %v2980
        %3110 = vst.msk [vmem:[%s400 + $0x80] sm:$0xff] %vm3093, %v2981
        %3111 = vst.msk [vmem:[%s400 + $0x88] sm:$0xff] %vm3093, %v2982
        %3112 = vst.msk [vmem:[%s400 + $0x90] sm:$0xff] %vm3093, %v2983
        %3113 = vst.msk [vmem:[%s400 + $0x98] sm:$0xff] %vm3093, %v2984
        %3114 = vst.msk [vmem:[%s400 + $0xa0] sm:$0xff] %vm3093, %v2985
        %3115 = vst.msk [vmem:[%s400 + $0xa8] sm:$0xff] %vm3093, %v2986
        %3116 = vst.msk [vmem:[%s400 + $0xb0] sm:$0xff] %vm3093, %v2987
        %3117 = vst.msk [vmem:[%s400 + $0xb8] sm:$0xff] %vm3093, %v2988
        %3118 = vst.msk [vmem:[%s400 + $0xc0] sm:$0xff] %vm3093, %v2989
        %3119 = vst.msk [vmem:[%s400 + $0xc8] sm:$0xff] %vm3093, %v2990
        %3120 = vst.msk [vmem:[%s400 + $0xd0] sm:$0xff] %vm3093, %v2991
        %3121 = vst.msk [vmem:[%s400 + $0xd8] sm:$0xff] %vm3093, %v2992
        %3122 = vst.msk [vmem:[%s400 + $0xe0] sm:$0xff] %vm3093, %v2993
        %3123 = vst.msk [vmem:[%s400 + $0xe8] sm:$0xff] %vm3093, %v2994
        %3124 = vst.msk [vmem:[%s400 + $0xf0] sm:$0xff] %vm3093, %v2995
        %3125 = vst.msk [vmem:[%s400 + $0xf8] sm:$0xff] %vm3093, %v2996
        %3126 = vst.msk [vmem:[%s400 + $0x100] sm:$0xff] %vm3093, %v2997
        %3127 = vst.msk [vmem:[%s400 + $0x108] sm:$0xff] %vm3093, %v2998
        %3128 = vst.msk [vmem:[%s400 + $0x110] sm:$0xff] %vm3093, %v2999
        %3129 = vst.msk [vmem:[%s400 + $0x118] sm:$0xff] %vm3093, %v3000
        %3130 = vst.msk [vmem:[%s400 + $0x120] sm:$0xff] %vm3093, %v3001
        %3131 = vst.msk [vmem:[%s400 + $0x128] sm:$0xff] %vm3093, %v3002
        %3132 = vst.msk [vmem:[%s400 + $0x130] sm:$0xff] %vm3093, %v3003
        %3133 = vst.msk [vmem:[%s400 + $0x138] sm:$0xff] %vm3093, %v3004
        %3134 = vst.msk [vmem:[%s400 + $0x140] sm:$0xff] %vm3093, %v3005
        %3135 = vst.msk [vmem:[%s400 + $0x148] sm:$0xff] %vm3093, %v3006
        %3136 = vst.msk [vmem:[%s400 + $0x150] sm:$0xff] %vm3093, %v3007
        %3137 = vst.msk [vmem:[%s400 + $0x158] sm:$0xff] %vm3093, %v3008
        %3138 = vst.msk [vmem:[%s400 + $0x160] sm:$0xff] %vm3093, %v3009
        %3139 = vst.msk [vmem:[%s400 + $0x168] sm:$0xff] %vm3093, %v3010
        %3140 = vst.msk [vmem:[%s400 + $0x170] sm:$0xff] %vm3093, %v3011
        %3141 = vst.msk [vmem:[%s400 + $0x178] sm:$0xff] %vm3093, %v3012
        %3142 = vst.msk [vmem:[%s400 + $0x180] sm:$0xff] %vm3093, %v3013
        %3143 = vst.msk [vmem:[%s400 + $0x188] sm:$0xff] %vm3093, %v3014
        %3144 = vst.msk [vmem:[%s400 + $0x190] sm:$0xff] %vm3093, %v3015
        %3145 = vst.msk [vmem:[%s400 + $0x198] sm:$0xff] %vm3093, %v3016
        %3146 = vst.msk [vmem:[%s400 + $0x1a0] sm:$0xff] %vm3093, %v3017
        %3147 = vst.msk [vmem:[%s400 + $0x1a8] sm:$0xff] %vm3093, %v3018
        %3148 = vst.msk [vmem:[%s400 + $0x1b0] sm:$0xff] %vm3093, %v3019
        %3149 = vst.msk [vmem:[%s400 + $0x1b8] sm:$0xff] %vm3093, %v3020
        %3150 = vst.msk [vmem:[%s400 + $0x1c0] sm:$0xff] %vm3093, %v3021
        %3151 = vst.msk [vmem:[%s400 + $0x1c8] sm:$0xff] %vm3093, %v3022
        %3152 = vst.msk [vmem:[%s400 + $0x1d0] sm:$0xff] %vm3093, %v3023
        %3153 = vst.msk [vmem:[%s400 + $0x1d8] sm:$0xff] %vm3093, %v3024
        %3154 = vst.msk [vmem:[%s400 + $0x1e0] sm:$0xff] %vm3093, %v3025
        %3155 = vst.msk [vmem:[%s400 + $0x1e8] sm:$0xff] %vm3093, %v3026
        %3156 = vst.msk [vmem:[%s400 + $0x1f0] sm:$0xff] %vm3093, %v3027
        %3157 = vst.msk [vmem:[%s400 + $0x1f8] sm:$0xff] %vm3093, %v3028
        %3158 = vst.msk [vmem:[%s400 + $0x200] sm:$0xff] %vm3093, %v3029
        %3159 = vst.msk [vmem:[%s400 + $0x208] sm:$0xff] %vm3093, %v3030
        %3160 = vst.msk [vmem:[%s400 + $0x210] sm:$0xff] %vm3093, %v3031
        %3161 = vst.msk [vmem:[%s400 + $0x218] sm:$0xff] %vm3093, %v3032
        %3162 = vst.msk [vmem:[%s400 + $0x220] sm:$0xff] %vm3093, %v3033
        %3163 = vst.msk [vmem:[%s400 + $0x228] sm:$0xff] %vm3093, %v3034
        %3164 = vst.msk [vmem:[%s400 + $0x230] sm:$0xff] %vm3093, %v3035
        %3165 = vst.msk [vmem:[%s400 + $0x238] sm:$0xff] %vm3093, %v3036
        %3166 = vst.msk [vmem:[%s400 + $0x240] sm:$0xff] %vm3093, %v3037
        %3167 = vst.msk [vmem:[%s400 + $0x248] sm:$0xff] %vm3093, %v3038
        %3168 = vst.msk [vmem:[%s400 + $0x250] sm:$0xff] %vm3093, %v3039
        %3169 = vst.msk [vmem:[%s400 + $0x258] sm:$0xff] %vm3093, %v3040
        %3170 = vst.msk [vmem:[%s400 + $0x260] sm:$0xff] %vm3093, %v3041
        %3171 = vst.msk [vmem:[%s400 + $0x268] sm:$0xff] %vm3093, %v3042
        %3172 = vst.msk [vmem:[%s400 + $0x270] sm:$0xff] %vm3093, %v3043
        %3173 = vst.msk [vmem:[%s400 + $0x278] sm:$0xff] %vm3093, %v3044
        %3174 = vst.msk [vmem:[%s400 + $0x280] sm:$0xff] %vm3093, %v3045
        %3175 = vst.msk [vmem:[%s400 + $0x288] sm:$0xff] %vm3093, %v3046
        %3176 = vst.msk [vmem:[%s400 + $0x290] sm:$0xff] %vm3093, %v3047
        %3177 = vst.msk [vmem:[%s400 + $0x298] sm:$0xff] %vm3093, %v3048
        %3178 = vst.msk [vmem:[%s400 + $0x2a0] sm:$0xff] %vm3093, %v3049
        %3179 = vst.msk [vmem:[%s400 + $0x2a8] sm:$0xff] %vm3093, %v3050
        %3180 = vst.msk [vmem:[%s400 + $0x2b0] sm:$0xff] %vm3093, %v3051
        %3181 = vst.msk [vmem:[%s400 + $0x2b8] sm:$0xff] %vm3093, %v3052
        %3182 = vst.msk [vmem:[%s400 + $0x2c0] sm:$0xff] %vm3093, %v3053
        %3183 = vst.msk [vmem:[%s400 + $0x2c8] sm:$0xff] %vm3093, %v3054
        %3184 = vst.msk [vmem:[%s400 + $0x2d0] sm:$0xff] %vm3093, %v3055
        %3185 = vst.msk [vmem:[%s400 + $0x2d8] sm:$0xff] %vm3093, %v3056
        %3186 = vst.msk [vmem:[%s400 + $0x2e0] sm:$0xff] %vm3093, %v3057
        %3187 = vst.msk [vmem:[%s400 + $0x2e8] sm:$0xff] %vm3093, %v3058
        %3188 = vst.msk [vmem:[%s400 + $0x2f0] sm:$0xff] %vm3093, %v3059
        %3189 = vst.msk [vmem:[%s400 + $0x2f8] sm:$0xff] %vm3093, %v3060
        %3190 = vst.msk [vmem:[%s400 + $0x300] sm:$0xff] %vm3093, %v3061
        %3191 = vst.msk [vmem:[%s400 + $0x308] sm:$0xff] %vm3093, %v3062
        %3192 = vst.msk [vmem:[%s400 + $0x310] sm:$0xff] %vm3093, %v3063
        %3193 = vst.msk [vmem:[%s400 + $0x318] sm:$0xff] %vm3093, %v3064
        %3194 = vst.msk [vmem:[%s400 + $0x320] sm:$0xff] %vm3093, %v3065
        %3195 = vst.msk [vmem:[%s400 + $0x328] sm:$0xff] %vm3093, %v3066
        %3196 = vst.msk [vmem:[%s400 + $0x330] sm:$0xff] %vm3093, %v3067
        %3197 = vst.msk [vmem:[%s400 + $0x338] sm:$0xff] %vm3093, %v3068
        %3198 = vst.msk [vmem:[%s400 + $0x340] sm:$0xff] %vm3093, %v3069
        %3199 = vst.msk [vmem:[%s400 + $0x348] sm:$0xff] %vm3093, %v3070
        %3200 = vst.msk [vmem:[%s400 + $0x350] sm:$0xff] %vm3093, %v3071
        %3201 = vst.msk [vmem:[%s400 + $0x358] sm:$0xff] %vm3093, %v3072
        %3202 = vst.msk [vmem:[%s400 + $0x360] sm:$0xff] %vm3093, %v3073
        %3203 = vst.msk [vmem:[%s400 + $0x368] sm:$0xff] %vm3093, %v3074
        %3204 = vst.msk [vmem:[%s400 + $0x370] sm:$0xff] %vm3093, %v3075
        %3205 = vst.msk [vmem:[%s400 + $0x378] sm:$0xff] %vm3093, %v3076
        %3206 = vst.msk [vmem:[%s400 + $0x380] sm:$0xff] %vm3093, %v3077
        %3207 = vst.msk [vmem:[%s400 + $0x388] sm:$0xff] %vm3093, %v3078
        %3208 = vst.msk [vmem:[%s400 + $0x390] sm:$0xff] %vm3093, %v3079
        %3209 = vst.msk [vmem:[%s400 + $0x398] sm:$0xff] %vm3093, %v3080
        %3210 = vst.msk [vmem:[%s400 + $0x3a0] sm:$0xff] %vm3093, %v3081
        %3211 = vst.msk [vmem:[%s400 + $0x3a8] sm:$0xff] %vm3093, %v3082
        %3212 = vst.msk [vmem:[%s400 + $0x3b0] sm:$0xff] %vm3093, %v3083
        %3213 = vst.msk [vmem:[%s400 + $0x3b8] sm:$0xff] %vm3093, %v3084
        %3214 = vst.msk [vmem:[%s400 + $0x3c0] sm:$0xff] %vm3093, %v3085
        %3215 = vst.msk [vmem:[%s400 + $0x3c8] sm:$0xff] %vm3093, %v3086
        %3216 = vst.msk [vmem:[%s400 + $0x3d0] sm:$0xff] %vm3093, %v3087
        %3217 = vst.msk [vmem:[%s400 + $0x3d8] sm:$0xff] %vm3093, %v3088
        %3218 = vst.msk [vmem:[%s400 + $0x3e0] sm:$0xff] %vm3093, %v3089
        %3219 = vst.msk [vmem:[%s400 + $0x3e8] sm:$0xff] %vm3093, %v3090
        %3220 = vst.msk [vmem:[%s400 + $0x3f0] sm:$0xff] %vm3093, %v3091
        %3221 = vst.msk [vmem:[%s400 + $0x3f8] sm:$0xff] %vm3093, %v3092
        %vm3222 = vcmp.gt.f32.partialorder %v1869, 0.0
        %vm3223 = vcmp.gt.f32.partialorder %v1870, 0.0
        %vm3224 = vcmp.gt.f32.partialorder %v1871, 0.0
        %vm3225 = vcmp.gt.f32.partialorder %v1872, 0.0
        %vm3226 = vcmp.gt.f32.partialorder %v1873, 0.0
        %vm3227 = vcmp.gt.f32.partialorder %v1874, 0.0
        %vm3228 = vcmp.gt.f32.partialorder %v1875, 0.0
        %vm3229 = vcmp.gt.f32.partialorder %v1876, 0.0
        %vm3230 = vcmp.gt.f32.partialorder %v1877, 0.0
        %vm3231 = vcmp.gt.f32.partialorder %v1878, 0.0
        %vm3232 = vcmp.gt.f32.partialorder %v1879, 0.0
        %vm3233 = vcmp.gt.f32.partialorder %v1880, 0.0
        %vm3234 = vcmp.gt.f32.partialorder %v1881, 0.0
        %vm3235 = vcmp.gt.f32.partialorder %v1882, 0.0
        %vm3236 = vcmp.gt.f32.partialorder %v1883, 0.0
        %vm3237 = vcmp.gt.f32.partialorder %v1884, 0.0
        %vm3238 = vcmp.gt.f32.partialorder %v1885, 0.0
        %vm3239 = vcmp.gt.f32.partialorder %v1886, 0.0
        %vm3240 = vcmp.gt.f32.partialorder %v1887, 0.0
        %vm3241 = vcmp.gt.f32.partialorder %v1888, 0.0
        %vm3242 = vcmp.gt.f32.partialorder %v1889, 0.0
        %vm3243 = vcmp.gt.f32.partialorder %v1890, 0.0
        %vm3244 = vcmp.gt.f32.partialorder %v1891, 0.0
        %vm3245 = vcmp.gt.f32.partialorder %v1892, 0.0
        %vm3246 = vcmp.gt.f32.partialorder %v1893, 0.0
        %vm3247 = vcmp.gt.f32.partialorder %v1894, 0.0
        %vm3248 = vcmp.gt.f32.partialorder %v1895, 0.0
        %vm3249 = vcmp.gt.f32.partialorder %v1896, 0.0
        %vm3250 = vcmp.gt.f32.partialorder %v1897, 0.0
        %vm3251 = vcmp.gt.f32.partialorder %v1898, 0.0
        %vm3252 = vcmp.gt.f32.partialorder %v1899, 0.0
        %vm3253 = vcmp.gt.f32.partialorder %v1900, 0.0
        %vm3254 = vcmp.gt.f32.partialorder %v1901, 0.0
        %vm3255 = vcmp.gt.f32.partialorder %v1902, 0.0
        %vm3256 = vcmp.gt.f32.partialorder %v1903, 0.0
        %vm3257 = vcmp.gt.f32.partialorder %v1904, 0.0
        %vm3258 = vcmp.gt.f32.partialorder %v1905, 0.0
        %vm3259 = vcmp.gt.f32.partialorder %v1906, 0.0
        %vm3260 = vcmp.gt.f32.partialorder %v1907, 0.0
        %vm3261 = vcmp.gt.f32.partialorder %v1908, 0.0
        %vm3262 = vcmp.gt.f32.partialorder %v1909, 0.0
        %vm3263 = vcmp.gt.f32.partialorder %v1910, 0.0
        %vm3264 = vcmp.gt.f32.partialorder %v1911, 0.0
        %vm3265 = vcmp.gt.f32.partialorder %v1912, 0.0
        %vm3266 = vcmp.gt.f32.partialorder %v1913, 0.0
        %vm3267 = vcmp.gt.f32.partialorder %v1914, 0.0
        %vm3268 = vcmp.gt.f32.partialorder %v1915, 0.0
        %vm3269 = vcmp.gt.f32.partialorder %v1916, 0.0
        %vm3270 = vcmp.gt.f32.partialorder %v1917, 0.0
        %vm3271 = vcmp.gt.f32.partialorder %v1918, 0.0
        %vm3272 = vcmp.gt.f32.partialorder %v1919, 0.0
        %vm3273 = vcmp.gt.f32.partialorder %v1920, 0.0
        %vm3274 = vcmp.gt.f32.partialorder %v1921, 0.0
        %vm3275 = vcmp.gt.f32.partialorder %v1922, 0.0
        %vm3276 = vcmp.gt.f32.partialorder %v1923, 0.0
        %vm3277 = vcmp.gt.f32.partialorder %v1924, 0.0
        %vm3278 = vcmp.gt.f32.partialorder %v1925, 0.0
        %vm3279 = vcmp.gt.f32.partialorder %v1926, 0.0
        %vm3280 = vcmp.gt.f32.partialorder %v1927, 0.0
        %vm3281 = vcmp.gt.f32.partialorder %v1928, 0.0
        %vm3282 = vcmp.gt.f32.partialorder %v1929, 0.0
        %vm3283 = vcmp.gt.f32.partialorder %v1930, 0.0
        %vm3284 = vcmp.gt.f32.partialorder %v1931, 0.0
        %vm3285 = vcmp.gt.f32.partialorder %v1932, 0.0
        %vm3286 = vcmp.gt.f32.partialorder %v1933, 0.0
        %vm3287 = vcmp.gt.f32.partialorder %v1934, 0.0
        %vm3288 = vcmp.gt.f32.partialorder %v1935, 0.0
        %vm3289 = vcmp.gt.f32.partialorder %v1936, 0.0
        %vm3290 = vcmp.gt.f32.partialorder %v1937, 0.0
        %vm3291 = vcmp.gt.f32.partialorder %v1938, 0.0
        %vm3292 = vcmp.gt.f32.partialorder %v1939, 0.0
        %vm3293 = vcmp.gt.f32.partialorder %v1940, 0.0
        %vm3294 = vcmp.gt.f32.partialorder %v1941, 0.0
        %vm3295 = vcmp.gt.f32.partialorder %v1942, 0.0
        %vm3296 = vcmp.gt.f32.partialorder %v1943, 0.0
        %vm3297 = vcmp.gt.f32.partialorder %v1944, 0.0
        %vm3298 = vcmp.gt.f32.partialorder %v1945, 0.0
        %vm3299 = vcmp.gt.f32.partialorder %v1946, 0.0
        %vm3300 = vcmp.gt.f32.partialorder %v1947, 0.0
        %vm3301 = vcmp.gt.f32.partialorder %v1948, 0.0
        %vm3302 = vcmp.gt.f32.partialorder %v1949, 0.0
        %vm3303 = vcmp.gt.f32.partialorder %v1950, 0.0
        %vm3304 = vcmp.gt.f32.partialorder %v1951, 0.0
        %vm3305 = vcmp.gt.f32.partialorder %v1952, 0.0
        %vm3306 = vcmp.gt.f32.partialorder %v1953, 0.0
        %vm3307 = vcmp.gt.f32.partialorder %v1954, 0.0
        %vm3308 = vcmp.gt.f32.partialorder %v1955, 0.0
        %vm3309 = vcmp.gt.f32.partialorder %v1956, 0.0
        %vm3310 = vcmp.gt.f32.partialorder %v1957, 0.0
        %vm3311 = vcmp.gt.f32.partialorder %v1958, 0.0
        %vm3312 = vcmp.gt.f32.partialorder %v1959, 0.0
        %vm3313 = vcmp.gt.f32.partialorder %v1960, 0.0
        %vm3314 = vcmp.gt.f32.partialorder %v1961, 0.0
        %vm3315 = vcmp.gt.f32.partialorder %v1962, 0.0
        %vm3316 = vcmp.gt.f32.partialorder %v1963, 0.0
        %vm3317 = vcmp.gt.f32.partialorder %v1964, 0.0
        %vm3318 = vcmp.gt.f32.partialorder %v1965, 0.0
        %vm3319 = vcmp.gt.f32.partialorder %v1966, 0.0
        %vm3320 = vcmp.gt.f32.partialorder %v1967, 0.0
        %vm3321 = vcmp.gt.f32.partialorder %v1968, 0.0
        %vm3322 = vcmp.gt.f32.partialorder %v1969, 0.0
        %vm3323 = vcmp.gt.f32.partialorder %v1970, 0.0
        %vm3324 = vcmp.gt.f32.partialorder %v1971, 0.0
        %vm3325 = vcmp.gt.f32.partialorder %v1972, 0.0
        %vm3326 = vcmp.gt.f32.partialorder %v1973, 0.0
        %vm3327 = vcmp.gt.f32.partialorder %v1974, 0.0
        %vm3328 = vcmp.gt.f32.partialorder %v1975, 0.0
        %vm3329 = vcmp.gt.f32.partialorder %v1976, 0.0
        %vm3330 = vcmp.gt.f32.partialorder %v1977, 0.0
        %vm3331 = vcmp.gt.f32.partialorder %v1978, 0.0
        %vm3332 = vcmp.gt.f32.partialorder %v1979, 0.0
        %vm3333 = vcmp.gt.f32.partialorder %v1980, 0.0
        %vm3334 = vcmp.gt.f32.partialorder %v1981, 0.0
        %vm3335 = vcmp.gt.f32.partialorder %v1982, 0.0
        %vm3336 = vcmp.gt.f32.partialorder %v1983, 0.0
        %vm3337 = vcmp.gt.f32.partialorder %v1984, 0.0
        %vm3338 = vcmp.gt.f32.partialorder %v1985, 0.0
        %vm3339 = vcmp.gt.f32.partialorder %v1986, 0.0
        %vm3340 = vcmp.gt.f32.partialorder %v1987, 0.0
        %vm3341 = vcmp.gt.f32.partialorder %v1988, 0.0
        %vm3342 = vcmp.gt.f32.partialorder %v1989, 0.0
        %vm3343 = vcmp.gt.f32.partialorder %v1990, 0.0
        %vm3344 = vcmp.gt.f32.partialorder %v1991, 0.0
        %vm3345 = vcmp.gt.f32.partialorder %v1992, 0.0
        %vm3346 = vcmp.gt.f32.partialorder %v1993, 0.0
        %vm3347 = vcmp.gt.f32.partialorder %v1994, 0.0
        %vm3348 = vcmp.gt.f32.partialorder %v1995, 0.0
        %vm3349 = vcmp.gt.f32.partialorder %v1996, 0.0
        %v3350 = vmul.f32 %v1869, 0.01
        %v3351 = vmul.f32 %v1870, 0.01
        %v3352 = vmul.f32 %v1871, 0.01
        %v3353 = vmul.f32 %v1872, 0.01
        %v3354 = vmul.f32 %v1873, 0.01
        %v3355 = vmul.f32 %v1874, 0.01
        %v3356 = vmul.f32 %v1875, 0.01
        %v3357 = vmul.f32 %v1876, 0.01
        %v3358 = vmul.f32 %v1877, 0.01
        %v3359 = vmul.f32 %v1878, 0.01
        %v3360 = vmul.f32 %v1879, 0.01
        %v3361 = vmul.f32 %v1880, 0.01
        %v3362 = vmul.f32 %v1881, 0.01
        %v3363 = vmul.f32 %v1882, 0.01
        %v3364 = vmul.f32 %v1883, 0.01
        %v3365 = vmul.f32 %v1884, 0.01
        %v3366 = vmul.f32 %v1885, 0.01
        %v3367 = vmul.f32 %v1886, 0.01
        %v3368 = vmul.f32 %v1887, 0.01
        %v3369 = vmul.f32 %v1888, 0.01
        %v3370 = vmul.f32 %v1889, 0.01
        %v3371 = vmul.f32 %v1890, 0.01
        %v3372 = vmul.f32 %v1891, 0.01
        %v3373 = vmul.f32 %v1892, 0.01
        %v3374 = vmul.f32 %v1893, 0.01
        %v3375 = vmul.f32 %v1894, 0.01
        %v3376 = vmul.f32 %v1895, 0.01
        %v3377 = vmul.f32 %v1896, 0.01
        %v3378 = vmul.f32 %v1897, 0.01
        %v3379 = vmul.f32 %v1898, 0.01
        %v3380 = vmul.f32 %v1899, 0.01
        %v3381 = vmul.f32 %v1900, 0.01
        %v3382 = vmul.f32 %v1901, 0.01
        %v3383 = vmul.f32 %v1902, 0.01
        %v3384 = vmul.f32 %v1903, 0.01
        %v3385 = vmul.f32 %v1904, 0.01
        %v3386 = vmul.f32 %v1905, 0.01
        %v3387 = vmul.f32 %v1906, 0.01
        %v3388 = vmul.f32 %v1907, 0.01
        %v3389 = vmul.f32 %v1908, 0.01
        %v3390 = vmul.f32 %v1909, 0.01
        %v3391 = vmul.f32 %v1910, 0.01
        %v3392 = vmul.f32 %v1911, 0.01
        %v3393 = vmul.f32 %v1912, 0.01
        %v3394 = vmul.f32 %v1913, 0.01
        %v3395 = vmul.f32 %v1914, 0.01
        %v3396 = vmul.f32 %v1915, 0.01
        %v3397 = vmul.f32 %v1916, 0.01
        %v3398 = vmul.f32 %v1917, 0.01
        %v3399 = vmul.f32 %v1918, 0.01
        %v3400 = vmul.f32 %v1919, 0.01
        %v3401 = vmul.f32 %v1920, 0.01
        %v3402 = vmul.f32 %v1921, 0.01
        %v3403 = vmul.f32 %v1922, 0.01
        %v3404 = vmul.f32 %v1923, 0.01
        %v3405 = vmul.f32 %v1924, 0.01
        %v3406 = vmul.f32 %v1925, 0.01
        %v3407 = vmul.f32 %v1926, 0.01
        %v3408 = vmul.f32 %v1927, 0.01
        %v3409 = vmul.f32 %v1928, 0.01
        %v3410 = vmul.f32 %v1929, 0.01
        %v3411 = vmul.f32 %v1930, 0.01
        %v3412 = vmul.f32 %v1931, 0.01
        %v3413 = vmul.f32 %v1932, 0.01
        %v3414 = vmul.f32 %v1933, 0.01
        %v3415 = vmul.f32 %v1934, 0.01
        %v3416 = vmul.f32 %v1935, 0.01
        %v3417 = vmul.f32 %v1936, 0.01
        %v3418 = vmul.f32 %v1937, 0.01
        %v3419 = vmul.f32 %v1938, 0.01
        %v3420 = vmul.f32 %v1939, 0.01
        %v3421 = vmul.f32 %v1940, 0.01
        %v3422 = vmul.f32 %v1941, 0.01
        %v3423 = vmul.f32 %v1942, 0.01
        %v3424 = vmul.f32 %v1943, 0.01
        %v3425 = vmul.f32 %v1944, 0.01
        %v3426 = vmul.f32 %v1945, 0.01
        %v3427 = vmul.f32 %v1946, 0.01
        %v3428 = vmul.f32 %v1947, 0.01
        %v3429 = vmul.f32 %v1948, 0.01
        %v3430 = vmul.f32 %v1949, 0.01
        %v3431 = vmul.f32 %v1950, 0.01
        %v3432 = vmul.f32 %v1951, 0.01
        %v3433 = vmul.f32 %v1952, 0.01
        %v3434 = vmul.f32 %v1953, 0.01
        %v3435 = vmul.f32 %v1954, 0.01
        %v3436 = vmul.f32 %v1955, 0.01
        %v3437 = vmul.f32 %v1956, 0.01
        %v3438 = vmul.f32 %v1957, 0.01
        %v3439 = vmul.f32 %v1958, 0.01
        %v3440 = vmul.f32 %v1959, 0.01
        %v3441 = vmul.f32 %v1960, 0.01
        %v3442 = vmul.f32 %v1961, 0.01
        %v3443 = vmul.f32 %v1962, 0.01
        %v3444 = vmul.f32 %v1963, 0.01
        %v3445 = vmul.f32 %v1964, 0.01
        %v3446 = vmul.f32 %v1965, 0.01
        %v3447 = vmul.f32 %v1966, 0.01
        %v3448 = vmul.f32 %v1967, 0.01
        %v3449 = vmul.f32 %v1968, 0.01
        %v3450 = vmul.f32 %v1969, 0.01
        %v3451 = vmul.f32 %v1970, 0.01
        %v3452 = vmul.f32 %v1971, 0.01
        %v3453 = vmul.f32 %v1972, 0.01
        %v3454 = vmul.f32 %v1973, 0.01
        %v3455 = vmul.f32 %v1974, 0.01
        %v3456 = vmul.f32 %v1975, 0.01
        %v3457 = vmul.f32 %v1976, 0.01
        %v3458 = vmul.f32 %v1977, 0.01
        %v3459 = vmul.f32 %v1978, 0.01
        %v3460 = vmul.f32 %v1979, 0.01
        %v3461 = vmul.f32 %v1980, 0.01
        %v3462 = vmul.f32 %v1981, 0.01
        %v3463 = vmul.f32 %v1982, 0.01
        %v3464 = vmul.f32 %v1983, 0.01
        %v3465 = vmul.f32 %v1984, 0.01
        %v3466 = vmul.f32 %v1985, 0.01
        %v3467 = vmul.f32 %v1986, 0.01
        %v3468 = vmul.f32 %v1987, 0.01
        %v3469 = vmul.f32 %v1988, 0.01
        %v3470 = vmul.f32 %v1989, 0.01
        %v3471 = vmul.f32 %v1990, 0.01
        %v3472 = vmul.f32 %v1991, 0.01
        %v3473 = vmul.f32 %v1992, 0.01
        %v3474 = vmul.f32 %v1993, 0.01
        %v3475 = vmul.f32 %v1994, 0.01
        %v3476 = vmul.f32 %v1995, 0.01
        %v3477 = vmul.f32 %v1996, 0.01
        %v3478 = vsel %vm3222, %v1869, %v3350
        %v3479 = vsel %vm3223, %v1870, %v3351
        %v3480 = vsel %vm3224, %v1871, %v3352
        %v3481 = vsel %vm3225, %v1872, %v3353
        %v3482 = vsel %vm3226, %v1873, %v3354
        %v3483 = vsel %vm3227, %v1874, %v3355
        %v3484 = vsel %vm3228, %v1875, %v3356
        %v3485 = vsel %vm3229, %v1876, %v3357
        %v3486 = vsel %vm3230, %v1877, %v3358
        %v3487 = vsel %vm3231, %v1878, %v3359
        %v3488 = vsel %vm3232, %v1879, %v3360
        %v3489 = vsel %vm3233, %v1880, %v3361
        %v3490 = vsel %vm3234, %v1881, %v3362
        %v3491 = vsel %vm3235, %v1882, %v3363
        %v3492 = vsel %vm3236, %v1883, %v3364
        %v3493 = vsel %vm3237, %v1884, %v3365
        %v3494 = vsel %vm3238, %v1885, %v3366
        %v3495 = vsel %vm3239, %v1886, %v3367
        %v3496 = vsel %vm3240, %v1887, %v3368
        %v3497 = vsel %vm3241, %v1888, %v3369
        %v3498 = vsel %vm3242, %v1889, %v3370
        %v3499 = vsel %vm3243, %v1890, %v3371
        %v3500 = vsel %vm3244, %v1891, %v3372
        %v3501 = vsel %vm3245, %v1892, %v3373
        %v3502 = vsel %vm3246, %v1893, %v3374
        %v3503 = vsel %vm3247, %v1894, %v3375
        %v3504 = vsel %vm3248, %v1895, %v3376
        %v3505 = vsel %vm3249, %v1896, %v3377
        %v3506 = vsel %vm3250, %v1897, %v3378
        %v3507 = vsel %vm3251, %v1898, %v3379
        %v3508 = vsel %vm3252, %v1899, %v3380
        %v3509 = vsel %vm3253, %v1900, %v3381
        %v3510 = vsel %vm3254, %v1901, %v3382
        %v3511 = vsel %vm3255, %v1902, %v3383
        %v3512 = vsel %vm3256, %v1903, %v3384
        %v3513 = vsel %vm3257, %v1904, %v3385
        %v3514 = vsel %vm3258, %v1905, %v3386
        %v3515 = vsel %vm3259, %v1906, %v3387
        %v3516 = vsel %vm3260, %v1907, %v3388
        %v3517 = vsel %vm3261, %v1908, %v3389
        %v3518 = vsel %vm3262, %v1909, %v3390
        %v3519 = vsel %vm3263, %v1910, %v3391
        %v3520 = vsel %vm3264, %v1911, %v3392
        %v3521 = vsel %vm3265, %v1912, %v3393
        %v3522 = vsel %vm3266, %v1913, %v3394
        %v3523 = vsel %vm3267, %v1914, %v3395
        %v3524 = vsel %vm3268, %v1915, %v3396
        %v3525 = vsel %vm3269, %v1916, %v3397
        %v3526 = vsel %vm3270, %v1917, %v3398
        %v3527 = vsel %vm3271, %v1918, %v3399
        %v3528 = vsel %vm3272, %v1919, %v3400
        %v3529 = vsel %vm3273, %v1920, %v3401
        %v3530 = vsel %vm3274, %v1921, %v3402
        %v3531 = vsel %vm3275, %v1922, %v3403
        %v3532 = vsel %vm3276, %v1923, %v3404
        %v3533 = vsel %vm3277, %v1924, %v3405
        %v3534 = vsel %vm3278, %v1925, %v3406
        %v3535 = vsel %vm3279, %v1926, %v3407
        %v3536 = vsel %vm3280, %v1927, %v3408
        %v3537 = vsel %vm3281, %v1928, %v3409
        %v3538 = vsel %vm3282, %v1929, %v3410
        %v3539 = vsel %vm3283, %v1930, %v3411
        %v3540 = vsel %vm3284, %v1931, %v3412
        %v3541 = vsel %vm3285, %v1932, %v3413
        %v3542 = vsel %vm3286, %v1933, %v3414
        %v3543 = vsel %vm3287, %v1934, %v3415
        %v3544 = vsel %vm3288, %v1935, %v3416
        %v3545 = vsel %vm3289, %v1936, %v3417
        %v3546 = vsel %vm3290, %v1937, %v3418
        %v3547 = vsel %vm3291, %v1938, %v3419
        %v3548 = vsel %vm3292, %v1939, %v3420
        %v3549 = vsel %vm3293, %v1940, %v3421
        %v3550 = vsel %vm3294, %v1941, %v3422
        %v3551 = vsel %vm3295, %v1942, %v3423
        %v3552 = vsel %vm3296, %v1943, %v3424
        %v3553 = vsel %vm3297, %v1944, %v3425
        %v3554 = vsel %vm3298, %v1945, %v3426
        %v3555 = vsel %vm3299, %v1946, %v3427
        %v3556 = vsel %vm3300, %v1947, %v3428
        %v3557 = vsel %vm3301, %v1948, %v3429
        %v3558 = vsel %vm3302, %v1949, %v3430
        %v3559 = vsel %vm3303, %v1950, %v3431
        %v3560 = vsel %vm3304, %v1951, %v3432
        %v3561 = vsel %vm3305, %v1952, %v3433
        %v3562 = vsel %vm3306, %v1953, %v3434
        %v3563 = vsel %vm3307, %v1954, %v3435
        %v3564 = vsel %vm3308, %v1955, %v3436
        %v3565 = vsel %vm3309, %v1956, %v3437
        %v3566 = vsel %vm3310, %v1957, %v3438
        %v3567 = vsel %vm3311, %v1958, %v3439
        %v3568 = vsel %vm3312, %v1959, %v3440
        %v3569 = vsel %vm3313, %v1960, %v3441
        %v3570 = vsel %vm3314, %v1961, %v3442
        %v3571 = vsel %vm3315, %v1962, %v3443
        %v3572 = vsel %vm3316, %v1963, %v3444
        %v3573 = vsel %vm3317, %v1964, %v3445
        %v3574 = vsel %vm3318, %v1965, %v3446
        %v3575 = vsel %vm3319, %v1966, %v3447
        %v3576 = vsel %vm3320, %v1967, %v3448
        %v3577 = vsel %vm3321, %v1968, %v3449
        %v3578 = vsel %vm3322, %v1969, %v3450
        %v3579 = vsel %vm3323, %v1970, %v3451
        %v3580 = vsel %vm3324, %v1971, %v3452
        %v3581 = vsel %vm3325, %v1972, %v3453
        %v3582 = vsel %vm3326, %v1973, %v3454
        %v3583 = vsel %vm3327, %v1974, %v3455
        %v3584 = vsel %vm3328, %v1975, %v3456
        %v3585 = vsel %vm3329, %v1976, %v3457
        %v3586 = vsel %vm3330, %v1977, %v3458
        %v3587 = vsel %vm3331, %v1978, %v3459
        %v3588 = vsel %vm3332, %v1979, %v3460
        %v3589 = vsel %vm3333, %v1980, %v3461
        %v3590 = vsel %vm3334, %v1981, %v3462
        %v3591 = vsel %vm3335, %v1982, %v3463
        %v3592 = vsel %vm3336, %v1983, %v3464
        %v3593 = vsel %vm3337, %v1984, %v3465
        %v3594 = vsel %vm3338, %v1985, %v3466
        %v3595 = vsel %vm3339, %v1986, %v3467
        %v3596 = vsel %vm3340, %v1987, %v3468
        %v3597 = vsel %vm3341, %v1988, %v3469
        %v3598 = vsel %vm3342, %v1989, %v3470
        %v3599 = vsel %vm3343, %v1990, %v3471
        %v3600 = vsel %vm3344, %v1991, %v3472
        %v3601 = vsel %vm3345, %v1992, %v3473
        %v3602 = vsel %vm3346, %v1993, %v3474
        %v3603 = vsel %vm3347, %v1994, %v3475
        %v3604 = vsel %vm3348, %v1995, %v3476
        %v3605 = vsel %vm3349, %v1996, %v3477
        %v3606 = vpack.c.bf16 %v3479, %v3478
        %v3607 = vpack.c.bf16 %v3481, %v3480
        %v3608 = vpack.c.bf16 %v3483, %v3482
        %v3609 = vpack.c.bf16 %v3485, %v3484
        %v3610 = vpack.c.bf16 %v3487, %v3486
        %v3611 = vpack.c.bf16 %v3489, %v3488
        %v3612 = vpack.c.bf16 %v3491, %v3490
        %v3613 = vpack.c.bf16 %v3493, %v3492
        %v3614 = vpack.c.bf16 %v3495, %v3494
        %v3615 = vpack.c.bf16 %v3497, %v3496
        %v3616 = vpack.c.bf16 %v3499, %v3498
        %v3617 = vpack.c.bf16 %v3501, %v3500
        %v3618 = vpack.c.bf16 %v3503, %v3502
        %v3619 = vpack.c.bf16 %v3505, %v3504
        %v3620 = vpack.c.bf16 %v3507, %v3506
        %v3621 = vpack.c.bf16 %v3509, %v3508
        %v3622 = vpack.c.bf16 %v3511, %v3510
        %v3623 = vpack.c.bf16 %v3513, %v3512
        %v3624 = vpack.c.bf16 %v3515, %v3514
        %v3625 = vpack.c.bf16 %v3517, %v3516
        %v3626 = vpack.c.bf16 %v3519, %v3518
        %v3627 = vpack.c.bf16 %v3521, %v3520
        %v3628 = vpack.c.bf16 %v3523, %v3522
        %v3629 = vpack.c.bf16 %v3525, %v3524
        %v3630 = vpack.c.bf16 %v3527, %v3526
        %v3631 = vpack.c.bf16 %v3529, %v3528
        %v3632 = vpack.c.bf16 %v3531, %v3530
        %v3633 = vpack.c.bf16 %v3533, %v3532
        %v3634 = vpack.c.bf16 %v3535, %v3534
        %v3635 = vpack.c.bf16 %v3537, %v3536
        %v3636 = vpack.c.bf16 %v3539, %v3538
        %v3637 = vpack.c.bf16 %v3541, %v3540
        %v3638 = vpack.c.bf16 %v3543, %v3542
        %v3639 = vpack.c.bf16 %v3545, %v3544
        %v3640 = vpack.c.bf16 %v3547, %v3546
        %v3641 = vpack.c.bf16 %v3549, %v3548
        %v3642 = vpack.c.bf16 %v3551, %v3550
        %v3643 = vpack.c.bf16 %v3553, %v3552
        %v3644 = vpack.c.bf16 %v3555, %v3554
        %v3645 = vpack.c.bf16 %v3557, %v3556
        %v3646 = vpack.c.bf16 %v3559, %v3558
        %v3647 = vpack.c.bf16 %v3561, %v3560
        %v3648 = vpack.c.bf16 %v3563, %v3562
        %v3649 = vpack.c.bf16 %v3565, %v3564
        %v3650 = vpack.c.bf16 %v3567, %v3566
        %v3651 = vpack.c.bf16 %v3569, %v3568
        %v3652 = vpack.c.bf16 %v3571, %v3570
        %v3653 = vpack.c.bf16 %v3573, %v3572
        %v3654 = vpack.c.bf16 %v3575, %v3574
        %v3655 = vpack.c.bf16 %v3577, %v3576
        %v3656 = vpack.c.bf16 %v3579, %v3578
        %v3657 = vpack.c.bf16 %v3581, %v3580
        %v3658 = vpack.c.bf16 %v3583, %v3582
        %v3659 = vpack.c.bf16 %v3585, %v3584
        %v3660 = vpack.c.bf16 %v3587, %v3586
        %v3661 = vpack.c.bf16 %v3589, %v3588
        %v3662 = vpack.c.bf16 %v3591, %v3590
        %v3663 = vpack.c.bf16 %v3593, %v3592
        %v3664 = vpack.c.bf16 %v3595, %v3594
        %v3665 = vpack.c.bf16 %v3597, %v3596
        %v3666 = vpack.c.bf16 %v3599, %v3598
        %v3667 = vpack.c.bf16 %v3601, %v3600
        %v3668 = vpack.c.bf16 %v3603, %v3602
        %v3669 = vpack.c.bf16 %v3605, %v3604
        %v3670 = vld [vmem:[%s5] sm:$0xf]
        %v3671 = vld [vmem:[%s5 + $0x4] sm:$0xf]
        %v3672 = vld [vmem:[%s5 + $0x8] sm:$0xf]
        %v3673 = vld [vmem:[%s5 + $0xc] sm:$0xf]
        %v3674 = vld [vmem:[%s5 + $0x10] sm:$0xf]
        %v3675 = vld [vmem:[%s5 + $0x14] sm:$0xf]
        %v3676 = vld [vmem:[%s5 + $0x18] sm:$0xf]
        %v3677 = vld [vmem:[%s5 + $0x1c] sm:$0xf]
        %v3686 = vunpack.c.l.b16 %v3670
        %v3687 = vunpack.c.l.b16 %v3671
        %v3688 = vunpack.c.l.b16 %v3672
        %v3689 = vunpack.c.l.b16 %v3673
        %v3690 = vunpack.c.l.b16 %v3674
        %v3691 = vunpack.c.l.b16 %v3675
        %v3692 = vunpack.c.l.b16 %v3676
        %v3693 = vunpack.c.l.b16 %v3677
        %v3694 = vpack.c.b16 %v3687, %v3686
        %v3695 = vpack.c.b16 %v3689, %v3688
        %v3696 = vpack.c.b16 %v3691, %v3690
        %v3697 = vpack.c.b16 %v3693, %v3692
        %v3703 = vsel %vm3093, %v3606, 0
        %v3706 = vsel %vm3093, %v3607, 0
        %v3709 = vsel %vm3093, %v3608, 0
        %v3712 = vsel %vm3093, %v3609, 0
        %v3715 = vsel %vm3093, %v3610, 0
        %v3718 = vsel %vm3093, %v3611, 0
        %v3721 = vsel %vm3093, %v3612, 0
        %v3724 = vsel %vm3093, %v3613, 0
        %v3727 = vsel %vm3093, %v3614, 0
        %v3730 = vsel %vm3093, %v3615, 0
        %v3733 = vsel %vm3093, %v3616, 0
        %v3736 = vsel %vm3093, %v3617, 0
        %v3739 = vsel %vm3093, %v3618, 0
        %v3742 = vsel %vm3093, %v3619, 0
        %v3745 = vsel %vm3093, %v3620, 0
        %v3748 = vsel %vm3093, %v3621, 0
        %v3751 = vsel %vm3093, %v3622, 0
        %v3754 = vsel %vm3093, %v3623, 0
        %v3757 = vsel %vm3093, %v3624, 0
        %v3760 = vsel %vm3093, %v3625, 0
        %v3763 = vsel %vm3093, %v3626, 0
        %v3766 = vsel %vm3093, %v3627, 0
        %v3769 = vsel %vm3093, %v3628, 0
        %v3772 = vsel %vm3093, %v3629, 0
        %v3775 = vsel %vm3093, %v3630, 0
        %v3778 = vsel %vm3093, %v3631, 0
        %v3781 = vsel %vm3093, %v3632, 0
        %v3784 = vsel %vm3093, %v3633, 0
        %v3787 = vsel %vm3093, %v3634, 0
        %v3790 = vsel %vm3093, %v3635, 0
        %v3793 = vsel %vm3093, %v3636, 0
        %v3796 = vsel %vm3093, %v3637, 0
        %v3799 = vsel %vm3093, %v3638, 0
        %v3802 = vsel %vm3093, %v3639, 0
        %v3805 = vsel %vm3093, %v3640, 0
        %v3808 = vsel %vm3093, %v3641, 0
        %v3811 = vsel %vm3093, %v3642, 0
        %v3814 = vsel %vm3093, %v3643, 0
        %v3817 = vsel %vm3093, %v3644, 0
        %v3820 = vsel %vm3093, %v3645, 0
        %v3823 = vsel %vm3093, %v3646, 0
        %v3826 = vsel %vm3093, %v3647, 0
        %v3829 = vsel %vm3093, %v3648, 0
        %v3832 = vsel %vm3093, %v3649, 0
        %v3835 = vsel %vm3093, %v3650, 0
        %v3838 = vsel %vm3093, %v3651, 0
        %v3841 = vsel %vm3093, %v3652, 0
        %v3844 = vsel %vm3093, %v3653, 0
        %v3847 = vsel %vm3093, %v3654, 0
        %v3850 = vsel %vm3093, %v3655, 0
        %v3853 = vsel %vm3093, %v3656, 0
        %v3856 = vsel %vm3093, %v3657, 0
        %v3859 = vsel %vm3093, %v3658, 0
        %v3862 = vsel %vm3093, %v3659, 0
        %v3865 = vsel %vm3093, %v3660, 0
        %v3868 = vsel %vm3093, %v3661, 0
        %v3871 = vsel %vm3093, %v3662, 0
        %v3874 = vsel %vm3093, %v3663, 0
        %v3877 = vsel %vm3093, %v3664, 0
        %v3880 = vsel %vm3093, %v3665, 0
        %v3883 = vsel %vm3093, %v3666, 0
        %v3886 = vsel %vm3093, %v3667, 0
        %v3889 = vsel %vm3093, %v3668, 0
        %v3892 = vsel %vm3093, %v3669, 0
        %3894 = vmatpush.bf16.msra.mxu0 0
        %3895 = vmatpush.bf16.msra.mxu0 0
        %3896 = vmatpush.bf16.msra.mxu0 0
        %3897 = vmatpush.bf16.msra.mxu0 0
        %3898 = vmatpush.bf16.msra.mxu0 %v3697
        %3899 = vmatpush.bf16.msra.mxu0 %v3696
        %3900 = vmatpush.bf16.msra.mxu0 %v3695
        %3901 = vmatpush.bf16.msra.mxu0 %v3694
        %3902 = vmatmul.bf16.gmra.mxu0 %v3703
        %v3903 = vpop.f32.mrf.mxu0
        %v3904 = vadd.f32 0.0, %v3903
        %v3905 = vpop.f32.mrf.mxu0
        %v3906 = vadd.f32 0.0, %v3905
        %3907 = vmatmul.bf16.gmra.mxu0 %v3706
        %v3908 = vpop.f32.mrf.mxu0
        %v3909 = vadd.f32 0.0, %v3908
        %v3910 = vpop.f32.mrf.mxu0
        %v3911 = vadd.f32 0.0, %v3910
        %3912 = vmatmul.bf16.gmra.mxu0 %v3709
        %v3913 = vpop.f32.mrf.mxu0
        %v3914 = vadd.f32 0.0, %v3913
        %v3915 = vpop.f32.mrf.mxu0
        %v3916 = vadd.f32 0.0, %v3915
        %3917 = vmatmul.bf16.gmra.mxu0 %v3712
        %v3918 = vpop.f32.mrf.mxu0
        %v3919 = vadd.f32 0.0, %v3918
        %v3920 = vpop.f32.mrf.mxu0
        %v3921 = vadd.f32 0.0, %v3920
        %3922 = vmatmul.bf16.gmra.mxu0 %v3715
        %v3923 = vpop.f32.mrf.mxu0
        %v3924 = vadd.f32 0.0, %v3923
        %v3925 = vpop.f32.mrf.mxu0
        %v3926 = vadd.f32 0.0, %v3925
        %3927 = vmatmul.bf16.gmra.mxu0 %v3718
        %v3928 = vpop.f32.mrf.mxu0
        %v3929 = vadd.f32 0.0, %v3928
        %v3930 = vpop.f32.mrf.mxu0
        %v3931 = vadd.f32 0.0, %v3930
        %3932 = vmatmul.bf16.gmra.mxu0 %v3721
        %v3933 = vpop.f32.mrf.mxu0
        %v3934 = vadd.f32 0.0, %v3933
        %v3935 = vpop.f32.mrf.mxu0
        %v3936 = vadd.f32 0.0, %v3935
        %3937 = vmatmul.bf16.gmra.mxu0 %v3724
        %v3938 = vpop.f32.mrf.mxu0
        %v3939 = vadd.f32 0.0, %v3938
        %v3940 = vpop.f32.mrf.mxu0
        %v3941 = vadd.f32 0.0, %v3940
        %3942 = vmatmul.bf16.gmra.mxu0 %v3727
        %v3943 = vpop.f32.mrf.mxu0
        %v3944 = vadd.f32 0.0, %v3943
        %v3945 = vpop.f32.mrf.mxu0
        %v3946 = vadd.f32 0.0, %v3945
        %3947 = vmatmul.bf16.gmra.mxu0 %v3730
        %v3948 = vpop.f32.mrf.mxu0
        %v3949 = vadd.f32 0.0, %v3948
        %v3950 = vpop.f32.mrf.mxu0
        %v3951 = vadd.f32 0.0, %v3950
        %3952 = vmatmul.bf16.gmra.mxu0 %v3733
        %v3953 = vpop.f32.mrf.mxu0
        %v3954 = vadd.f32 0.0, %v3953
        %v3955 = vpop.f32.mrf.mxu0
        %v3956 = vadd.f32 0.0, %v3955
        %3957 = vmatmul.bf16.gmra.mxu0 %v3736
        %v3958 = vpop.f32.mrf.mxu0
        %v3959 = vadd.f32 0.0, %v3958
        %v3960 = vpop.f32.mrf.mxu0
        %v3961 = vadd.f32 0.0, %v3960
        %3962 = vmatmul.bf16.gmra.mxu0 %v3739
        %v3963 = vpop.f32.mrf.mxu0
        %v3964 = vadd.f32 0.0, %v3963
        %v3965 = vpop.f32.mrf.mxu0
        %v3966 = vadd.f32 0.0, %v3965
        %3967 = vmatmul.bf16.gmra.mxu0 %v3742
        %v3968 = vpop.f32.mrf.mxu0
        %v3969 = vadd.f32 0.0, %v3968
        %v3970 = vpop.f32.mrf.mxu0
        %v3971 = vadd.f32 0.0, %v3970
        %3972 = vmatmul.bf16.gmra.mxu0 %v3745
        %v3973 = vpop.f32.mrf.mxu0
        %v3974 = vadd.f32 0.0, %v3973
        %v3975 = vpop.f32.mrf.mxu0
        %v3976 = vadd.f32 0.0, %v3975
        %3977 = vmatmul.bf16.gmra.mxu0 %v3748
        %v3978 = vpop.f32.mrf.mxu0
        %v3979 = vadd.f32 0.0, %v3978
        %v3980 = vpop.f32.mrf.mxu0
        %v3981 = vadd.f32 0.0, %v3980
        %3982 = vmatmul.bf16.gmra.mxu0 %v3751
        %v3983 = vpop.f32.mrf.mxu0
        %v3984 = vadd.f32 0.0, %v3983
        %v3985 = vpop.f32.mrf.mxu0
        %v3986 = vadd.f32 0.0, %v3985
        %3987 = vmatmul.bf16.gmra.mxu0 %v3754
        %v3988 = vpop.f32.mrf.mxu0
        %v3989 = vadd.f32 0.0, %v3988
        %v3990 = vpop.f32.mrf.mxu0
        %v3991 = vadd.f32 0.0, %v3990
        %3992 = vmatmul.bf16.gmra.mxu0 %v3757
        %v3993 = vpop.f32.mrf.mxu0
        %v3994 = vadd.f32 0.0, %v3993
        %v3995 = vpop.f32.mrf.mxu0
        %v3996 = vadd.f32 0.0, %v3995
        %3997 = vmatmul.bf16.gmra.mxu0 %v3760
        %v3998 = vpop.f32.mrf.mxu0
        %v3999 = vadd.f32 0.0, %v3998
        %v4000 = vpop.f32.mrf.mxu0
        %v4001 = vadd.f32 0.0, %v4000
        %4002 = vmatmul.bf16.gmra.mxu0 %v3763
        %v4003 = vpop.f32.mrf.mxu0
        %v4004 = vadd.f32 0.0, %v4003
        %v4005 = vpop.f32.mrf.mxu0
        %v4006 = vadd.f32 0.0, %v4005
        %4007 = vmatmul.bf16.gmra.mxu0 %v3766
        %v4008 = vpop.f32.mrf.mxu0
        %v4009 = vadd.f32 0.0, %v4008
        %v4010 = vpop.f32.mrf.mxu0
        %v4011 = vadd.f32 0.0, %v4010
        %4012 = vmatmul.bf16.gmra.mxu0 %v3769
        %v4013 = vpop.f32.mrf.mxu0
        %v4014 = vadd.f32 0.0, %v4013
        %v4015 = vpop.f32.mrf.mxu0
        %v4016 = vadd.f32 0.0, %v4015
        %4017 = vmatmul.bf16.gmra.mxu0 %v3772
        %v4018 = vpop.f32.mrf.mxu0
        %v4019 = vadd.f32 0.0, %v4018
        %v4020 = vpop.f32.mrf.mxu0
        %v4021 = vadd.f32 0.0, %v4020
        %4022 = vmatmul.bf16.gmra.mxu0 %v3775
        %v4023 = vpop.f32.mrf.mxu0
        %v4024 = vadd.f32 0.0, %v4023
        %v4025 = vpop.f32.mrf.mxu0
        %v4026 = vadd.f32 0.0, %v4025
        %4027 = vmatmul.bf16.gmra.mxu0 %v3778
        %v4028 = vpop.f32.mrf.mxu0
        %v4029 = vadd.f32 0.0, %v4028
        %v4030 = vpop.f32.mrf.mxu0
        %v4031 = vadd.f32 0.0, %v4030
        %4032 = vmatmul.bf16.gmra.mxu0 %v3781
        %v4033 = vpop.f32.mrf.mxu0
        %v4034 = vadd.f32 0.0, %v4033
        %v4035 = vpop.f32.mrf.mxu0
        %v4036 = vadd.f32 0.0, %v4035
        %4037 = vmatmul.bf16.gmra.mxu0 %v3784
        %v4038 = vpop.f32.mrf.mxu0
        %v4039 = vadd.f32 0.0, %v4038
        %v4040 = vpop.f32.mrf.mxu0
        %v4041 = vadd.f32 0.0, %v4040
        %4042 = vmatmul.bf16.gmra.mxu0 %v3787
        %v4043 = vpop.f32.mrf.mxu0
        %v4044 = vadd.f32 0.0, %v4043
        %v4045 = vpop.f32.mrf.mxu0
        %v4046 = vadd.f32 0.0, %v4045
        %4047 = vmatmul.bf16.gmra.mxu0 %v3790
        %v4048 = vpop.f32.mrf.mxu0
        %v4049 = vadd.f32 0.0, %v4048
        %v4050 = vpop.f32.mrf.mxu0
        %v4051 = vadd.f32 0.0, %v4050
        %4052 = vmatmul.bf16.gmra.mxu0 %v3793
        %v4053 = vpop.f32.mrf.mxu0
        %v4054 = vadd.f32 0.0, %v4053
        %v4055 = vpop.f32.mrf.mxu0
        %v4056 = vadd.f32 0.0, %v4055
        %4057 = vmatmul.bf16.gmra.mxu0 %v3796
        %v4058 = vpop.f32.mrf.mxu0
        %v4059 = vadd.f32 0.0, %v4058
        %v4060 = vpop.f32.mrf.mxu0
        %v4061 = vadd.f32 0.0, %v4060
        %4062 = vmatmul.bf16.gmra.mxu0 %v3799
        %v4063 = vpop.f32.mrf.mxu0
        %v4064 = vadd.f32 0.0, %v4063
        %v4065 = vpop.f32.mrf.mxu0
        %v4066 = vadd.f32 0.0, %v4065
        %4067 = vmatmul.bf16.gmra.mxu0 %v3802
        %v4068 = vpop.f32.mrf.mxu0
        %v4069 = vadd.f32 0.0, %v4068
        %v4070 = vpop.f32.mrf.mxu0
        %v4071 = vadd.f32 0.0, %v4070
        %4072 = vmatmul.bf16.gmra.mxu0 %v3805
        %v4073 = vpop.f32.mrf.mxu0
        %v4074 = vadd.f32 0.0, %v4073
        %v4075 = vpop.f32.mrf.mxu0
        %v4076 = vadd.f32 0.0, %v4075
        %4077 = vmatmul.bf16.gmra.mxu0 %v3808
        %v4078 = vpop.f32.mrf.mxu0
        %v4079 = vadd.f32 0.0, %v4078
        %v4080 = vpop.f32.mrf.mxu0
        %v4081 = vadd.f32 0.0, %v4080
        %4082 = vmatmul.bf16.gmra.mxu0 %v3811
        %v4083 = vpop.f32.mrf.mxu0
        %v4084 = vadd.f32 0.0, %v4083
        %v4085 = vpop.f32.mrf.mxu0
        %v4086 = vadd.f32 0.0, %v4085
        %4087 = vmatmul.bf16.gmra.mxu0 %v3814
        %v4088 = vpop.f32.mrf.mxu0
        %v4089 = vadd.f32 0.0, %v4088
        %v4090 = vpop.f32.mrf.mxu0
        %v4091 = vadd.f32 0.0, %v4090
        %4092 = vmatmul.bf16.gmra.mxu0 %v3817
        %v4093 = vpop.f32.mrf.mxu0
        %v4094 = vadd.f32 0.0, %v4093
        %v4095 = vpop.f32.mrf.mxu0
        %v4096 = vadd.f32 0.0, %v4095
        %4097 = vmatmul.bf16.gmra.mxu0 %v3820
        %v4098 = vpop.f32.mrf.mxu0
        %v4099 = vadd.f32 0.0, %v4098
        %v4100 = vpop.f32.mrf.mxu0
        %v4101 = vadd.f32 0.0, %v4100
        %4102 = vmatmul.bf16.gmra.mxu0 %v3823
        %v4103 = vpop.f32.mrf.mxu0
        %v4104 = vadd.f32 0.0, %v4103
        %v4105 = vpop.f32.mrf.mxu0
        %v4106 = vadd.f32 0.0, %v4105
        %4107 = vmatmul.bf16.gmra.mxu0 %v3826
        %v4108 = vpop.f32.mrf.mxu0
        %v4109 = vadd.f32 0.0, %v4108
        %v4110 = vpop.f32.mrf.mxu0
        %v4111 = vadd.f32 0.0, %v4110
        %4112 = vmatmul.bf16.gmra.mxu0 %v3829
        %v4113 = vpop.f32.mrf.mxu0
        %v4114 = vadd.f32 0.0, %v4113
        %v4115 = vpop.f32.mrf.mxu0
        %v4116 = vadd.f32 0.0, %v4115
        %4117 = vmatmul.bf16.gmra.mxu0 %v3832
        %v4118 = vpop.f32.mrf.mxu0
        %v4119 = vadd.f32 0.0, %v4118
        %v4120 = vpop.f32.mrf.mxu0
        %v4121 = vadd.f32 0.0, %v4120
        %4122 = vmatmul.bf16.gmra.mxu0 %v3835
        %v4123 = vpop.f32.mrf.mxu0
        %v4124 = vadd.f32 0.0, %v4123
        %v4125 = vpop.f32.mrf.mxu0
        %v4126 = vadd.f32 0.0, %v4125
        %4127 = vmatmul.bf16.gmra.mxu0 %v3838
        %v4128 = vpop.f32.mrf.mxu0
        %v4129 = vadd.f32 0.0, %v4128
        %v4130 = vpop.f32.mrf.mxu0
        %v4131 = vadd.f32 0.0, %v4130
        %4132 = vmatmul.bf16.gmra.mxu0 %v3841
        %v4133 = vpop.f32.mrf.mxu0
        %v4134 = vadd.f32 0.0, %v4133
        %v4135 = vpop.f32.mrf.mxu0
        %v4136 = vadd.f32 0.0, %v4135
        %4137 = vmatmul.bf16.gmra.mxu0 %v3844
        %v4138 = vpop.f32.mrf.mxu0
        %v4139 = vadd.f32 0.0, %v4138
        %v4140 = vpop.f32.mrf.mxu0
        %v4141 = vadd.f32 0.0, %v4140
        %4142 = vmatmul.bf16.gmra.mxu0 %v3847
        %v4143 = vpop.f32.mrf.mxu0
        %v4144 = vadd.f32 0.0, %v4143
        %v4145 = vpop.f32.mrf.mxu0
        %v4146 = vadd.f32 0.0, %v4145
        %4147 = vmatmul.bf16.gmra.mxu0 %v3850
        %v4148 = vpop.f32.mrf.mxu0
        %v4149 = vadd.f32 0.0, %v4148
        %v4150 = vpop.f32.mrf.mxu0
        %v4151 = vadd.f32 0.0, %v4150
        %4152 = vmatmul.bf16.gmra.mxu0 %v3853
        %v4153 = vpop.f32.mrf.mxu0
        %v4154 = vadd.f32 0.0, %v4153
        %v4155 = vpop.f32.mrf.mxu0
        %v4156 = vadd.f32 0.0, %v4155
        %4157 = vmatmul.bf16.gmra.mxu0 %v3856
        %v4158 = vpop.f32.mrf.mxu0
        %v4159 = vadd.f32 0.0, %v4158
        %v4160 = vpop.f32.mrf.mxu0
        %v4161 = vadd.f32 0.0, %v4160
        %4162 = vmatmul.bf16.gmra.mxu0 %v3859
        %v4163 = vpop.f32.mrf.mxu0
        %v4164 = vadd.f32 0.0, %v4163
        %v4165 = vpop.f32.mrf.mxu0
        %v4166 = vadd.f32 0.0, %v4165
        %4167 = vmatmul.bf16.gmra.mxu0 %v3862
        %v4168 = vpop.f32.mrf.mxu0
        %v4169 = vadd.f32 0.0, %v4168
        %v4170 = vpop.f32.mrf.mxu0
        %v4171 = vadd.f32 0.0, %v4170
        %4172 = vmatmul.bf16.gmra.mxu0 %v3865
        %v4173 = vpop.f32.mrf.mxu0
        %v4174 = vadd.f32 0.0, %v4173
        %v4175 = vpop.f32.mrf.mxu0
        %v4176 = vadd.f32 0.0, %v4175
        %4177 = vmatmul.bf16.gmra.mxu0 %v3868
        %v4178 = vpop.f32.mrf.mxu0
        %v4179 = vadd.f32 0.0, %v4178
        %v4180 = vpop.f32.mrf.mxu0
        %v4181 = vadd.f32 0.0, %v4180
        %4182 = vmatmul.bf16.gmra.mxu0 %v3871
        %v4183 = vpop.f32.mrf.mxu0
        %v4184 = vadd.f32 0.0, %v4183
        %v4185 = vpop.f32.mrf.mxu0
        %v4186 = vadd.f32 0.0, %v4185
        %4187 = vmatmul.bf16.gmra.mxu0 %v3874
        %v4188 = vpop.f32.mrf.mxu0
        %v4189 = vadd.f32 0.0, %v4188
        %v4190 = vpop.f32.mrf.mxu0
        %v4191 = vadd.f32 0.0, %v4190
        %4192 = vmatmul.bf16.gmra.mxu0 %v3877
        %v4193 = vpop.f32.mrf.mxu0
        %v4194 = vadd.f32 0.0, %v4193
        %v4195 = vpop.f32.mrf.mxu0
        %v4196 = vadd.f32 0.0, %v4195
        %4197 = vmatmul.bf16.gmra.mxu0 %v3880
        %v4198 = vpop.f32.mrf.mxu0
        %v4199 = vadd.f32 0.0, %v4198
        %v4200 = vpop.f32.mrf.mxu0
        %v4201 = vadd.f32 0.0, %v4200
        %4202 = vmatmul.bf16.gmra.mxu0 %v3883
        %v4203 = vpop.f32.mrf.mxu0
        %v4204 = vadd.f32 0.0, %v4203
        %v4205 = vpop.f32.mrf.mxu0
        %v4206 = vadd.f32 0.0, %v4205
        %4207 = vmatmul.bf16.gmra.mxu0 %v3886
        %v4208 = vpop.f32.mrf.mxu0
        %v4209 = vadd.f32 0.0, %v4208
        %v4210 = vpop.f32.mrf.mxu0
        %v4211 = vadd.f32 0.0, %v4210
        %4212 = vmatmul.bf16.gmra.mxu0 %v3889
        %v4213 = vpop.f32.mrf.mxu0
        %v4214 = vadd.f32 0.0, %v4213
        %v4215 = vpop.f32.mrf.mxu0
        %v4216 = vadd.f32 0.0, %v4215
        %4217 = vmatmul.bf16.gmra.mxu0 %v3892
        %v4218 = vpop.f32.mrf.mxu0
        %v4219 = vadd.f32 0.0, %v4218
        %v4220 = vpop.f32.mrf.mxu0
        %v4221 = vadd.f32 0.0, %v4220
        %4222 = vdwg.mxu0
        %v4223 = vsub.f32 %v1997, 1.0
        %v4224 = vsub.f32 %v1998, 1.0
        %v4225 = vsub.f32 %v1999, 1.0
        %v4226 = vsub.f32 %v2000, 1.0
        %v4227 = vsub.f32 %v2001, 1.0
        %v4228 = vsub.f32 %v2002, 1.0
        %v4229 = vsub.f32 %v2003, 1.0
        %v4230 = vsub.f32 %v2004, 1.0
        %v4231 = vmul.f32 %v4223, 1e+30
        %v4232 = vmul.f32 %v4224, 1e+30
        %v4233 = vmul.f32 %v4225, 1e+30
        %v4234 = vmul.f32 %v4226, 1e+30
        %v4235 = vmul.f32 %v4227, 1e+30
        %v4236 = vmul.f32 %v4228, 1e+30
        %v4237 = vmul.f32 %v4229, 1e+30
        %v4238 = vmul.f32 %v4230, 1e+30
        %v4239 = vperm.slane %v4231, 0
        %v4240 = vlaneseq
        %v4241 = vshrl.u32 %v4240, 7
        %4243 = vset.pattern.permute.xlu0 %v4241
        %4244 = vperm.xlu0 %4243, %v4239
        %v4245 = vpop.permute.xlu0 %4244
        %v4246 = vlaneseq
        %v4247 = vshrl.u32 %v4246, 7
        %v4248 = vadd.s32 %v4247, 8
        %4249 = vset.pattern.permute.xlu0 %v4248
        %4250 = vperm.xlu0 %4249, %v4239
        %v4251 = vpop.permute.xlu0 %4250
        %v4252 = vperm.slane %v4231, 1
        %v4253 = vlaneseq
        %v4254 = vshrl.u32 %v4253, 7
        %4256 = vset.pattern.permute.xlu0 %v4254
        %4257 = vperm.xlu0 %4256, %v4252
        %v4258 = vpop.permute.xlu0 %4257
        %v4259 = vlaneseq
        %v4260 = vshrl.u32 %v4259, 7
        %v4261 = vadd.s32 %v4260, 8
        %4262 = vset.pattern.permute.xlu0 %v4261
        %4263 = vperm.xlu0 %4262, %v4252
        %v4264 = vpop.permute.xlu0 %4263
        %v4265 = vperm.slane %v4231, 2
        %v4266 = vlaneseq
        %v4267 = vshrl.u32 %v4266, 7
        %4269 = vset.pattern.permute.xlu0 %v4267
        %4270 = vperm.xlu0 %4269, %v4265
        %v4271 = vpop.permute.xlu0 %4270
        %v4272 = vlaneseq
        %v4273 = vshrl.u32 %v4272, 7
        %v4274 = vadd.s32 %v4273, 8
        %4275 = vset.pattern.permute.xlu0 %v4274
        %4276 = vperm.xlu0 %4275, %v4265
        %v4277 = vpop.permute.xlu0 %4276
        %v4278 = vperm.slane %v4231, 3
        %v4279 = vlaneseq
        %v4280 = vshrl.u32 %v4279, 7
        %4282 = vset.pattern.permute.xlu0 %v4280
        %4283 = vperm.xlu0 %4282, %v4278
        %v4284 = vpop.permute.xlu0 %4283
        %v4285 = vlaneseq
        %v4286 = vshrl.u32 %v4285, 7
        %v4287 = vadd.s32 %v4286, 8
        %4288 = vset.pattern.permute.xlu0 %v4287
        %4289 = vperm.xlu0 %4288, %v4278
        %v4290 = vpop.permute.xlu0 %4289
        %v4291 = vperm.slane %v4231, 4
        %v4292 = vlaneseq
        %v4293 = vshrl.u32 %v4292, 7
        %4295 = vset.pattern.permute.xlu0 %v4293
        %4296 = vperm.xlu0 %4295, %v4291
        %v4297 = vpop.permute.xlu0 %4296
        %v4298 = vlaneseq
        %v4299 = vshrl.u32 %v4298, 7
        %v4300 = vadd.s32 %v4299, 8
        %4301 = vset.pattern.permute.xlu0 %v4300
        %4302 = vperm.xlu0 %4301, %v4291
        %v4303 = vpop.permute.xlu0 %4302
        %v4304 = vperm.slane %v4231, 5
        %v4305 = vlaneseq
        %v4306 = vshrl.u32 %v4305, 7
        %4308 = vset.pattern.permute.xlu0 %v4306
        %4309 = vperm.xlu0 %4308, %v4304
        %v4310 = vpop.permute.xlu0 %4309
        %v4311 = vlaneseq
        %v4312 = vshrl.u32 %v4311, 7
        %v4313 = vadd.s32 %v4312, 8
        %4314 = vset.pattern.permute.xlu0 %v4313
        %4315 = vperm.xlu0 %4314, %v4304
        %v4316 = vpop.permute.xlu0 %4315
        %v4317 = vperm.slane %v4231, 6
        %v4318 = vlaneseq
        %v4319 = vshrl.u32 %v4318, 7
        %4321 = vset.pattern.permute.xlu0 %v4319
        %4322 = vperm.xlu0 %4321, %v4317
        %v4323 = vpop.permute.xlu0 %4322
        %v4324 = vlaneseq
        %v4325 = vshrl.u32 %v4324, 7
        %v4326 = vadd.s32 %v4325, 8
        %4327 = vset.pattern.permute.xlu0 %v4326
        %4328 = vperm.xlu0 %4327, %v4317
        %v4329 = vpop.permute.xlu0 %4328
        %v4330 = vperm.slane %v4231, 7
        %v4331 = vlaneseq
        %v4332 = vshrl.u32 %v4331, 7
        %4334 = vset.pattern.permute.xlu0 %v4332
        %4335 = vperm.xlu0 %4334, %v4330
        %v4336 = vpop.permute.xlu0 %4335
        %v4337 = vlaneseq
        %v4338 = vshrl.u32 %v4337, 7
        %v4339 = vadd.s32 %v4338, 8
        %4340 = vset.pattern.permute.xlu0 %v4339
        %4341 = vperm.xlu0 %4340, %v4330
        %v4342 = vpop.permute.xlu0 %4341
        %v4343 = vperm.slane %v4232, 0
        %v4344 = vlaneseq
        %v4345 = vshrl.u32 %v4344, 7
        %4347 = vset.pattern.permute.xlu0 %v4345
        %4348 = vperm.xlu0 %4347, %v4343
        %v4349 = vpop.permute.xlu0 %4348
        %v4350 = vlaneseq
        %v4351 = vshrl.u32 %v4350, 7
        %v4352 = vadd.s32 %v4351, 8
        %4353 = vset.pattern.permute.xlu0 %v4352
        %4354 = vperm.xlu0 %4353, %v4343
        %v4355 = vpop.permute.xlu0 %4354
        %v4356 = vperm.slane %v4232, 1
        %v4357 = vlaneseq
        %v4358 = vshrl.u32 %v4357, 7
        %4360 = vset.pattern.permute.xlu0 %v4358
        %4361 = vperm.xlu0 %4360, %v4356
        %v4362 = vpop.permute.xlu0 %4361
        %v4363 = vlaneseq
        %v4364 = vshrl.u32 %v4363, 7
        %v4365 = vadd.s32 %v4364, 8
        %4366 = vset.pattern.permute.xlu0 %v4365
        %4367 = vperm.xlu0 %4366, %v4356
        %v4368 = vpop.permute.xlu0 %4367
        %v4369 = vperm.slane %v4232, 2
        %v4370 = vlaneseq
        %v4371 = vshrl.u32 %v4370, 7
        %4373 = vset.pattern.permute.xlu0 %v4371
        %4374 = vperm.xlu0 %4373, %v4369
        %v4375 = vpop.permute.xlu0 %4374
        %v4376 = vlaneseq
        %v4377 = vshrl.u32 %v4376, 7
        %v4378 = vadd.s32 %v4377, 8
        %4379 = vset.pattern.permute.xlu0 %v4378
        %4380 = vperm.xlu0 %4379, %v4369
        %v4381 = vpop.permute.xlu0 %4380
        %v4382 = vperm.slane %v4232, 3
        %v4383 = vlaneseq
        %v4384 = vshrl.u32 %v4383, 7
        %4386 = vset.pattern.permute.xlu0 %v4384
        %4387 = vperm.xlu0 %4386, %v4382
        %v4388 = vpop.permute.xlu0 %4387
        %v4389 = vlaneseq
        %v4390 = vshrl.u32 %v4389, 7
        %v4391 = vadd.s32 %v4390, 8
        %4392 = vset.pattern.permute.xlu0 %v4391
        %4393 = vperm.xlu0 %4392, %v4382
        %v4394 = vpop.permute.xlu0 %4393
        %v4395 = vperm.slane %v4232, 4
        %v4396 = vlaneseq
        %v4397 = vshrl.u32 %v4396, 7
        %4399 = vset.pattern.permute.xlu0 %v4397
        %4400 = vperm.xlu0 %4399, %v4395
        %v4401 = vpop.permute.xlu0 %4400
        %v4402 = vlaneseq
        %v4403 = vshrl.u32 %v4402, 7
        %v4404 = vadd.s32 %v4403, 8
        %4405 = vset.pattern.permute.xlu0 %v4404
        %4406 = vperm.xlu0 %4405, %v4395
        %v4407 = vpop.permute.xlu0 %4406
        %v4408 = vperm.slane %v4232, 5
        %v4409 = vlaneseq
        %v4410 = vshrl.u32 %v4409, 7
        %4412 = vset.pattern.permute.xlu0 %v4410
        %4413 = vperm.xlu0 %4412, %v4408
        %v4414 = vpop.permute.xlu0 %4413
        %v4415 = vlaneseq
        %v4416 = vshrl.u32 %v4415, 7
        %v4417 = vadd.s32 %v4416, 8
        %4418 = vset.pattern.permute.xlu0 %v4417
        %4419 = vperm.xlu0 %4418, %v4408
        %v4420 = vpop.permute.xlu0 %4419
        %v4421 = vperm.slane %v4232, 6
        %v4422 = vlaneseq
        %v4423 = vshrl.u32 %v4422, 7
        %4425 = vset.pattern.permute.xlu0 %v4423
        %4426 = vperm.xlu0 %4425, %v4421
        %v4427 = vpop.permute.xlu0 %4426
        %v4428 = vlaneseq
        %v4429 = vshrl.u32 %v4428, 7
        %v4430 = vadd.s32 %v4429, 8
        %4431 = vset.pattern.permute.xlu0 %v4430
        %4432 = vperm.xlu0 %4431, %v4421
        %v4433 = vpop.permute.xlu0 %4432
        %v4434 = vperm.slane %v4232, 7
        %v4435 = vlaneseq
        %v4436 = vshrl.u32 %v4435, 7
        %4438 = vset.pattern.permute.xlu0 %v4436
        %4439 = vperm.xlu0 %4438, %v4434
        %v4440 = vpop.permute.xlu0 %4439
        %v4441 = vlaneseq
        %v4442 = vshrl.u32 %v4441, 7
        %v4443 = vadd.s32 %v4442, 8
        %4444 = vset.pattern.permute.xlu0 %v4443
        %4445 = vperm.xlu0 %4444, %v4434
        %v4446 = vpop.permute.xlu0 %4445
        %v4447 = vperm.slane %v4233, 0
        %v4448 = vlaneseq
        %v4449 = vshrl.u32 %v4448, 7
        %4451 = vset.pattern.permute.xlu0 %v4449
        %4452 = vperm.xlu0 %4451, %v4447
        %v4453 = vpop.permute.xlu0 %4452
        %v4454 = vlaneseq
        %v4455 = vshrl.u32 %v4454, 7
        %v4456 = vadd.s32 %v4455, 8
        %4457 = vset.pattern.permute.xlu0 %v4456
        %4458 = vperm.xlu0 %4457, %v4447
        %v4459 = vpop.permute.xlu0 %4458
        %v4460 = vperm.slane %v4233, 1
        %v4461 = vlaneseq
        %v4462 = vshrl.u32 %v4461, 7
        %4464 = vset.pattern.permute.xlu0 %v4462
        %4465 = vperm.xlu0 %4464, %v4460
        %v4466 = vpop.permute.xlu0 %4465
        %v4467 = vlaneseq
        %v4468 = vshrl.u32 %v4467, 7
        %v4469 = vadd.s32 %v4468, 8
        %4470 = vset.pattern.permute.xlu0 %v4469
        %4471 = vperm.xlu0 %4470, %v4460
        %v4472 = vpop.permute.xlu0 %4471
        %v4473 = vperm.slane %v4233, 2
        %v4474 = vlaneseq
        %v4475 = vshrl.u32 %v4474, 7
        %4477 = vset.pattern.permute.xlu0 %v4475
        %4478 = vperm.xlu0 %4477, %v4473
        %v4479 = vpop.permute.xlu0 %4478
        %v4480 = vlaneseq
        %v4481 = vshrl.u32 %v4480, 7
        %v4482 = vadd.s32 %v4481, 8
        %4483 = vset.pattern.permute.xlu0 %v4482
        %4484 = vperm.xlu0 %4483, %v4473
        %v4485 = vpop.permute.xlu0 %4484
        %v4486 = vperm.slane %v4233, 3
        %v4487 = vlaneseq
        %v4488 = vshrl.u32 %v4487, 7
        %4490 = vset.pattern.permute.xlu0 %v4488
        %4491 = vperm.xlu0 %4490, %v4486
        %v4492 = vpop.permute.xlu0 %4491
        %v4493 = vlaneseq
        %v4494 = vshrl.u32 %v4493, 7
        %v4495 = vadd.s32 %v4494, 8
        %4496 = vset.pattern.permute.xlu0 %v4495
        %4497 = vperm.xlu0 %4496, %v4486
        %v4498 = vpop.permute.xlu0 %4497
        %v4499 = vperm.slane %v4233, 4
        %v4500 = vlaneseq
        %v4501 = vshrl.u32 %v4500, 7
        %4503 = vset.pattern.permute.xlu0 %v4501
        %4504 = vperm.xlu0 %4503, %v4499
        %v4505 = vpop.permute.xlu0 %4504
        %v4506 = vlaneseq
        %v4507 = vshrl.u32 %v4506, 7
        %v4508 = vadd.s32 %v4507, 8
        %4509 = vset.pattern.permute.xlu0 %v4508
        %4510 = vperm.xlu0 %4509, %v4499
        %v4511 = vpop.permute.xlu0 %4510
        %v4512 = vperm.slane %v4233, 5
        %v4513 = vlaneseq
        %v4514 = vshrl.u32 %v4513, 7
        %4516 = vset.pattern.permute.xlu0 %v4514
        %4517 = vperm.xlu0 %4516, %v4512
        %v4518 = vpop.permute.xlu0 %4517
        %v4519 = vlaneseq
        %v4520 = vshrl.u32 %v4519, 7
        %v4521 = vadd.s32 %v4520, 8
        %4522 = vset.pattern.permute.xlu0 %v4521
        %4523 = vperm.xlu0 %4522, %v4512
        %v4524 = vpop.permute.xlu0 %4523
        %v4525 = vperm.slane %v4233, 6
        %v4526 = vlaneseq
        %v4527 = vshrl.u32 %v4526, 7
        %4529 = vset.pattern.permute.xlu0 %v4527
        %4530 = vperm.xlu0 %4529, %v4525
        %v4531 = vpop.permute.xlu0 %4530
        %v4532 = vlaneseq
        %v4533 = vshrl.u32 %v4532, 7
        %v4534 = vadd.s32 %v4533, 8
        %4535 = vset.pattern.permute.xlu0 %v4534
        %4536 = vperm.xlu0 %4535, %v4525
        %v4537 = vpop.permute.xlu0 %4536
        %v4538 = vperm.slane %v4233, 7
        %v4539 = vlaneseq
        %v4540 = vshrl.u32 %v4539, 7
        %4542 = vset.pattern.permute.xlu0 %v4540
        %4543 = vperm.xlu0 %4542, %v4538
        %v4544 = vpop.permute.xlu0 %4543
        %v4545 = vlaneseq
        %v4546 = vshrl.u32 %v4545, 7
        %v4547 = vadd.s32 %v4546, 8
        %4548 = vset.pattern.permute.xlu0 %v4547
        %4549 = vperm.xlu0 %4548, %v4538
        %v4550 = vpop.permute.xlu0 %4549
        %v4551 = vperm.slane %v4234, 0
        %v4552 = vlaneseq
        %v4553 = vshrl.u32 %v4552, 7
        %4555 = vset.pattern.permute.xlu0 %v4553
        %4556 = vperm.xlu0 %4555, %v4551
        %v4557 = vpop.permute.xlu0 %4556
        %v4558 = vlaneseq
        %v4559 = vshrl.u32 %v4558, 7
        %v4560 = vadd.s32 %v4559, 8
        %4561 = vset.pattern.permute.xlu0 %v4560
        %4562 = vperm.xlu0 %4561, %v4551
        %v4563 = vpop.permute.xlu0 %4562
        %v4564 = vperm.slane %v4234, 1
        %v4565 = vlaneseq
        %v4566 = vshrl.u32 %v4565, 7
        %4568 = vset.pattern.permute.xlu0 %v4566
        %4569 = vperm.xlu0 %4568, %v4564
        %v4570 = vpop.permute.xlu0 %4569
        %v4571 = vlaneseq
        %v4572 = vshrl.u32 %v4571, 7
        %v4573 = vadd.s32 %v4572, 8
        %4574 = vset.pattern.permute.xlu0 %v4573
        %4575 = vperm.xlu0 %4574, %v4564
        %v4576 = vpop.permute.xlu0 %4575
        %v4577 = vperm.slane %v4234, 2
        %v4578 = vlaneseq
        %v4579 = vshrl.u32 %v4578, 7
        %4581 = vset.pattern.permute.xlu0 %v4579
        %4582 = vperm.xlu0 %4581, %v4577
        %v4583 = vpop.permute.xlu0 %4582
        %v4584 = vlaneseq
        %v4585 = vshrl.u32 %v4584, 7
        %v4586 = vadd.s32 %v4585, 8
        %4587 = vset.pattern.permute.xlu0 %v4586
        %4588 = vperm.xlu0 %4587, %v4577
        %v4589 = vpop.permute.xlu0 %4588
        %v4590 = vperm.slane %v4234, 3
        %v4591 = vlaneseq
        %v4592 = vshrl.u32 %v4591, 7
        %4594 = vset.pattern.permute.xlu0 %v4592
        %4595 = vperm.xlu0 %4594, %v4590
        %v4596 = vpop.permute.xlu0 %4595
        %v4597 = vlaneseq
        %v4598 = vshrl.u32 %v4597, 7
        %v4599 = vadd.s32 %v4598, 8
        %4600 = vset.pattern.permute.xlu0 %v4599
        %4601 = vperm.xlu0 %4600, %v4590
        %v4602 = vpop.permute.xlu0 %4601
        %v4603 = vperm.slane %v4234, 4
        %v4604 = vlaneseq
        %v4605 = vshrl.u32 %v4604, 7
        %4607 = vset.pattern.permute.xlu0 %v4605
        %4608 = vperm.xlu0 %4607, %v4603
        %v4609 = vpop.permute.xlu0 %4608
        %v4610 = vlaneseq
        %v4611 = vshrl.u32 %v4610, 7
        %v4612 = vadd.s32 %v4611, 8
        %4613 = vset.pattern.permute.xlu0 %v4612
        %4614 = vperm.xlu0 %4613, %v4603
        %v4615 = vpop.permute.xlu0 %4614
        %v4616 = vperm.slane %v4234, 5
        %v4617 = vlaneseq
        %v4618 = vshrl.u32 %v4617, 7
        %4620 = vset.pattern.permute.xlu0 %v4618
        %4621 = vperm.xlu0 %4620, %v4616
        %v4622 = vpop.permute.xlu0 %4621
        %v4623 = vlaneseq
        %v4624 = vshrl.u32 %v4623, 7
        %v4625 = vadd.s32 %v4624, 8
        %4626 = vset.pattern.permute.xlu0 %v4625
        %4627 = vperm.xlu0 %4626, %v4616
        %v4628 = vpop.permute.xlu0 %4627
        %v4629 = vperm.slane %v4234, 6
        %v4630 = vlaneseq
        %v4631 = vshrl.u32 %v4630, 7
        %4633 = vset.pattern.permute.xlu0 %v4631
        %4634 = vperm.xlu0 %4633, %v4629
        %v4635 = vpop.permute.xlu0 %4634
        %v4636 = vlaneseq
        %v4637 = vshrl.u32 %v4636, 7
        %v4638 = vadd.s32 %v4637, 8
        %4639 = vset.pattern.permute.xlu0 %v4638
        %4640 = vperm.xlu0 %4639, %v4629
        %v4641 = vpop.permute.xlu0 %4640
        %v4642 = vperm.slane %v4234, 7
        %v4643 = vlaneseq
        %v4644 = vshrl.u32 %v4643, 7
        %4646 = vset.pattern.permute.xlu0 %v4644
        %4647 = vperm.xlu0 %4646, %v4642
        %v4648 = vpop.permute.xlu0 %4647
        %v4649 = vlaneseq
        %v4650 = vshrl.u32 %v4649, 7
        %v4651 = vadd.s32 %v4650, 8
        %4652 = vset.pattern.permute.xlu0 %v4651
        %4653 = vperm.xlu0 %4652, %v4642
        %v4654 = vpop.permute.xlu0 %4653
        %v4655 = vperm.slane %v4235, 0
        %v4656 = vlaneseq
        %v4657 = vshrl.u32 %v4656, 7
        %4659 = vset.pattern.permute.xlu0 %v4657
        %4660 = vperm.xlu0 %4659, %v4655
        %v4661 = vpop.permute.xlu0 %4660
        %v4662 = vlaneseq
        %v4663 = vshrl.u32 %v4662, 7
        %v4664 = vadd.s32 %v4663, 8
        %4665 = vset.pattern.permute.xlu0 %v4664
        %4666 = vperm.xlu0 %4665, %v4655
        %v4667 = vpop.permute.xlu0 %4666
        %v4668 = vperm.slane %v4235, 1
        %v4669 = vlaneseq
        %v4670 = vshrl.u32 %v4669, 7
        %4672 = vset.pattern.permute.xlu0 %v4670
        %4673 = vperm.xlu0 %4672, %v4668
        %v4674 = vpop.permute.xlu0 %4673
        %v4675 = vlaneseq
        %v4676 = vshrl.u32 %v4675, 7
        %v4677 = vadd.s32 %v4676, 8
        %4678 = vset.pattern.permute.xlu0 %v4677
        %4679 = vperm.xlu0 %4678, %v4668
        %v4680 = vpop.permute.xlu0 %4679
        %v4681 = vperm.slane %v4235, 2
        %v4682 = vlaneseq
        %v4683 = vshrl.u32 %v4682, 7
        %4685 = vset.pattern.permute.xlu0 %v4683
        %4686 = vperm.xlu0 %4685, %v4681
        %v4687 = vpop.permute.xlu0 %4686
        %v4688 = vlaneseq
        %v4689 = vshrl.u32 %v4688, 7
        %v4690 = vadd.s32 %v4689, 8
        %4691 = vset.pattern.permute.xlu0 %v4690
        %4692 = vperm.xlu0 %4691, %v4681
        %v4693 = vpop.permute.xlu0 %4692
        %v4694 = vperm.slane %v4235, 3
        %v4695 = vlaneseq
        %v4696 = vshrl.u32 %v4695, 7
        %4698 = vset.pattern.permute.xlu0 %v4696
        %4699 = vperm.xlu0 %4698, %v4694
        %v4700 = vpop.permute.xlu0 %4699
        %v4701 = vlaneseq
        %v4702 = vshrl.u32 %v4701, 7
        %v4703 = vadd.s32 %v4702, 8
        %4704 = vset.pattern.permute.xlu0 %v4703
        %4705 = vperm.xlu0 %4704, %v4694
        %v4706 = vpop.permute.xlu0 %4705
        %v4707 = vperm.slane %v4235, 4
        %v4708 = vlaneseq
        %v4709 = vshrl.u32 %v4708, 7
        %4711 = vset.pattern.permute.xlu0 %v4709
        %4712 = vperm.xlu0 %4711, %v4707
        %v4713 = vpop.permute.xlu0 %4712
        %v4714 = vlaneseq
        %v4715 = vshrl.u32 %v4714, 7
        %v4716 = vadd.s32 %v4715, 8
        %4717 = vset.pattern.permute.xlu0 %v4716
        %4718 = vperm.xlu0 %4717, %v4707
        %v4719 = vpop.permute.xlu0 %4718
        %v4720 = vperm.slane %v4235, 5
        %v4721 = vlaneseq
        %v4722 = vshrl.u32 %v4721, 7
        %4724 = vset.pattern.permute.xlu0 %v4722
        %4725 = vperm.xlu0 %4724, %v4720
        %v4726 = vpop.permute.xlu0 %4725
        %v4727 = vlaneseq
        %v4728 = vshrl.u32 %v4727, 7
        %v4729 = vadd.s32 %v4728, 8
        %4730 = vset.pattern.permute.xlu0 %v4729
        %4731 = vperm.xlu0 %4730, %v4720
        %v4732 = vpop.permute.xlu0 %4731
        %v4733 = vperm.slane %v4235, 6
        %v4734 = vlaneseq
        %v4735 = vshrl.u32 %v4734, 7
        %4737 = vset.pattern.permute.xlu0 %v4735
        %4738 = vperm.xlu0 %4737, %v4733
        %v4739 = vpop.permute.xlu0 %4738
        %v4740 = vlaneseq
        %v4741 = vshrl.u32 %v4740, 7
        %v4742 = vadd.s32 %v4741, 8
        %4743 = vset.pattern.permute.xlu0 %v4742
        %4744 = vperm.xlu0 %4743, %v4733
        %v4745 = vpop.permute.xlu0 %4744
        %v4746 = vperm.slane %v4235, 7
        %v4747 = vlaneseq
        %v4748 = vshrl.u32 %v4747, 7
        %4750 = vset.pattern.permute.xlu0 %v4748
        %4751 = vperm.xlu0 %4750, %v4746
        %v4752 = vpop.permute.xlu0 %4751
        %v4753 = vlaneseq
        %v4754 = vshrl.u32 %v4753, 7
        %v4755 = vadd.s32 %v4754, 8
        %4756 = vset.pattern.permute.xlu0 %v4755
        %4757 = vperm.xlu0 %4756, %v4746
        %v4758 = vpop.permute.xlu0 %4757
        %v4759 = vperm.slane %v4236, 0
        %v4760 = vlaneseq
        %v4761 = vshrl.u32 %v4760, 7
        %4763 = vset.pattern.permute.xlu0 %v4761
        %4764 = vperm.xlu0 %4763, %v4759
        %v4765 = vpop.permute.xlu0 %4764
        %v4766 = vlaneseq
        %v4767 = vshrl.u32 %v4766, 7
        %v4768 = vadd.s32 %v4767, 8
        %4769 = vset.pattern.permute.xlu0 %v4768
        %4770 = vperm.xlu0 %4769, %v4759
        %v4771 = vpop.permute.xlu0 %4770
        %v4772 = vperm.slane %v4236, 1
        %v4773 = vlaneseq
        %v4774 = vshrl.u32 %v4773, 7
        %4776 = vset.pattern.permute.xlu0 %v4774
        %4777 = vperm.xlu0 %4776, %v4772
        %v4778 = vpop.permute.xlu0 %4777
        %v4779 = vlaneseq
        %v4780 = vshrl.u32 %v4779, 7
        %v4781 = vadd.s32 %v4780, 8
        %4782 = vset.pattern.permute.xlu0 %v4781
        %4783 = vperm.xlu0 %4782, %v4772
        %v4784 = vpop.permute.xlu0 %4783
        %v4785 = vperm.slane %v4236, 2
        %v4786 = vlaneseq
        %v4787 = vshrl.u32 %v4786, 7
        %4789 = vset.pattern.permute.xlu0 %v4787
        %4790 = vperm.xlu0 %4789, %v4785
        %v4791 = vpop.permute.xlu0 %4790
        %v4792 = vlaneseq
        %v4793 = vshrl.u32 %v4792, 7
        %v4794 = vadd.s32 %v4793, 8
        %4795 = vset.pattern.permute.xlu0 %v4794
        %4796 = vperm.xlu0 %4795, %v4785
        %v4797 = vpop.permute.xlu0 %4796
        %v4798 = vperm.slane %v4236, 3
        %v4799 = vlaneseq
        %v4800 = vshrl.u32 %v4799, 7
        %4802 = vset.pattern.permute.xlu0 %v4800
        %4803 = vperm.xlu0 %4802, %v4798
        %v4804 = vpop.permute.xlu0 %4803
        %v4805 = vlaneseq
        %v4806 = vshrl.u32 %v4805, 7
        %v4807 = vadd.s32 %v4806, 8
        %4808 = vset.pattern.permute.xlu0 %v4807
        %4809 = vperm.xlu0 %4808, %v4798
        %v4810 = vpop.permute.xlu0 %4809
        %v4811 = vperm.slane %v4236, 4
        %v4812 = vlaneseq
        %v4813 = vshrl.u32 %v4812, 7
        %4815 = vset.pattern.permute.xlu0 %v4813
        %4816 = vperm.xlu0 %4815, %v4811
        %v4817 = vpop.permute.xlu0 %4816
        %v4818 = vlaneseq
        %v4819 = vshrl.u32 %v4818, 7
        %v4820 = vadd.s32 %v4819, 8
        %4821 = vset.pattern.permute.xlu0 %v4820
        %4822 = vperm.xlu0 %4821, %v4811
        %v4823 = vpop.permute.xlu0 %4822
        %v4824 = vperm.slane %v4236, 5
        %v4825 = vlaneseq
        %v4826 = vshrl.u32 %v4825, 7
        %4828 = vset.pattern.permute.xlu0 %v4826
        %4829 = vperm.xlu0 %4828, %v4824
        %v4830 = vpop.permute.xlu0 %4829
        %v4831 = vlaneseq
        %v4832 = vshrl.u32 %v4831, 7
        %v4833 = vadd.s32 %v4832, 8
        %4834 = vset.pattern.permute.xlu0 %v4833
        %4835 = vperm.xlu0 %4834, %v4824
        %v4836 = vpop.permute.xlu0 %4835
        %v4837 = vperm.slane %v4236, 6
        %v4838 = vlaneseq
        %v4839 = vshrl.u32 %v4838, 7
        %4841 = vset.pattern.permute.xlu0 %v4839
        %4842 = vperm.xlu0 %4841, %v4837
        %v4843 = vpop.permute.xlu0 %4842
        %v4844 = vlaneseq
        %v4845 = vshrl.u32 %v4844, 7
        %v4846 = vadd.s32 %v4845, 8
        %4847 = vset.pattern.permute.xlu0 %v4846
        %4848 = vperm.xlu0 %4847, %v4837
        %v4849 = vpop.permute.xlu0 %4848
        %v4850 = vperm.slane %v4236, 7
        %v4851 = vlaneseq
        %v4852 = vshrl.u32 %v4851, 7
        %4854 = vset.pattern.permute.xlu0 %v4852
        %4855 = vperm.xlu0 %4854, %v4850
        %v4856 = vpop.permute.xlu0 %4855
        %v4857 = vlaneseq
        %v4858 = vshrl.u32 %v4857, 7
        %v4859 = vadd.s32 %v4858, 8
        %4860 = vset.pattern.permute.xlu0 %v4859
        %4861 = vperm.xlu0 %4860, %v4850
        %v4862 = vpop.permute.xlu0 %4861
        %v4863 = vperm.slane %v4237, 0
        %v4864 = vlaneseq
        %v4865 = vshrl.u32 %v4864, 7
        %4867 = vset.pattern.permute.xlu0 %v4865
        %4868 = vperm.xlu0 %4867, %v4863
        %v4869 = vpop.permute.xlu0 %4868
        %v4870 = vlaneseq
        %v4871 = vshrl.u32 %v4870, 7
        %v4872 = vadd.s32 %v4871, 8
        %4873 = vset.pattern.permute.xlu0 %v4872
        %4874 = vperm.xlu0 %4873, %v4863
        %v4875 = vpop.permute.xlu0 %4874
        %v4876 = vperm.slane %v4237, 1
        %v4877 = vlaneseq
        %v4878 = vshrl.u32 %v4877, 7
        %4880 = vset.pattern.permute.xlu0 %v4878
        %4881 = vperm.xlu0 %4880, %v4876
        %v4882 = vpop.permute.xlu0 %4881
        %v4883 = vlaneseq
        %v4884 = vshrl.u32 %v4883, 7
        %v4885 = vadd.s32 %v4884, 8
        %4886 = vset.pattern.permute.xlu0 %v4885
        %4887 = vperm.xlu0 %4886, %v4876
        %v4888 = vpop.permute.xlu0 %4887
        %v4889 = vperm.slane %v4237, 2
        %v4890 = vlaneseq
        %v4891 = vshrl.u32 %v4890, 7
        %4893 = vset.pattern.permute.xlu0 %v4891
        %4894 = vperm.xlu0 %4893, %v4889
        %v4895 = vpop.permute.xlu0 %4894
        %v4896 = vlaneseq
        %v4897 = vshrl.u32 %v4896, 7
        %v4898 = vadd.s32 %v4897, 8
        %4899 = vset.pattern.permute.xlu0 %v4898
        %4900 = vperm.xlu0 %4899, %v4889
        %v4901 = vpop.permute.xlu0 %4900
        %v4902 = vperm.slane %v4237, 3
        %v4903 = vlaneseq
        %v4904 = vshrl.u32 %v4903, 7
        %4906 = vset.pattern.permute.xlu0 %v4904
        %4907 = vperm.xlu0 %4906, %v4902
        %v4908 = vpop.permute.xlu0 %4907
        %v4909 = vlaneseq
        %v4910 = vshrl.u32 %v4909, 7
        %v4911 = vadd.s32 %v4910, 8
        %4912 = vset.pattern.permute.xlu0 %v4911
        %4913 = vperm.xlu0 %4912, %v4902
        %v4914 = vpop.permute.xlu0 %4913
        %v4915 = vperm.slane %v4237, 4
        %v4916 = vlaneseq
        %v4917 = vshrl.u32 %v4916, 7
        %4919 = vset.pattern.permute.xlu0 %v4917
        %4920 = vperm.xlu0 %4919, %v4915
        %v4921 = vpop.permute.xlu0 %4920
        %v4922 = vlaneseq
        %v4923 = vshrl.u32 %v4922, 7
        %v4924 = vadd.s32 %v4923, 8
        %4925 = vset.pattern.permute.xlu0 %v4924
        %4926 = vperm.xlu0 %4925, %v4915
        %v4927 = vpop.permute.xlu0 %4926
        %v4928 = vperm.slane %v4237, 5
        %v4929 = vlaneseq
        %v4930 = vshrl.u32 %v4929, 7
        %4932 = vset.pattern.permute.xlu0 %v4930
        %4933 = vperm.xlu0 %4932, %v4928
        %v4934 = vpop.permute.xlu0 %4933
        %v4935 = vlaneseq
        %v4936 = vshrl.u32 %v4935, 7
        %v4937 = vadd.s32 %v4936, 8
        %4938 = vset.pattern.permute.xlu0 %v4937
        %4939 = vperm.xlu0 %4938, %v4928
        %v4940 = vpop.permute.xlu0 %4939
        %v4941 = vperm.slane %v4237, 6
        %v4942 = vlaneseq
        %v4943 = vshrl.u32 %v4942, 7
        %4945 = vset.pattern.permute.xlu0 %v4943
        %4946 = vperm.xlu0 %4945, %v4941
        %v4947 = vpop.permute.xlu0 %4946
        %v4948 = vlaneseq
        %v4949 = vshrl.u32 %v4948, 7
        %v4950 = vadd.s32 %v4949, 8
        %4951 = vset.pattern.permute.xlu0 %v4950
        %4952 = vperm.xlu0 %4951, %v4941
        %v4953 = vpop.permute.xlu0 %4952
        %v4954 = vperm.slane %v4237, 7
        %v4955 = vlaneseq
        %v4956 = vshrl.u32 %v4955, 7
        %4958 = vset.pattern.permute.xlu0 %v4956
        %4959 = vperm.xlu0 %4958, %v4954
        %v4960 = vpop.permute.xlu0 %4959
        %v4961 = vlaneseq
        %v4962 = vshrl.u32 %v4961, 7
        %v4963 = vadd.s32 %v4962, 8
        %4964 = vset.pattern.permute.xlu0 %v4963
        %4965 = vperm.xlu0 %4964, %v4954
        %v4966 = vpop.permute.xlu0 %4965
        %v4967 = vperm.slane %v4238, 0
        %v4968 = vlaneseq
        %v4969 = vshrl.u32 %v4968, 7
        %4971 = vset.pattern.permute.xlu0 %v4969
        %4972 = vperm.xlu0 %4971, %v4967
        %v4973 = vpop.permute.xlu0 %4972
        %v4974 = vlaneseq
        %v4975 = vshrl.u32 %v4974, 7
        %v4976 = vadd.s32 %v4975, 8
        %4977 = vset.pattern.permute.xlu0 %v4976
        %4978 = vperm.xlu0 %4977, %v4967
        %v4979 = vpop.permute.xlu0 %4978
        %v4980 = vperm.slane %v4238, 1
        %v4981 = vlaneseq
        %v4982 = vshrl.u32 %v4981, 7
        %4984 = vset.pattern.permute.xlu0 %v4982
        %4985 = vperm.xlu0 %4984, %v4980
        %v4986 = vpop.permute.xlu0 %4985
        %v4987 = vlaneseq
        %v4988 = vshrl.u32 %v4987, 7
        %v4989 = vadd.s32 %v4988, 8
        %4990 = vset.pattern.permute.xlu0 %v4989
        %4991 = vperm.xlu0 %4990, %v4980
        %v4992 = vpop.permute.xlu0 %4991
        %v4993 = vperm.slane %v4238, 2
        %v4994 = vlaneseq
        %v4995 = vshrl.u32 %v4994, 7
        %4997 = vset.pattern.permute.xlu0 %v4995
        %4998 = vperm.xlu0 %4997, %v4993
        %v4999 = vpop.permute.xlu0 %4998
        %v5000 = vlaneseq
        %v5001 = vshrl.u32 %v5000, 7
        %v5002 = vadd.s32 %v5001, 8
        %5003 = vset.pattern.permute.xlu0 %v5002
        %5004 = vperm.xlu0 %5003, %v4993
        %v5005 = vpop.permute.xlu0 %5004
        %v5006 = vperm.slane %v4238, 3
        %v5007 = vlaneseq
        %v5008 = vshrl.u32 %v5007, 7
        %5010 = vset.pattern.permute.xlu0 %v5008
        %5011 = vperm.xlu0 %5010, %v5006
        %v5012 = vpop.permute.xlu0 %5011
        %v5013 = vlaneseq
        %v5014 = vshrl.u32 %v5013, 7
        %v5015 = vadd.s32 %v5014, 8
        %5016 = vset.pattern.permute.xlu0 %v5015
        %5017 = vperm.xlu0 %5016, %v5006
        %v5018 = vpop.permute.xlu0 %5017
        %v5019 = vperm.slane %v4238, 4
        %v5020 = vlaneseq
        %v5021 = vshrl.u32 %v5020, 7
        %5023 = vset.pattern.permute.xlu0 %v5021
        %5024 = vperm.xlu0 %5023, %v5019
        %v5025 = vpop.permute.xlu0 %5024
        %v5026 = vlaneseq
        %v5027 = vshrl.u32 %v5026, 7
        %v5028 = vadd.s32 %v5027, 8
        %5029 = vset.pattern.permute.xlu0 %v5028
        %5030 = vperm.xlu0 %5029, %v5019
        %v5031 = vpop.permute.xlu0 %5030
        %v5032 = vperm.slane %v4238, 5
        %v5033 = vlaneseq
        %v5034 = vshrl.u32 %v5033, 7
        %5036 = vset.pattern.permute.xlu0 %v5034
        %5037 = vperm.xlu0 %5036, %v5032
        %v5038 = vpop.permute.xlu0 %5037
        %v5039 = vlaneseq
        %v5040 = vshrl.u32 %v5039, 7
        %v5041 = vadd.s32 %v5040, 8
        %5042 = vset.pattern.permute.xlu0 %v5041
        %5043 = vperm.xlu0 %5042, %v5032
        %v5044 = vpop.permute.xlu0 %5043
        %v5045 = vperm.slane %v4238, 6
        %v5046 = vlaneseq
        %v5047 = vshrl.u32 %v5046, 7
        %5049 = vset.pattern.permute.xlu0 %v5047
        %5050 = vperm.xlu0 %5049, %v5045
        %v5051 = vpop.permute.xlu0 %5050
        %v5052 = vlaneseq
        %v5053 = vshrl.u32 %v5052, 7
        %v5054 = vadd.s32 %v5053, 8
        %5055 = vset.pattern.permute.xlu0 %v5054
        %5056 = vperm.xlu0 %5055, %v5045
        %v5057 = vpop.permute.xlu0 %5056
        %v5058 = vperm.slane %v4238, 7
        %v5059 = vlaneseq
        %v5060 = vshrl.u32 %v5059, 7
        %5062 = vset.pattern.permute.xlu0 %v5060
        %5063 = vperm.xlu0 %5062, %v5058
        %v5064 = vpop.permute.xlu0 %5063
        %v5065 = vlaneseq
        %v5066 = vshrl.u32 %v5065, 7
        %v5067 = vadd.s32 %v5066, 8
        %5068 = vset.pattern.permute.xlu0 %v5067
        %5069 = vperm.xlu0 %5068, %v5058
        %v5070 = vpop.permute.xlu0 %5069
        %v5071 = vadd.f32 %v3904, %v4245
        %v5072 = vadd.f32 %v3906, %v4251
        %v5073 = vadd.f32 %v3909, %v4258
        %v5074 = vadd.f32 %v3911, %v4264
        %v5075 = vadd.f32 %v3914, %v4271
        %v5076 = vadd.f32 %v3916, %v4277
        %v5077 = vadd.f32 %v3919, %v4284
        %v5078 = vadd.f32 %v3921, %v4290
        %v5079 = vadd.f32 %v3924, %v4297
        %v5080 = vadd.f32 %v3926, %v4303
        %v5081 = vadd.f32 %v3929, %v4310
        %v5082 = vadd.f32 %v3931, %v4316
        %v5083 = vadd.f32 %v3934, %v4323
        %v5084 = vadd.f32 %v3936, %v4329
        %v5085 = vadd.f32 %v3939, %v4336
        %v5086 = vadd.f32 %v3941, %v4342
        %v5087 = vadd.f32 %v3944, %v4349
        %v5088 = vadd.f32 %v3946, %v4355
        %v5089 = vadd.f32 %v3949, %v4362
        %v5090 = vadd.f32 %v3951, %v4368
        %v5091 = vadd.f32 %v3954, %v4375
        %v5092 = vadd.f32 %v3956, %v4381
        %v5093 = vadd.f32 %v3959, %v4388
        %v5094 = vadd.f32 %v3961, %v4394
        %v5095 = vadd.f32 %v3964, %v4401
        %v5096 = vadd.f32 %v3966, %v4407
        %v5097 = vadd.f32 %v3969, %v4414
        %v5098 = vadd.f32 %v3971, %v4420
        %v5099 = vadd.f32 %v3974, %v4427
        %v5100 = vadd.f32 %v3976, %v4433
        %v5101 = vadd.f32 %v3979, %v4440
        %v5102 = vadd.f32 %v3981, %v4446
        %v5103 = vadd.f32 %v3984, %v4453
        %v5104 = vadd.f32 %v3986, %v4459
        %v5105 = vadd.f32 %v3989, %v4466
        %v5106 = vadd.f32 %v3991, %v4472
        %v5107 = vadd.f32 %v3994, %v4479
        %v5108 = vadd.f32 %v3996, %v4485
        %v5109 = vadd.f32 %v3999, %v4492
        %v5110 = vadd.f32 %v4001, %v4498
        %v5111 = vadd.f32 %v4004, %v4505
        %v5112 = vadd.f32 %v4006, %v4511
        %v5113 = vadd.f32 %v4009, %v4518
        %v5114 = vadd.f32 %v4011, %v4524
        %v5115 = vadd.f32 %v4014, %v4531
        %v5116 = vadd.f32 %v4016, %v4537
        %v5117 = vadd.f32 %v4019, %v4544
        %v5118 = vadd.f32 %v4021, %v4550
        %v5119 = vadd.f32 %v4024, %v4557
        %v5120 = vadd.f32 %v4026, %v4563
        %v5121 = vadd.f32 %v4029, %v4570
        %v5122 = vadd.f32 %v4031, %v4576
        %v5123 = vadd.f32 %v4034, %v4583
        %v5124 = vadd.f32 %v4036, %v4589
        %v5125 = vadd.f32 %v4039, %v4596
        %v5126 = vadd.f32 %v4041, %v4602
        %v5127 = vadd.f32 %v4044, %v4609
        %v5128 = vadd.f32 %v4046, %v4615
        %v5129 = vadd.f32 %v4049, %v4622
        %v5130 = vadd.f32 %v4051, %v4628
        %v5131 = vadd.f32 %v4054, %v4635
        %v5132 = vadd.f32 %v4056, %v4641
        %v5133 = vadd.f32 %v4059, %v4648
        %v5134 = vadd.f32 %v4061, %v4654
        %v5135 = vadd.f32 %v4064, %v4661
        %v5136 = vadd.f32 %v4066, %v4667
        %v5137 = vadd.f32 %v4069, %v4674
        %v5138 = vadd.f32 %v4071, %v4680
        %v5139 = vadd.f32 %v4074, %v4687
        %v5140 = vadd.f32 %v4076, %v4693
        %v5141 = vadd.f32 %v4079, %v4700
        %v5142 = vadd.f32 %v4081, %v4706
        %v5143 = vadd.f32 %v4084, %v4713
        %v5144 = vadd.f32 %v4086, %v4719
        %v5145 = vadd.f32 %v4089, %v4726
        %v5146 = vadd.f32 %v4091, %v4732
        %v5147 = vadd.f32 %v4094, %v4739
        %v5148 = vadd.f32 %v4096, %v4745
        %v5149 = vadd.f32 %v4099, %v4752
        %v5150 = vadd.f32 %v4101, %v4758
        %v5151 = vadd.f32 %v4104, %v4765
        %v5152 = vadd.f32 %v4106, %v4771
        %v5153 = vadd.f32 %v4109, %v4778
        %v5154 = vadd.f32 %v4111, %v4784
        %v5155 = vadd.f32 %v4114, %v4791
        %v5156 = vadd.f32 %v4116, %v4797
        %v5157 = vadd.f32 %v4119, %v4804
        %v5158 = vadd.f32 %v4121, %v4810
        %v5159 = vadd.f32 %v4124, %v4817
        %v5160 = vadd.f32 %v4126, %v4823
        %v5161 = vadd.f32 %v4129, %v4830
        %v5162 = vadd.f32 %v4131, %v4836
        %v5163 = vadd.f32 %v4134, %v4843
        %v5164 = vadd.f32 %v4136, %v4849
        %v5165 = vadd.f32 %v4139, %v4856
        %v5166 = vadd.f32 %v4141, %v4862
        %v5167 = vadd.f32 %v4144, %v4869
        %v5168 = vadd.f32 %v4146, %v4875
        %v5169 = vadd.f32 %v4149, %v4882
        %v5170 = vadd.f32 %v4151, %v4888
        %v5171 = vadd.f32 %v4154, %v4895
        %v5172 = vadd.f32 %v4156, %v4901
        %v5173 = vadd.f32 %v4159, %v4908
        %v5174 = vadd.f32 %v4161, %v4914
        %v5175 = vadd.f32 %v4164, %v4921
        %v5176 = vadd.f32 %v4166, %v4927
        %v5177 = vadd.f32 %v4169, %v4934
        %v5178 = vadd.f32 %v4171, %v4940
        %v5179 = vadd.f32 %v4174, %v4947
        %v5180 = vadd.f32 %v4176, %v4953
        %v5181 = vadd.f32 %v4179, %v4960
        %v5182 = vadd.f32 %v4181, %v4966
        %v5183 = vadd.f32 %v4184, %v4973
        %v5184 = vadd.f32 %v4186, %v4979
        %v5185 = vadd.f32 %v4189, %v4986
        %v5186 = vadd.f32 %v4191, %v4992
        %v5187 = vadd.f32 %v4194, %v4999
        %v5188 = vadd.f32 %v4196, %v5005
        %v5189 = vadd.f32 %v4199, %v5012
        %v5190 = vadd.f32 %v4201, %v5018
        %v5191 = vadd.f32 %v4204, %v5025
        %v5192 = vadd.f32 %v4206, %v5031
        %v5193 = vadd.f32 %v4209, %v5038
        %v5194 = vadd.f32 %v4211, %v5044
        %v5195 = vadd.f32 %v4214, %v5051
        %v5196 = vadd.f32 %v4216, %v5057
        %v5197 = vadd.f32 %v4219, %v5064
        %v5198 = vadd.f32 %v4221, %v5070
        %v5199 = vmax.f32 %v5071, %v5073
        %v5200 = vmax.f32 %v5199, %v5075
        %v5201 = vmax.f32 %v5200, %v5077
        %v5202 = vmax.f32 %v5201, %v5079
        %v5203 = vmax.f32 %v5202, %v5081
        %v5204 = vmax.f32 %v5203, %v5083
        %v5205 = vmax.f32 %v5204, %v5085
        %v5206 = vmax.f32 %v5205, %v5087
        %v5207 = vmax.f32 %v5206, %v5089
        %v5208 = vmax.f32 %v5207, %v5091
        %v5209 = vmax.f32 %v5208, %v5093
        %v5210 = vmax.f32 %v5209, %v5095
        %v5211 = vmax.f32 %v5210, %v5097
        %v5212 = vmax.f32 %v5211, %v5099
        %v5213 = vmax.f32 %v5212, %v5101
        %v5214 = vmax.f32 %v5072, %v5074
        %v5215 = vmax.f32 %v5214, %v5076
        %v5216 = vmax.f32 %v5215, %v5078
        %v5217 = vmax.f32 %v5216, %v5080
        %v5218 = vmax.f32 %v5217, %v5082
        %v5219 = vmax.f32 %v5218, %v5084
        %v5220 = vmax.f32 %v5219, %v5086
        %v5221 = vmax.f32 %v5220, %v5088
        %v5222 = vmax.f32 %v5221, %v5090
        %v5223 = vmax.f32 %v5222, %v5092
        %v5224 = vmax.f32 %v5223, %v5094
        %v5225 = vmax.f32 %v5224, %v5096
        %v5226 = vmax.f32 %v5225, %v5098
        %v5227 = vmax.f32 %v5226, %v5100
        %v5228 = vmax.f32 %v5227, %v5102
        %v5229 = vmax.f32 %v5103, %v5105
        %v5230 = vmax.f32 %v5229, %v5107
        %v5231 = vmax.f32 %v5230, %v5109
        %v5232 = vmax.f32 %v5231, %v5111
        %v5233 = vmax.f32 %v5232, %v5113
        %v5234 = vmax.f32 %v5233, %v5115
        %v5235 = vmax.f32 %v5234, %v5117
        %v5236 = vmax.f32 %v5235, %v5119
        %v5237 = vmax.f32 %v5236, %v5121
        %v5238 = vmax.f32 %v5237, %v5123
        %v5239 = vmax.f32 %v5238, %v5125
        %v5240 = vmax.f32 %v5239, %v5127
        %v5241 = vmax.f32 %v5240, %v5129
        %v5242 = vmax.f32 %v5241, %v5131
        %v5243 = vmax.f32 %v5242, %v5133
        %v5244 = vmax.f32 %v5104, %v5106
        %v5245 = vmax.f32 %v5244, %v5108
        %v5246 = vmax.f32 %v5245, %v5110
        %v5247 = vmax.f32 %v5246, %v5112
        %v5248 = vmax.f32 %v5247, %v5114
        %v5249 = vmax.f32 %v5248, %v5116
        %v5250 = vmax.f32 %v5249, %v5118
        %v5251 = vmax.f32 %v5250, %v5120
        %v5252 = vmax.f32 %v5251, %v5122
        %v5253 = vmax.f32 %v5252, %v5124
        %v5254 = vmax.f32 %v5253, %v5126
        %v5255 = vmax.f32 %v5254, %v5128
        %v5256 = vmax.f32 %v5255, %v5130
        %v5257 = vmax.f32 %v5256, %v5132
        %v5258 = vmax.f32 %v5257, %v5134
        %v5259 = vmax.f32 %v5135, %v5137
        %v5260 = vmax.f32 %v5259, %v5139
        %v5261 = vmax.f32 %v5260, %v5141
        %v5262 = vmax.f32 %v5261, %v5143
        %v5263 = vmax.f32 %v5262, %v5145
        %v5264 = vmax.f32 %v5263, %v5147
        %v5265 = vmax.f32 %v5264, %v5149
        %v5266 = vmax.f32 %v5265, %v5151
        %v5267 = vmax.f32 %v5266, %v5153
        %v5268 = vmax.f32 %v5267, %v5155
        %v5269 = vmax.f32 %v5268, %v5157
        %v5270 = vmax.f32 %v5269, %v5159
        %v5271 = vmax.f32 %v5270, %v5161
        %v5272 = vmax.f32 %v5271, %v5163
        %v5273 = vmax.f32 %v5272, %v5165
        %v5274 = vmax.f32 %v5136, %v5138
        %v5275 = vmax.f32 %v5274, %v5140
        %v5276 = vmax.f32 %v5275, %v5142
        %v5277 = vmax.f32 %v5276, %v5144
        %v5278 = vmax.f32 %v5277, %v5146
        %v5279 = vmax.f32 %v5278, %v5148
        %v5280 = vmax.f32 %v5279, %v5150
        %v5281 = vmax.f32 %v5280, %v5152
        %v5282 = vmax.f32 %v5281, %v5154
        %v5283 = vmax.f32 %v5282, %v5156
        %v5284 = vmax.f32 %v5283, %v5158
        %v5285 = vmax.f32 %v5284, %v5160
        %v5286 = vmax.f32 %v5285, %v5162
        %v5287 = vmax.f32 %v5286, %v5164
        %v5288 = vmax.f32 %v5287, %v5166
        %v5289 = vmax.f32 %v5167, %v5169
        %v5290 = vmax.f32 %v5289, %v5171
        %v5291 = vmax.f32 %v5290, %v5173
        %v5292 = vmax.f32 %v5291, %v5175
        %v5293 = vmax.f32 %v5292, %v5177
        %v5294 = vmax.f32 %v5293, %v5179
        %v5295 = vmax.f32 %v5294, %v5181
        %v5296 = vmax.f32 %v5295, %v5183
        %v5297 = vmax.f32 %v5296, %v5185
        %v5298 = vmax.f32 %v5297, %v5187
        %v5299 = vmax.f32 %v5298, %v5189
        %v5300 = vmax.f32 %v5299, %v5191
        %v5301 = vmax.f32 %v5300, %v5193
        %v5302 = vmax.f32 %v5301, %v5195
        %v5303 = vmax.f32 %v5302, %v5197
        %v5304 = vmax.f32 %v5168, %v5170
        %v5305 = vmax.f32 %v5304, %v5172
        %v5306 = vmax.f32 %v5305, %v5174
        %v5307 = vmax.f32 %v5306, %v5176
        %v5308 = vmax.f32 %v5307, %v5178
        %v5309 = vmax.f32 %v5308, %v5180
        %v5310 = vmax.f32 %v5309, %v5182
        %v5311 = vmax.f32 %v5310, %v5184
        %v5312 = vmax.f32 %v5311, %v5186
        %v5313 = vmax.f32 %v5312, %v5188
        %v5314 = vmax.f32 %v5313, %v5190
        %v5315 = vmax.f32 %v5314, %v5192
        %v5316 = vmax.f32 %v5315, %v5194
        %v5317 = vmax.f32 %v5316, %v5196
        %v5318 = vmax.f32 %v5317, %v5198
        %v5319 = vsub.f32 %v5071, %v5213
        %v5320 = vsub.f32 %v5072, %v5228
        %v5321 = vsub.f32 %v5073, %v5213
        %v5322 = vsub.f32 %v5074, %v5228
        %v5323 = vsub.f32 %v5075, %v5213
        %v5324 = vsub.f32 %v5076, %v5228
        %v5325 = vsub.f32 %v5077, %v5213
        %v5326 = vsub.f32 %v5078, %v5228
        %v5327 = vsub.f32 %v5079, %v5213
        %v5328 = vsub.f32 %v5080, %v5228
        %v5329 = vsub.f32 %v5081, %v5213
        %v5330 = vsub.f32 %v5082, %v5228
        %v5331 = vsub.f32 %v5083, %v5213
        %v5332 = vsub.f32 %v5084, %v5228
        %v5333 = vsub.f32 %v5085, %v5213
        %v5334 = vsub.f32 %v5086, %v5228
        %v5335 = vsub.f32 %v5087, %v5213
        %v5336 = vsub.f32 %v5088, %v5228
        %v5337 = vsub.f32 %v5089, %v5213
        %v5338 = vsub.f32 %v5090, %v5228
        %v5339 = vsub.f32 %v5091, %v5213
        %v5340 = vsub.f32 %v5092, %v5228
        %v5341 = vsub.f32 %v5093, %v5213
        %v5342 = vsub.f32 %v5094, %v5228
        %v5343 = vsub.f32 %v5095, %v5213
        %v5344 = vsub.f32 %v5096, %v5228
        %v5345 = vsub.f32 %v5097, %v5213
        %v5346 = vsub.f32 %v5098, %v5228
        %v5347 = vsub.f32 %v5099, %v5213
        %v5348 = vsub.f32 %v5100, %v5228
        %v5349 = vsub.f32 %v5101, %v5213
        %v5350 = vsub.f32 %v5102, %v5228
        %v5351 = vsub.f32 %v5103, %v5243
        %v5352 = vsub.f32 %v5104, %v5258
        %v5353 = vsub.f32 %v5105, %v5243
        %v5354 = vsub.f32 %v5106, %v5258
        %v5355 = vsub.f32 %v5107, %v5243
        %v5356 = vsub.f32 %v5108, %v5258
        %v5357 = vsub.f32 %v5109, %v5243
        %v5358 = vsub.f32 %v5110, %v5258
        %v5359 = vsub.f32 %v5111, %v5243
        %v5360 = vsub.f32 %v5112, %v5258
        %v5361 = vsub.f32 %v5113, %v5243
        %v5362 = vsub.f32 %v5114, %v5258
        %v5363 = vsub.f32 %v5115, %v5243
        %v5364 = vsub.f32 %v5116, %v5258
        %v5365 = vsub.f32 %v5117, %v5243
        %v5366 = vsub.f32 %v5118, %v5258
        %v5367 = vsub.f32 %v5119, %v5243
        %v5368 = vsub.f32 %v5120, %v5258
        %v5369 = vsub.f32 %v5121, %v5243
        %v5370 = vsub.f32 %v5122, %v5258
        %v5371 = vsub.f32 %v5123, %v5243
        %v5372 = vsub.f32 %v5124, %v5258
        %v5373 = vsub.f32 %v5125, %v5243
        %v5374 = vsub.f32 %v5126, %v5258
        %v5375 = vsub.f32 %v5127, %v5243
        %v5376 = vsub.f32 %v5128, %v5258
        %v5377 = vsub.f32 %v5129, %v5243
        %v5378 = vsub.f32 %v5130, %v5258
        %v5379 = vsub.f32 %v5131, %v5243
        %v5380 = vsub.f32 %v5132, %v5258
        %v5381 = vsub.f32 %v5133, %v5243
        %v5382 = vsub.f32 %v5134, %v5258
        %v5383 = vsub.f32 %v5135, %v5273
        %v5384 = vsub.f32 %v5136, %v5288
        %v5385 = vsub.f32 %v5137, %v5273
        %v5386 = vsub.f32 %v5138, %v5288
        %v5387 = vsub.f32 %v5139, %v5273
        %v5388 = vsub.f32 %v5140, %v5288
        %v5389 = vsub.f32 %v5141, %v5273
        %v5390 = vsub.f32 %v5142, %v5288
        %v5391 = vsub.f32 %v5143, %v5273
        %v5392 = vsub.f32 %v5144, %v5288
        %v5393 = vsub.f32 %v5145, %v5273
        %v5394 = vsub.f32 %v5146, %v5288
        %v5395 = vsub.f32 %v5147, %v5273
        %v5396 = vsub.f32 %v5148, %v5288
        %v5397 = vsub.f32 %v5149, %v5273
        %v5398 = vsub.f32 %v5150, %v5288
        %v5399 = vsub.f32 %v5151, %v5273
        %v5400 = vsub.f32 %v5152, %v5288
        %v5401 = vsub.f32 %v5153, %v5273
        %v5402 = vsub.f32 %v5154, %v5288
        %v5403 = vsub.f32 %v5155, %v5273
        %v5404 = vsub.f32 %v5156, %v5288
        %v5405 = vsub.f32 %v5157, %v5273
        %v5406 = vsub.f32 %v5158, %v5288
        %v5407 = vsub.f32 %v5159, %v5273
        %v5408 = vsub.f32 %v5160, %v5288
        %v5409 = vsub.f32 %v5161, %v5273
        %v5410 = vsub.f32 %v5162, %v5288
        %v5411 = vsub.f32 %v5163, %v5273
        %v5412 = vsub.f32 %v5164, %v5288
        %v5413 = vsub.f32 %v5165, %v5273
        %v5414 = vsub.f32 %v5166, %v5288
        %v5415 = vsub.f32 %v5167, %v5303
        %v5416 = vsub.f32 %v5168, %v5318
        %v5417 = vsub.f32 %v5169, %v5303
        %v5418 = vsub.f32 %v5170, %v5318
        %v5419 = vsub.f32 %v5171, %v5303
        %v5420 = vsub.f32 %v5172, %v5318
        %v5421 = vsub.f32 %v5173, %v5303
        %v5422 = vsub.f32 %v5174, %v5318
        %v5423 = vsub.f32 %v5175, %v5303
        %v5424 = vsub.f32 %v5176, %v5318
        %v5425 = vsub.f32 %v5177, %v5303
        %v5426 = vsub.f32 %v5178, %v5318
        %v5427 = vsub.f32 %v5179, %v5303
        %v5428 = vsub.f32 %v5180, %v5318
        %v5429 = vsub.f32 %v5181, %v5303
        %v5430 = vsub.f32 %v5182, %v5318
        %v5431 = vsub.f32 %v5183, %v5303
        %v5432 = vsub.f32 %v5184, %v5318
        %v5433 = vsub.f32 %v5185, %v5303
        %v5434 = vsub.f32 %v5186, %v5318
        %v5435 = vsub.f32 %v5187, %v5303
        %v5436 = vsub.f32 %v5188, %v5318
        %v5437 = vsub.f32 %v5189, %v5303
        %v5438 = vsub.f32 %v5190, %v5318
        %v5439 = vsub.f32 %v5191, %v5303
        %v5440 = vsub.f32 %v5192, %v5318
        %v5441 = vsub.f32 %v5193, %v5303
        %v5442 = vsub.f32 %v5194, %v5318
        %v5443 = vsub.f32 %v5195, %v5303
        %v5444 = vsub.f32 %v5196, %v5318
        %v5445 = vsub.f32 %v5197, %v5303
        %v5446 = vsub.f32 %v5198, %v5318
        %v5447 = vmul.f32 %v5319, 1.442695
        %v5448 = vpow.pop %v5447
        %v5449 = vmul.f32 %v5320, 1.442695
        %v5450 = vpow.pop %v5449
        %v5451 = vmul.f32 %v5321, 1.442695
        %v5452 = vpow.pop %v5451
        %v5453 = vmul.f32 %v5322, 1.442695
        %v5454 = vpow.pop %v5453
        %v5455 = vmul.f32 %v5323, 1.442695
        %v5456 = vpow.pop %v5455
        %v5457 = vmul.f32 %v5324, 1.442695
        %v5458 = vpow.pop %v5457
        %v5459 = vmul.f32 %v5325, 1.442695
        %v5460 = vpow.pop %v5459
        %v5461 = vmul.f32 %v5326, 1.442695
        %v5462 = vpow.pop %v5461
        %v5463 = vmul.f32 %v5327, 1.442695
        %v5464 = vpow.pop %v5463
        %v5465 = vmul.f32 %v5328, 1.442695
        %v5466 = vpow.pop %v5465
        %v5467 = vmul.f32 %v5329, 1.442695
        %v5468 = vpow.pop %v5467
        %v5469 = vmul.f32 %v5330, 1.442695
        %v5470 = vpow.pop %v5469
        %v5471 = vmul.f32 %v5331, 1.442695
        %v5472 = vpow.pop %v5471
        %v5473 = vmul.f32 %v5332, 1.442695
        %v5474 = vpow.pop %v5473
        %v5475 = vmul.f32 %v5333, 1.442695
        %v5476 = vpow.pop %v5475
        %v5477 = vmul.f32 %v5334, 1.442695
        %v5478 = vpow.pop %v5477
        %v5479 = vmul.f32 %v5335, 1.442695
        %v5480 = vpow.pop %v5479
        %v5481 = vmul.f32 %v5336, 1.442695
        %v5482 = vpow.pop %v5481
        %v5483 = vmul.f32 %v5337, 1.442695
        %v5484 = vpow.pop %v5483
        %v5485 = vmul.f32 %v5338, 1.442695
        %v5486 = vpow.pop %v5485
        %v5487 = vmul.f32 %v5339, 1.442695
        %v5488 = vpow.pop %v5487
        %v5489 = vmul.f32 %v5340, 1.442695
        %v5490 = vpow.pop %v5489
        %v5491 = vmul.f32 %v5341, 1.442695
        %v5492 = vpow.pop %v5491
        %v5493 = vmul.f32 %v5342, 1.442695
        %v5494 = vpow.pop %v5493
        %v5495 = vmul.f32 %v5343, 1.442695
        %v5496 = vpow.pop %v5495
        %v5497 = vmul.f32 %v5344, 1.442695
        %v5498 = vpow.pop %v5497
        %v5499 = vmul.f32 %v5345, 1.442695
        %v5500 = vpow.pop %v5499
        %v5501 = vmul.f32 %v5346, 1.442695
        %v5502 = vpow.pop %v5501
        %v5503 = vmul.f32 %v5347, 1.442695
        %v5504 = vpow.pop %v5503
        %v5505 = vmul.f32 %v5348, 1.442695
        %v5506 = vpow.pop %v5505
        %v5507 = vmul.f32 %v5349, 1.442695
        %v5508 = vpow.pop %v5507
        %v5509 = vmul.f32 %v5350, 1.442695
        %v5510 = vpow.pop %v5509
        %v5511 = vmul.f32 %v5351, 1.442695
        %v5512 = vpow.pop %v5511
        %v5513 = vmul.f32 %v5352, 1.442695
        %v5514 = vpow.pop %v5513
        %v5515 = vmul.f32 %v5353, 1.442695
        %v5516 = vpow.pop %v5515
        %v5517 = vmul.f32 %v5354, 1.442695
        %v5518 = vpow.pop %v5517
        %v5519 = vmul.f32 %v5355, 1.442695
        %v5520 = vpow.pop %v5519
        %v5521 = vmul.f32 %v5356, 1.442695
        %v5522 = vpow.pop %v5521
        %v5523 = vmul.f32 %v5357, 1.442695
        %v5524 = vpow.pop %v5523
        %v5525 = vmul.f32 %v5358, 1.442695
        %v5526 = vpow.pop %v5525
        %v5527 = vmul.f32 %v5359, 1.442695
        %v5528 = vpow.pop %v5527
        %v5529 = vmul.f32 %v5360, 1.442695
        %v5530 = vpow.pop %v5529
        %v5531 = vmul.f32 %v5361, 1.442695
        %v5532 = vpow.pop %v5531
        %v5533 = vmul.f32 %v5362, 1.442695
        %v5534 = vpow.pop %v5533
        %v5535 = vmul.f32 %v5363, 1.442695
        %v5536 = vpow.pop %v5535
        %v5537 = vmul.f32 %v5364, 1.442695
        %v5538 = vpow.pop %v5537
        %v5539 = vmul.f32 %v5365, 1.442695
        %v5540 = vpow.pop %v5539
        %v5541 = vmul.f32 %v5366, 1.442695
        %v5542 = vpow.pop %v5541
        %v5543 = vmul.f32 %v5367, 1.442695
        %v5544 = vpow.pop %v5543
        %v5545 = vmul.f32 %v5368, 1.442695
        %v5546 = vpow.pop %v5545
        %v5547 = vmul.f32 %v5369, 1.442695
        %v5548 = vpow.pop %v5547
        %v5549 = vmul.f32 %v5370, 1.442695
        %v5550 = vpow.pop %v5549
        %v5551 = vmul.f32 %v5371, 1.442695
        %v5552 = vpow.pop %v5551
        %v5553 = vmul.f32 %v5372, 1.442695
        %v5554 = vpow.pop %v5553
        %v5555 = vmul.f32 %v5373, 1.442695
        %v5556 = vpow.pop %v5555
        %v5557 = vmul.f32 %v5374, 1.442695
        %v5558 = vpow.pop %v5557
        %v5559 = vmul.f32 %v5375, 1.442695
        %v5560 = vpow.pop %v5559
        %v5561 = vmul.f32 %v5376, 1.442695
        %v5562 = vpow.pop %v5561
        %v5563 = vmul.f32 %v5377, 1.442695
        %v5564 = vpow.pop %v5563
        %v5565 = vmul.f32 %v5378, 1.442695
        %v5566 = vpow.pop %v5565
        %v5567 = vmul.f32 %v5379, 1.442695
        %v5568 = vpow.pop %v5567
        %v5569 = vmul.f32 %v5380, 1.442695
        %v5570 = vpow.pop %v5569
        %v5571 = vmul.f32 %v5381, 1.442695
        %v5572 = vpow.pop %v5571
        %v5573 = vmul.f32 %v5382, 1.442695
        %v5574 = vpow.pop %v5573
        %v5575 = vmul.f32 %v5383, 1.442695
        %v5576 = vpow.pop %v5575
        %v5577 = vmul.f32 %v5384, 1.442695
        %v5578 = vpow.pop %v5577
        %v5579 = vmul.f32 %v5385, 1.442695
        %v5580 = vpow.pop %v5579
        %v5581 = vmul.f32 %v5386, 1.442695
        %v5582 = vpow.pop %v5581
        %v5583 = vmul.f32 %v5387, 1.442695
        %v5584 = vpow.pop %v5583
        %v5585 = vmul.f32 %v5388, 1.442695
        %v5586 = vpow.pop %v5585
        %v5587 = vmul.f32 %v5389, 1.442695
        %v5588 = vpow.pop %v5587
        %v5589 = vmul.f32 %v5390, 1.442695
        %v5590 = vpow.pop %v5589
        %v5591 = vmul.f32 %v5391, 1.442695
        %v5592 = vpow.pop %v5591
        %v5593 = vmul.f32 %v5392, 1.442695
        %v5594 = vpow.pop %v5593
        %v5595 = vmul.f32 %v5393, 1.442695
        %v5596 = vpow.pop %v5595
        %v5597 = vmul.f32 %v5394, 1.442695
        %v5598 = vpow.pop %v5597
        %v5599 = vmul.f32 %v5395, 1.442695
        %v5600 = vpow.pop %v5599
        %v5601 = vmul.f32 %v5396, 1.442695
        %v5602 = vpow.pop %v5601
        %v5603 = vmul.f32 %v5397, 1.442695
        %v5604 = vpow.pop %v5603
        %v5605 = vmul.f32 %v5398, 1.442695
        %v5606 = vpow.pop %v5605
        %v5607 = vmul.f32 %v5399, 1.442695
        %v5608 = vpow.pop %v5607
        %v5609 = vmul.f32 %v5400, 1.442695
        %v5610 = vpow.pop %v5609
        %v5611 = vmul.f32 %v5401, 1.442695
        %v5612 = vpow.pop %v5611
        %v5613 = vmul.f32 %v5402, 1.442695
        %v5614 = vpow.pop %v5613
        %v5615 = vmul.f32 %v5403, 1.442695
        %v5616 = vpow.pop %v5615
        %v5617 = vmul.f32 %v5404, 1.442695
        %v5618 = vpow.pop %v5617
        %v5619 = vmul.f32 %v5405, 1.442695
        %v5620 = vpow.pop %v5619
        %v5621 = vmul.f32 %v5406, 1.442695
        %v5622 = vpow.pop %v5621
        %v5623 = vmul.f32 %v5407, 1.442695
        %v5624 = vpow.pop %v5623
        %v5625 = vmul.f32 %v5408, 1.442695
        %v5626 = vpow.pop %v5625
        %v5627 = vmul.f32 %v5409, 1.442695
        %v5628 = vpow.pop %v5627
        %v5629 = vmul.f32 %v5410, 1.442695
        %v5630 = vpow.pop %v5629
        %v5631 = vmul.f32 %v5411, 1.442695
        %v5632 = vpow.pop %v5631
        %v5633 = vmul.f32 %v5412, 1.442695
        %v5634 = vpow.pop %v5633
        %v5635 = vmul.f32 %v5413, 1.442695
        %v5636 = vpow.pop %v5635
        %v5637 = vmul.f32 %v5414, 1.442695
        %v5638 = vpow.pop %v5637
        %v5639 = vmul.f32 %v5415, 1.442695
        %v5640 = vpow.pop %v5639
        %v5641 = vmul.f32 %v5416, 1.442695
        %v5642 = vpow.pop %v5641
        %v5643 = vmul.f32 %v5417, 1.442695
        %v5644 = vpow.pop %v5643
        %v5645 = vmul.f32 %v5418, 1.442695
        %v5646 = vpow.pop %v5645
        %v5647 = vmul.f32 %v5419, 1.442695
        %v5648 = vpow.pop %v5647
        %v5649 = vmul.f32 %v5420, 1.442695
        %v5650 = vpow.pop %v5649
        %v5651 = vmul.f32 %v5421, 1.442695
        %v5652 = vpow.pop %v5651
        %v5653 = vmul.f32 %v5422, 1.442695
        %v5654 = vpow.pop %v5653
        %v5655 = vmul.f32 %v5423, 1.442695
        %v5656 = vpow.pop %v5655
        %v5657 = vmul.f32 %v5424, 1.442695
        %v5658 = vpow.pop %v5657
        %v5659 = vmul.f32 %v5425, 1.442695
        %v5660 = vpow.pop %v5659
        %v5661 = vmul.f32 %v5426, 1.442695
        %v5662 = vpow.pop %v5661
        %v5663 = vmul.f32 %v5427, 1.442695
        %v5664 = vpow.pop %v5663
        %v5665 = vmul.f32 %v5428, 1.442695
        %v5666 = vpow.pop %v5665
        %v5667 = vmul.f32 %v5429, 1.442695
        %v5668 = vpow.pop %v5667
        %v5669 = vmul.f32 %v5430, 1.442695
        %v5670 = vpow.pop %v5669
        %v5671 = vmul.f32 %v5431, 1.442695
        %v5672 = vpow.pop %v5671
        %v5673 = vmul.f32 %v5432, 1.442695
        %v5674 = vpow.pop %v5673
        %v5675 = vmul.f32 %v5433, 1.442695
        %v5676 = vpow.pop %v5675
        %v5677 = vmul.f32 %v5434, 1.442695
        %v5678 = vpow.pop %v5677
        %v5679 = vmul.f32 %v5435, 1.442695
        %v5680 = vpow.pop %v5679
        %v5681 = vmul.f32 %v5436, 1.442695
        %v5682 = vpow.pop %v5681
        %v5683 = vmul.f32 %v5437, 1.442695
        %v5684 = vpow.pop %v5683
        %v5685 = vmul.f32 %v5438, 1.442695
        %v5686 = vpow.pop %v5685
        %v5687 = vmul.f32 %v5439, 1.442695
        %v5688 = vpow.pop %v5687
        %v5689 = vmul.f32 %v5440, 1.442695
        %v5690 = vpow.pop %v5689
        %v5691 = vmul.f32 %v5441, 1.442695
        %v5692 = vpow.pop %v5691
        %v5693 = vmul.f32 %v5442, 1.442695
        %v5694 = vpow.pop %v5693
        %v5695 = vmul.f32 %v5443, 1.442695
        %v5696 = vpow.pop %v5695
        %v5697 = vmul.f32 %v5444, 1.442695
        %v5698 = vpow.pop %v5697
        %v5699 = vmul.f32 %v5445, 1.442695
        %v5700 = vpow.pop %v5699
        %v5701 = vmul.f32 %v5446, 1.442695
        %v5702 = vpow.pop %v5701
        %v5703 = vmul.f32 %v5448, %v2139
        %v5704 = vmul.f32 %v5450, %v2145
        %v5705 = vmul.f32 %v5452, %v2152
        %v5706 = vmul.f32 %v5454, %v2158
        %v5707 = vmul.f32 %v5456, %v2165
        %v5708 = vmul.f32 %v5458, %v2171
        %v5709 = vmul.f32 %v5460, %v2178
        %v5710 = vmul.f32 %v5462, %v2184
        %v5711 = vmul.f32 %v5464, %v2191
        %v5712 = vmul.f32 %v5466, %v2197
        %v5713 = vmul.f32 %v5468, %v2204
        %v5714 = vmul.f32 %v5470, %v2210
        %v5715 = vmul.f32 %v5472, %v2217
        %v5716 = vmul.f32 %v5474, %v2223
        %v5717 = vmul.f32 %v5476, %v2230
        %v5718 = vmul.f32 %v5478, %v2236
        %v5719 = vmul.f32 %v5480, %v2243
        %v5720 = vmul.f32 %v5482, %v2249
        %v5721 = vmul.f32 %v5484, %v2256
        %v5722 = vmul.f32 %v5486, %v2262
        %v5723 = vmul.f32 %v5488, %v2269
        %v5724 = vmul.f32 %v5490, %v2275
        %v5725 = vmul.f32 %v5492, %v2282
        %v5726 = vmul.f32 %v5494, %v2288
        %v5727 = vmul.f32 %v5496, %v2295
        %v5728 = vmul.f32 %v5498, %v2301
        %v5729 = vmul.f32 %v5500, %v2308
        %v5730 = vmul.f32 %v5502, %v2314
        %v5731 = vmul.f32 %v5504, %v2321
        %v5732 = vmul.f32 %v5506, %v2327
        %v5733 = vmul.f32 %v5508, %v2334
        %v5734 = vmul.f32 %v5510, %v2340
        %v5735 = vmul.f32 %v5512, %v2347
        %v5736 = vmul.f32 %v5514, %v2353
        %v5737 = vmul.f32 %v5516, %v2360
        %v5738 = vmul.f32 %v5518, %v2366
        %v5739 = vmul.f32 %v5520, %v2373
        %v5740 = vmul.f32 %v5522, %v2379
        %v5741 = vmul.f32 %v5524, %v2386
        %v5742 = vmul.f32 %v5526, %v2392
        %v5743 = vmul.f32 %v5528, %v2399
        %v5744 = vmul.f32 %v5530, %v2405
        %v5745 = vmul.f32 %v5532, %v2412
        %v5746 = vmul.f32 %v5534, %v2418
        %v5747 = vmul.f32 %v5536, %v2425
        %v5748 = vmul.f32 %v5538, %v2431
        %v5749 = vmul.f32 %v5540, %v2438
        %v5750 = vmul.f32 %v5542, %v2444
        %v5751 = vmul.f32 %v5544, %v2451
        %v5752 = vmul.f32 %v5546, %v2457
        %v5753 = vmul.f32 %v5548, %v2464
        %v5754 = vmul.f32 %v5550, %v2470
        %v5755 = vmul.f32 %v5552, %v2477
        %v5756 = vmul.f32 %v5554, %v2483
        %v5757 = vmul.f32 %v5556, %v2490
        %v5758 = vmul.f32 %v5558, %v2496
        %v5759 = vmul.f32 %v5560, %v2503
        %v5760 = vmul.f32 %v5562, %v2509
        %v5761 = vmul.f32 %v5564, %v2516
        %v5762 = vmul.f32 %v5566, %v2522
        %v5763 = vmul.f32 %v5568, %v2529
        %v5764 = vmul.f32 %v5570, %v2535
        %v5765 = vmul.f32 %v5572, %v2542
        %v5766 = vmul.f32 %v5574, %v2548
        %v5767 = vmul.f32 %v5576, %v2555
        %v5768 = vmul.f32 %v5578, %v2561
        %v5769 = vmul.f32 %v5580, %v2568
        %v5770 = vmul.f32 %v5582, %v2574
        %v5771 = vmul.f32 %v5584, %v2581
        %v5772 = vmul.f32 %v5586, %v2587
        %v5773 = vmul.f32 %v5588, %v2594
        %v5774 = vmul.f32 %v5590, %v2600
        %v5775 = vmul.f32 %v5592, %v2607
        %v5776 = vmul.f32 %v5594, %v2613
        %v5777 = vmul.f32 %v5596, %v2620
        %v5778 = vmul.f32 %v5598, %v2626
        %v5779 = vmul.f32 %v5600, %v2633
        %v5780 = vmul.f32 %v5602, %v2639
        %v5781 = vmul.f32 %v5604, %v2646
        %v5782 = vmul.f32 %v5606, %v2652
        %v5783 = vmul.f32 %v5608, %v2659
        %v5784 = vmul.f32 %v5610, %v2665
        %v5785 = vmul.f32 %v5612, %v2672
        %v5786 = vmul.f32 %v5614, %v2678
        %v5787 = vmul.f32 %v5616, %v2685
        %v5788 = vmul.f32 %v5618, %v2691
        %v5789 = vmul.f32 %v5620, %v2698
        %v5790 = vmul.f32 %v5622, %v2704
        %v5791 = vmul.f32 %v5624, %v2711
        %v5792 = vmul.f32 %v5626, %v2717
        %v5793 = vmul.f32 %v5628, %v2724
        %v5794 = vmul.f32 %v5630, %v2730
        %v5795 = vmul.f32 %v5632, %v2737
        %v5796 = vmul.f32 %v5634, %v2743
        %v5797 = vmul.f32 %v5636, %v2750
        %v5798 = vmul.f32 %v5638, %v2756
        %v5799 = vmul.f32 %v5640, %v2763
        %v5800 = vmul.f32 %v5642, %v2769
        %v5801 = vmul.f32 %v5644, %v2776
        %v5802 = vmul.f32 %v5646, %v2782
        %v5803 = vmul.f32 %v5648, %v2789
        %v5804 = vmul.f32 %v5650, %v2795
        %v5805 = vmul.f32 %v5652, %v2802
        %v5806 = vmul.f32 %v5654, %v2808
        %v5807 = vmul.f32 %v5656, %v2815
        %v5808 = vmul.f32 %v5658, %v2821
        %v5809 = vmul.f32 %v5660, %v2828
        %v5810 = vmul.f32 %v5662, %v2834
        %v5811 = vmul.f32 %v5664, %v2841
        %v5812 = vmul.f32 %v5666, %v2847
        %v5813 = vmul.f32 %v5668, %v2854
        %v5814 = vmul.f32 %v5670, %v2860
        %v5815 = vmul.f32 %v5672, %v2867
        %v5816 = vmul.f32 %v5674, %v2873
        %v5817 = vmul.f32 %v5676, %v2880
        %v5818 = vmul.f32 %v5678, %v2886
        %v5819 = vmul.f32 %v5680, %v2893
        %v5820 = vmul.f32 %v5682, %v2899
        %v5821 = vmul.f32 %v5684, %v2906
        %v5822 = vmul.f32 %v5686, %v2912
        %v5823 = vmul.f32 %v5688, %v2919
        %v5824 = vmul.f32 %v5690, %v2925
        %v5825 = vmul.f32 %v5692, %v2932
        %v5826 = vmul.f32 %v5694, %v2938
        %v5827 = vmul.f32 %v5696, %v2945
        %v5828 = vmul.f32 %v5698, %v2951
        %v5829 = vmul.f32 %v5700, %v2958
        %v5830 = vmul.f32 %v5702, %v2964
        %v5831 = vadd.f32 %v5703, %v5705
        %v5832 = vadd.f32 %v5831, %v5707
        %v5833 = vadd.f32 %v5832, %v5709
        %v5834 = vadd.f32 %v5833, %v5711
        %v5835 = vadd.f32 %v5834, %v5713
        %v5836 = vadd.f32 %v5835, %v5715
        %v5837 = vadd.f32 %v5836, %v5717
        %v5838 = vadd.f32 %v5837, %v5719
        %v5839 = vadd.f32 %v5838, %v5721
        %v5840 = vadd.f32 %v5839, %v5723
        %v5841 = vadd.f32 %v5840, %v5725
        %v5842 = vadd.f32 %v5841, %v5727
        %v5843 = vadd.f32 %v5842, %v5729
        %v5844 = vadd.f32 %v5843, %v5731
        %v5845 = vadd.f32 %v5844, %v5733
        %v5846 = vadd.f32 %v5704, %v5706
        %v5847 = vadd.f32 %v5846, %v5708
        %v5848 = vadd.f32 %v5847, %v5710
        %v5849 = vadd.f32 %v5848, %v5712
        %v5850 = vadd.f32 %v5849, %v5714
        %v5851 = vadd.f32 %v5850, %v5716
        %v5852 = vadd.f32 %v5851, %v5718
        %v5853 = vadd.f32 %v5852, %v5720
        %v5854 = vadd.f32 %v5853, %v5722
        %v5855 = vadd.f32 %v5854, %v5724
        %v5856 = vadd.f32 %v5855, %v5726
        %v5857 = vadd.f32 %v5856, %v5728
        %v5858 = vadd.f32 %v5857, %v5730
        %v5859 = vadd.f32 %v5858, %v5732
        %v5860 = vadd.f32 %v5859, %v5734
        %v5861 = vadd.f32 %v5735, %v5737
        %v5862 = vadd.f32 %v5861, %v5739
        %v5863 = vadd.f32 %v5862, %v5741
        %v5864 = vadd.f32 %v5863, %v5743
        %v5865 = vadd.f32 %v5864, %v5745
        %v5866 = vadd.f32 %v5865, %v5747
        %v5867 = vadd.f32 %v5866, %v5749
        %v5868 = vadd.f32 %v5867, %v5751
        %v5869 = vadd.f32 %v5868, %v5753
        %v5870 = vadd.f32 %v5869, %v5755
        %v5871 = vadd.f32 %v5870, %v5757
        %v5872 = vadd.f32 %v5871, %v5759
        %v5873 = vadd.f32 %v5872, %v5761
        %v5874 = vadd.f32 %v5873, %v5763
        %v5875 = vadd.f32 %v5874, %v5765
        %v5876 = vadd.f32 %v5736, %v5738
        %v5877 = vadd.f32 %v5876, %v5740
        %v5878 = vadd.f32 %v5877, %v5742
        %v5879 = vadd.f32 %v5878, %v5744
        %v5880 = vadd.f32 %v5879, %v5746
        %v5881 = vadd.f32 %v5880, %v5748
        %v5882 = vadd.f32 %v5881, %v5750
        %v5883 = vadd.f32 %v5882, %v5752
        %v5884 = vadd.f32 %v5883, %v5754
        %v5885 = vadd.f32 %v5884, %v5756
        %v5886 = vadd.f32 %v5885, %v5758
        %v5887 = vadd.f32 %v5886, %v5760
        %v5888 = vadd.f32 %v5887, %v5762
        %v5889 = vadd.f32 %v5888, %v5764
        %v5890 = vadd.f32 %v5889, %v5766
        %v5891 = vadd.f32 %v5767, %v5769
        %v5892 = vadd.f32 %v5891, %v5771
        %v5893 = vadd.f32 %v5892, %v5773
        %v5894 = vadd.f32 %v5893, %v5775
        %v5895 = vadd.f32 %v5894, %v5777
        %v5896 = vadd.f32 %v5895, %v5779
        %v5897 = vadd.f32 %v5896, %v5781
        %v5898 = vadd.f32 %v5897, %v5783
        %v5899 = vadd.f32 %v5898, %v5785
        %v5900 = vadd.f32 %v5899, %v5787
        %v5901 = vadd.f32 %v5900, %v5789
        %v5902 = vadd.f32 %v5901, %v5791
        %v5903 = vadd.f32 %v5902, %v5793
        %v5904 = vadd.f32 %v5903, %v5795
        %v5905 = vadd.f32 %v5904, %v5797
        %v5906 = vadd.f32 %v5768, %v5770
        %v5907 = vadd.f32 %v5906, %v5772
        %v5908 = vadd.f32 %v5907, %v5774
        %v5909 = vadd.f32 %v5908, %v5776
        %v5910 = vadd.f32 %v5909, %v5778
        %v5911 = vadd.f32 %v5910, %v5780
        %v5912 = vadd.f32 %v5911, %v5782
        %v5913 = vadd.f32 %v5912, %v5784
        %v5914 = vadd.f32 %v5913, %v5786
        %v5915 = vadd.f32 %v5914, %v5788
        %v5916 = vadd.f32 %v5915, %v5790
        %v5917 = vadd.f32 %v5916, %v5792
        %v5918 = vadd.f32 %v5917, %v5794
        %v5919 = vadd.f32 %v5918, %v5796
        %v5920 = vadd.f32 %v5919, %v5798
        %v5921 = vadd.f32 %v5799, %v5801
        %v5922 = vadd.f32 %v5921, %v5803
        %v5923 = vadd.f32 %v5922, %v5805
        %v5924 = vadd.f32 %v5923, %v5807
        %v5925 = vadd.f32 %v5924, %v5809
        %v5926 = vadd.f32 %v5925, %v5811
        %v5927 = vadd.f32 %v5926, %v5813
        %v5928 = vadd.f32 %v5927, %v5815
        %v5929 = vadd.f32 %v5928, %v5817
        %v5930 = vadd.f32 %v5929, %v5819
        %v5931 = vadd.f32 %v5930, %v5821
        %v5932 = vadd.f32 %v5931, %v5823
        %v5933 = vadd.f32 %v5932, %v5825
        %v5934 = vadd.f32 %v5933, %v5827
        %v5935 = vadd.f32 %v5934, %v5829
        %v5936 = vadd.f32 %v5800, %v5802
        %v5937 = vadd.f32 %v5936, %v5804
        %v5938 = vadd.f32 %v5937, %v5806
        %v5939 = vadd.f32 %v5938, %v5808
        %v5940 = vadd.f32 %v5939, %v5810
        %v5941 = vadd.f32 %v5940, %v5812
        %v5942 = vadd.f32 %v5941, %v5814
        %v5943 = vadd.f32 %v5942, %v5816
        %v5944 = vadd.f32 %v5943, %v5818
        %v5945 = vadd.f32 %v5944, %v5820
        %v5946 = vadd.f32 %v5945, %v5822
        %v5947 = vadd.f32 %v5946, %v5824
        %v5948 = vadd.f32 %v5947, %v5826
        %v5949 = vadd.f32 %v5948, %v5828
        %v5950 = vadd.f32 %v5949, %v5830
        %v5951 = vmax.f32 %v5845, 1e-30
        %v5952 = vmax.f32 %v5860, 1e-30
        %v5953 = vmax.f32 %v5875, 1e-30
        %v5954 = vmax.f32 %v5890, 1e-30
        %v5955 = vmax.f32 %v5905, 1e-30
        %v5956 = vmax.f32 %v5920, 1e-30
        %v5957 = vmax.f32 %v5935, 1e-30
        %v5958 = vmax.f32 %v5950, 1e-30
        %v5959 = vrcp.pop %v5951
        %v5960 = vrcp.pop %v5952
        %v5961 = vrcp.pop %v5953
        %v5962 = vrcp.pop %v5954
        %v5963 = vrcp.pop %v5955
        %v5964 = vrcp.pop %v5956
        %v5965 = vrcp.pop %v5957
        %v5966 = vrcp.pop %v5958
        %v5967 = vmul.f32 %v5703, %v5959
        %v5968 = vmul.f32 %v5704, %v5960
        %v5969 = vmul.f32 %v5705, %v5959
        %v5970 = vmul.f32 %v5706, %v5960
        %v5971 = vmul.f32 %v5707, %v5959
        %v5972 = vmul.f32 %v5708, %v5960
        %v5973 = vmul.f32 %v5709, %v5959
        %v5974 = vmul.f32 %v5710, %v5960
        %v5975 = vmul.f32 %v5711, %v5959
        %v5976 = vmul.f32 %v5712, %v5960
        %v5977 = vmul.f32 %v5713, %v5959
        %v5978 = vmul.f32 %v5714, %v5960
        %v5979 = vmul.f32 %v5715, %v5959
        %v5980 = vmul.f32 %v5716, %v5960
        %v5981 = vmul.f32 %v5717, %v5959
        %v5982 = vmul.f32 %v5718, %v5960
        %v5983 = vmul.f32 %v5719, %v5959
        %v5984 = vmul.f32 %v5720, %v5960
        %v5985 = vmul.f32 %v5721, %v5959
        %v5986 = vmul.f32 %v5722, %v5960
        %v5987 = vmul.f32 %v5723, %v5959
        %v5988 = vmul.f32 %v5724, %v5960
        %v5989 = vmul.f32 %v5725, %v5959
        %v5990 = vmul.f32 %v5726, %v5960
        %v5991 = vmul.f32 %v5727, %v5959
        %v5992 = vmul.f32 %v5728, %v5960
        %v5993 = vmul.f32 %v5729, %v5959
        %v5994 = vmul.f32 %v5730, %v5960
        %v5995 = vmul.f32 %v5731, %v5959
        %v5996 = vmul.f32 %v5732, %v5960
        %v5997 = vmul.f32 %v5733, %v5959
        %v5998 = vmul.f32 %v5734, %v5960
        %v5999 = vmul.f32 %v5735, %v5961
        %v6000 = vmul.f32 %v5736, %v5962
        %v6001 = vmul.f32 %v5737, %v5961
        %v6002 = vmul.f32 %v5738, %v5962
        %v6003 = vmul.f32 %v5739, %v5961
        %v6004 = vmul.f32 %v5740, %v5962
        %v6005 = vmul.f32 %v5741, %v5961
        %v6006 = vmul.f32 %v5742, %v5962
        %v6007 = vmul.f32 %v5743, %v5961
        %v6008 = vmul.f32 %v5744, %v5962
        %v6009 = vmul.f32 %v5745, %v5961
        %v6010 = vmul.f32 %v5746, %v5962
        %v6011 = vmul.f32 %v5747, %v5961
        %v6012 = vmul.f32 %v5748, %v5962
        %v6013 = vmul.f32 %v5749, %v5961
        %v6014 = vmul.f32 %v5750, %v5962
        %v6015 = vmul.f32 %v5751, %v5961
        %v6016 = vmul.f32 %v5752, %v5962
        %v6017 = vmul.f32 %v5753, %v5961
        %v6018 = vmul.f32 %v5754, %v5962
        %v6019 = vmul.f32 %v5755, %v5961
        %v6020 = vmul.f32 %v5756, %v5962
        %v6021 = vmul.f32 %v5757, %v5961
        %v6022 = vmul.f32 %v5758, %v5962
        %v6023 = vmul.f32 %v5759, %v5961
        %v6024 = vmul.f32 %v5760, %v5962
        %v6025 = vmul.f32 %v5761, %v5961
        %v6026 = vmul.f32 %v5762, %v5962
        %v6027 = vmul.f32 %v5763, %v5961
        %v6028 = vmul.f32 %v5764, %v5962
        %v6029 = vmul.f32 %v5765, %v5961
        %v6030 = vmul.f32 %v5766, %v5962
        %v6031 = vmul.f32 %v5767, %v5963
        %v6032 = vmul.f32 %v5768, %v5964
        %v6033 = vmul.f32 %v5769, %v5963
        %v6034 = vmul.f32 %v5770, %v5964
        %v6035 = vmul.f32 %v5771, %v5963
        %v6036 = vmul.f32 %v5772, %v5964
        %v6037 = vmul.f32 %v5773, %v5963
        %v6038 = vmul.f32 %v5774, %v5964
        %v6039 = vmul.f32 %v5775, %v5963
        %v6040 = vmul.f32 %v5776, %v5964
        %v6041 = vmul.f32 %v5777, %v5963
        %v6042 = vmul.f32 %v5778, %v5964
        %v6043 = vmul.f32 %v5779, %v5963
        %v6044 = vmul.f32 %v5780, %v5964
        %v6045 = vmul.f32 %v5781, %v5963
        %v6046 = vmul.f32 %v5782, %v5964
        %v6047 = vmul.f32 %v5783, %v5963
        %v6048 = vmul.f32 %v5784, %v5964
        %v6049 = vmul.f32 %v5785, %v5963
        %v6050 = vmul.f32 %v5786, %v5964
        %v6051 = vmul.f32 %v5787, %v5963
        %v6052 = vmul.f32 %v5788, %v5964
        %v6053 = vmul.f32 %v5789, %v5963
        %v6054 = vmul.f32 %v5790, %v5964
        %v6055 = vmul.f32 %v5791, %v5963
        %v6056 = vmul.f32 %v5792, %v5964
        %v6057 = vmul.f32 %v5793, %v5963
        %v6058 = vmul.f32 %v5794, %v5964
        %v6059 = vmul.f32 %v5795, %v5963
        %v6060 = vmul.f32 %v5796, %v5964
        %v6061 = vmul.f32 %v5797, %v5963
        %v6062 = vmul.f32 %v5798, %v5964
        %v6063 = vmul.f32 %v5799, %v5965
        %v6064 = vmul.f32 %v5800, %v5966
        %v6065 = vmul.f32 %v5801, %v5965
        %v6066 = vmul.f32 %v5802, %v5966
        %v6067 = vmul.f32 %v5803, %v5965
        %v6068 = vmul.f32 %v5804, %v5966
        %v6069 = vmul.f32 %v5805, %v5965
        %v6070 = vmul.f32 %v5806, %v5966
        %v6071 = vmul.f32 %v5807, %v5965
        %v6072 = vmul.f32 %v5808, %v5966
        %v6073 = vmul.f32 %v5809, %v5965
        %v6074 = vmul.f32 %v5810, %v5966
        %v6075 = vmul.f32 %v5811, %v5965
        %v6076 = vmul.f32 %v5812, %v5966
        %v6077 = vmul.f32 %v5813, %v5965
        %v6078 = vmul.f32 %v5814, %v5966
        %v6079 = vmul.f32 %v5815, %v5965
        %v6080 = vmul.f32 %v5816, %v5966
        %v6081 = vmul.f32 %v5817, %v5965
        %v6082 = vmul.f32 %v5818, %v5966
        %v6083 = vmul.f32 %v5819, %v5965
        %v6084 = vmul.f32 %v5820, %v5966
        %v6085 = vmul.f32 %v5821, %v5965
        %v6086 = vmul.f32 %v5822, %v5966
        %v6087 = vmul.f32 %v5823, %v5965
        %v6088 = vmul.f32 %v5824, %v5966
        %v6089 = vmul.f32 %v5825, %v5965
        %v6090 = vmul.f32 %v5826, %v5966
        %v6091 = vmul.f32 %v5827, %v5965
        %v6092 = vmul.f32 %v5828, %v5966
        %v6093 = vmul.f32 %v5829, %v5965
        %v6094 = vmul.f32 %v5830, %v5966
        %6095 = vadd.xlane.f32.xlu0 %v5967
        %v6096 = vpop.xlane.xlu0 %6095
        %6097 = vadd.xlane.f32.xlu0 %v5968
        %v6098 = vpop.xlane.xlu0 %6097
        %6099 = vadd.xlane.f32.xlu0 %v5969
        %v6100 = vpop.xlane.xlu0 %6099
        %6101 = vadd.xlane.f32.xlu0 %v5970
        %v6102 = vpop.xlane.xlu0 %6101
        %6103 = vadd.xlane.f32.xlu0 %v5971
        %v6104 = vpop.xlane.xlu0 %6103
        %6105 = vadd.xlane.f32.xlu0 %v5972
        %v6106 = vpop.xlane.xlu0 %6105
        %6107 = vadd.xlane.f32.xlu0 %v5973
        %v6108 = vpop.xlane.xlu0 %6107
        %6109 = vadd.xlane.f32.xlu0 %v5974
        %v6110 = vpop.xlane.xlu0 %6109
        %6111 = vadd.xlane.f32.xlu0 %v5975
        %v6112 = vpop.xlane.xlu0 %6111
        %6113 = vadd.xlane.f32.xlu0 %v5976
        %v6114 = vpop.xlane.xlu0 %6113
        %6115 = vadd.xlane.f32.xlu0 %v5977
        %v6116 = vpop.xlane.xlu0 %6115
        %6117 = vadd.xlane.f32.xlu0 %v5978
        %v6118 = vpop.xlane.xlu0 %6117
        %6119 = vadd.xlane.f32.xlu0 %v5979
        %v6120 = vpop.xlane.xlu0 %6119
        %6121 = vadd.xlane.f32.xlu0 %v5980
        %v6122 = vpop.xlane.xlu0 %6121
        %6123 = vadd.xlane.f32.xlu0 %v5981
        %v6124 = vpop.xlane.xlu0 %6123
        %6125 = vadd.xlane.f32.xlu0 %v5982
        %v6126 = vpop.xlane.xlu0 %6125
        %6127 = vadd.xlane.f32.xlu0 %v5983
        %v6128 = vpop.xlane.xlu0 %6127
        %6129 = vadd.xlane.f32.xlu0 %v5984
        %v6130 = vpop.xlane.xlu0 %6129
        %6131 = vadd.xlane.f32.xlu0 %v5985
        %v6132 = vpop.xlane.xlu0 %6131
        %6133 = vadd.xlane.f32.xlu0 %v5986
        %v6134 = vpop.xlane.xlu0 %6133
        %6135 = vadd.xlane.f32.xlu0 %v5987
        %v6136 = vpop.xlane.xlu0 %6135
        %6137 = vadd.xlane.f32.xlu0 %v5988
        %v6138 = vpop.xlane.xlu0 %6137
        %6139 = vadd.xlane.f32.xlu0 %v5989
        %v6140 = vpop.xlane.xlu0 %6139
        %6141 = vadd.xlane.f32.xlu0 %v5990
        %v6142 = vpop.xlane.xlu0 %6141
        %6143 = vadd.xlane.f32.xlu0 %v5991
        %v6144 = vpop.xlane.xlu0 %6143
        %6145 = vadd.xlane.f32.xlu0 %v5992
        %v6146 = vpop.xlane.xlu0 %6145
        %6147 = vadd.xlane.f32.xlu0 %v5993
        %v6148 = vpop.xlane.xlu0 %6147
        %6149 = vadd.xlane.f32.xlu0 %v5994
        %v6150 = vpop.xlane.xlu0 %6149
        %6151 = vadd.xlane.f32.xlu0 %v5995
        %v6152 = vpop.xlane.xlu0 %6151
        %6153 = vadd.xlane.f32.xlu0 %v5996
        %v6154 = vpop.xlane.xlu0 %6153
        %6155 = vadd.xlane.f32.xlu0 %v5997
        %v6156 = vpop.xlane.xlu0 %6155
        %6157 = vadd.xlane.f32.xlu0 %v5998
        %v6158 = vpop.xlane.xlu0 %6157
        %6159 = vadd.xlane.f32.xlu0 %v5999
        %v6160 = vpop.xlane.xlu0 %6159
        %6161 = vadd.xlane.f32.xlu0 %v6000
        %v6162 = vpop.xlane.xlu0 %6161
        %6163 = vadd.xlane.f32.xlu0 %v6001
        %v6164 = vpop.xlane.xlu0 %6163
        %6165 = vadd.xlane.f32.xlu0 %v6002
        %v6166 = vpop.xlane.xlu0 %6165
        %6167 = vadd.xlane.f32.xlu0 %v6003
        %v6168 = vpop.xlane.xlu0 %6167
        %6169 = vadd.xlane.f32.xlu0 %v6004
        %v6170 = vpop.xlane.xlu0 %6169
        %6171 = vadd.xlane.f32.xlu0 %v6005
        %v6172 = vpop.xlane.xlu0 %6171
        %6173 = vadd.xlane.f32.xlu0 %v6006
        %v6174 = vpop.xlane.xlu0 %6173
        %6175 = vadd.xlane.f32.xlu0 %v6007
        %v6176 = vpop.xlane.xlu0 %6175
        %6177 = vadd.xlane.f32.xlu0 %v6008
        %v6178 = vpop.xlane.xlu0 %6177
        %6179 = vadd.xlane.f32.xlu0 %v6009
        %v6180 = vpop.xlane.xlu0 %6179
        %6181 = vadd.xlane.f32.xlu0 %v6010
        %v6182 = vpop.xlane.xlu0 %6181
        %6183 = vadd.xlane.f32.xlu0 %v6011
        %v6184 = vpop.xlane.xlu0 %6183
        %6185 = vadd.xlane.f32.xlu0 %v6012
        %v6186 = vpop.xlane.xlu0 %6185
        %6187 = vadd.xlane.f32.xlu0 %v6013
        %v6188 = vpop.xlane.xlu0 %6187
        %6189 = vadd.xlane.f32.xlu0 %v6014
        %v6190 = vpop.xlane.xlu0 %6189
        %6191 = vadd.xlane.f32.xlu0 %v6015
        %v6192 = vpop.xlane.xlu0 %6191
        %6193 = vadd.xlane.f32.xlu0 %v6016
        %v6194 = vpop.xlane.xlu0 %6193
        %6195 = vadd.xlane.f32.xlu0 %v6017
        %v6196 = vpop.xlane.xlu0 %6195
        %6197 = vadd.xlane.f32.xlu0 %v6018
        %v6198 = vpop.xlane.xlu0 %6197
        %6199 = vadd.xlane.f32.xlu0 %v6019
        %v6200 = vpop.xlane.xlu0 %6199
        %6201 = vadd.xlane.f32.xlu0 %v6020
        %v6202 = vpop.xlane.xlu0 %6201
        %6203 = vadd.xlane.f32.xlu0 %v6021
        %v6204 = vpop.xlane.xlu0 %6203
        %6205 = vadd.xlane.f32.xlu0 %v6022
        %v6206 = vpop.xlane.xlu0 %6205
        %6207 = vadd.xlane.f32.xlu0 %v6023
        %v6208 = vpop.xlane.xlu0 %6207
        %6209 = vadd.xlane.f32.xlu0 %v6024
        %v6210 = vpop.xlane.xlu0 %6209
        %6211 = vadd.xlane.f32.xlu0 %v6025
        %v6212 = vpop.xlane.xlu0 %6211
        %6213 = vadd.xlane.f32.xlu0 %v6026
        %v6214 = vpop.xlane.xlu0 %6213
        %6215 = vadd.xlane.f32.xlu0 %v6027
        %v6216 = vpop.xlane.xlu0 %6215
        %6217 = vadd.xlane.f32.xlu0 %v6028
        %v6218 = vpop.xlane.xlu0 %6217
        %6219 = vadd.xlane.f32.xlu0 %v6029
        %v6220 = vpop.xlane.xlu0 %6219
        %6221 = vadd.xlane.f32.xlu0 %v6030
        %v6222 = vpop.xlane.xlu0 %6221
        %6223 = vadd.xlane.f32.xlu0 %v6031
        %v6224 = vpop.xlane.xlu0 %6223
        %6225 = vadd.xlane.f32.xlu0 %v6032
        %v6226 = vpop.xlane.xlu0 %6225
        %6227 = vadd.xlane.f32.xlu0 %v6033
        %v6228 = vpop.xlane.xlu0 %6227
        %6229 = vadd.xlane.f32.xlu0 %v6034
        %v6230 = vpop.xlane.xlu0 %6229
        %6231 = vadd.xlane.f32.xlu0 %v6035
        %v6232 = vpop.xlane.xlu0 %6231
        %6233 = vadd.xlane.f32.xlu0 %v6036
        %v6234 = vpop.xlane.xlu0 %6233
        %6235 = vadd.xlane.f32.xlu0 %v6037
        %v6236 = vpop.xlane.xlu0 %6235
        %6237 = vadd.xlane.f32.xlu0 %v6038
        %v6238 = vpop.xlane.xlu0 %6237
        %6239 = vadd.xlane.f32.xlu0 %v6039
        %v6240 = vpop.xlane.xlu0 %6239
        %6241 = vadd.xlane.f32.xlu0 %v6040
        %v6242 = vpop.xlane.xlu0 %6241
        %6243 = vadd.xlane.f32.xlu0 %v6041
        %v6244 = vpop.xlane.xlu0 %6243
        %6245 = vadd.xlane.f32.xlu0 %v6042
        %v6246 = vpop.xlane.xlu0 %6245
        %6247 = vadd.xlane.f32.xlu0 %v6043
        %v6248 = vpop.xlane.xlu0 %6247
        %6249 = vadd.xlane.f32.xlu0 %v6044
        %v6250 = vpop.xlane.xlu0 %6249
        %6251 = vadd.xlane.f32.xlu0 %v6045
        %v6252 = vpop.xlane.xlu0 %6251
        %6253 = vadd.xlane.f32.xlu0 %v6046
        %v6254 = vpop.xlane.xlu0 %6253
        %6255 = vadd.xlane.f32.xlu0 %v6047
        %v6256 = vpop.xlane.xlu0 %6255
        %6257 = vadd.xlane.f32.xlu0 %v6048
        %v6258 = vpop.xlane.xlu0 %6257
        %6259 = vadd.xlane.f32.xlu0 %v6049
        %v6260 = vpop.xlane.xlu0 %6259
        %6261 = vadd.xlane.f32.xlu0 %v6050
        %v6262 = vpop.xlane.xlu0 %6261
        %6263 = vadd.xlane.f32.xlu0 %v6051
        %v6264 = vpop.xlane.xlu0 %6263
        %6265 = vadd.xlane.f32.xlu0 %v6052
        %v6266 = vpop.xlane.xlu0 %6265
        %6267 = vadd.xlane.f32.xlu0 %v6053
        %v6268 = vpop.xlane.xlu0 %6267
        %6269 = vadd.xlane.f32.xlu0 %v6054
        %v6270 = vpop.xlane.xlu0 %6269
        %6271 = vadd.xlane.f32.xlu0 %v6055
        %v6272 = vpop.xlane.xlu0 %6271
        %6273 = vadd.xlane.f32.xlu0 %v6056
        %v6274 = vpop.xlane.xlu0 %6273
        %6275 = vadd.xlane.f32.xlu0 %v6057
        %v6276 = vpop.xlane.xlu0 %6275
        %6277 = vadd.xlane.f32.xlu0 %v6058
        %v6278 = vpop.xlane.xlu0 %6277
        %6279 = vadd.xlane.f32.xlu0 %v6059
        %v6280 = vpop.xlane.xlu0 %6279
        %6281 = vadd.xlane.f32.xlu0 %v6060
        %v6282 = vpop.xlane.xlu0 %6281
        %6283 = vadd.xlane.f32.xlu0 %v6061
        %v6284 = vpop.xlane.xlu0 %6283
        %6285 = vadd.xlane.f32.xlu0 %v6062
        %v6286 = vpop.xlane.xlu0 %6285
        %6287 = vadd.xlane.f32.xlu0 %v6063
        %v6288 = vpop.xlane.xlu0 %6287
        %6289 = vadd.xlane.f32.xlu0 %v6064
        %v6290 = vpop.xlane.xlu0 %6289
        %6291 = vadd.xlane.f32.xlu0 %v6065
        %v6292 = vpop.xlane.xlu0 %6291
        %6293 = vadd.xlane.f32.xlu0 %v6066
        %v6294 = vpop.xlane.xlu0 %6293
        %6295 = vadd.xlane.f32.xlu0 %v6067
        %v6296 = vpop.xlane.xlu0 %6295
        %6297 = vadd.xlane.f32.xlu0 %v6068
        %v6298 = vpop.xlane.xlu0 %6297
        %6299 = vadd.xlane.f32.xlu0 %v6069
        %v6300 = vpop.xlane.xlu0 %6299
        %6301 = vadd.xlane.f32.xlu0 %v6070
        %v6302 = vpop.xlane.xlu0 %6301
        %6303 = vadd.xlane.f32.xlu0 %v6071
        %v6304 = vpop.xlane.xlu0 %6303
        %6305 = vadd.xlane.f32.xlu0 %v6072
        %v6306 = vpop.xlane.xlu0 %6305
        %6307 = vadd.xlane.f32.xlu0 %v6073
        %v6308 = vpop.xlane.xlu0 %6307
        %6309 = vadd.xlane.f32.xlu0 %v6074
        %v6310 = vpop.xlane.xlu0 %6309
        %6311 = vadd.xlane.f32.xlu0 %v6075
        %v6312 = vpop.xlane.xlu0 %6311
        %6313 = vadd.xlane.f32.xlu0 %v6076
        %v6314 = vpop.xlane.xlu0 %6313
        %6315 = vadd.xlane.f32.xlu0 %v6077
        %v6316 = vpop.xlane.xlu0 %6315
        %6317 = vadd.xlane.f32.xlu0 %v6078
        %v6318 = vpop.xlane.xlu0 %6317
        %6319 = vadd.xlane.f32.xlu0 %v6079
        %v6320 = vpop.xlane.xlu0 %6319
        %6321 = vadd.xlane.f32.xlu0 %v6080
        %v6322 = vpop.xlane.xlu0 %6321
        %6323 = vadd.xlane.f32.xlu0 %v6081
        %v6324 = vpop.xlane.xlu0 %6323
        %6325 = vadd.xlane.f32.xlu0 %v6082
        %v6326 = vpop.xlane.xlu0 %6325
        %6327 = vadd.xlane.f32.xlu0 %v6083
        %v6328 = vpop.xlane.xlu0 %6327
        %6329 = vadd.xlane.f32.xlu0 %v6084
        %v6330 = vpop.xlane.xlu0 %6329
        %6331 = vadd.xlane.f32.xlu0 %v6085
        %v6332 = vpop.xlane.xlu0 %6331
        %6333 = vadd.xlane.f32.xlu0 %v6086
        %v6334 = vpop.xlane.xlu0 %6333
        %6335 = vadd.xlane.f32.xlu0 %v6087
        %v6336 = vpop.xlane.xlu0 %6335
        %6337 = vadd.xlane.f32.xlu0 %v6088
        %v6338 = vpop.xlane.xlu0 %6337
        %6339 = vadd.xlane.f32.xlu0 %v6089
        %v6340 = vpop.xlane.xlu0 %6339
        %6341 = vadd.xlane.f32.xlu0 %v6090
        %v6342 = vpop.xlane.xlu0 %6341
        %6343 = vadd.xlane.f32.xlu0 %v6091
        %v6344 = vpop.xlane.xlu0 %6343
        %6345 = vadd.xlane.f32.xlu0 %v6092
        %v6346 = vpop.xlane.xlu0 %6345
        %6347 = vadd.xlane.f32.xlu0 %v6093
        %v6348 = vpop.xlane.xlu0 %6347
        %6349 = vadd.xlane.f32.xlu0 %v6094
        %v6350 = vpop.xlane.xlu0 %6349
        %v6351 = vmul.f32 %v6096, 0.0078125
        %v6352 = vmul.f32 %v6098, 0.0078125
        %v6353 = vmul.f32 %v6100, 0.0078125
        %v6354 = vmul.f32 %v6102, 0.0078125
        %v6355 = vmul.f32 %v6104, 0.0078125
        %v6356 = vmul.f32 %v6106, 0.0078125
        %v6357 = vmul.f32 %v6108, 0.0078125
        %v6358 = vmul.f32 %v6110, 0.0078125
        %v6359 = vmul.f32 %v6112, 0.0078125
        %v6360 = vmul.f32 %v6114, 0.0078125
        %v6361 = vmul.f32 %v6116, 0.0078125
        %v6362 = vmul.f32 %v6118, 0.0078125
        %v6363 = vmul.f32 %v6120, 0.0078125
        %v6364 = vmul.f32 %v6122, 0.0078125
        %v6365 = vmul.f32 %v6124, 0.0078125
        %v6366 = vmul.f32 %v6126, 0.0078125
        %v6367 = vmul.f32 %v6128, 0.0078125
        %v6368 = vmul.f32 %v6130, 0.0078125
        %v6369 = vmul.f32 %v6132, 0.0078125
        %v6370 = vmul.f32 %v6134, 0.0078125
        %v6371 = vmul.f32 %v6136, 0.0078125
        %v6372 = vmul.f32 %v6138, 0.0078125
        %v6373 = vmul.f32 %v6140, 0.0078125
        %v6374 = vmul.f32 %v6142, 0.0078125
        %v6375 = vmul.f32 %v6144, 0.0078125
        %v6376 = vmul.f32 %v6146, 0.0078125
        %v6377 = vmul.f32 %v6148, 0.0078125
        %v6378 = vmul.f32 %v6150, 0.0078125
        %v6379 = vmul.f32 %v6152, 0.0078125
        %v6380 = vmul.f32 %v6154, 0.0078125
        %v6381 = vmul.f32 %v6156, 0.0078125
        %v6382 = vmul.f32 %v6158, 0.0078125
        %v6383 = vmul.f32 %v6160, 0.0078125
        %v6384 = vmul.f32 %v6162, 0.0078125
        %v6385 = vmul.f32 %v6164, 0.0078125
        %v6386 = vmul.f32 %v6166, 0.0078125
        %v6387 = vmul.f32 %v6168, 0.0078125
        %v6388 = vmul.f32 %v6170, 0.0078125
        %v6389 = vmul.f32 %v6172, 0.0078125
        %v6390 = vmul.f32 %v6174, 0.0078125
        %v6391 = vmul.f32 %v6176, 0.0078125
        %v6392 = vmul.f32 %v6178, 0.0078125
        %v6393 = vmul.f32 %v6180, 0.0078125
        %v6394 = vmul.f32 %v6182, 0.0078125
        %v6395 = vmul.f32 %v6184, 0.0078125
        %v6396 = vmul.f32 %v6186, 0.0078125
        %v6397 = vmul.f32 %v6188, 0.0078125
        %v6398 = vmul.f32 %v6190, 0.0078125
        %v6399 = vmul.f32 %v6192, 0.0078125
        %v6400 = vmul.f32 %v6194, 0.0078125
        %v6401 = vmul.f32 %v6196, 0.0078125
        %v6402 = vmul.f32 %v6198, 0.0078125
        %v6403 = vmul.f32 %v6200, 0.0078125
        %v6404 = vmul.f32 %v6202, 0.0078125
        %v6405 = vmul.f32 %v6204, 0.0078125
        %v6406 = vmul.f32 %v6206, 0.0078125
        %v6407 = vmul.f32 %v6208, 0.0078125
        %v6408 = vmul.f32 %v6210, 0.0078125
        %v6409 = vmul.f32 %v6212, 0.0078125
        %v6410 = vmul.f32 %v6214, 0.0078125
        %v6411 = vmul.f32 %v6216, 0.0078125
        %v6412 = vmul.f32 %v6218, 0.0078125
        %v6413 = vmul.f32 %v6220, 0.0078125
        %v6414 = vmul.f32 %v6222, 0.0078125
        %v6415 = vmul.f32 %v6224, 0.0078125
        %v6416 = vmul.f32 %v6226, 0.0078125
        %v6417 = vmul.f32 %v6228, 0.0078125
        %v6418 = vmul.f32 %v6230, 0.0078125
        %v6419 = vmul.f32 %v6232, 0.0078125
        %v6420 = vmul.f32 %v6234, 0.0078125
        %v6421 = vmul.f32 %v6236, 0.0078125
        %v6422 = vmul.f32 %v6238, 0.0078125
        %v6423 = vmul.f32 %v6240, 0.0078125
        %v6424 = vmul.f32 %v6242, 0.0078125
        %v6425 = vmul.f32 %v6244, 0.0078125
        %v6426 = vmul.f32 %v6246, 0.0078125
        %v6427 = vmul.f32 %v6248, 0.0078125
        %v6428 = vmul.f32 %v6250, 0.0078125
        %v6429 = vmul.f32 %v6252, 0.0078125
        %v6430 = vmul.f32 %v6254, 0.0078125
        %v6431 = vmul.f32 %v6256, 0.0078125
        %v6432 = vmul.f32 %v6258, 0.0078125
        %v6433 = vmul.f32 %v6260, 0.0078125
        %v6434 = vmul.f32 %v6262, 0.0078125
        %v6435 = vmul.f32 %v6264, 0.0078125
        %v6436 = vmul.f32 %v6266, 0.0078125
        %v6437 = vmul.f32 %v6268, 0.0078125
        %v6438 = vmul.f32 %v6270, 0.0078125
        %v6439 = vmul.f32 %v6272, 0.0078125
        %v6440 = vmul.f32 %v6274, 0.0078125
        %v6441 = vmul.f32 %v6276, 0.0078125
        %v6442 = vmul.f32 %v6278, 0.0078125
        %v6443 = vmul.f32 %v6280, 0.0078125
        %v6444 = vmul.f32 %v6282, 0.0078125
        %v6445 = vmul.f32 %v6284, 0.0078125
        %v6446 = vmul.f32 %v6286, 0.0078125
        %v6447 = vmul.f32 %v6288, 0.0078125
        %v6448 = vmul.f32 %v6290, 0.0078125
        %v6449 = vmul.f32 %v6292, 0.0078125
        %v6450 = vmul.f32 %v6294, 0.0078125
        %v6451 = vmul.f32 %v6296, 0.0078125
        %v6452 = vmul.f32 %v6298, 0.0078125
        %v6453 = vmul.f32 %v6300, 0.0078125
        %v6454 = vmul.f32 %v6302, 0.0078125
        %v6455 = vmul.f32 %v6304, 0.0078125
        %v6456 = vmul.f32 %v6306, 0.0078125
        %v6457 = vmul.f32 %v6308, 0.0078125
        %v6458 = vmul.f32 %v6310, 0.0078125
        %v6459 = vmul.f32 %v6312, 0.0078125
        %v6460 = vmul.f32 %v6314, 0.0078125
        %v6461 = vmul.f32 %v6316, 0.0078125
        %v6462 = vmul.f32 %v6318, 0.0078125
        %v6463 = vmul.f32 %v6320, 0.0078125
        %v6464 = vmul.f32 %v6322, 0.0078125
        %v6465 = vmul.f32 %v6324, 0.0078125
        %v6466 = vmul.f32 %v6326, 0.0078125
        %v6467 = vmul.f32 %v6328, 0.0078125
        %v6468 = vmul.f32 %v6330, 0.0078125
        %v6469 = vmul.f32 %v6332, 0.0078125
        %v6470 = vmul.f32 %v6334, 0.0078125
        %v6471 = vmul.f32 %v6336, 0.0078125
        %v6472 = vmul.f32 %v6338, 0.0078125
        %v6473 = vmul.f32 %v6340, 0.0078125
        %v6474 = vmul.f32 %v6342, 0.0078125
        %v6475 = vmul.f32 %v6344, 0.0078125
        %v6476 = vmul.f32 %v6346, 0.0078125
        %v6477 = vmul.f32 %v6348, 0.0078125
        %v6478 = vmul.f32 %v6350, 0.0078125
        %v6479 = vxor.u32 %v6351, 2147483648
        %v6480 = vxor.u32 %v6352, 2147483648
        %v6481 = vxor.u32 %v6353, 2147483648
        %v6482 = vxor.u32 %v6354, 2147483648
        %v6483 = vxor.u32 %v6355, 2147483648
        %v6484 = vxor.u32 %v6356, 2147483648
        %v6485 = vxor.u32 %v6357, 2147483648
        %v6486 = vxor.u32 %v6358, 2147483648
        %v6487 = vxor.u32 %v6359, 2147483648
        %v6488 = vxor.u32 %v6360, 2147483648
        %v6489 = vxor.u32 %v6361, 2147483648
        %v6490 = vxor.u32 %v6362, 2147483648
        %v6491 = vxor.u32 %v6363, 2147483648
        %v6492 = vxor.u32 %v6364, 2147483648
        %v6493 = vxor.u32 %v6365, 2147483648
        %v6494 = vxor.u32 %v6366, 2147483648
        %v6495 = vxor.u32 %v6367, 2147483648
        %v6496 = vxor.u32 %v6368, 2147483648
        %v6497 = vxor.u32 %v6369, 2147483648
        %v6498 = vxor.u32 %v6370, 2147483648
        %v6499 = vxor.u32 %v6371, 2147483648
        %v6500 = vxor.u32 %v6372, 2147483648
        %v6501 = vxor.u32 %v6373, 2147483648
        %v6502 = vxor.u32 %v6374, 2147483648
        %v6503 = vxor.u32 %v6375, 2147483648
        %v6504 = vxor.u32 %v6376, 2147483648
        %v6505 = vxor.u32 %v6377, 2147483648
        %v6506 = vxor.u32 %v6378, 2147483648
        %v6507 = vxor.u32 %v6379, 2147483648
        %v6508 = vxor.u32 %v6380, 2147483648
        %v6509 = vxor.u32 %v6381, 2147483648
        %v6510 = vxor.u32 %v6382, 2147483648
        %v6511 = vxor.u32 %v6383, 2147483648
        %v6512 = vxor.u32 %v6384, 2147483648
        %v6513 = vxor.u32 %v6385, 2147483648
        %v6514 = vxor.u32 %v6386, 2147483648
        %v6515 = vxor.u32 %v6387, 2147483648
        %v6516 = vxor.u32 %v6388, 2147483648
        %v6517 = vxor.u32 %v6389, 2147483648
        %v6518 = vxor.u32 %v6390, 2147483648
        %v6519 = vxor.u32 %v6391, 2147483648
        %v6520 = vxor.u32 %v6392, 2147483648
        %v6521 = vxor.u32 %v6393, 2147483648
        %v6522 = vxor.u32 %v6394, 2147483648
        %v6523 = vxor.u32 %v6395, 2147483648
        %v6524 = vxor.u32 %v6396, 2147483648
        %v6525 = vxor.u32 %v6397, 2147483648
        %v6526 = vxor.u32 %v6398, 2147483648
        %v6527 = vxor.u32 %v6399, 2147483648
        %v6528 = vxor.u32 %v6400, 2147483648
        %v6529 = vxor.u32 %v6401, 2147483648
        %v6530 = vxor.u32 %v6402, 2147483648
        %v6531 = vxor.u32 %v6403, 2147483648
        %v6532 = vxor.u32 %v6404, 2147483648
        %v6533 = vxor.u32 %v6405, 2147483648
        %v6534 = vxor.u32 %v6406, 2147483648
        %v6535 = vxor.u32 %v6407, 2147483648
        %v6536 = vxor.u32 %v6408, 2147483648
        %v6537 = vxor.u32 %v6409, 2147483648
        %v6538 = vxor.u32 %v6410, 2147483648
        %v6539 = vxor.u32 %v6411, 2147483648
        %v6540 = vxor.u32 %v6412, 2147483648
        %v6541 = vxor.u32 %v6413, 2147483648
        %v6542 = vxor.u32 %v6414, 2147483648
        %v6543 = vxor.u32 %v6415, 2147483648
        %v6544 = vxor.u32 %v6416, 2147483648
        %v6545 = vxor.u32 %v6417, 2147483648
        %v6546 = vxor.u32 %v6418, 2147483648
        %v6547 = vxor.u32 %v6419, 2147483648
        %v6548 = vxor.u32 %v6420, 2147483648
        %v6549 = vxor.u32 %v6421, 2147483648
        %v6550 = vxor.u32 %v6422, 2147483648
        %v6551 = vxor.u32 %v6423, 2147483648
        %v6552 = vxor.u32 %v6424, 2147483648
        %v6553 = vxor.u32 %v6425, 2147483648
        %v6554 = vxor.u32 %v6426, 2147483648
        %v6555 = vxor.u32 %v6427, 2147483648
        %v6556 = vxor.u32 %v6428, 2147483648
        %v6557 = vxor.u32 %v6429, 2147483648
        %v6558 = vxor.u32 %v6430, 2147483648
        %v6559 = vxor.u32 %v6431, 2147483648
        %v6560 = vxor.u32 %v6432, 2147483648
        %v6561 = vxor.u32 %v6433, 2147483648
        %v6562 = vxor.u32 %v6434, 2147483648
        %v6563 = vxor.u32 %v6435, 2147483648
        %v6564 = vxor.u32 %v6436, 2147483648
        %v6565 = vxor.u32 %v6437, 2147483648
        %v6566 = vxor.u32 %v6438, 2147483648
        %v6567 = vxor.u32 %v6439, 2147483648
        %v6568 = vxor.u32 %v6440, 2147483648
        %v6569 = vxor.u32 %v6441, 2147483648
        %v6570 = vxor.u32 %v6442, 2147483648
        %v6571 = vxor.u32 %v6443, 2147483648
        %v6572 = vxor.u32 %v6444, 2147483648
        %v6573 = vxor.u32 %v6445, 2147483648
        %v6574 = vxor.u32 %v6446, 2147483648
        %v6575 = vxor.u32 %v6447, 2147483648
        %v6576 = vxor.u32 %v6448, 2147483648
        %v6577 = vxor.u32 %v6449, 2147483648
        %v6578 = vxor.u32 %v6450, 2147483648
        %v6579 = vxor.u32 %v6451, 2147483648
        %v6580 = vxor.u32 %v6452, 2147483648
        %v6581 = vxor.u32 %v6453, 2147483648
        %v6582 = vxor.u32 %v6454, 2147483648
        %v6583 = vxor.u32 %v6455, 2147483648
        %v6584 = vxor.u32 %v6456, 2147483648
        %v6585 = vxor.u32 %v6457, 2147483648
        %v6586 = vxor.u32 %v6458, 2147483648
        %v6587 = vxor.u32 %v6459, 2147483648
        %v6588 = vxor.u32 %v6460, 2147483648
        %v6589 = vxor.u32 %v6461, 2147483648
        %v6590 = vxor.u32 %v6462, 2147483648
        %v6591 = vxor.u32 %v6463, 2147483648
        %v6592 = vxor.u32 %v6464, 2147483648
        %v6593 = vxor.u32 %v6465, 2147483648
        %v6594 = vxor.u32 %v6466, 2147483648
        %v6595 = vxor.u32 %v6467, 2147483648
        %v6596 = vxor.u32 %v6468, 2147483648
        %v6597 = vxor.u32 %v6469, 2147483648
        %v6598 = vxor.u32 %v6470, 2147483648
        %v6599 = vxor.u32 %v6471, 2147483648
        %v6600 = vxor.u32 %v6472, 2147483648
        %v6601 = vxor.u32 %v6473, 2147483648
        %v6602 = vxor.u32 %v6474, 2147483648
        %v6603 = vxor.u32 %v6475, 2147483648
        %v6604 = vxor.u32 %v6476, 2147483648
        %v6605 = vxor.u32 %v6477, 2147483648
        %v6606 = vxor.u32 %v6478, 2147483648
        %v6607 = vmul.f32 %v6479, 1.442695
        %v6608 = vpow.pop %v6607
        %v6609 = vmul.f32 %v6480, 1.442695
        %v6610 = vpow.pop %v6609
        %v6611 = vmul.f32 %v6481, 1.442695
        %v6612 = vpow.pop %v6611
        %v6613 = vmul.f32 %v6482, 1.442695
        %v6614 = vpow.pop %v6613
        %v6615 = vmul.f32 %v6483, 1.442695
        %v6616 = vpow.pop %v6615
        %v6617 = vmul.f32 %v6484, 1.442695
        %v6618 = vpow.pop %v6617
        %v6619 = vmul.f32 %v6485, 1.442695
        %v6620 = vpow.pop %v6619
        %v6621 = vmul.f32 %v6486, 1.442695
        %v6622 = vpow.pop %v6621
        %v6623 = vmul.f32 %v6487, 1.442695
        %v6624 = vpow.pop %v6623
        %v6625 = vmul.f32 %v6488, 1.442695
        %v6626 = vpow.pop %v6625
        %v6627 = vmul.f32 %v6489, 1.442695
        %v6628 = vpow.pop %v6627
        %v6629 = vmul.f32 %v6490, 1.442695
        %v6630 = vpow.pop %v6629
        %v6631 = vmul.f32 %v6491, 1.442695
        %v6632 = vpow.pop %v6631
        %v6633 = vmul.f32 %v6492, 1.442695
        %v6634 = vpow.pop %v6633
        %v6635 = vmul.f32 %v6493, 1.442695
        %v6636 = vpow.pop %v6635
        %v6637 = vmul.f32 %v6494, 1.442695
        %v6638 = vpow.pop %v6637
        %v6639 = vmul.f32 %v6495, 1.442695
        %v6640 = vpow.pop %v6639
        %v6641 = vmul.f32 %v6496, 1.442695
        %v6642 = vpow.pop %v6641
        %v6643 = vmul.f32 %v6497, 1.442695
        %v6644 = vpow.pop %v6643
        %v6645 = vmul.f32 %v6498, 1.442695
        %v6646 = vpow.pop %v6645
        %v6647 = vmul.f32 %v6499, 1.442695
        %v6648 = vpow.pop %v6647
        %v6649 = vmul.f32 %v6500, 1.442695
        %v6650 = vpow.pop %v6649
        %v6651 = vmul.f32 %v6501, 1.442695
        %v6652 = vpow.pop %v6651
        %v6653 = vmul.f32 %v6502, 1.442695
        %v6654 = vpow.pop %v6653
        %v6655 = vmul.f32 %v6503, 1.442695
        %v6656 = vpow.pop %v6655
        %v6657 = vmul.f32 %v6504, 1.442695
        %v6658 = vpow.pop %v6657
        %v6659 = vmul.f32 %v6505, 1.442695
        %v6660 = vpow.pop %v6659
        %v6661 = vmul.f32 %v6506, 1.442695
        %v6662 = vpow.pop %v6661
        %v6663 = vmul.f32 %v6507, 1.442695
        %v6664 = vpow.pop %v6663
        %v6665 = vmul.f32 %v6508, 1.442695
        %v6666 = vpow.pop %v6665
        %v6667 = vmul.f32 %v6509, 1.442695
        %v6668 = vpow.pop %v6667
        %v6669 = vmul.f32 %v6510, 1.442695
        %v6670 = vpow.pop %v6669
        %v6671 = vmul.f32 %v6511, 1.442695
        %v6672 = vpow.pop %v6671
        %v6673 = vmul.f32 %v6512, 1.442695
        %v6674 = vpow.pop %v6673
        %v6675 = vmul.f32 %v6513, 1.442695
        %v6676 = vpow.pop %v6675
        %v6677 = vmul.f32 %v6514, 1.442695
        %v6678 = vpow.pop %v6677
        %v6679 = vmul.f32 %v6515, 1.442695
        %v6680 = vpow.pop %v6679
        %v6681 = vmul.f32 %v6516, 1.442695
        %v6682 = vpow.pop %v6681
        %v6683 = vmul.f32 %v6517, 1.442695
        %v6684 = vpow.pop %v6683
        %v6685 = vmul.f32 %v6518, 1.442695
        %v6686 = vpow.pop %v6685
        %v6687 = vmul.f32 %v6519, 1.442695
        %v6688 = vpow.pop %v6687
        %v6689 = vmul.f32 %v6520, 1.442695
        %v6690 = vpow.pop %v6689
        %v6691 = vmul.f32 %v6521, 1.442695
        %v6692 = vpow.pop %v6691
        %v6693 = vmul.f32 %v6522, 1.442695
        %v6694 = vpow.pop %v6693
        %v6695 = vmul.f32 %v6523, 1.442695
        %v6696 = vpow.pop %v6695
        %v6697 = vmul.f32 %v6524, 1.442695
        %v6698 = vpow.pop %v6697
        %v6699 = vmul.f32 %v6525, 1.442695
        %v6700 = vpow.pop %v6699
        %v6701 = vmul.f32 %v6526, 1.442695
        %v6702 = vpow.pop %v6701
        %v6703 = vmul.f32 %v6527, 1.442695
        %v6704 = vpow.pop %v6703
        %v6705 = vmul.f32 %v6528, 1.442695
        %v6706 = vpow.pop %v6705
        %v6707 = vmul.f32 %v6529, 1.442695
        %v6708 = vpow.pop %v6707
        %v6709 = vmul.f32 %v6530, 1.442695
        %v6710 = vpow.pop %v6709
        %v6711 = vmul.f32 %v6531, 1.442695
        %v6712 = vpow.pop %v6711
        %v6713 = vmul.f32 %v6532, 1.442695
        %v6714 = vpow.pop %v6713
        %v6715 = vmul.f32 %v6533, 1.442695
        %v6716 = vpow.pop %v6715
        %v6717 = vmul.f32 %v6534, 1.442695
        %v6718 = vpow.pop %v6717
        %v6719 = vmul.f32 %v6535, 1.442695
        %v6720 = vpow.pop %v6719
        %v6721 = vmul.f32 %v6536, 1.442695
        %v6722 = vpow.pop %v6721
        %v6723 = vmul.f32 %v6537, 1.442695
        %v6724 = vpow.pop %v6723
        %v6725 = vmul.f32 %v6538, 1.442695
        %v6726 = vpow.pop %v6725
        %v6727 = vmul.f32 %v6539, 1.442695
        %v6728 = vpow.pop %v6727
        %v6729 = vmul.f32 %v6540, 1.442695
        %v6730 = vpow.pop %v6729
        %v6731 = vmul.f32 %v6541, 1.442695
        %v6732 = vpow.pop %v6731
        %v6733 = vmul.f32 %v6542, 1.442695
        %v6734 = vpow.pop %v6733
        %v6735 = vmul.f32 %v6543, 1.442695
        %v6736 = vpow.pop %v6735
        %v6737 = vmul.f32 %v6544, 1.442695
        %v6738 = vpow.pop %v6737
        %v6739 = vmul.f32 %v6545, 1.442695
        %v6740 = vpow.pop %v6739
        %v6741 = vmul.f32 %v6546, 1.442695
        %v6742 = vpow.pop %v6741
        %v6743 = vmul.f32 %v6547, 1.442695
        %v6744 = vpow.pop %v6743
        %v6745 = vmul.f32 %v6548, 1.442695
        %v6746 = vpow.pop %v6745
        %v6747 = vmul.f32 %v6549, 1.442695
        %v6748 = vpow.pop %v6747
        %v6749 = vmul.f32 %v6550, 1.442695
        %v6750 = vpow.pop %v6749
        %v6751 = vmul.f32 %v6551, 1.442695
        %v6752 = vpow.pop %v6751
        %v6753 = vmul.f32 %v6552, 1.442695
        %v6754 = vpow.pop %v6753
        %v6755 = vmul.f32 %v6553, 1.442695
        %v6756 = vpow.pop %v6755
        %v6757 = vmul.f32 %v6554, 1.442695
        %v6758 = vpow.pop %v6757
        %v6759 = vmul.f32 %v6555, 1.442695
        %v6760 = vpow.pop %v6759
        %v6761 = vmul.f32 %v6556, 1.442695
        %v6762 = vpow.pop %v6761
        %v6763 = vmul.f32 %v6557, 1.442695
        %v6764 = vpow.pop %v6763
        %v6765 = vmul.f32 %v6558, 1.442695
        %v6766 = vpow.pop %v6765
        %v6767 = vmul.f32 %v6559, 1.442695
        %v6768 = vpow.pop %v6767
        %v6769 = vmul.f32 %v6560, 1.442695
        %v6770 = vpow.pop %v6769
        %v6771 = vmul.f32 %v6561, 1.442695
        %v6772 = vpow.pop %v6771
        %v6773 = vmul.f32 %v6562, 1.442695
        %v6774 = vpow.pop %v6773
        %v6775 = vmul.f32 %v6563, 1.442695
        %v6776 = vpow.pop %v6775
        %v6777 = vmul.f32 %v6564, 1.442695
        %v6778 = vpow.pop %v6777
        %v6779 = vmul.f32 %v6565, 1.442695
        %v6780 = vpow.pop %v6779
        %v6781 = vmul.f32 %v6566, 1.442695
        %v6782 = vpow.pop %v6781
        %v6783 = vmul.f32 %v6567, 1.442695
        %v6784 = vpow.pop %v6783
        %v6785 = vmul.f32 %v6568, 1.442695
        %v6786 = vpow.pop %v6785
        %v6787 = vmul.f32 %v6569, 1.442695
        %v6788 = vpow.pop %v6787
        %v6789 = vmul.f32 %v6570, 1.442695
        %v6790 = vpow.pop %v6789
        %v6791 = vmul.f32 %v6571, 1.442695
        %v6792 = vpow.pop %v6791
        %v6793 = vmul.f32 %v6572, 1.442695
        %v6794 = vpow.pop %v6793
        %v6795 = vmul.f32 %v6573, 1.442695
        %v6796 = vpow.pop %v6795
        %v6797 = vmul.f32 %v6574, 1.442695
        %v6798 = vpow.pop %v6797
        %v6799 = vmul.f32 %v6575, 1.442695
        %v6800 = vpow.pop %v6799
        %v6801 = vmul.f32 %v6576, 1.442695
        %v6802 = vpow.pop %v6801
        %v6803 = vmul.f32 %v6577, 1.442695
        %v6804 = vpow.pop %v6803
        %v6805 = vmul.f32 %v6578, 1.442695
        %v6806 = vpow.pop %v6805
        %v6807 = vmul.f32 %v6579, 1.442695
        %v6808 = vpow.pop %v6807
        %v6809 = vmul.f32 %v6580, 1.442695
        %v6810 = vpow.pop %v6809
        %v6811 = vmul.f32 %v6581, 1.442695
        %v6812 = vpow.pop %v6811
        %v6813 = vmul.f32 %v6582, 1.442695
        %v6814 = vpow.pop %v6813
        %v6815 = vmul.f32 %v6583, 1.442695
        %v6816 = vpow.pop %v6815
        %v6817 = vmul.f32 %v6584, 1.442695
        %v6818 = vpow.pop %v6817
        %v6819 = vmul.f32 %v6585, 1.442695
        %v6820 = vpow.pop %v6819
        %v6821 = vmul.f32 %v6586, 1.442695
        %v6822 = vpow.pop %v6821
        %v6823 = vmul.f32 %v6587, 1.442695
        %v6824 = vpow.pop %v6823
        %v6825 = vmul.f32 %v6588, 1.442695
        %v6826 = vpow.pop %v6825
        %v6827 = vmul.f32 %v6589, 1.442695
        %v6828 = vpow.pop %v6827
        %v6829 = vmul.f32 %v6590, 1.442695
        %v6830 = vpow.pop %v6829
        %v6831 = vmul.f32 %v6591, 1.442695
        %v6832 = vpow.pop %v6831
        %v6833 = vmul.f32 %v6592, 1.442695
        %v6834 = vpow.pop %v6833
        %v6835 = vmul.f32 %v6593, 1.442695
        %v6836 = vpow.pop %v6835
        %v6837 = vmul.f32 %v6594, 1.442695
        %v6838 = vpow.pop %v6837
        %v6839 = vmul.f32 %v6595, 1.442695
        %v6840 = vpow.pop %v6839
        %v6841 = vmul.f32 %v6596, 1.442695
        %v6842 = vpow.pop %v6841
        %v6843 = vmul.f32 %v6597, 1.442695
        %v6844 = vpow.pop %v6843
        %v6845 = vmul.f32 %v6598, 1.442695
        %v6846 = vpow.pop %v6845
        %v6847 = vmul.f32 %v6599, 1.442695
        %v6848 = vpow.pop %v6847
        %v6849 = vmul.f32 %v6600, 1.442695
        %v6850 = vpow.pop %v6849
        %v6851 = vmul.f32 %v6601, 1.442695
        %v6852 = vpow.pop %v6851
        %v6853 = vmul.f32 %v6602, 1.442695
        %v6854 = vpow.pop %v6853
        %v6855 = vmul.f32 %v6603, 1.442695
        %v6856 = vpow.pop %v6855
        %v6857 = vmul.f32 %v6604, 1.442695
        %v6858 = vpow.pop %v6857
        %v6859 = vmul.f32 %v6605, 1.442695
        %v6860 = vpow.pop %v6859
        %v6861 = vmul.f32 %v6606, 1.442695
        %v6862 = vpow.pop %v6861
        %v6863 = vadd.f32 %v6608, 1.0
        %v6864 = vadd.f32 %v6610, 1.0
        %v6865 = vadd.f32 %v6612, 1.0
        %v6866 = vadd.f32 %v6614, 1.0
        %v6867 = vadd.f32 %v6616, 1.0
        %v6868 = vadd.f32 %v6618, 1.0
        %v6869 = vadd.f32 %v6620, 1.0
        %v6870 = vadd.f32 %v6622, 1.0
        %v6871 = vadd.f32 %v6624, 1.0
        %v6872 = vadd.f32 %v6626, 1.0
        %v6873 = vadd.f32 %v6628, 1.0
        %v6874 = vadd.f32 %v6630, 1.0
        %v6875 = vadd.f32 %v6632, 1.0
        %v6876 = vadd.f32 %v6634, 1.0
        %v6877 = vadd.f32 %v6636, 1.0
        %v6878 = vadd.f32 %v6638, 1.0
        %v6879 = vadd.f32 %v6640, 1.0
        %v6880 = vadd.f32 %v6642, 1.0
        %v6881 = vadd.f32 %v6644, 1.0
        %v6882 = vadd.f32 %v6646, 1.0
        %v6883 = vadd.f32 %v6648, 1.0
        %v6884 = vadd.f32 %v6650, 1.0
        %v6885 = vadd.f32 %v6652, 1.0
        %v6886 = vadd.f32 %v6654, 1.0
        %v6887 = vadd.f32 %v6656, 1.0
        %v6888 = vadd.f32 %v6658, 1.0
        %v6889 = vadd.f32 %v6660, 1.0
        %v6890 = vadd.f32 %v6662, 1.0
        %v6891 = vadd.f32 %v6664, 1.0
        %v6892 = vadd.f32 %v6666, 1.0
        %v6893 = vadd.f32 %v6668, 1.0
        %v6894 = vadd.f32 %v6670, 1.0
        %v6895 = vadd.f32 %v6672, 1.0
        %v6896 = vadd.f32 %v6674, 1.0
        %v6897 = vadd.f32 %v6676, 1.0
        %v6898 = vadd.f32 %v6678, 1.0
        %v6899 = vadd.f32 %v6680, 1.0
        %v6900 = vadd.f32 %v6682, 1.0
        %v6901 = vadd.f32 %v6684, 1.0
        %v6902 = vadd.f32 %v6686, 1.0
        %v6903 = vadd.f32 %v6688, 1.0
        %v6904 = vadd.f32 %v6690, 1.0
        %v6905 = vadd.f32 %v6692, 1.0
        %v6906 = vadd.f32 %v6694, 1.0
        %v6907 = vadd.f32 %v6696, 1.0
        %v6908 = vadd.f32 %v6698, 1.0
        %v6909 = vadd.f32 %v6700, 1.0
        %v6910 = vadd.f32 %v6702, 1.0
        %v6911 = vadd.f32 %v6704, 1.0
        %v6912 = vadd.f32 %v6706, 1.0
        %v6913 = vadd.f32 %v6708, 1.0
        %v6914 = vadd.f32 %v6710, 1.0
        %v6915 = vadd.f32 %v6712, 1.0
        %v6916 = vadd.f32 %v6714, 1.0
        %v6917 = vadd.f32 %v6716, 1.0
        %v6918 = vadd.f32 %v6718, 1.0
        %v6919 = vadd.f32 %v6720, 1.0
        %v6920 = vadd.f32 %v6722, 1.0
        %v6921 = vadd.f32 %v6724, 1.0
        %v6922 = vadd.f32 %v6726, 1.0
        %v6923 = vadd.f32 %v6728, 1.0
        %v6924 = vadd.f32 %v6730, 1.0
        %v6925 = vadd.f32 %v6732, 1.0
        %v6926 = vadd.f32 %v6734, 1.0
        %v6927 = vadd.f32 %v6736, 1.0
        %v6928 = vadd.f32 %v6738, 1.0
        %v6929 = vadd.f32 %v6740, 1.0
        %v6930 = vadd.f32 %v6742, 1.0
        %v6931 = vadd.f32 %v6744, 1.0
        %v6932 = vadd.f32 %v6746, 1.0
        %v6933 = vadd.f32 %v6748, 1.0
        %v6934 = vadd.f32 %v6750, 1.0
        %v6935 = vadd.f32 %v6752, 1.0
        %v6936 = vadd.f32 %v6754, 1.0
        %v6937 = vadd.f32 %v6756, 1.0
        %v6938 = vadd.f32 %v6758, 1.0
        %v6939 = vadd.f32 %v6760, 1.0
        %v6940 = vadd.f32 %v6762, 1.0
        %v6941 = vadd.f32 %v6764, 1.0
        %v6942 = vadd.f32 %v6766, 1.0
        %v6943 = vadd.f32 %v6768, 1.0
        %v6944 = vadd.f32 %v6770, 1.0
        %v6945 = vadd.f32 %v6772, 1.0
        %v6946 = vadd.f32 %v6774, 1.0
        %v6947 = vadd.f32 %v6776, 1.0
        %v6948 = vadd.f32 %v6778, 1.0
        %v6949 = vadd.f32 %v6780, 1.0
        %v6950 = vadd.f32 %v6782, 1.0
        %v6951 = vadd.f32 %v6784, 1.0
        %v6952 = vadd.f32 %v6786, 1.0
        %v6953 = vadd.f32 %v6788, 1.0
        %v6954 = vadd.f32 %v6790, 1.0
        %v6955 = vadd.f32 %v6792, 1.0
        %v6956 = vadd.f32 %v6794, 1.0
        %v6957 = vadd.f32 %v6796, 1.0
        %v6958 = vadd.f32 %v6798, 1.0
        %v6959 = vadd.f32 %v6800, 1.0
        %v6960 = vadd.f32 %v6802, 1.0
        %v6961 = vadd.f32 %v6804, 1.0
        %v6962 = vadd.f32 %v6806, 1.0
        %v6963 = vadd.f32 %v6808, 1.0
        %v6964 = vadd.f32 %v6810, 1.0
        %v6965 = vadd.f32 %v6812, 1.0
        %v6966 = vadd.f32 %v6814, 1.0
        %v6967 = vadd.f32 %v6816, 1.0
        %v6968 = vadd.f32 %v6818, 1.0
        %v6969 = vadd.f32 %v6820, 1.0
        %v6970 = vadd.f32 %v6822, 1.0
        %v6971 = vadd.f32 %v6824, 1.0
        %v6972 = vadd.f32 %v6826, 1.0
        %v6973 = vadd.f32 %v6828, 1.0
        %v6974 = vadd.f32 %v6830, 1.0
        %v6975 = vadd.f32 %v6832, 1.0
        %v6976 = vadd.f32 %v6834, 1.0
        %v6977 = vadd.f32 %v6836, 1.0
        %v6978 = vadd.f32 %v6838, 1.0
        %v6979 = vadd.f32 %v6840, 1.0
        %v6980 = vadd.f32 %v6842, 1.0
        %v6981 = vadd.f32 %v6844, 1.0
        %v6982 = vadd.f32 %v6846, 1.0
        %v6983 = vadd.f32 %v6848, 1.0
        %v6984 = vadd.f32 %v6850, 1.0
        %v6985 = vadd.f32 %v6852, 1.0
        %v6986 = vadd.f32 %v6854, 1.0
        %v6987 = vadd.f32 %v6856, 1.0
        %v6988 = vadd.f32 %v6858, 1.0
        %v6989 = vadd.f32 %v6860, 1.0
        %v6990 = vadd.f32 %v6862, 1.0
        %v6991 = vrcp.pop %v6863
        %v6992 = vmul.f32 %v6863, %v6991
        %v6993 = vsub.f32 1.0, %v6992
        %v6994 = vmul.f32 %v6991, %v6993
        %v6995 = vadd.f32 %v6991, %v6994
        %vm6996 = vweird.f32 %v6863
        %vm6997 = vweird.f32 %v6991
        %vm6998 = vmor %vm6996, %vm6997
        %v6999 = vsel %vm6998, %v6991, %v6995
        %v7000 = vand.u32 2147483647, %v6863
        %vm7001 = vcmp.eq.f32.partialorder %v7000, 8.507059e+37
        %v7002 = vand.u32 %v6863, 2147483648
        %v7003 = vor.u32 1.1754944e-38, %v7002
        %v7004 = vsel %vm7001, %v7003, %v6999
        %v7005 = vmul.f32 1.0, %v7004
        %v7006 = vrcp.pop %v6864
        %v7007 = vmul.f32 %v6864, %v7006
        %v7008 = vsub.f32 1.0, %v7007
        %v7009 = vmul.f32 %v7006, %v7008
        %v7010 = vadd.f32 %v7006, %v7009
        %vm7011 = vweird.f32 %v6864
        %vm7012 = vweird.f32 %v7006
        %vm7013 = vmor %vm7011, %vm7012
        %v7014 = vsel %vm7013, %v7006, %v7010
        %v7015 = vand.u32 2147483647, %v6864
        %vm7016 = vcmp.eq.f32.partialorder %v7015, 8.507059e+37
        %v7017 = vand.u32 %v6864, 2147483648
        %v7018 = vor.u32 1.1754944e-38, %v7017
        %v7019 = vsel %vm7016, %v7018, %v7014
        %v7020 = vmul.f32 1.0, %v7019
        %v7021 = vrcp.pop %v6865
        %v7022 = vmul.f32 %v6865, %v7021
        %v7023 = vsub.f32 1.0, %v7022
        %v7024 = vmul.f32 %v7021, %v7023
        %v7025 = vadd.f32 %v7021, %v7024
        %vm7026 = vweird.f32 %v6865
        %vm7027 = vweird.f32 %v7021
        %vm7028 = vmor %vm7026, %vm7027
        %v7029 = vsel %vm7028, %v7021, %v7025
        %v7030 = vand.u32 2147483647, %v6865
        %vm7031 = vcmp.eq.f32.partialorder %v7030, 8.507059e+37
        %v7032 = vand.u32 %v6865, 2147483648
        %v7033 = vor.u32 1.1754944e-38, %v7032
        %v7034 = vsel %vm7031, %v7033, %v7029
        %v7035 = vmul.f32 1.0, %v7034
        %v7036 = vrcp.pop %v6866
        %v7037 = vmul.f32 %v6866, %v7036
        %v7038 = vsub.f32 1.0, %v7037
        %v7039 = vmul.f32 %v7036, %v7038
        %v7040 = vadd.f32 %v7036, %v7039
        %vm7041 = vweird.f32 %v6866
        %vm7042 = vweird.f32 %v7036
        %vm7043 = vmor %vm7041, %vm7042
        %v7044 = vsel %vm7043, %v7036, %v7040
        %v7045 = vand.u32 2147483647, %v6866
        %vm7046 = vcmp.eq.f32.partialorder %v7045, 8.507059e+37
        %v7047 = vand.u32 %v6866, 2147483648
        %v7048 = vor.u32 1.1754944e-38, %v7047
        %v7049 = vsel %vm7046, %v7048, %v7044
        %v7050 = vmul.f32 1.0, %v7049
        %v7051 = vrcp.pop %v6867
        %v7052 = vmul.f32 %v6867, %v7051
        %v7053 = vsub.f32 1.0, %v7052
        %v7054 = vmul.f32 %v7051, %v7053
        %v7055 = vadd.f32 %v7051, %v7054
        %vm7056 = vweird.f32 %v6867
        %vm7057 = vweird.f32 %v7051
        %vm7058 = vmor %vm7056, %vm7057
        %v7059 = vsel %vm7058, %v7051, %v7055
        %v7060 = vand.u32 2147483647, %v6867
        %vm7061 = vcmp.eq.f32.partialorder %v7060, 8.507059e+37
        %v7062 = vand.u32 %v6867, 2147483648
        %v7063 = vor.u32 1.1754944e-38, %v7062
        %v7064 = vsel %vm7061, %v7063, %v7059
        %v7065 = vmul.f32 1.0, %v7064
        %v7066 = vrcp.pop %v6868
        %v7067 = vmul.f32 %v6868, %v7066
        %v7068 = vsub.f32 1.0, %v7067
        %v7069 = vmul.f32 %v7066, %v7068
        %v7070 = vadd.f32 %v7066, %v7069
        %vm7071 = vweird.f32 %v6868
        %vm7072 = vweird.f32 %v7066
        %vm7073 = vmor %vm7071, %vm7072
        %v7074 = vsel %vm7073, %v7066, %v7070
        %v7075 = vand.u32 2147483647, %v6868
        %vm7076 = vcmp.eq.f32.partialorder %v7075, 8.507059e+37
        %v7077 = vand.u32 %v6868, 2147483648
        %v7078 = vor.u32 1.1754944e-38, %v7077
        %v7079 = vsel %vm7076, %v7078, %v7074
        %v7080 = vmul.f32 1.0, %v7079
        %v7081 = vrcp.pop %v6869
        %v7082 = vmul.f32 %v6869, %v7081
        %v7083 = vsub.f32 1.0, %v7082
        %v7084 = vmul.f32 %v7081, %v7083
        %v7085 = vadd.f32 %v7081, %v7084
        %vm7086 = vweird.f32 %v6869
        %vm7087 = vweird.f32 %v7081
        %vm7088 = vmor %vm7086, %vm7087
        %v7089 = vsel %vm7088, %v7081, %v7085
        %v7090 = vand.u32 2147483647, %v6869
        %vm7091 = vcmp.eq.f32.partialorder %v7090, 8.507059e+37
        %v7092 = vand.u32 %v6869, 2147483648
        %v7093 = vor.u32 1.1754944e-38, %v7092
        %v7094 = vsel %vm7091, %v7093, %v7089
        %v7095 = vmul.f32 1.0, %v7094
        %v7096 = vrcp.pop %v6870
        %v7097 = vmul.f32 %v6870, %v7096
        %v7098 = vsub.f32 1.0, %v7097
        %v7099 = vmul.f32 %v7096, %v7098
        %v7100 = vadd.f32 %v7096, %v7099
        %vm7101 = vweird.f32 %v6870
        %vm7102 = vweird.f32 %v7096
        %vm7103 = vmor %vm7101, %vm7102
        %v7104 = vsel %vm7103, %v7096, %v7100
        %v7105 = vand.u32 2147483647, %v6870
        %vm7106 = vcmp.eq.f32.partialorder %v7105, 8.507059e+37
        %v7107 = vand.u32 %v6870, 2147483648
        %v7108 = vor.u32 1.1754944e-38, %v7107
        %v7109 = vsel %vm7106, %v7108, %v7104
        %v7110 = vmul.f32 1.0, %v7109
        %v7111 = vrcp.pop %v6871
        %v7112 = vmul.f32 %v6871, %v7111
        %v7113 = vsub.f32 1.0, %v7112
        %v7114 = vmul.f32 %v7111, %v7113
        %v7115 = vadd.f32 %v7111, %v7114
        %vm7116 = vweird.f32 %v6871
        %vm7117 = vweird.f32 %v7111
        %vm7118 = vmor %vm7116, %vm7117
        %v7119 = vsel %vm7118, %v7111, %v7115
        %v7120 = vand.u32 2147483647, %v6871
        %vm7121 = vcmp.eq.f32.partialorder %v7120, 8.507059e+37
        %v7122 = vand.u32 %v6871, 2147483648
        %v7123 = vor.u32 1.1754944e-38, %v7122
        %v7124 = vsel %vm7121, %v7123, %v7119
        %v7125 = vmul.f32 1.0, %v7124
        %v7126 = vrcp.pop %v6872
        %v7127 = vmul.f32 %v6872, %v7126
        %v7128 = vsub.f32 1.0, %v7127
        %v7129 = vmul.f32 %v7126, %v7128
        %v7130 = vadd.f32 %v7126, %v7129
        %vm7131 = vweird.f32 %v6872
        %vm7132 = vweird.f32 %v7126
        %vm7133 = vmor %vm7131, %vm7132
        %v7134 = vsel %vm7133, %v7126, %v7130
        %v7135 = vand.u32 2147483647, %v6872
        %vm7136 = vcmp.eq.f32.partialorder %v7135, 8.507059e+37
        %v7137 = vand.u32 %v6872, 2147483648
        %v7138 = vor.u32 1.1754944e-38, %v7137
        %v7139 = vsel %vm7136, %v7138, %v7134
        %v7140 = vmul.f32 1.0, %v7139
        %v7141 = vrcp.pop %v6873
        %v7142 = vmul.f32 %v6873, %v7141
        %v7143 = vsub.f32 1.0, %v7142
        %v7144 = vmul.f32 %v7141, %v7143
        %v7145 = vadd.f32 %v7141, %v7144
        %vm7146 = vweird.f32 %v6873
        %vm7147 = vweird.f32 %v7141
        %vm7148 = vmor %vm7146, %vm7147
        %v7149 = vsel %vm7148, %v7141, %v7145
        %v7150 = vand.u32 2147483647, %v6873
        %vm7151 = vcmp.eq.f32.partialorder %v7150, 8.507059e+37
        %v7152 = vand.u32 %v6873, 2147483648
        %v7153 = vor.u32 1.1754944e-38, %v7152
        %v7154 = vsel %vm7151, %v7153, %v7149
        %v7155 = vmul.f32 1.0, %v7154
        %v7156 = vrcp.pop %v6874
        %v7157 = vmul.f32 %v6874, %v7156
        %v7158 = vsub.f32 1.0, %v7157
        %v7159 = vmul.f32 %v7156, %v7158
        %v7160 = vadd.f32 %v7156, %v7159
        %vm7161 = vweird.f32 %v6874
        %vm7162 = vweird.f32 %v7156
        %vm7163 = vmor %vm7161, %vm7162
        %v7164 = vsel %vm7163, %v7156, %v7160
        %v7165 = vand.u32 2147483647, %v6874
        %vm7166 = vcmp.eq.f32.partialorder %v7165, 8.507059e+37
        %v7167 = vand.u32 %v6874, 2147483648
        %v7168 = vor.u32 1.1754944e-38, %v7167
        %v7169 = vsel %vm7166, %v7168, %v7164
        %v7170 = vmul.f32 1.0, %v7169
        %v7171 = vrcp.pop %v6875
        %v7172 = vmul.f32 %v6875, %v7171
        %v7173 = vsub.f32 1.0, %v7172
        %v7174 = vmul.f32 %v7171, %v7173
        %v7175 = vadd.f32 %v7171, %v7174
        %vm7176 = vweird.f32 %v6875
        %vm7177 = vweird.f32 %v7171
        %vm7178 = vmor %vm7176, %vm7177
        %v7179 = vsel %vm7178, %v7171, %v7175
        %v7180 = vand.u32 2147483647, %v6875
        %vm7181 = vcmp.eq.f32.partialorder %v7180, 8.507059e+37
        %v7182 = vand.u32 %v6875, 2147483648
        %v7183 = vor.u32 1.1754944e-38, %v7182
        %v7184 = vsel %vm7181, %v7183, %v7179
        %v7185 = vmul.f32 1.0, %v7184
        %v7186 = vrcp.pop %v6876
        %v7187 = vmul.f32 %v6876, %v7186
        %v7188 = vsub.f32 1.0, %v7187
        %v7189 = vmul.f32 %v7186, %v7188
        %v7190 = vadd.f32 %v7186, %v7189
        %vm7191 = vweird.f32 %v6876
        %vm7192 = vweird.f32 %v7186
        %vm7193 = vmor %vm7191, %vm7192
        %v7194 = vsel %vm7193, %v7186, %v7190
        %v7195 = vand.u32 2147483647, %v6876
        %vm7196 = vcmp.eq.f32.partialorder %v7195, 8.507059e+37
        %v7197 = vand.u32 %v6876, 2147483648
        %v7198 = vor.u32 1.1754944e-38, %v7197
        %v7199 = vsel %vm7196, %v7198, %v7194
        %v7200 = vmul.f32 1.0, %v7199
        %v7201 = vrcp.pop %v6877
        %v7202 = vmul.f32 %v6877, %v7201
        %v7203 = vsub.f32 1.0, %v7202
        %v7204 = vmul.f32 %v7201, %v7203
        %v7205 = vadd.f32 %v7201, %v7204
        %vm7206 = vweird.f32 %v6877
        %vm7207 = vweird.f32 %v7201
        %vm7208 = vmor %vm7206, %vm7207
        %v7209 = vsel %vm7208, %v7201, %v7205
        %v7210 = vand.u32 2147483647, %v6877
        %vm7211 = vcmp.eq.f32.partialorder %v7210, 8.507059e+37
        %v7212 = vand.u32 %v6877, 2147483648
        %v7213 = vor.u32 1.1754944e-38, %v7212
        %v7214 = vsel %vm7211, %v7213, %v7209
        %v7215 = vmul.f32 1.0, %v7214
        %v7216 = vrcp.pop %v6878
        %v7217 = vmul.f32 %v6878, %v7216
        %v7218 = vsub.f32 1.0, %v7217
        %v7219 = vmul.f32 %v7216, %v7218
        %v7220 = vadd.f32 %v7216, %v7219
        %vm7221 = vweird.f32 %v6878
        %vm7222 = vweird.f32 %v7216
        %vm7223 = vmor %vm7221, %vm7222
        %v7224 = vsel %vm7223, %v7216, %v7220
        %v7225 = vand.u32 2147483647, %v6878
        %vm7226 = vcmp.eq.f32.partialorder %v7225, 8.507059e+37
        %v7227 = vand.u32 %v6878, 2147483648
        %v7228 = vor.u32 1.1754944e-38, %v7227
        %v7229 = vsel %vm7226, %v7228, %v7224
        %v7230 = vmul.f32 1.0, %v7229
        %v7231 = vrcp.pop %v6879
        %v7232 = vmul.f32 %v6879, %v7231
        %v7233 = vsub.f32 1.0, %v7232
        %v7234 = vmul.f32 %v7231, %v7233
        %v7235 = vadd.f32 %v7231, %v7234
        %vm7236 = vweird.f32 %v6879
        %vm7237 = vweird.f32 %v7231
        %vm7238 = vmor %vm7236, %vm7237
        %v7239 = vsel %vm7238, %v7231, %v7235
        %v7240 = vand.u32 2147483647, %v6879
        %vm7241 = vcmp.eq.f32.partialorder %v7240, 8.507059e+37
        %v7242 = vand.u32 %v6879, 2147483648
        %v7243 = vor.u32 1.1754944e-38, %v7242
        %v7244 = vsel %vm7241, %v7243, %v7239
        %v7245 = vmul.f32 1.0, %v7244
        %v7246 = vrcp.pop %v6880
        %v7247 = vmul.f32 %v6880, %v7246
        %v7248 = vsub.f32 1.0, %v7247
        %v7249 = vmul.f32 %v7246, %v7248
        %v7250 = vadd.f32 %v7246, %v7249
        %vm7251 = vweird.f32 %v6880
        %vm7252 = vweird.f32 %v7246
        %vm7253 = vmor %vm7251, %vm7252
        %v7254 = vsel %vm7253, %v7246, %v7250
        %v7255 = vand.u32 2147483647, %v6880
        %vm7256 = vcmp.eq.f32.partialorder %v7255, 8.507059e+37
        %v7257 = vand.u32 %v6880, 2147483648
        %v7258 = vor.u32 1.1754944e-38, %v7257
        %v7259 = vsel %vm7256, %v7258, %v7254
        %v7260 = vmul.f32 1.0, %v7259
        %v7261 = vrcp.pop %v6881
        %v7262 = vmul.f32 %v6881, %v7261
        %v7263 = vsub.f32 1.0, %v7262
        %v7264 = vmul.f32 %v7261, %v7263
        %v7265 = vadd.f32 %v7261, %v7264
        %vm7266 = vweird.f32 %v6881
        %vm7267 = vweird.f32 %v7261
        %vm7268 = vmor %vm7266, %vm7267
        %v7269 = vsel %vm7268, %v7261, %v7265
        %v7270 = vand.u32 2147483647, %v6881
        %vm7271 = vcmp.eq.f32.partialorder %v7270, 8.507059e+37
        %v7272 = vand.u32 %v6881, 2147483648
        %v7273 = vor.u32 1.1754944e-38, %v7272
        %v7274 = vsel %vm7271, %v7273, %v7269
        %v7275 = vmul.f32 1.0, %v7274
        %v7276 = vrcp.pop %v6882
        %v7277 = vmul.f32 %v6882, %v7276
        %v7278 = vsub.f32 1.0, %v7277
        %v7279 = vmul.f32 %v7276, %v7278
        %v7280 = vadd.f32 %v7276, %v7279
        %vm7281 = vweird.f32 %v6882
        %vm7282 = vweird.f32 %v7276
        %vm7283 = vmor %vm7281, %vm7282
        %v7284 = vsel %vm7283, %v7276, %v7280
        %v7285 = vand.u32 2147483647, %v6882
        %vm7286 = vcmp.eq.f32.partialorder %v7285, 8.507059e+37
        %v7287 = vand.u32 %v6882, 2147483648
        %v7288 = vor.u32 1.1754944e-38, %v7287
        %v7289 = vsel %vm7286, %v7288, %v7284
        %v7290 = vmul.f32 1.0, %v7289
        %v7291 = vrcp.pop %v6883
        %v7292 = vmul.f32 %v6883, %v7291
        %v7293 = vsub.f32 1.0, %v7292
        %v7294 = vmul.f32 %v7291, %v7293
        %v7295 = vadd.f32 %v7291, %v7294
        %vm7296 = vweird.f32 %v6883
        %vm7297 = vweird.f32 %v7291
        %vm7298 = vmor %vm7296, %vm7297
        %v7299 = vsel %vm7298, %v7291, %v7295
        %v7300 = vand.u32 2147483647, %v6883
        %vm7301 = vcmp.eq.f32.partialorder %v7300, 8.507059e+37
        %v7302 = vand.u32 %v6883, 2147483648
        %v7303 = vor.u32 1.1754944e-38, %v7302
        %v7304 = vsel %vm7301, %v7303, %v7299
        %v7305 = vmul.f32 1.0, %v7304
        %v7306 = vrcp.pop %v6884
        %v7307 = vmul.f32 %v6884, %v7306
        %v7308 = vsub.f32 1.0, %v7307
        %v7309 = vmul.f32 %v7306, %v7308
        %v7310 = vadd.f32 %v7306, %v7309
        %vm7311 = vweird.f32 %v6884
        %vm7312 = vweird.f32 %v7306
        %vm7313 = vmor %vm7311, %vm7312
        %v7314 = vsel %vm7313, %v7306, %v7310
        %v7315 = vand.u32 2147483647, %v6884
        %vm7316 = vcmp.eq.f32.partialorder %v7315, 8.507059e+37
        %v7317 = vand.u32 %v6884, 2147483648
        %v7318 = vor.u32 1.1754944e-38, %v7317
        %v7319 = vsel %vm7316, %v7318, %v7314
        %v7320 = vmul.f32 1.0, %v7319
        %v7321 = vrcp.pop %v6885
        %v7322 = vmul.f32 %v6885, %v7321
        %v7323 = vsub.f32 1.0, %v7322
        %v7324 = vmul.f32 %v7321, %v7323
        %v7325 = vadd.f32 %v7321, %v7324
        %vm7326 = vweird.f32 %v6885
        %vm7327 = vweird.f32 %v7321
        %vm7328 = vmor %vm7326, %vm7327
        %v7329 = vsel %vm7328, %v7321, %v7325
        %v7330 = vand.u32 2147483647, %v6885
        %vm7331 = vcmp.eq.f32.partialorder %v7330, 8.507059e+37
        %v7332 = vand.u32 %v6885, 2147483648
        %v7333 = vor.u32 1.1754944e-38, %v7332
        %v7334 = vsel %vm7331, %v7333, %v7329
        %v7335 = vmul.f32 1.0, %v7334
        %v7336 = vrcp.pop %v6886
        %v7337 = vmul.f32 %v6886, %v7336
        %v7338 = vsub.f32 1.0, %v7337
        %v7339 = vmul.f32 %v7336, %v7338
        %v7340 = vadd.f32 %v7336, %v7339
        %vm7341 = vweird.f32 %v6886
        %vm7342 = vweird.f32 %v7336
        %vm7343 = vmor %vm7341, %vm7342
        %v7344 = vsel %vm7343, %v7336, %v7340
        %v7345 = vand.u32 2147483647, %v6886
        %vm7346 = vcmp.eq.f32.partialorder %v7345, 8.507059e+37
        %v7347 = vand.u32 %v6886, 2147483648
        %v7348 = vor.u32 1.1754944e-38, %v7347
        %v7349 = vsel %vm7346, %v7348, %v7344
        %v7350 = vmul.f32 1.0, %v7349
        %v7351 = vrcp.pop %v6887
        %v7352 = vmul.f32 %v6887, %v7351
        %v7353 = vsub.f32 1.0, %v7352
        %v7354 = vmul.f32 %v7351, %v7353
        %v7355 = vadd.f32 %v7351, %v7354
        %vm7356 = vweird.f32 %v6887
        %vm7357 = vweird.f32 %v7351
        %vm7358 = vmor %vm7356, %vm7357
        %v7359 = vsel %vm7358, %v7351, %v7355
        %v7360 = vand.u32 2147483647, %v6887
        %vm7361 = vcmp.eq.f32.partialorder %v7360, 8.507059e+37
        %v7362 = vand.u32 %v6887, 2147483648
        %v7363 = vor.u32 1.1754944e-38, %v7362
        %v7364 = vsel %vm7361, %v7363, %v7359
        %v7365 = vmul.f32 1.0, %v7364
        %v7366 = vrcp.pop %v6888
        %v7367 = vmul.f32 %v6888, %v7366
        %v7368 = vsub.f32 1.0, %v7367
        %v7369 = vmul.f32 %v7366, %v7368
        %v7370 = vadd.f32 %v7366, %v7369
        %vm7371 = vweird.f32 %v6888
        %vm7372 = vweird.f32 %v7366
        %vm7373 = vmor %vm7371, %vm7372
        %v7374 = vsel %vm7373, %v7366, %v7370
        %v7375 = vand.u32 2147483647, %v6888
        %vm7376 = vcmp.eq.f32.partialorder %v7375, 8.507059e+37
        %v7377 = vand.u32 %v6888, 2147483648
        %v7378 = vor.u32 1.1754944e-38, %v7377
        %v7379 = vsel %vm7376, %v7378, %v7374
        %v7380 = vmul.f32 1.0, %v7379
        %v7381 = vrcp.pop %v6889
        %v7382 = vmul.f32 %v6889, %v7381
        %v7383 = vsub.f32 1.0, %v7382
        %v7384 = vmul.f32 %v7381, %v7383
        %v7385 = vadd.f32 %v7381, %v7384
        %vm7386 = vweird.f32 %v6889
        %vm7387 = vweird.f32 %v7381
        %vm7388 = vmor %vm7386, %vm7387
        %v7389 = vsel %vm7388, %v7381, %v7385
        %v7390 = vand.u32 2147483647, %v6889
        %vm7391 = vcmp.eq.f32.partialorder %v7390, 8.507059e+37
        %v7392 = vand.u32 %v6889, 2147483648
        %v7393 = vor.u32 1.1754944e-38, %v7392
        %v7394 = vsel %vm7391, %v7393, %v7389
        %v7395 = vmul.f32 1.0, %v7394
        %v7396 = vrcp.pop %v6890
        %v7397 = vmul.f32 %v6890, %v7396
        %v7398 = vsub.f32 1.0, %v7397
        %v7399 = vmul.f32 %v7396, %v7398
        %v7400 = vadd.f32 %v7396, %v7399
        %vm7401 = vweird.f32 %v6890
        %vm7402 = vweird.f32 %v7396
        %vm7403 = vmor %vm7401, %vm7402
        %v7404 = vsel %vm7403, %v7396, %v7400
        %v7405 = vand.u32 2147483647, %v6890
        %vm7406 = vcmp.eq.f32.partialorder %v7405, 8.507059e+37
        %v7407 = vand.u32 %v6890, 2147483648
        %v7408 = vor.u32 1.1754944e-38, %v7407
        %v7409 = vsel %vm7406, %v7408, %v7404
        %v7410 = vmul.f32 1.0, %v7409
        %v7411 = vrcp.pop %v6891
        %v7412 = vmul.f32 %v6891, %v7411
        %v7413 = vsub.f32 1.0, %v7412
        %v7414 = vmul.f32 %v7411, %v7413
        %v7415 = vadd.f32 %v7411, %v7414
        %vm7416 = vweird.f32 %v6891
        %vm7417 = vweird.f32 %v7411
        %vm7418 = vmor %vm7416, %vm7417
        %v7419 = vsel %vm7418, %v7411, %v7415
        %v7420 = vand.u32 2147483647, %v6891
        %vm7421 = vcmp.eq.f32.partialorder %v7420, 8.507059e+37
        %v7422 = vand.u32 %v6891, 2147483648
        %v7423 = vor.u32 1.1754944e-38, %v7422
        %v7424 = vsel %vm7421, %v7423, %v7419
        %v7425 = vmul.f32 1.0, %v7424
        %v7426 = vrcp.pop %v6892
        %v7427 = vmul.f32 %v6892, %v7426
        %v7428 = vsub.f32 1.0, %v7427
        %v7429 = vmul.f32 %v7426, %v7428
        %v7430 = vadd.f32 %v7426, %v7429
        %vm7431 = vweird.f32 %v6892
        %vm7432 = vweird.f32 %v7426
        %vm7433 = vmor %vm7431, %vm7432
        %v7434 = vsel %vm7433, %v7426, %v7430
        %v7435 = vand.u32 2147483647, %v6892
        %vm7436 = vcmp.eq.f32.partialorder %v7435, 8.507059e+37
        %v7437 = vand.u32 %v6892, 2147483648
        %v7438 = vor.u32 1.1754944e-38, %v7437
        %v7439 = vsel %vm7436, %v7438, %v7434
        %v7440 = vmul.f32 1.0, %v7439
        %v7441 = vrcp.pop %v6893
        %v7442 = vmul.f32 %v6893, %v7441
        %v7443 = vsub.f32 1.0, %v7442
        %v7444 = vmul.f32 %v7441, %v7443
        %v7445 = vadd.f32 %v7441, %v7444
        %vm7446 = vweird.f32 %v6893
        %vm7447 = vweird.f32 %v7441
        %vm7448 = vmor %vm7446, %vm7447
        %v7449 = vsel %vm7448, %v7441, %v7445
        %v7450 = vand.u32 2147483647, %v6893
        %vm7451 = vcmp.eq.f32.partialorder %v7450, 8.507059e+37
        %v7452 = vand.u32 %v6893, 2147483648
        %v7453 = vor.u32 1.1754944e-38, %v7452
        %v7454 = vsel %vm7451, %v7453, %v7449
        %v7455 = vmul.f32 1.0, %v7454
        %v7456 = vrcp.pop %v6894
        %v7457 = vmul.f32 %v6894, %v7456
        %v7458 = vsub.f32 1.0, %v7457
        %v7459 = vmul.f32 %v7456, %v7458
        %v7460 = vadd.f32 %v7456, %v7459
        %vm7461 = vweird.f32 %v6894
        %vm7462 = vweird.f32 %v7456
        %vm7463 = vmor %vm7461, %vm7462
        %v7464 = vsel %vm7463, %v7456, %v7460
        %v7465 = vand.u32 2147483647, %v6894
        %vm7466 = vcmp.eq.f32.partialorder %v7465, 8.507059e+37
        %v7467 = vand.u32 %v6894, 2147483648
        %v7468 = vor.u32 1.1754944e-38, %v7467
        %v7469 = vsel %vm7466, %v7468, %v7464
        %v7470 = vmul.f32 1.0, %v7469
        %v7471 = vrcp.pop %v6895
        %v7472 = vmul.f32 %v6895, %v7471
        %v7473 = vsub.f32 1.0, %v7472
        %v7474 = vmul.f32 %v7471, %v7473
        %v7475 = vadd.f32 %v7471, %v7474
        %vm7476 = vweird.f32 %v6895
        %vm7477 = vweird.f32 %v7471
        %vm7478 = vmor %vm7476, %vm7477
        %v7479 = vsel %vm7478, %v7471, %v7475
        %v7480 = vand.u32 2147483647, %v6895
        %vm7481 = vcmp.eq.f32.partialorder %v7480, 8.507059e+37
        %v7482 = vand.u32 %v6895, 2147483648
        %v7483 = vor.u32 1.1754944e-38, %v7482
        %v7484 = vsel %vm7481, %v7483, %v7479
        %v7485 = vmul.f32 1.0, %v7484
        %v7486 = vrcp.pop %v6896
        %v7487 = vmul.f32 %v6896, %v7486
        %v7488 = vsub.f32 1.0, %v7487
        %v7489 = vmul.f32 %v7486, %v7488
        %v7490 = vadd.f32 %v7486, %v7489
        %vm7491 = vweird.f32 %v6896
        %vm7492 = vweird.f32 %v7486
        %vm7493 = vmor %vm7491, %vm7492
        %v7494 = vsel %vm7493, %v7486, %v7490
        %v7495 = vand.u32 2147483647, %v6896
        %vm7496 = vcmp.eq.f32.partialorder %v7495, 8.507059e+37
        %v7497 = vand.u32 %v6896, 2147483648
        %v7498 = vor.u32 1.1754944e-38, %v7497
        %v7499 = vsel %vm7496, %v7498, %v7494
        %v7500 = vmul.f32 1.0, %v7499
        %v7501 = vrcp.pop %v6897
        %v7502 = vmul.f32 %v6897, %v7501
        %v7503 = vsub.f32 1.0, %v7502
        %v7504 = vmul.f32 %v7501, %v7503
        %v7505 = vadd.f32 %v7501, %v7504
        %vm7506 = vweird.f32 %v6897
        %vm7507 = vweird.f32 %v7501
        %vm7508 = vmor %vm7506, %vm7507
        %v7509 = vsel %vm7508, %v7501, %v7505
        %v7510 = vand.u32 2147483647, %v6897
        %vm7511 = vcmp.eq.f32.partialorder %v7510, 8.507059e+37
        %v7512 = vand.u32 %v6897, 2147483648
        %v7513 = vor.u32 1.1754944e-38, %v7512
        %v7514 = vsel %vm7511, %v7513, %v7509
        %v7515 = vmul.f32 1.0, %v7514
        %v7516 = vrcp.pop %v6898
        %v7517 = vmul.f32 %v6898, %v7516
        %v7518 = vsub.f32 1.0, %v7517
        %v7519 = vmul.f32 %v7516, %v7518
        %v7520 = vadd.f32 %v7516, %v7519
        %vm7521 = vweird.f32 %v6898
        %vm7522 = vweird.f32 %v7516
        %vm7523 = vmor %vm7521, %vm7522
        %v7524 = vsel %vm7523, %v7516, %v7520
        %v7525 = vand.u32 2147483647, %v6898
        %vm7526 = vcmp.eq.f32.partialorder %v7525, 8.507059e+37
        %v7527 = vand.u32 %v6898, 2147483648
        %v7528 = vor.u32 1.1754944e-38, %v7527
        %v7529 = vsel %vm7526, %v7528, %v7524
        %v7530 = vmul.f32 1.0, %v7529
        %v7531 = vrcp.pop %v6899
        %v7532 = vmul.f32 %v6899, %v7531
        %v7533 = vsub.f32 1.0, %v7532
        %v7534 = vmul.f32 %v7531, %v7533
        %v7535 = vadd.f32 %v7531, %v7534
        %vm7536 = vweird.f32 %v6899
        %vm7537 = vweird.f32 %v7531
        %vm7538 = vmor %vm7536, %vm7537
        %v7539 = vsel %vm7538, %v7531, %v7535
        %v7540 = vand.u32 2147483647, %v6899
        %vm7541 = vcmp.eq.f32.partialorder %v7540, 8.507059e+37
        %v7542 = vand.u32 %v6899, 2147483648
        %v7543 = vor.u32 1.1754944e-38, %v7542
        %v7544 = vsel %vm7541, %v7543, %v7539
        %v7545 = vmul.f32 1.0, %v7544
        %v7546 = vrcp.pop %v6900
        %v7547 = vmul.f32 %v6900, %v7546
        %v7548 = vsub.f32 1.0, %v7547
        %v7549 = vmul.f32 %v7546, %v7548
        %v7550 = vadd.f32 %v7546, %v7549
        %vm7551 = vweird.f32 %v6900
        %vm7552 = vweird.f32 %v7546
        %vm7553 = vmor %vm7551, %vm7552
        %v7554 = vsel %vm7553, %v7546, %v7550
        %v7555 = vand.u32 2147483647, %v6900
        %vm7556 = vcmp.eq.f32.partialorder %v7555, 8.507059e+37
        %v7557 = vand.u32 %v6900, 2147483648
        %v7558 = vor.u32 1.1754944e-38, %v7557
        %v7559 = vsel %vm7556, %v7558, %v7554
        %v7560 = vmul.f32 1.0, %v7559
        %v7561 = vrcp.pop %v6901
        %v7562 = vmul.f32 %v6901, %v7561
        %v7563 = vsub.f32 1.0, %v7562
        %v7564 = vmul.f32 %v7561, %v7563
        %v7565 = vadd.f32 %v7561, %v7564
        %vm7566 = vweird.f32 %v6901
        %vm7567 = vweird.f32 %v7561
        %vm7568 = vmor %vm7566, %vm7567
        %v7569 = vsel %vm7568, %v7561, %v7565
        %v7570 = vand.u32 2147483647, %v6901
        %vm7571 = vcmp.eq.f32.partialorder %v7570, 8.507059e+37
        %v7572 = vand.u32 %v6901, 2147483648
        %v7573 = vor.u32 1.1754944e-38, %v7572
        %v7574 = vsel %vm7571, %v7573, %v7569
        %v7575 = vmul.f32 1.0, %v7574
        %v7576 = vrcp.pop %v6902
        %v7577 = vmul.f32 %v6902, %v7576
        %v7578 = vsub.f32 1.0, %v7577
        %v7579 = vmul.f32 %v7576, %v7578
        %v7580 = vadd.f32 %v7576, %v7579
        %vm7581 = vweird.f32 %v6902
        %vm7582 = vweird.f32 %v7576
        %vm7583 = vmor %vm7581, %vm7582
        %v7584 = vsel %vm7583, %v7576, %v7580
        %v7585 = vand.u32 2147483647, %v6902
        %vm7586 = vcmp.eq.f32.partialorder %v7585, 8.507059e+37
        %v7587 = vand.u32 %v6902, 2147483648
        %v7588 = vor.u32 1.1754944e-38, %v7587
        %v7589 = vsel %vm7586, %v7588, %v7584
        %v7590 = vmul.f32 1.0, %v7589
        %v7591 = vrcp.pop %v6903
        %v7592 = vmul.f32 %v6903, %v7591
        %v7593 = vsub.f32 1.0, %v7592
        %v7594 = vmul.f32 %v7591, %v7593
        %v7595 = vadd.f32 %v7591, %v7594
        %vm7596 = vweird.f32 %v6903
        %vm7597 = vweird.f32 %v7591
        %vm7598 = vmor %vm7596, %vm7597
        %v7599 = vsel %vm7598, %v7591, %v7595
        %v7600 = vand.u32 2147483647, %v6903
        %vm7601 = vcmp.eq.f32.partialorder %v7600, 8.507059e+37
        %v7602 = vand.u32 %v6903, 2147483648
        %v7603 = vor.u32 1.1754944e-38, %v7602
        %v7604 = vsel %vm7601, %v7603, %v7599
        %v7605 = vmul.f32 1.0, %v7604
        %v7606 = vrcp.pop %v6904
        %v7607 = vmul.f32 %v6904, %v7606
        %v7608 = vsub.f32 1.0, %v7607
        %v7609 = vmul.f32 %v7606, %v7608
        %v7610 = vadd.f32 %v7606, %v7609
        %vm7611 = vweird.f32 %v6904
        %vm7612 = vweird.f32 %v7606
        %vm7613 = vmor %vm7611, %vm7612
        %v7614 = vsel %vm7613, %v7606, %v7610
        %v7615 = vand.u32 2147483647, %v6904
        %vm7616 = vcmp.eq.f32.partialorder %v7615, 8.507059e+37
        %v7617 = vand.u32 %v6904, 2147483648
        %v7618 = vor.u32 1.1754944e-38, %v7617
        %v7619 = vsel %vm7616, %v7618, %v7614
        %v7620 = vmul.f32 1.0, %v7619
        %v7621 = vrcp.pop %v6905
        %v7622 = vmul.f32 %v6905, %v7621
        %v7623 = vsub.f32 1.0, %v7622
        %v7624 = vmul.f32 %v7621, %v7623
        %v7625 = vadd.f32 %v7621, %v7624
        %vm7626 = vweird.f32 %v6905
        %vm7627 = vweird.f32 %v7621
        %vm7628 = vmor %vm7626, %vm7627
        %v7629 = vsel %vm7628, %v7621, %v7625
        %v7630 = vand.u32 2147483647, %v6905
        %vm7631 = vcmp.eq.f32.partialorder %v7630, 8.507059e+37
        %v7632 = vand.u32 %v6905, 2147483648
        %v7633 = vor.u32 1.1754944e-38, %v7632
        %v7634 = vsel %vm7631, %v7633, %v7629
        %v7635 = vmul.f32 1.0, %v7634
        %v7636 = vrcp.pop %v6906
        %v7637 = vmul.f32 %v6906, %v7636
        %v7638 = vsub.f32 1.0, %v7637
        %v7639 = vmul.f32 %v7636, %v7638
        %v7640 = vadd.f32 %v7636, %v7639
        %vm7641 = vweird.f32 %v6906
        %vm7642 = vweird.f32 %v7636
        %vm7643 = vmor %vm7641, %vm7642
        %v7644 = vsel %vm7643, %v7636, %v7640
        %v7645 = vand.u32 2147483647, %v6906
        %vm7646 = vcmp.eq.f32.partialorder %v7645, 8.507059e+37
        %v7647 = vand.u32 %v6906, 2147483648
        %v7648 = vor.u32 1.1754944e-38, %v7647
        %v7649 = vsel %vm7646, %v7648, %v7644
        %v7650 = vmul.f32 1.0, %v7649
        %v7651 = vrcp.pop %v6907
        %v7652 = vmul.f32 %v6907, %v7651
        %v7653 = vsub.f32 1.0, %v7652
        %v7654 = vmul.f32 %v7651, %v7653
        %v7655 = vadd.f32 %v7651, %v7654
        %vm7656 = vweird.f32 %v6907
        %vm7657 = vweird.f32 %v7651
        %vm7658 = vmor %vm7656, %vm7657
        %v7659 = vsel %vm7658, %v7651, %v7655
        %v7660 = vand.u32 2147483647, %v6907
        %vm7661 = vcmp.eq.f32.partialorder %v7660, 8.507059e+37
        %v7662 = vand.u32 %v6907, 2147483648
        %v7663 = vor.u32 1.1754944e-38, %v7662
        %v7664 = vsel %vm7661, %v7663, %v7659
        %v7665 = vmul.f32 1.0, %v7664
        %v7666 = vrcp.pop %v6908
        %v7667 = vmul.f32 %v6908, %v7666
        %v7668 = vsub.f32 1.0, %v7667
        %v7669 = vmul.f32 %v7666, %v7668
        %v7670 = vadd.f32 %v7666, %v7669
        %vm7671 = vweird.f32 %v6908
        %vm7672 = vweird.f32 %v7666
        %vm7673 = vmor %vm7671, %vm7672
        %v7674 = vsel %vm7673, %v7666, %v7670
        %v7675 = vand.u32 2147483647, %v6908
        %vm7676 = vcmp.eq.f32.partialorder %v7675, 8.507059e+37
        %v7677 = vand.u32 %v6908, 2147483648
        %v7678 = vor.u32 1.1754944e-38, %v7677
        %v7679 = vsel %vm7676, %v7678, %v7674
        %v7680 = vmul.f32 1.0, %v7679
        %v7681 = vrcp.pop %v6909
        %v7682 = vmul.f32 %v6909, %v7681
        %v7683 = vsub.f32 1.0, %v7682
        %v7684 = vmul.f32 %v7681, %v7683
        %v7685 = vadd.f32 %v7681, %v7684
        %vm7686 = vweird.f32 %v6909
        %vm7687 = vweird.f32 %v7681
        %vm7688 = vmor %vm7686, %vm7687
        %v7689 = vsel %vm7688, %v7681, %v7685
        %v7690 = vand.u32 2147483647, %v6909
        %vm7691 = vcmp.eq.f32.partialorder %v7690, 8.507059e+37
        %v7692 = vand.u32 %v6909, 2147483648
        %v7693 = vor.u32 1.1754944e-38, %v7692
        %v7694 = vsel %vm7691, %v7693, %v7689
        %v7695 = vmul.f32 1.0, %v7694
        %v7696 = vrcp.pop %v6910
        %v7697 = vmul.f32 %v6910, %v7696
        %v7698 = vsub.f32 1.0, %v7697
        %v7699 = vmul.f32 %v7696, %v7698
        %v7700 = vadd.f32 %v7696, %v7699
        %vm7701 = vweird.f32 %v6910
        %vm7702 = vweird.f32 %v7696
        %vm7703 = vmor %vm7701, %vm7702
        %v7704 = vsel %vm7703, %v7696, %v7700
        %v7705 = vand.u32 2147483647, %v6910
        %vm7706 = vcmp.eq.f32.partialorder %v7705, 8.507059e+37
        %v7707 = vand.u32 %v6910, 2147483648
        %v7708 = vor.u32 1.1754944e-38, %v7707
        %v7709 = vsel %vm7706, %v7708, %v7704
        %v7710 = vmul.f32 1.0, %v7709
        %v7711 = vrcp.pop %v6911
        %v7712 = vmul.f32 %v6911, %v7711
        %v7713 = vsub.f32 1.0, %v7712
        %v7714 = vmul.f32 %v7711, %v7713
        %v7715 = vadd.f32 %v7711, %v7714
        %vm7716 = vweird.f32 %v6911
        %vm7717 = vweird.f32 %v7711
        %vm7718 = vmor %vm7716, %vm7717
        %v7719 = vsel %vm7718, %v7711, %v7715
        %v7720 = vand.u32 2147483647, %v6911
        %vm7721 = vcmp.eq.f32.partialorder %v7720, 8.507059e+37
        %v7722 = vand.u32 %v6911, 2147483648
        %v7723 = vor.u32 1.1754944e-38, %v7722
        %v7724 = vsel %vm7721, %v7723, %v7719
        %v7725 = vmul.f32 1.0, %v7724
        %v7726 = vrcp.pop %v6912
        %v7727 = vmul.f32 %v6912, %v7726
        %v7728 = vsub.f32 1.0, %v7727
        %v7729 = vmul.f32 %v7726, %v7728
        %v7730 = vadd.f32 %v7726, %v7729
        %vm7731 = vweird.f32 %v6912
        %vm7732 = vweird.f32 %v7726
        %vm7733 = vmor %vm7731, %vm7732
        %v7734 = vsel %vm7733, %v7726, %v7730
        %v7735 = vand.u32 2147483647, %v6912
        %vm7736 = vcmp.eq.f32.partialorder %v7735, 8.507059e+37
        %v7737 = vand.u32 %v6912, 2147483648
        %v7738 = vor.u32 1.1754944e-38, %v7737
        %v7739 = vsel %vm7736, %v7738, %v7734
        %v7740 = vmul.f32 1.0, %v7739
        %v7741 = vrcp.pop %v6913
        %v7742 = vmul.f32 %v6913, %v7741
        %v7743 = vsub.f32 1.0, %v7742
        %v7744 = vmul.f32 %v7741, %v7743
        %v7745 = vadd.f32 %v7741, %v7744
        %vm7746 = vweird.f32 %v6913
        %vm7747 = vweird.f32 %v7741
        %vm7748 = vmor %vm7746, %vm7747
        %v7749 = vsel %vm7748, %v7741, %v7745
        %v7750 = vand.u32 2147483647, %v6913
        %vm7751 = vcmp.eq.f32.partialorder %v7750, 8.507059e+37
        %v7752 = vand.u32 %v6913, 2147483648
        %v7753 = vor.u32 1.1754944e-38, %v7752
        %v7754 = vsel %vm7751, %v7753, %v7749
        %v7755 = vmul.f32 1.0, %v7754
        %v7756 = vrcp.pop %v6914
        %v7757 = vmul.f32 %v6914, %v7756
        %v7758 = vsub.f32 1.0, %v7757
        %v7759 = vmul.f32 %v7756, %v7758
        %v7760 = vadd.f32 %v7756, %v7759
        %vm7761 = vweird.f32 %v6914
        %vm7762 = vweird.f32 %v7756
        %vm7763 = vmor %vm7761, %vm7762
        %v7764 = vsel %vm7763, %v7756, %v7760
        %v7765 = vand.u32 2147483647, %v6914
        %vm7766 = vcmp.eq.f32.partialorder %v7765, 8.507059e+37
        %v7767 = vand.u32 %v6914, 2147483648
        %v7768 = vor.u32 1.1754944e-38, %v7767
        %v7769 = vsel %vm7766, %v7768, %v7764
        %v7770 = vmul.f32 1.0, %v7769
        %v7771 = vrcp.pop %v6915
        %v7772 = vmul.f32 %v6915, %v7771
        %v7773 = vsub.f32 1.0, %v7772
        %v7774 = vmul.f32 %v7771, %v7773
        %v7775 = vadd.f32 %v7771, %v7774
        %vm7776 = vweird.f32 %v6915
        %vm7777 = vweird.f32 %v7771
        %vm7778 = vmor %vm7776, %vm7777
        %v7779 = vsel %vm7778, %v7771, %v7775
        %v7780 = vand.u32 2147483647, %v6915
        %vm7781 = vcmp.eq.f32.partialorder %v7780, 8.507059e+37
        %v7782 = vand.u32 %v6915, 2147483648
        %v7783 = vor.u32 1.1754944e-38, %v7782
        %v7784 = vsel %vm7781, %v7783, %v7779
        %v7785 = vmul.f32 1.0, %v7784
        %v7786 = vrcp.pop %v6916
        %v7787 = vmul.f32 %v6916, %v7786
        %v7788 = vsub.f32 1.0, %v7787
        %v7789 = vmul.f32 %v7786, %v7788
        %v7790 = vadd.f32 %v7786, %v7789
        %vm7791 = vweird.f32 %v6916
        %vm7792 = vweird.f32 %v7786
        %vm7793 = vmor %vm7791, %vm7792
        %v7794 = vsel %vm7793, %v7786, %v7790
        %v7795 = vand.u32 2147483647, %v6916
        %vm7796 = vcmp.eq.f32.partialorder %v7795, 8.507059e+37
        %v7797 = vand.u32 %v6916, 2147483648
        %v7798 = vor.u32 1.1754944e-38, %v7797
        %v7799 = vsel %vm7796, %v7798, %v7794
        %v7800 = vmul.f32 1.0, %v7799
        %v7801 = vrcp.pop %v6917
        %v7802 = vmul.f32 %v6917, %v7801
        %v7803 = vsub.f32 1.0, %v7802
        %v7804 = vmul.f32 %v7801, %v7803
        %v7805 = vadd.f32 %v7801, %v7804
        %vm7806 = vweird.f32 %v6917
        %vm7807 = vweird.f32 %v7801
        %vm7808 = vmor %vm7806, %vm7807
        %v7809 = vsel %vm7808, %v7801, %v7805
        %v7810 = vand.u32 2147483647, %v6917
        %vm7811 = vcmp.eq.f32.partialorder %v7810, 8.507059e+37
        %v7812 = vand.u32 %v6917, 2147483648
        %v7813 = vor.u32 1.1754944e-38, %v7812
        %v7814 = vsel %vm7811, %v7813, %v7809
        %v7815 = vmul.f32 1.0, %v7814
        %v7816 = vrcp.pop %v6918
        %v7817 = vmul.f32 %v6918, %v7816
        %v7818 = vsub.f32 1.0, %v7817
        %v7819 = vmul.f32 %v7816, %v7818
        %v7820 = vadd.f32 %v7816, %v7819
        %vm7821 = vweird.f32 %v6918
        %vm7822 = vweird.f32 %v7816
        %vm7823 = vmor %vm7821, %vm7822
        %v7824 = vsel %vm7823, %v7816, %v7820
        %v7825 = vand.u32 2147483647, %v6918
        %vm7826 = vcmp.eq.f32.partialorder %v7825, 8.507059e+37
        %v7827 = vand.u32 %v6918, 2147483648
        %v7828 = vor.u32 1.1754944e-38, %v7827
        %v7829 = vsel %vm7826, %v7828, %v7824
        %v7830 = vmul.f32 1.0, %v7829
        %v7831 = vrcp.pop %v6919
        %v7832 = vmul.f32 %v6919, %v7831
        %v7833 = vsub.f32 1.0, %v7832
        %v7834 = vmul.f32 %v7831, %v7833
        %v7835 = vadd.f32 %v7831, %v7834
        %vm7836 = vweird.f32 %v6919
        %vm7837 = vweird.f32 %v7831
        %vm7838 = vmor %vm7836, %vm7837
        %v7839 = vsel %vm7838, %v7831, %v7835
        %v7840 = vand.u32 2147483647, %v6919
        %vm7841 = vcmp.eq.f32.partialorder %v7840, 8.507059e+37
        %v7842 = vand.u32 %v6919, 2147483648
        %v7843 = vor.u32 1.1754944e-38, %v7842
        %v7844 = vsel %vm7841, %v7843, %v7839
        %v7845 = vmul.f32 1.0, %v7844
        %v7846 = vrcp.pop %v6920
        %v7847 = vmul.f32 %v6920, %v7846
        %v7848 = vsub.f32 1.0, %v7847
        %v7849 = vmul.f32 %v7846, %v7848
        %v7850 = vadd.f32 %v7846, %v7849
        %vm7851 = vweird.f32 %v6920
        %vm7852 = vweird.f32 %v7846
        %vm7853 = vmor %vm7851, %vm7852
        %v7854 = vsel %vm7853, %v7846, %v7850
        %v7855 = vand.u32 2147483647, %v6920
        %vm7856 = vcmp.eq.f32.partialorder %v7855, 8.507059e+37
        %v7857 = vand.u32 %v6920, 2147483648
        %v7858 = vor.u32 1.1754944e-38, %v7857
        %v7859 = vsel %vm7856, %v7858, %v7854
        %v7860 = vmul.f32 1.0, %v7859
        %v7861 = vrcp.pop %v6921
        %v7862 = vmul.f32 %v6921, %v7861
        %v7863 = vsub.f32 1.0, %v7862
        %v7864 = vmul.f32 %v7861, %v7863
        %v7865 = vadd.f32 %v7861, %v7864
        %vm7866 = vweird.f32 %v6921
        %vm7867 = vweird.f32 %v7861
        %vm7868 = vmor %vm7866, %vm7867
        %v7869 = vsel %vm7868, %v7861, %v7865
        %v7870 = vand.u32 2147483647, %v6921
        %vm7871 = vcmp.eq.f32.partialorder %v7870, 8.507059e+37
        %v7872 = vand.u32 %v6921, 2147483648
        %v7873 = vor.u32 1.1754944e-38, %v7872
        %v7874 = vsel %vm7871, %v7873, %v7869
        %v7875 = vmul.f32 1.0, %v7874
        %v7876 = vrcp.pop %v6922
        %v7877 = vmul.f32 %v6922, %v7876
        %v7878 = vsub.f32 1.0, %v7877
        %v7879 = vmul.f32 %v7876, %v7878
        %v7880 = vadd.f32 %v7876, %v7879
        %vm7881 = vweird.f32 %v6922
        %vm7882 = vweird.f32 %v7876
        %vm7883 = vmor %vm7881, %vm7882
        %v7884 = vsel %vm7883, %v7876, %v7880
        %v7885 = vand.u32 2147483647, %v6922
        %vm7886 = vcmp.eq.f32.partialorder %v7885, 8.507059e+37
        %v7887 = vand.u32 %v6922, 2147483648
        %v7888 = vor.u32 1.1754944e-38, %v7887
        %v7889 = vsel %vm7886, %v7888, %v7884
        %v7890 = vmul.f32 1.0, %v7889
        %v7891 = vrcp.pop %v6923
        %v7892 = vmul.f32 %v6923, %v7891
        %v7893 = vsub.f32 1.0, %v7892
        %v7894 = vmul.f32 %v7891, %v7893
        %v7895 = vadd.f32 %v7891, %v7894
        %vm7896 = vweird.f32 %v6923
        %vm7897 = vweird.f32 %v7891
        %vm7898 = vmor %vm7896, %vm7897
        %v7899 = vsel %vm7898, %v7891, %v7895
        %v7900 = vand.u32 2147483647, %v6923
        %vm7901 = vcmp.eq.f32.partialorder %v7900, 8.507059e+37
        %v7902 = vand.u32 %v6923, 2147483648
        %v7903 = vor.u32 1.1754944e-38, %v7902
        %v7904 = vsel %vm7901, %v7903, %v7899
        %v7905 = vmul.f32 1.0, %v7904
        %v7906 = vrcp.pop %v6924
        %v7907 = vmul.f32 %v6924, %v7906
        %v7908 = vsub.f32 1.0, %v7907
        %v7909 = vmul.f32 %v7906, %v7908
        %v7910 = vadd.f32 %v7906, %v7909
        %vm7911 = vweird.f32 %v6924
        %vm7912 = vweird.f32 %v7906
        %vm7913 = vmor %vm7911, %vm7912
        %v7914 = vsel %vm7913, %v7906, %v7910
        %v7915 = vand.u32 2147483647, %v6924
        %vm7916 = vcmp.eq.f32.partialorder %v7915, 8.507059e+37
        %v7917 = vand.u32 %v6924, 2147483648
        %v7918 = vor.u32 1.1754944e-38, %v7917
        %v7919 = vsel %vm7916, %v7918, %v7914
        %v7920 = vmul.f32 1.0, %v7919
        %v7921 = vrcp.pop %v6925
        %v7922 = vmul.f32 %v6925, %v7921
        %v7923 = vsub.f32 1.0, %v7922
        %v7924 = vmul.f32 %v7921, %v7923
        %v7925 = vadd.f32 %v7921, %v7924
        %vm7926 = vweird.f32 %v6925
        %vm7927 = vweird.f32 %v7921
        %vm7928 = vmor %vm7926, %vm7927
        %v7929 = vsel %vm7928, %v7921, %v7925
        %v7930 = vand.u32 2147483647, %v6925
        %vm7931 = vcmp.eq.f32.partialorder %v7930, 8.507059e+37
        %v7932 = vand.u32 %v6925, 2147483648
        %v7933 = vor.u32 1.1754944e-38, %v7932
        %v7934 = vsel %vm7931, %v7933, %v7929
        %v7935 = vmul.f32 1.0, %v7934
        %v7936 = vrcp.pop %v6926
        %v7937 = vmul.f32 %v6926, %v7936
        %v7938 = vsub.f32 1.0, %v7937
        %v7939 = vmul.f32 %v7936, %v7938
        %v7940 = vadd.f32 %v7936, %v7939
        %vm7941 = vweird.f32 %v6926
        %vm7942 = vweird.f32 %v7936
        %vm7943 = vmor %vm7941, %vm7942
        %v7944 = vsel %vm7943, %v7936, %v7940
        %v7945 = vand.u32 2147483647, %v6926
        %vm7946 = vcmp.eq.f32.partialorder %v7945, 8.507059e+37
        %v7947 = vand.u32 %v6926, 2147483648
        %v7948 = vor.u32 1.1754944e-38, %v7947
        %v7949 = vsel %vm7946, %v7948, %v7944
        %v7950 = vmul.f32 1.0, %v7949
        %v7951 = vrcp.pop %v6927
        %v7952 = vmul.f32 %v6927, %v7951
        %v7953 = vsub.f32 1.0, %v7952
        %v7954 = vmul.f32 %v7951, %v7953
        %v7955 = vadd.f32 %v7951, %v7954
        %vm7956 = vweird.f32 %v6927
        %vm7957 = vweird.f32 %v7951
        %vm7958 = vmor %vm7956, %vm7957
        %v7959 = vsel %vm7958, %v7951, %v7955
        %v7960 = vand.u32 2147483647, %v6927
        %vm7961 = vcmp.eq.f32.partialorder %v7960, 8.507059e+37
        %v7962 = vand.u32 %v6927, 2147483648
        %v7963 = vor.u32 1.1754944e-38, %v7962
        %v7964 = vsel %vm7961, %v7963, %v7959
        %v7965 = vmul.f32 1.0, %v7964
        %v7966 = vrcp.pop %v6928
        %v7967 = vmul.f32 %v6928, %v7966
        %v7968 = vsub.f32 1.0, %v7967
        %v7969 = vmul.f32 %v7966, %v7968
        %v7970 = vadd.f32 %v7966, %v7969
        %vm7971 = vweird.f32 %v6928
        %vm7972 = vweird.f32 %v7966
        %vm7973 = vmor %vm7971, %vm7972
        %v7974 = vsel %vm7973, %v7966, %v7970
        %v7975 = vand.u32 2147483647, %v6928
        %vm7976 = vcmp.eq.f32.partialorder %v7975, 8.507059e+37
        %v7977 = vand.u32 %v6928, 2147483648
        %v7978 = vor.u32 1.1754944e-38, %v7977
        %v7979 = vsel %vm7976, %v7978, %v7974
        %v7980 = vmul.f32 1.0, %v7979
        %v7981 = vrcp.pop %v6929
        %v7982 = vmul.f32 %v6929, %v7981
        %v7983 = vsub.f32 1.0, %v7982
        %v7984 = vmul.f32 %v7981, %v7983
        %v7985 = vadd.f32 %v7981, %v7984
        %vm7986 = vweird.f32 %v6929
        %vm7987 = vweird.f32 %v7981
        %vm7988 = vmor %vm7986, %vm7987
        %v7989 = vsel %vm7988, %v7981, %v7985
        %v7990 = vand.u32 2147483647, %v6929
        %vm7991 = vcmp.eq.f32.partialorder %v7990, 8.507059e+37
        %v7992 = vand.u32 %v6929, 2147483648
        %v7993 = vor.u32 1.1754944e-38, %v7992
        %v7994 = vsel %vm7991, %v7993, %v7989
        %v7995 = vmul.f32 1.0, %v7994
        %v7996 = vrcp.pop %v6930
        %v7997 = vmul.f32 %v6930, %v7996
        %v7998 = vsub.f32 1.0, %v7997
        %v7999 = vmul.f32 %v7996, %v7998
        %v8000 = vadd.f32 %v7996, %v7999
        %vm8001 = vweird.f32 %v6930
        %vm8002 = vweird.f32 %v7996
        %vm8003 = vmor %vm8001, %vm8002
        %v8004 = vsel %vm8003, %v7996, %v8000
        %v8005 = vand.u32 2147483647, %v6930
        %vm8006 = vcmp.eq.f32.partialorder %v8005, 8.507059e+37
        %v8007 = vand.u32 %v6930, 2147483648
        %v8008 = vor.u32 1.1754944e-38, %v8007
        %v8009 = vsel %vm8006, %v8008, %v8004
        %v8010 = vmul.f32 1.0, %v8009
        %v8011 = vrcp.pop %v6931
        %v8012 = vmul.f32 %v6931, %v8011
        %v8013 = vsub.f32 1.0, %v8012
        %v8014 = vmul.f32 %v8011, %v8013
        %v8015 = vadd.f32 %v8011, %v8014
        %vm8016 = vweird.f32 %v6931
        %vm8017 = vweird.f32 %v8011
        %vm8018 = vmor %vm8016, %vm8017
        %v8019 = vsel %vm8018, %v8011, %v8015
        %v8020 = vand.u32 2147483647, %v6931
        %vm8021 = vcmp.eq.f32.partialorder %v8020, 8.507059e+37
        %v8022 = vand.u32 %v6931, 2147483648
        %v8023 = vor.u32 1.1754944e-38, %v8022
        %v8024 = vsel %vm8021, %v8023, %v8019
        %v8025 = vmul.f32 1.0, %v8024
        %v8026 = vrcp.pop %v6932
        %v8027 = vmul.f32 %v6932, %v8026
        %v8028 = vsub.f32 1.0, %v8027
        %v8029 = vmul.f32 %v8026, %v8028
        %v8030 = vadd.f32 %v8026, %v8029
        %vm8031 = vweird.f32 %v6932
        %vm8032 = vweird.f32 %v8026
        %vm8033 = vmor %vm8031, %vm8032
        %v8034 = vsel %vm8033, %v8026, %v8030
        %v8035 = vand.u32 2147483647, %v6932
        %vm8036 = vcmp.eq.f32.partialorder %v8035, 8.507059e+37
        %v8037 = vand.u32 %v6932, 2147483648
        %v8038 = vor.u32 1.1754944e-38, %v8037
        %v8039 = vsel %vm8036, %v8038, %v8034
        %v8040 = vmul.f32 1.0, %v8039
        %v8041 = vrcp.pop %v6933
        %v8042 = vmul.f32 %v6933, %v8041
        %v8043 = vsub.f32 1.0, %v8042
        %v8044 = vmul.f32 %v8041, %v8043
        %v8045 = vadd.f32 %v8041, %v8044
        %vm8046 = vweird.f32 %v6933
        %vm8047 = vweird.f32 %v8041
        %vm8048 = vmor %vm8046, %vm8047
        %v8049 = vsel %vm8048, %v8041, %v8045
        %v8050 = vand.u32 2147483647, %v6933
        %vm8051 = vcmp.eq.f32.partialorder %v8050, 8.507059e+37
        %v8052 = vand.u32 %v6933, 2147483648
        %v8053 = vor.u32 1.1754944e-38, %v8052
        %v8054 = vsel %vm8051, %v8053, %v8049
        %v8055 = vmul.f32 1.0, %v8054
        %v8056 = vrcp.pop %v6934
        %v8057 = vmul.f32 %v6934, %v8056
        %v8058 = vsub.f32 1.0, %v8057
        %v8059 = vmul.f32 %v8056, %v8058
        %v8060 = vadd.f32 %v8056, %v8059
        %vm8061 = vweird.f32 %v6934
        %vm8062 = vweird.f32 %v8056
        %vm8063 = vmor %vm8061, %vm8062
        %v8064 = vsel %vm8063, %v8056, %v8060
        %v8065 = vand.u32 2147483647, %v6934
        %vm8066 = vcmp.eq.f32.partialorder %v8065, 8.507059e+37
        %v8067 = vand.u32 %v6934, 2147483648
        %v8068 = vor.u32 1.1754944e-38, %v8067
        %v8069 = vsel %vm8066, %v8068, %v8064
        %v8070 = vmul.f32 1.0, %v8069
        %v8071 = vrcp.pop %v6935
        %v8072 = vmul.f32 %v6935, %v8071
        %v8073 = vsub.f32 1.0, %v8072
        %v8074 = vmul.f32 %v8071, %v8073
        %v8075 = vadd.f32 %v8071, %v8074
        %vm8076 = vweird.f32 %v6935
        %vm8077 = vweird.f32 %v8071
        %vm8078 = vmor %vm8076, %vm8077
        %v8079 = vsel %vm8078, %v8071, %v8075
        %v8080 = vand.u32 2147483647, %v6935
        %vm8081 = vcmp.eq.f32.partialorder %v8080, 8.507059e+37
        %v8082 = vand.u32 %v6935, 2147483648
        %v8083 = vor.u32 1.1754944e-38, %v8082
        %v8084 = vsel %vm8081, %v8083, %v8079
        %v8085 = vmul.f32 1.0, %v8084
        %v8086 = vrcp.pop %v6936
        %v8087 = vmul.f32 %v6936, %v8086
        %v8088 = vsub.f32 1.0, %v8087
        %v8089 = vmul.f32 %v8086, %v8088
        %v8090 = vadd.f32 %v8086, %v8089
        %vm8091 = vweird.f32 %v6936
        %vm8092 = vweird.f32 %v8086
        %vm8093 = vmor %vm8091, %vm8092
        %v8094 = vsel %vm8093, %v8086, %v8090
        %v8095 = vand.u32 2147483647, %v6936
        %vm8096 = vcmp.eq.f32.partialorder %v8095, 8.507059e+37
        %v8097 = vand.u32 %v6936, 2147483648
        %v8098 = vor.u32 1.1754944e-38, %v8097
        %v8099 = vsel %vm8096, %v8098, %v8094
        %v8100 = vmul.f32 1.0, %v8099
        %v8101 = vrcp.pop %v6937
        %v8102 = vmul.f32 %v6937, %v8101
        %v8103 = vsub.f32 1.0, %v8102
        %v8104 = vmul.f32 %v8101, %v8103
        %v8105 = vadd.f32 %v8101, %v8104
        %vm8106 = vweird.f32 %v6937
        %vm8107 = vweird.f32 %v8101
        %vm8108 = vmor %vm8106, %vm8107
        %v8109 = vsel %vm8108, %v8101, %v8105
        %v8110 = vand.u32 2147483647, %v6937
        %vm8111 = vcmp.eq.f32.partialorder %v8110, 8.507059e+37
        %v8112 = vand.u32 %v6937, 2147483648
        %v8113 = vor.u32 1.1754944e-38, %v8112
        %v8114 = vsel %vm8111, %v8113, %v8109
        %v8115 = vmul.f32 1.0, %v8114
        %v8116 = vrcp.pop %v6938
        %v8117 = vmul.f32 %v6938, %v8116
        %v8118 = vsub.f32 1.0, %v8117
        %v8119 = vmul.f32 %v8116, %v8118
        %v8120 = vadd.f32 %v8116, %v8119
        %vm8121 = vweird.f32 %v6938
        %vm8122 = vweird.f32 %v8116
        %vm8123 = vmor %vm8121, %vm8122
        %v8124 = vsel %vm8123, %v8116, %v8120
        %v8125 = vand.u32 2147483647, %v6938
        %vm8126 = vcmp.eq.f32.partialorder %v8125, 8.507059e+37
        %v8127 = vand.u32 %v6938, 2147483648
        %v8128 = vor.u32 1.1754944e-38, %v8127
        %v8129 = vsel %vm8126, %v8128, %v8124
        %v8130 = vmul.f32 1.0, %v8129
        %v8131 = vrcp.pop %v6939
        %v8132 = vmul.f32 %v6939, %v8131
        %v8133 = vsub.f32 1.0, %v8132
        %v8134 = vmul.f32 %v8131, %v8133
        %v8135 = vadd.f32 %v8131, %v8134
        %vm8136 = vweird.f32 %v6939
        %vm8137 = vweird.f32 %v8131
        %vm8138 = vmor %vm8136, %vm8137
        %v8139 = vsel %vm8138, %v8131, %v8135
        %v8140 = vand.u32 2147483647, %v6939
        %vm8141 = vcmp.eq.f32.partialorder %v8140, 8.507059e+37
        %v8142 = vand.u32 %v6939, 2147483648
        %v8143 = vor.u32 1.1754944e-38, %v8142
        %v8144 = vsel %vm8141, %v8143, %v8139
        %v8145 = vmul.f32 1.0, %v8144
        %v8146 = vrcp.pop %v6940
        %v8147 = vmul.f32 %v6940, %v8146
        %v8148 = vsub.f32 1.0, %v8147
        %v8149 = vmul.f32 %v8146, %v8148
        %v8150 = vadd.f32 %v8146, %v8149
        %vm8151 = vweird.f32 %v6940
        %vm8152 = vweird.f32 %v8146
        %vm8153 = vmor %vm8151, %vm8152
        %v8154 = vsel %vm8153, %v8146, %v8150
        %v8155 = vand.u32 2147483647, %v6940
        %vm8156 = vcmp.eq.f32.partialorder %v8155, 8.507059e+37
        %v8157 = vand.u32 %v6940, 2147483648
        %v8158 = vor.u32 1.1754944e-38, %v8157
        %v8159 = vsel %vm8156, %v8158, %v8154
        %v8160 = vmul.f32 1.0, %v8159
        %v8161 = vrcp.pop %v6941
        %v8162 = vmul.f32 %v6941, %v8161
        %v8163 = vsub.f32 1.0, %v8162
        %v8164 = vmul.f32 %v8161, %v8163
        %v8165 = vadd.f32 %v8161, %v8164
        %vm8166 = vweird.f32 %v6941
        %vm8167 = vweird.f32 %v8161
        %vm8168 = vmor %vm8166, %vm8167
        %v8169 = vsel %vm8168, %v8161, %v8165
        %v8170 = vand.u32 2147483647, %v6941
        %vm8171 = vcmp.eq.f32.partialorder %v8170, 8.507059e+37
        %v8172 = vand.u32 %v6941, 2147483648
        %v8173 = vor.u32 1.1754944e-38, %v8172
        %v8174 = vsel %vm8171, %v8173, %v8169
        %v8175 = vmul.f32 1.0, %v8174
        %v8176 = vrcp.pop %v6942
        %v8177 = vmul.f32 %v6942, %v8176
        %v8178 = vsub.f32 1.0, %v8177
        %v8179 = vmul.f32 %v8176, %v8178
        %v8180 = vadd.f32 %v8176, %v8179
        %vm8181 = vweird.f32 %v6942
        %vm8182 = vweird.f32 %v8176
        %vm8183 = vmor %vm8181, %vm8182
        %v8184 = vsel %vm8183, %v8176, %v8180
        %v8185 = vand.u32 2147483647, %v6942
        %vm8186 = vcmp.eq.f32.partialorder %v8185, 8.507059e+37
        %v8187 = vand.u32 %v6942, 2147483648
        %v8188 = vor.u32 1.1754944e-38, %v8187
        %v8189 = vsel %vm8186, %v8188, %v8184
        %v8190 = vmul.f32 1.0, %v8189
        %v8191 = vrcp.pop %v6943
        %v8192 = vmul.f32 %v6943, %v8191
        %v8193 = vsub.f32 1.0, %v8192
        %v8194 = vmul.f32 %v8191, %v8193
        %v8195 = vadd.f32 %v8191, %v8194
        %vm8196 = vweird.f32 %v6943
        %vm8197 = vweird.f32 %v8191
        %vm8198 = vmor %vm8196, %vm8197
        %v8199 = vsel %vm8198, %v8191, %v8195
        %v8200 = vand.u32 2147483647, %v6943
        %vm8201 = vcmp.eq.f32.partialorder %v8200, 8.507059e+37
        %v8202 = vand.u32 %v6943, 2147483648
        %v8203 = vor.u32 1.1754944e-38, %v8202
        %v8204 = vsel %vm8201, %v8203, %v8199
        %v8205 = vmul.f32 1.0, %v8204
        %v8206 = vrcp.pop %v6944
        %v8207 = vmul.f32 %v6944, %v8206
        %v8208 = vsub.f32 1.0, %v8207
        %v8209 = vmul.f32 %v8206, %v8208
        %v8210 = vadd.f32 %v8206, %v8209
        %vm8211 = vweird.f32 %v6944
        %vm8212 = vweird.f32 %v8206
        %vm8213 = vmor %vm8211, %vm8212
        %v8214 = vsel %vm8213, %v8206, %v8210
        %v8215 = vand.u32 2147483647, %v6944
        %vm8216 = vcmp.eq.f32.partialorder %v8215, 8.507059e+37
        %v8217 = vand.u32 %v6944, 2147483648
        %v8218 = vor.u32 1.1754944e-38, %v8217
        %v8219 = vsel %vm8216, %v8218, %v8214
        %v8220 = vmul.f32 1.0, %v8219
        %v8221 = vrcp.pop %v6945
        %v8222 = vmul.f32 %v6945, %v8221
        %v8223 = vsub.f32 1.0, %v8222
        %v8224 = vmul.f32 %v8221, %v8223
        %v8225 = vadd.f32 %v8221, %v8224
        %vm8226 = vweird.f32 %v6945
        %vm8227 = vweird.f32 %v8221
        %vm8228 = vmor %vm8226, %vm8227
        %v8229 = vsel %vm8228, %v8221, %v8225
        %v8230 = vand.u32 2147483647, %v6945
        %vm8231 = vcmp.eq.f32.partialorder %v8230, 8.507059e+37
        %v8232 = vand.u32 %v6945, 2147483648
        %v8233 = vor.u32 1.1754944e-38, %v8232
        %v8234 = vsel %vm8231, %v8233, %v8229
        %v8235 = vmul.f32 1.0, %v8234
        %v8236 = vrcp.pop %v6946
        %v8237 = vmul.f32 %v6946, %v8236
        %v8238 = vsub.f32 1.0, %v8237
        %v8239 = vmul.f32 %v8236, %v8238
        %v8240 = vadd.f32 %v8236, %v8239
        %vm8241 = vweird.f32 %v6946
        %vm8242 = vweird.f32 %v8236
        %vm8243 = vmor %vm8241, %vm8242
        %v8244 = vsel %vm8243, %v8236, %v8240
        %v8245 = vand.u32 2147483647, %v6946
        %vm8246 = vcmp.eq.f32.partialorder %v8245, 8.507059e+37
        %v8247 = vand.u32 %v6946, 2147483648
        %v8248 = vor.u32 1.1754944e-38, %v8247
        %v8249 = vsel %vm8246, %v8248, %v8244
        %v8250 = vmul.f32 1.0, %v8249
        %v8251 = vrcp.pop %v6947
        %v8252 = vmul.f32 %v6947, %v8251
        %v8253 = vsub.f32 1.0, %v8252
        %v8254 = vmul.f32 %v8251, %v8253
        %v8255 = vadd.f32 %v8251, %v8254
        %vm8256 = vweird.f32 %v6947
        %vm8257 = vweird.f32 %v8251
        %vm8258 = vmor %vm8256, %vm8257
        %v8259 = vsel %vm8258, %v8251, %v8255
        %v8260 = vand.u32 2147483647, %v6947
        %vm8261 = vcmp.eq.f32.partialorder %v8260, 8.507059e+37
        %v8262 = vand.u32 %v6947, 2147483648
        %v8263 = vor.u32 1.1754944e-38, %v8262
        %v8264 = vsel %vm8261, %v8263, %v8259
        %v8265 = vmul.f32 1.0, %v8264
        %v8266 = vrcp.pop %v6948
        %v8267 = vmul.f32 %v6948, %v8266
        %v8268 = vsub.f32 1.0, %v8267
        %v8269 = vmul.f32 %v8266, %v8268
        %v8270 = vadd.f32 %v8266, %v8269
        %vm8271 = vweird.f32 %v6948
        %vm8272 = vweird.f32 %v8266
        %vm8273 = vmor %vm8271, %vm8272
        %v8274 = vsel %vm8273, %v8266, %v8270
        %v8275 = vand.u32 2147483647, %v6948
        %vm8276 = vcmp.eq.f32.partialorder %v8275, 8.507059e+37
        %v8277 = vand.u32 %v6948, 2147483648
        %v8278 = vor.u32 1.1754944e-38, %v8277
        %v8279 = vsel %vm8276, %v8278, %v8274
        %v8280 = vmul.f32 1.0, %v8279
        %v8281 = vrcp.pop %v6949
        %v8282 = vmul.f32 %v6949, %v8281
        %v8283 = vsub.f32 1.0, %v8282
        %v8284 = vmul.f32 %v8281, %v8283
        %v8285 = vadd.f32 %v8281, %v8284
        %vm8286 = vweird.f32 %v6949
        %vm8287 = vweird.f32 %v8281
        %vm8288 = vmor %vm8286, %vm8287
        %v8289 = vsel %vm8288, %v8281, %v8285
        %v8290 = vand.u32 2147483647, %v6949
        %vm8291 = vcmp.eq.f32.partialorder %v8290, 8.507059e+37
        %v8292 = vand.u32 %v6949, 2147483648
        %v8293 = vor.u32 1.1754944e-38, %v8292
        %v8294 = vsel %vm8291, %v8293, %v8289
        %v8295 = vmul.f32 1.0, %v8294
        %v8296 = vrcp.pop %v6950
        %v8297 = vmul.f32 %v6950, %v8296
        %v8298 = vsub.f32 1.0, %v8297
        %v8299 = vmul.f32 %v8296, %v8298
        %v8300 = vadd.f32 %v8296, %v8299
        %vm8301 = vweird.f32 %v6950
        %vm8302 = vweird.f32 %v8296
        %vm8303 = vmor %vm8301, %vm8302
        %v8304 = vsel %vm8303, %v8296, %v8300
        %v8305 = vand.u32 2147483647, %v6950
        %vm8306 = vcmp.eq.f32.partialorder %v8305, 8.507059e+37
        %v8307 = vand.u32 %v6950, 2147483648
        %v8308 = vor.u32 1.1754944e-38, %v8307
        %v8309 = vsel %vm8306, %v8308, %v8304
        %v8310 = vmul.f32 1.0, %v8309
        %v8311 = vrcp.pop %v6951
        %v8312 = vmul.f32 %v6951, %v8311
        %v8313 = vsub.f32 1.0, %v8312
        %v8314 = vmul.f32 %v8311, %v8313
        %v8315 = vadd.f32 %v8311, %v8314
        %vm8316 = vweird.f32 %v6951
        %vm8317 = vweird.f32 %v8311
        %vm8318 = vmor %vm8316, %vm8317
        %v8319 = vsel %vm8318, %v8311, %v8315
        %v8320 = vand.u32 2147483647, %v6951
        %vm8321 = vcmp.eq.f32.partialorder %v8320, 8.507059e+37
        %v8322 = vand.u32 %v6951, 2147483648
        %v8323 = vor.u32 1.1754944e-38, %v8322
        %v8324 = vsel %vm8321, %v8323, %v8319
        %v8325 = vmul.f32 1.0, %v8324
        %v8326 = vrcp.pop %v6952
        %v8327 = vmul.f32 %v6952, %v8326
        %v8328 = vsub.f32 1.0, %v8327
        %v8329 = vmul.f32 %v8326, %v8328
        %v8330 = vadd.f32 %v8326, %v8329
        %vm8331 = vweird.f32 %v6952
        %vm8332 = vweird.f32 %v8326
        %vm8333 = vmor %vm8331, %vm8332
        %v8334 = vsel %vm8333, %v8326, %v8330
        %v8335 = vand.u32 2147483647, %v6952
        %vm8336 = vcmp.eq.f32.partialorder %v8335, 8.507059e+37
        %v8337 = vand.u32 %v6952, 2147483648
        %v8338 = vor.u32 1.1754944e-38, %v8337
        %v8339 = vsel %vm8336, %v8338, %v8334
        %v8340 = vmul.f32 1.0, %v8339
        %v8341 = vrcp.pop %v6953
        %v8342 = vmul.f32 %v6953, %v8341
        %v8343 = vsub.f32 1.0, %v8342
        %v8344 = vmul.f32 %v8341, %v8343
        %v8345 = vadd.f32 %v8341, %v8344
        %vm8346 = vweird.f32 %v6953
        %vm8347 = vweird.f32 %v8341
        %vm8348 = vmor %vm8346, %vm8347
        %v8349 = vsel %vm8348, %v8341, %v8345
        %v8350 = vand.u32 2147483647, %v6953
        %vm8351 = vcmp.eq.f32.partialorder %v8350, 8.507059e+37
        %v8352 = vand.u32 %v6953, 2147483648
        %v8353 = vor.u32 1.1754944e-38, %v8352
        %v8354 = vsel %vm8351, %v8353, %v8349
        %v8355 = vmul.f32 1.0, %v8354
        %v8356 = vrcp.pop %v6954
        %v8357 = vmul.f32 %v6954, %v8356
        %v8358 = vsub.f32 1.0, %v8357
        %v8359 = vmul.f32 %v8356, %v8358
        %v8360 = vadd.f32 %v8356, %v8359
        %vm8361 = vweird.f32 %v6954
        %vm8362 = vweird.f32 %v8356
        %vm8363 = vmor %vm8361, %vm8362
        %v8364 = vsel %vm8363, %v8356, %v8360
        %v8365 = vand.u32 2147483647, %v6954
        %vm8366 = vcmp.eq.f32.partialorder %v8365, 8.507059e+37
        %v8367 = vand.u32 %v6954, 2147483648
        %v8368 = vor.u32 1.1754944e-38, %v8367
        %v8369 = vsel %vm8366, %v8368, %v8364
        %v8370 = vmul.f32 1.0, %v8369
        %v8371 = vrcp.pop %v6955
        %v8372 = vmul.f32 %v6955, %v8371
        %v8373 = vsub.f32 1.0, %v8372
        %v8374 = vmul.f32 %v8371, %v8373
        %v8375 = vadd.f32 %v8371, %v8374
        %vm8376 = vweird.f32 %v6955
        %vm8377 = vweird.f32 %v8371
        %vm8378 = vmor %vm8376, %vm8377
        %v8379 = vsel %vm8378, %v8371, %v8375
        %v8380 = vand.u32 2147483647, %v6955
        %vm8381 = vcmp.eq.f32.partialorder %v8380, 8.507059e+37
        %v8382 = vand.u32 %v6955, 2147483648
        %v8383 = vor.u32 1.1754944e-38, %v8382
        %v8384 = vsel %vm8381, %v8383, %v8379
        %v8385 = vmul.f32 1.0, %v8384
        %v8386 = vrcp.pop %v6956
        %v8387 = vmul.f32 %v6956, %v8386
        %v8388 = vsub.f32 1.0, %v8387
        %v8389 = vmul.f32 %v8386, %v8388
        %v8390 = vadd.f32 %v8386, %v8389
        %vm8391 = vweird.f32 %v6956
        %vm8392 = vweird.f32 %v8386
        %vm8393 = vmor %vm8391, %vm8392
        %v8394 = vsel %vm8393, %v8386, %v8390
        %v8395 = vand.u32 2147483647, %v6956
        %vm8396 = vcmp.eq.f32.partialorder %v8395, 8.507059e+37
        %v8397 = vand.u32 %v6956, 2147483648
        %v8398 = vor.u32 1.1754944e-38, %v8397
        %v8399 = vsel %vm8396, %v8398, %v8394
        %v8400 = vmul.f32 1.0, %v8399
        %v8401 = vrcp.pop %v6957
        %v8402 = vmul.f32 %v6957, %v8401
        %v8403 = vsub.f32 1.0, %v8402
        %v8404 = vmul.f32 %v8401, %v8403
        %v8405 = vadd.f32 %v8401, %v8404
        %vm8406 = vweird.f32 %v6957
        %vm8407 = vweird.f32 %v8401
        %vm8408 = vmor %vm8406, %vm8407
        %v8409 = vsel %vm8408, %v8401, %v8405
        %v8410 = vand.u32 2147483647, %v6957
        %vm8411 = vcmp.eq.f32.partialorder %v8410, 8.507059e+37
        %v8412 = vand.u32 %v6957, 2147483648
        %v8413 = vor.u32 1.1754944e-38, %v8412
        %v8414 = vsel %vm8411, %v8413, %v8409
        %v8415 = vmul.f32 1.0, %v8414
        %v8416 = vrcp.pop %v6958
        %v8417 = vmul.f32 %v6958, %v8416
        %v8418 = vsub.f32 1.0, %v8417
        %v8419 = vmul.f32 %v8416, %v8418
        %v8420 = vadd.f32 %v8416, %v8419
        %vm8421 = vweird.f32 %v6958
        %vm8422 = vweird.f32 %v8416
        %vm8423 = vmor %vm8421, %vm8422
        %v8424 = vsel %vm8423, %v8416, %v8420
        %v8425 = vand.u32 2147483647, %v6958
        %vm8426 = vcmp.eq.f32.partialorder %v8425, 8.507059e+37
        %v8427 = vand.u32 %v6958, 2147483648
        %v8428 = vor.u32 1.1754944e-38, %v8427
        %v8429 = vsel %vm8426, %v8428, %v8424
        %v8430 = vmul.f32 1.0, %v8429
        %v8431 = vrcp.pop %v6959
        %v8432 = vmul.f32 %v6959, %v8431
        %v8433 = vsub.f32 1.0, %v8432
        %v8434 = vmul.f32 %v8431, %v8433
        %v8435 = vadd.f32 %v8431, %v8434
        %vm8436 = vweird.f32 %v6959
        %vm8437 = vweird.f32 %v8431
        %vm8438 = vmor %vm8436, %vm8437
        %v8439 = vsel %vm8438, %v8431, %v8435
        %v8440 = vand.u32 2147483647, %v6959
        %vm8441 = vcmp.eq.f32.partialorder %v8440, 8.507059e+37
        %v8442 = vand.u32 %v6959, 2147483648
        %v8443 = vor.u32 1.1754944e-38, %v8442
        %v8444 = vsel %vm8441, %v8443, %v8439
        %v8445 = vmul.f32 1.0, %v8444
        %v8446 = vrcp.pop %v6960
        %v8447 = vmul.f32 %v6960, %v8446
        %v8448 = vsub.f32 1.0, %v8447
        %v8449 = vmul.f32 %v8446, %v8448
        %v8450 = vadd.f32 %v8446, %v8449
        %vm8451 = vweird.f32 %v6960
        %vm8452 = vweird.f32 %v8446
        %vm8453 = vmor %vm8451, %vm8452
        %v8454 = vsel %vm8453, %v8446, %v8450
        %v8455 = vand.u32 2147483647, %v6960
        %vm8456 = vcmp.eq.f32.partialorder %v8455, 8.507059e+37
        %v8457 = vand.u32 %v6960, 2147483648
        %v8458 = vor.u32 1.1754944e-38, %v8457
        %v8459 = vsel %vm8456, %v8458, %v8454
        %v8460 = vmul.f32 1.0, %v8459
        %v8461 = vrcp.pop %v6961
        %v8462 = vmul.f32 %v6961, %v8461
        %v8463 = vsub.f32 1.0, %v8462
        %v8464 = vmul.f32 %v8461, %v8463
        %v8465 = vadd.f32 %v8461, %v8464
        %vm8466 = vweird.f32 %v6961
        %vm8467 = vweird.f32 %v8461
        %vm8468 = vmor %vm8466, %vm8467
        %v8469 = vsel %vm8468, %v8461, %v8465
        %v8470 = vand.u32 2147483647, %v6961
        %vm8471 = vcmp.eq.f32.partialorder %v8470, 8.507059e+37
        %v8472 = vand.u32 %v6961, 2147483648
        %v8473 = vor.u32 1.1754944e-38, %v8472
        %v8474 = vsel %vm8471, %v8473, %v8469
        %v8475 = vmul.f32 1.0, %v8474
        %v8476 = vrcp.pop %v6962
        %v8477 = vmul.f32 %v6962, %v8476
        %v8478 = vsub.f32 1.0, %v8477
        %v8479 = vmul.f32 %v8476, %v8478
        %v8480 = vadd.f32 %v8476, %v8479
        %vm8481 = vweird.f32 %v6962
        %vm8482 = vweird.f32 %v8476
        %vm8483 = vmor %vm8481, %vm8482
        %v8484 = vsel %vm8483, %v8476, %v8480
        %v8485 = vand.u32 2147483647, %v6962
        %vm8486 = vcmp.eq.f32.partialorder %v8485, 8.507059e+37
        %v8487 = vand.u32 %v6962, 2147483648
        %v8488 = vor.u32 1.1754944e-38, %v8487
        %v8489 = vsel %vm8486, %v8488, %v8484
        %v8490 = vmul.f32 1.0, %v8489
        %v8491 = vrcp.pop %v6963
        %v8492 = vmul.f32 %v6963, %v8491
        %v8493 = vsub.f32 1.0, %v8492
        %v8494 = vmul.f32 %v8491, %v8493
        %v8495 = vadd.f32 %v8491, %v8494
        %vm8496 = vweird.f32 %v6963
        %vm8497 = vweird.f32 %v8491
        %vm8498 = vmor %vm8496, %vm8497
        %v8499 = vsel %vm8498, %v8491, %v8495
        %v8500 = vand.u32 2147483647, %v6963
        %vm8501 = vcmp.eq.f32.partialorder %v8500, 8.507059e+37
        %v8502 = vand.u32 %v6963, 2147483648
        %v8503 = vor.u32 1.1754944e-38, %v8502
        %v8504 = vsel %vm8501, %v8503, %v8499
        %v8505 = vmul.f32 1.0, %v8504
        %v8506 = vrcp.pop %v6964
        %v8507 = vmul.f32 %v6964, %v8506
        %v8508 = vsub.f32 1.0, %v8507
        %v8509 = vmul.f32 %v8506, %v8508
        %v8510 = vadd.f32 %v8506, %v8509
        %vm8511 = vweird.f32 %v6964
        %vm8512 = vweird.f32 %v8506
        %vm8513 = vmor %vm8511, %vm8512
        %v8514 = vsel %vm8513, %v8506, %v8510
        %v8515 = vand.u32 2147483647, %v6964
        %vm8516 = vcmp.eq.f32.partialorder %v8515, 8.507059e+37
        %v8517 = vand.u32 %v6964, 2147483648
        %v8518 = vor.u32 1.1754944e-38, %v8517
        %v8519 = vsel %vm8516, %v8518, %v8514
        %v8520 = vmul.f32 1.0, %v8519
        %v8521 = vrcp.pop %v6965
        %v8522 = vmul.f32 %v6965, %v8521
        %v8523 = vsub.f32 1.0, %v8522
        %v8524 = vmul.f32 %v8521, %v8523
        %v8525 = vadd.f32 %v8521, %v8524
        %vm8526 = vweird.f32 %v6965
        %vm8527 = vweird.f32 %v8521
        %vm8528 = vmor %vm8526, %vm8527
        %v8529 = vsel %vm8528, %v8521, %v8525
        %v8530 = vand.u32 2147483647, %v6965
        %vm8531 = vcmp.eq.f32.partialorder %v8530, 8.507059e+37
        %v8532 = vand.u32 %v6965, 2147483648
        %v8533 = vor.u32 1.1754944e-38, %v8532
        %v8534 = vsel %vm8531, %v8533, %v8529
        %v8535 = vmul.f32 1.0, %v8534
        %v8536 = vrcp.pop %v6966
        %v8537 = vmul.f32 %v6966, %v8536
        %v8538 = vsub.f32 1.0, %v8537
        %v8539 = vmul.f32 %v8536, %v8538
        %v8540 = vadd.f32 %v8536, %v8539
        %vm8541 = vweird.f32 %v6966
        %vm8542 = vweird.f32 %v8536
        %vm8543 = vmor %vm8541, %vm8542
        %v8544 = vsel %vm8543, %v8536, %v8540
        %v8545 = vand.u32 2147483647, %v6966
        %vm8546 = vcmp.eq.f32.partialorder %v8545, 8.507059e+37
        %v8547 = vand.u32 %v6966, 2147483648
        %v8548 = vor.u32 1.1754944e-38, %v8547
        %v8549 = vsel %vm8546, %v8548, %v8544
        %v8550 = vmul.f32 1.0, %v8549
        %v8551 = vrcp.pop %v6967
        %v8552 = vmul.f32 %v6967, %v8551
        %v8553 = vsub.f32 1.0, %v8552
        %v8554 = vmul.f32 %v8551, %v8553
        %v8555 = vadd.f32 %v8551, %v8554
        %vm8556 = vweird.f32 %v6967
        %vm8557 = vweird.f32 %v8551
        %vm8558 = vmor %vm8556, %vm8557
        %v8559 = vsel %vm8558, %v8551, %v8555
        %v8560 = vand.u32 2147483647, %v6967
        %vm8561 = vcmp.eq.f32.partialorder %v8560, 8.507059e+37
        %v8562 = vand.u32 %v6967, 2147483648
        %v8563 = vor.u32 1.1754944e-38, %v8562
        %v8564 = vsel %vm8561, %v8563, %v8559
        %v8565 = vmul.f32 1.0, %v8564
        %v8566 = vrcp.pop %v6968
        %v8567 = vmul.f32 %v6968, %v8566
        %v8568 = vsub.f32 1.0, %v8567
        %v8569 = vmul.f32 %v8566, %v8568
        %v8570 = vadd.f32 %v8566, %v8569
        %vm8571 = vweird.f32 %v6968
        %vm8572 = vweird.f32 %v8566
        %vm8573 = vmor %vm8571, %vm8572
        %v8574 = vsel %vm8573, %v8566, %v8570
        %v8575 = vand.u32 2147483647, %v6968
        %vm8576 = vcmp.eq.f32.partialorder %v8575, 8.507059e+37
        %v8577 = vand.u32 %v6968, 2147483648
        %v8578 = vor.u32 1.1754944e-38, %v8577
        %v8579 = vsel %vm8576, %v8578, %v8574
        %v8580 = vmul.f32 1.0, %v8579
        %v8581 = vrcp.pop %v6969
        %v8582 = vmul.f32 %v6969, %v8581
        %v8583 = vsub.f32 1.0, %v8582
        %v8584 = vmul.f32 %v8581, %v8583
        %v8585 = vadd.f32 %v8581, %v8584
        %vm8586 = vweird.f32 %v6969
        %vm8587 = vweird.f32 %v8581
        %vm8588 = vmor %vm8586, %vm8587
        %v8589 = vsel %vm8588, %v8581, %v8585
        %v8590 = vand.u32 2147483647, %v6969
        %vm8591 = vcmp.eq.f32.partialorder %v8590, 8.507059e+37
        %v8592 = vand.u32 %v6969, 2147483648
        %v8593 = vor.u32 1.1754944e-38, %v8592
        %v8594 = vsel %vm8591, %v8593, %v8589
        %v8595 = vmul.f32 1.0, %v8594
        %v8596 = vrcp.pop %v6970
        %v8597 = vmul.f32 %v6970, %v8596
        %v8598 = vsub.f32 1.0, %v8597
        %v8599 = vmul.f32 %v8596, %v8598
        %v8600 = vadd.f32 %v8596, %v8599
        %vm8601 = vweird.f32 %v6970
        %vm8602 = vweird.f32 %v8596
        %vm8603 = vmor %vm8601, %vm8602
        %v8604 = vsel %vm8603, %v8596, %v8600
        %v8605 = vand.u32 2147483647, %v6970
        %vm8606 = vcmp.eq.f32.partialorder %v8605, 8.507059e+37
        %v8607 = vand.u32 %v6970, 2147483648
        %v8608 = vor.u32 1.1754944e-38, %v8607
        %v8609 = vsel %vm8606, %v8608, %v8604
        %v8610 = vmul.f32 1.0, %v8609
        %v8611 = vrcp.pop %v6971
        %v8612 = vmul.f32 %v6971, %v8611
        %v8613 = vsub.f32 1.0, %v8612
        %v8614 = vmul.f32 %v8611, %v8613
        %v8615 = vadd.f32 %v8611, %v8614
        %vm8616 = vweird.f32 %v6971
        %vm8617 = vweird.f32 %v8611
        %vm8618 = vmor %vm8616, %vm8617
        %v8619 = vsel %vm8618, %v8611, %v8615
        %v8620 = vand.u32 2147483647, %v6971
        %vm8621 = vcmp.eq.f32.partialorder %v8620, 8.507059e+37
        %v8622 = vand.u32 %v6971, 2147483648
        %v8623 = vor.u32 1.1754944e-38, %v8622
        %v8624 = vsel %vm8621, %v8623, %v8619
        %v8625 = vmul.f32 1.0, %v8624
        %v8626 = vrcp.pop %v6972
        %v8627 = vmul.f32 %v6972, %v8626
        %v8628 = vsub.f32 1.0, %v8627
        %v8629 = vmul.f32 %v8626, %v8628
        %v8630 = vadd.f32 %v8626, %v8629
        %vm8631 = vweird.f32 %v6972
        %vm8632 = vweird.f32 %v8626
        %vm8633 = vmor %vm8631, %vm8632
        %v8634 = vsel %vm8633, %v8626, %v8630
        %v8635 = vand.u32 2147483647, %v6972
        %vm8636 = vcmp.eq.f32.partialorder %v8635, 8.507059e+37
        %v8637 = vand.u32 %v6972, 2147483648
        %v8638 = vor.u32 1.1754944e-38, %v8637
        %v8639 = vsel %vm8636, %v8638, %v8634
        %v8640 = vmul.f32 1.0, %v8639
        %v8641 = vrcp.pop %v6973
        %v8642 = vmul.f32 %v6973, %v8641
        %v8643 = vsub.f32 1.0, %v8642
        %v8644 = vmul.f32 %v8641, %v8643
        %v8645 = vadd.f32 %v8641, %v8644
        %vm8646 = vweird.f32 %v6973
        %vm8647 = vweird.f32 %v8641
        %vm8648 = vmor %vm8646, %vm8647
        %v8649 = vsel %vm8648, %v8641, %v8645
        %v8650 = vand.u32 2147483647, %v6973
        %vm8651 = vcmp.eq.f32.partialorder %v8650, 8.507059e+37
        %v8652 = vand.u32 %v6973, 2147483648
        %v8653 = vor.u32 1.1754944e-38, %v8652
        %v8654 = vsel %vm8651, %v8653, %v8649
        %v8655 = vmul.f32 1.0, %v8654
        %v8656 = vrcp.pop %v6974
        %v8657 = vmul.f32 %v6974, %v8656
        %v8658 = vsub.f32 1.0, %v8657
        %v8659 = vmul.f32 %v8656, %v8658
        %v8660 = vadd.f32 %v8656, %v8659
        %vm8661 = vweird.f32 %v6974
        %vm8662 = vweird.f32 %v8656
        %vm8663 = vmor %vm8661, %vm8662
        %v8664 = vsel %vm8663, %v8656, %v8660
        %v8665 = vand.u32 2147483647, %v6974
        %vm8666 = vcmp.eq.f32.partialorder %v8665, 8.507059e+37
        %v8667 = vand.u32 %v6974, 2147483648
        %v8668 = vor.u32 1.1754944e-38, %v8667
        %v8669 = vsel %vm8666, %v8668, %v8664
        %v8670 = vmul.f32 1.0, %v8669
        %v8671 = vrcp.pop %v6975
        %v8672 = vmul.f32 %v6975, %v8671
        %v8673 = vsub.f32 1.0, %v8672
        %v8674 = vmul.f32 %v8671, %v8673
        %v8675 = vadd.f32 %v8671, %v8674
        %vm8676 = vweird.f32 %v6975
        %vm8677 = vweird.f32 %v8671
        %vm8678 = vmor %vm8676, %vm8677
        %v8679 = vsel %vm8678, %v8671, %v8675
        %v8680 = vand.u32 2147483647, %v6975
        %vm8681 = vcmp.eq.f32.partialorder %v8680, 8.507059e+37
        %v8682 = vand.u32 %v6975, 2147483648
        %v8683 = vor.u32 1.1754944e-38, %v8682
        %v8684 = vsel %vm8681, %v8683, %v8679
        %v8685 = vmul.f32 1.0, %v8684
        %v8686 = vrcp.pop %v6976
        %v8687 = vmul.f32 %v6976, %v8686
        %v8688 = vsub.f32 1.0, %v8687
        %v8689 = vmul.f32 %v8686, %v8688
        %v8690 = vadd.f32 %v8686, %v8689
        %vm8691 = vweird.f32 %v6976
        %vm8692 = vweird.f32 %v8686
        %vm8693 = vmor %vm8691, %vm8692
        %v8694 = vsel %vm8693, %v8686, %v8690
        %v8695 = vand.u32 2147483647, %v6976
        %vm8696 = vcmp.eq.f32.partialorder %v8695, 8.507059e+37
        %v8697 = vand.u32 %v6976, 2147483648
        %v8698 = vor.u32 1.1754944e-38, %v8697
        %v8699 = vsel %vm8696, %v8698, %v8694
        %v8700 = vmul.f32 1.0, %v8699
        %v8701 = vrcp.pop %v6977
        %v8702 = vmul.f32 %v6977, %v8701
        %v8703 = vsub.f32 1.0, %v8702
        %v8704 = vmul.f32 %v8701, %v8703
        %v8705 = vadd.f32 %v8701, %v8704
        %vm8706 = vweird.f32 %v6977
        %vm8707 = vweird.f32 %v8701
        %vm8708 = vmor %vm8706, %vm8707
        %v8709 = vsel %vm8708, %v8701, %v8705
        %v8710 = vand.u32 2147483647, %v6977
        %vm8711 = vcmp.eq.f32.partialorder %v8710, 8.507059e+37
        %v8712 = vand.u32 %v6977, 2147483648
        %v8713 = vor.u32 1.1754944e-38, %v8712
        %v8714 = vsel %vm8711, %v8713, %v8709
        %v8715 = vmul.f32 1.0, %v8714
        %v8716 = vrcp.pop %v6978
        %v8717 = vmul.f32 %v6978, %v8716
        %v8718 = vsub.f32 1.0, %v8717
        %v8719 = vmul.f32 %v8716, %v8718
        %v8720 = vadd.f32 %v8716, %v8719
        %vm8721 = vweird.f32 %v6978
        %vm8722 = vweird.f32 %v8716
        %vm8723 = vmor %vm8721, %vm8722
        %v8724 = vsel %vm8723, %v8716, %v8720
        %v8725 = vand.u32 2147483647, %v6978
        %vm8726 = vcmp.eq.f32.partialorder %v8725, 8.507059e+37
        %v8727 = vand.u32 %v6978, 2147483648
        %v8728 = vor.u32 1.1754944e-38, %v8727
        %v8729 = vsel %vm8726, %v8728, %v8724
        %v8730 = vmul.f32 1.0, %v8729
        %v8731 = vrcp.pop %v6979
        %v8732 = vmul.f32 %v6979, %v8731
        %v8733 = vsub.f32 1.0, %v8732
        %v8734 = vmul.f32 %v8731, %v8733
        %v8735 = vadd.f32 %v8731, %v8734
        %vm8736 = vweird.f32 %v6979
        %vm8737 = vweird.f32 %v8731
        %vm8738 = vmor %vm8736, %vm8737
        %v8739 = vsel %vm8738, %v8731, %v8735
        %v8740 = vand.u32 2147483647, %v6979
        %vm8741 = vcmp.eq.f32.partialorder %v8740, 8.507059e+37
        %v8742 = vand.u32 %v6979, 2147483648
        %v8743 = vor.u32 1.1754944e-38, %v8742
        %v8744 = vsel %vm8741, %v8743, %v8739
        %v8745 = vmul.f32 1.0, %v8744
        %v8746 = vrcp.pop %v6980
        %v8747 = vmul.f32 %v6980, %v8746
        %v8748 = vsub.f32 1.0, %v8747
        %v8749 = vmul.f32 %v8746, %v8748
        %v8750 = vadd.f32 %v8746, %v8749
        %vm8751 = vweird.f32 %v6980
        %vm8752 = vweird.f32 %v8746
        %vm8753 = vmor %vm8751, %vm8752
        %v8754 = vsel %vm8753, %v8746, %v8750
        %v8755 = vand.u32 2147483647, %v6980
        %vm8756 = vcmp.eq.f32.partialorder %v8755, 8.507059e+37
        %v8757 = vand.u32 %v6980, 2147483648
        %v8758 = vor.u32 1.1754944e-38, %v8757
        %v8759 = vsel %vm8756, %v8758, %v8754
        %v8760 = vmul.f32 1.0, %v8759
        %v8761 = vrcp.pop %v6981
        %v8762 = vmul.f32 %v6981, %v8761
        %v8763 = vsub.f32 1.0, %v8762
        %v8764 = vmul.f32 %v8761, %v8763
        %v8765 = vadd.f32 %v8761, %v8764
        %vm8766 = vweird.f32 %v6981
        %vm8767 = vweird.f32 %v8761
        %vm8768 = vmor %vm8766, %vm8767
        %v8769 = vsel %vm8768, %v8761, %v8765
        %v8770 = vand.u32 2147483647, %v6981
        %vm8771 = vcmp.eq.f32.partialorder %v8770, 8.507059e+37
        %v8772 = vand.u32 %v6981, 2147483648
        %v8773 = vor.u32 1.1754944e-38, %v8772
        %v8774 = vsel %vm8771, %v8773, %v8769
        %v8775 = vmul.f32 1.0, %v8774
        %v8776 = vrcp.pop %v6982
        %v8777 = vmul.f32 %v6982, %v8776
        %v8778 = vsub.f32 1.0, %v8777
        %v8779 = vmul.f32 %v8776, %v8778
        %v8780 = vadd.f32 %v8776, %v8779
        %vm8781 = vweird.f32 %v6982
        %vm8782 = vweird.f32 %v8776
        %vm8783 = vmor %vm8781, %vm8782
        %v8784 = vsel %vm8783, %v8776, %v8780
        %v8785 = vand.u32 2147483647, %v6982
        %vm8786 = vcmp.eq.f32.partialorder %v8785, 8.507059e+37
        %v8787 = vand.u32 %v6982, 2147483648
        %v8788 = vor.u32 1.1754944e-38, %v8787
        %v8789 = vsel %vm8786, %v8788, %v8784
        %v8790 = vmul.f32 1.0, %v8789
        %v8791 = vrcp.pop %v6983
        %v8792 = vmul.f32 %v6983, %v8791
        %v8793 = vsub.f32 1.0, %v8792
        %v8794 = vmul.f32 %v8791, %v8793
        %v8795 = vadd.f32 %v8791, %v8794
        %vm8796 = vweird.f32 %v6983
        %vm8797 = vweird.f32 %v8791
        %vm8798 = vmor %vm8796, %vm8797
        %v8799 = vsel %vm8798, %v8791, %v8795
        %v8800 = vand.u32 2147483647, %v6983
        %vm8801 = vcmp.eq.f32.partialorder %v8800, 8.507059e+37
        %v8802 = vand.u32 %v6983, 2147483648
        %v8803 = vor.u32 1.1754944e-38, %v8802
        %v8804 = vsel %vm8801, %v8803, %v8799
        %v8805 = vmul.f32 1.0, %v8804
        %v8806 = vrcp.pop %v6984
        %v8807 = vmul.f32 %v6984, %v8806
        %v8808 = vsub.f32 1.0, %v8807
        %v8809 = vmul.f32 %v8806, %v8808
        %v8810 = vadd.f32 %v8806, %v8809
        %vm8811 = vweird.f32 %v6984
        %vm8812 = vweird.f32 %v8806
        %vm8813 = vmor %vm8811, %vm8812
        %v8814 = vsel %vm8813, %v8806, %v8810
        %v8815 = vand.u32 2147483647, %v6984
        %vm8816 = vcmp.eq.f32.partialorder %v8815, 8.507059e+37
        %v8817 = vand.u32 %v6984, 2147483648
        %v8818 = vor.u32 1.1754944e-38, %v8817
        %v8819 = vsel %vm8816, %v8818, %v8814
        %v8820 = vmul.f32 1.0, %v8819
        %v8821 = vrcp.pop %v6985
        %v8822 = vmul.f32 %v6985, %v8821
        %v8823 = vsub.f32 1.0, %v8822
        %v8824 = vmul.f32 %v8821, %v8823
        %v8825 = vadd.f32 %v8821, %v8824
        %vm8826 = vweird.f32 %v6985
        %vm8827 = vweird.f32 %v8821
        %vm8828 = vmor %vm8826, %vm8827
        %v8829 = vsel %vm8828, %v8821, %v8825
        %v8830 = vand.u32 2147483647, %v6985
        %vm8831 = vcmp.eq.f32.partialorder %v8830, 8.507059e+37
        %v8832 = vand.u32 %v6985, 2147483648
        %v8833 = vor.u32 1.1754944e-38, %v8832
        %v8834 = vsel %vm8831, %v8833, %v8829
        %v8835 = vmul.f32 1.0, %v8834
        %v8836 = vrcp.pop %v6986
        %v8837 = vmul.f32 %v6986, %v8836
        %v8838 = vsub.f32 1.0, %v8837
        %v8839 = vmul.f32 %v8836, %v8838
        %v8840 = vadd.f32 %v8836, %v8839
        %vm8841 = vweird.f32 %v6986
        %vm8842 = vweird.f32 %v8836
        %vm8843 = vmor %vm8841, %vm8842
        %v8844 = vsel %vm8843, %v8836, %v8840
        %v8845 = vand.u32 2147483647, %v6986
        %vm8846 = vcmp.eq.f32.partialorder %v8845, 8.507059e+37
        %v8847 = vand.u32 %v6986, 2147483648
        %v8848 = vor.u32 1.1754944e-38, %v8847
        %v8849 = vsel %vm8846, %v8848, %v8844
        %v8850 = vmul.f32 1.0, %v8849
        %v8851 = vrcp.pop %v6987
        %v8852 = vmul.f32 %v6987, %v8851
        %v8853 = vsub.f32 1.0, %v8852
        %v8854 = vmul.f32 %v8851, %v8853
        %v8855 = vadd.f32 %v8851, %v8854
        %vm8856 = vweird.f32 %v6987
        %vm8857 = vweird.f32 %v8851
        %vm8858 = vmor %vm8856, %vm8857
        %v8859 = vsel %vm8858, %v8851, %v8855
        %v8860 = vand.u32 2147483647, %v6987
        %vm8861 = vcmp.eq.f32.partialorder %v8860, 8.507059e+37
        %v8862 = vand.u32 %v6987, 2147483648
        %v8863 = vor.u32 1.1754944e-38, %v8862
        %v8864 = vsel %vm8861, %v8863, %v8859
        %v8865 = vmul.f32 1.0, %v8864
        %v8866 = vrcp.pop %v6988
        %v8867 = vmul.f32 %v6988, %v8866
        %v8868 = vsub.f32 1.0, %v8867
        %v8869 = vmul.f32 %v8866, %v8868
        %v8870 = vadd.f32 %v8866, %v8869
        %vm8871 = vweird.f32 %v6988
        %vm8872 = vweird.f32 %v8866
        %vm8873 = vmor %vm8871, %vm8872
        %v8874 = vsel %vm8873, %v8866, %v8870
        %v8875 = vand.u32 2147483647, %v6988
        %vm8876 = vcmp.eq.f32.partialorder %v8875, 8.507059e+37
        %v8877 = vand.u32 %v6988, 2147483648
        %v8878 = vor.u32 1.1754944e-38, %v8877
        %v8879 = vsel %vm8876, %v8878, %v8874
        %v8880 = vmul.f32 1.0, %v8879
        %v8881 = vrcp.pop %v6989
        %v8882 = vmul.f32 %v6989, %v8881
        %v8883 = vsub.f32 1.0, %v8882
        %v8884 = vmul.f32 %v8881, %v8883
        %v8885 = vadd.f32 %v8881, %v8884
        %vm8886 = vweird.f32 %v6989
        %vm8887 = vweird.f32 %v8881
        %vm8888 = vmor %vm8886, %vm8887
        %v8889 = vsel %vm8888, %v8881, %v8885
        %v8890 = vand.u32 2147483647, %v6989
        %vm8891 = vcmp.eq.f32.partialorder %v8890, 8.507059e+37
        %v8892 = vand.u32 %v6989, 2147483648
        %v8893 = vor.u32 1.1754944e-38, %v8892
        %v8894 = vsel %vm8891, %v8893, %v8889
        %v8895 = vmul.f32 1.0, %v8894
        %v8896 = vrcp.pop %v6990
        %v8897 = vmul.f32 %v6990, %v8896
        %v8898 = vsub.f32 1.0, %v8897
        %v8899 = vmul.f32 %v8896, %v8898
        %v8900 = vadd.f32 %v8896, %v8899
        %vm8901 = vweird.f32 %v6990
        %vm8902 = vweird.f32 %v8896
        %vm8903 = vmor %vm8901, %vm8902
        %v8904 = vsel %vm8903, %v8896, %v8900
        %v8905 = vand.u32 2147483647, %v6990
        %vm8906 = vcmp.eq.f32.partialorder %v8905, 8.507059e+37
        %v8907 = vand.u32 %v6990, 2147483648
        %v8908 = vor.u32 1.1754944e-38, %v8907
        %v8909 = vsel %vm8906, %v8908, %v8904
        %v8910 = vmul.f32 1.0, %v8909
        %v8919 = vperm.slane %v1997, 0
        %v8920 = vlaneseq
        %v8921 = vshrl.u32 %v8920, 7
        %8923 = vset.pattern.permute.xlu0 %v8921
        %8924 = vperm.xlu0 %8923, %v8919
        %v8925 = vpop.permute.xlu0 %8924
        %v8926 = vlaneseq
        %v8927 = vshrl.u32 %v8926, 7
        %v8928 = vadd.s32 %v8927, 8
        %8929 = vset.pattern.permute.xlu0 %v8928
        %8930 = vperm.xlu0 %8929, %v8919
        %v8931 = vpop.permute.xlu0 %8930
        %v8932 = vperm.slane %v1997, 1
        %v8933 = vlaneseq
        %v8934 = vshrl.u32 %v8933, 7
        %8936 = vset.pattern.permute.xlu0 %v8934
        %8937 = vperm.xlu0 %8936, %v8932
        %v8938 = vpop.permute.xlu0 %8937
        %v8939 = vlaneseq
        %v8940 = vshrl.u32 %v8939, 7
        %v8941 = vadd.s32 %v8940, 8
        %8942 = vset.pattern.permute.xlu0 %v8941
        %8943 = vperm.xlu0 %8942, %v8932
        %v8944 = vpop.permute.xlu0 %8943
        %v8945 = vperm.slane %v1997, 2
        %v8946 = vlaneseq
        %v8947 = vshrl.u32 %v8946, 7
        %8949 = vset.pattern.permute.xlu0 %v8947
        %8950 = vperm.xlu0 %8949, %v8945
        %v8951 = vpop.permute.xlu0 %8950
        %v8952 = vlaneseq
        %v8953 = vshrl.u32 %v8952, 7
        %v8954 = vadd.s32 %v8953, 8
        %8955 = vset.pattern.permute.xlu0 %v8954
        %8956 = vperm.xlu0 %8955, %v8945
        %v8957 = vpop.permute.xlu0 %8956
        %v8958 = vperm.slane %v1997, 3
        %v8959 = vlaneseq
        %v8960 = vshrl.u32 %v8959, 7
        %8962 = vset.pattern.permute.xlu0 %v8960
        %8963 = vperm.xlu0 %8962, %v8958
        %v8964 = vpop.permute.xlu0 %8963
        %v8965 = vlaneseq
        %v8966 = vshrl.u32 %v8965, 7
        %v8967 = vadd.s32 %v8966, 8
        %8968 = vset.pattern.permute.xlu0 %v8967
        %8969 = vperm.xlu0 %8968, %v8958
        %v8970 = vpop.permute.xlu0 %8969
        %v8971 = vperm.slane %v1997, 4
        %v8972 = vlaneseq
        %v8973 = vshrl.u32 %v8972, 7
        %8975 = vset.pattern.permute.xlu0 %v8973
        %8976 = vperm.xlu0 %8975, %v8971
        %v8977 = vpop.permute.xlu0 %8976
        %v8978 = vlaneseq
        %v8979 = vshrl.u32 %v8978, 7
        %v8980 = vadd.s32 %v8979, 8
        %8981 = vset.pattern.permute.xlu0 %v8980
        %8982 = vperm.xlu0 %8981, %v8971
        %v8983 = vpop.permute.xlu0 %8982
        %v8984 = vperm.slane %v1997, 5
        %v8985 = vlaneseq
        %v8986 = vshrl.u32 %v8985, 7
        %8988 = vset.pattern.permute.xlu0 %v8986
        %8989 = vperm.xlu0 %8988, %v8984
        %v8990 = vpop.permute.xlu0 %8989
        %v8991 = vlaneseq
        %v8992 = vshrl.u32 %v8991, 7
        %v8993 = vadd.s32 %v8992, 8
        %8994 = vset.pattern.permute.xlu0 %v8993
        %8995 = vperm.xlu0 %8994, %v8984
        %v8996 = vpop.permute.xlu0 %8995
        %v8997 = vperm.slane %v1997, 6
        %v8998 = vlaneseq
        %v8999 = vshrl.u32 %v8998, 7
        %9001 = vset.pattern.permute.xlu0 %v8999
        %9002 = vperm.xlu0 %9001, %v8997
        %v9003 = vpop.permute.xlu0 %9002
        %v9004 = vlaneseq
        %v9005 = vshrl.u32 %v9004, 7
        %v9006 = vadd.s32 %v9005, 8
        %9007 = vset.pattern.permute.xlu0 %v9006
        %9008 = vperm.xlu0 %9007, %v8997
        %v9009 = vpop.permute.xlu0 %9008
        %v9010 = vperm.slane %v1997, 7
        %v9011 = vlaneseq
        %v9012 = vshrl.u32 %v9011, 7
        %9014 = vset.pattern.permute.xlu0 %v9012
        %9015 = vperm.xlu0 %9014, %v9010
        %v9016 = vpop.permute.xlu0 %9015
        %v9017 = vlaneseq
        %v9018 = vshrl.u32 %v9017, 7
        %v9019 = vadd.s32 %v9018, 8
        %9020 = vset.pattern.permute.xlu0 %v9019
        %9021 = vperm.xlu0 %9020, %v9010
        %v9022 = vpop.permute.xlu0 %9021
        %v9023 = vperm.slane %v1998, 0
        %v9024 = vlaneseq
        %v9025 = vshrl.u32 %v9024, 7
        %9027 = vset.pattern.permute.xlu0 %v9025
        %9028 = vperm.xlu0 %9027, %v9023
        %v9029 = vpop.permute.xlu0 %9028
        %v9030 = vlaneseq
        %v9031 = vshrl.u32 %v9030, 7
        %v9032 = vadd.s32 %v9031, 8
        %9033 = vset.pattern.permute.xlu0 %v9032
        %9034 = vperm.xlu0 %9033, %v9023
        %v9035 = vpop.permute.xlu0 %9034
        %v9036 = vperm.slane %v1998, 1
        %v9037 = vlaneseq
        %v9038 = vshrl.u32 %v9037, 7
        %9040 = vset.pattern.permute.xlu0 %v9038
        %9041 = vperm.xlu0 %9040, %v9036
        %v9042 = vpop.permute.xlu0 %9041
        %v9043 = vlaneseq
        %v9044 = vshrl.u32 %v9043, 7
        %v9045 = vadd.s32 %v9044, 8
        %9046 = vset.pattern.permute.xlu0 %v9045
        %9047 = vperm.xlu0 %9046, %v9036
        %v9048 = vpop.permute.xlu0 %9047
        %v9049 = vperm.slane %v1998, 2
        %v9050 = vlaneseq
        %v9051 = vshrl.u32 %v9050, 7
        %9053 = vset.pattern.permute.xlu0 %v9051
        %9054 = vperm.xlu0 %9053, %v9049
        %v9055 = vpop.permute.xlu0 %9054
        %v9056 = vlaneseq
        %v9057 = vshrl.u32 %v9056, 7
        %v9058 = vadd.s32 %v9057, 8
        %9059 = vset.pattern.permute.xlu0 %v9058
        %9060 = vperm.xlu0 %9059, %v9049
        %v9061 = vpop.permute.xlu0 %9060
        %v9062 = vperm.slane %v1998, 3
        %v9063 = vlaneseq
        %v9064 = vshrl.u32 %v9063, 7
        %9066 = vset.pattern.permute.xlu0 %v9064
        %9067 = vperm.xlu0 %9066, %v9062
        %v9068 = vpop.permute.xlu0 %9067
        %v9069 = vlaneseq
        %v9070 = vshrl.u32 %v9069, 7
        %v9071 = vadd.s32 %v9070, 8
        %9072 = vset.pattern.permute.xlu0 %v9071
        %9073 = vperm.xlu0 %9072, %v9062
        %v9074 = vpop.permute.xlu0 %9073
        %v9075 = vperm.slane %v1998, 4
        %v9076 = vlaneseq
        %v9077 = vshrl.u32 %v9076, 7
        %9079 = vset.pattern.permute.xlu0 %v9077
        %9080 = vperm.xlu0 %9079, %v9075
        %v9081 = vpop.permute.xlu0 %9080
        %v9082 = vlaneseq
        %v9083 = vshrl.u32 %v9082, 7
        %v9084 = vadd.s32 %v9083, 8
        %9085 = vset.pattern.permute.xlu0 %v9084
        %9086 = vperm.xlu0 %9085, %v9075
        %v9087 = vpop.permute.xlu0 %9086
        %v9088 = vperm.slane %v1998, 5
        %v9089 = vlaneseq
        %v9090 = vshrl.u32 %v9089, 7
        %9092 = vset.pattern.permute.xlu0 %v9090
        %9093 = vperm.xlu0 %9092, %v9088
        %v9094 = vpop.permute.xlu0 %9093
        %v9095 = vlaneseq
        %v9096 = vshrl.u32 %v9095, 7
        %v9097 = vadd.s32 %v9096, 8
        %9098 = vset.pattern.permute.xlu0 %v9097
        %9099 = vperm.xlu0 %9098, %v9088
        %v9100 = vpop.permute.xlu0 %9099
        %v9101 = vperm.slane %v1998, 6
        %v9102 = vlaneseq
        %v9103 = vshrl.u32 %v9102, 7
        %9105 = vset.pattern.permute.xlu0 %v9103
        %9106 = vperm.xlu0 %9105, %v9101
        %v9107 = vpop.permute.xlu0 %9106
        %v9108 = vlaneseq
        %v9109 = vshrl.u32 %v9108, 7
        %v9110 = vadd.s32 %v9109, 8
        %9111 = vset.pattern.permute.xlu0 %v9110
        %9112 = vperm.xlu0 %9111, %v9101
        %v9113 = vpop.permute.xlu0 %9112
        %v9114 = vperm.slane %v1998, 7
        %v9115 = vlaneseq
        %v9116 = vshrl.u32 %v9115, 7
        %9118 = vset.pattern.permute.xlu0 %v9116
        %9119 = vperm.xlu0 %9118, %v9114
        %v9120 = vpop.permute.xlu0 %9119
        %v9121 = vlaneseq
        %v9122 = vshrl.u32 %v9121, 7
        %v9123 = vadd.s32 %v9122, 8
        %9124 = vset.pattern.permute.xlu0 %v9123
        %9125 = vperm.xlu0 %9124, %v9114
        %v9126 = vpop.permute.xlu0 %9125
        %v9127 = vperm.slane %v1999, 0
        %v9128 = vlaneseq
        %v9129 = vshrl.u32 %v9128, 7
        %9131 = vset.pattern.permute.xlu0 %v9129
        %9132 = vperm.xlu0 %9131, %v9127
        %v9133 = vpop.permute.xlu0 %9132
        %v9134 = vlaneseq
        %v9135 = vshrl.u32 %v9134, 7
        %v9136 = vadd.s32 %v9135, 8
        %9137 = vset.pattern.permute.xlu0 %v9136
        %9138 = vperm.xlu0 %9137, %v9127
        %v9139 = vpop.permute.xlu0 %9138
        %v9140 = vperm.slane %v1999, 1
        %v9141 = vlaneseq
        %v9142 = vshrl.u32 %v9141, 7
        %9144 = vset.pattern.permute.xlu0 %v9142
        %9145 = vperm.xlu0 %9144, %v9140
        %v9146 = vpop.permute.xlu0 %9145
        %v9147 = vlaneseq
        %v9148 = vshrl.u32 %v9147, 7
        %v9149 = vadd.s32 %v9148, 8
        %9150 = vset.pattern.permute.xlu0 %v9149
        %9151 = vperm.xlu0 %9150, %v9140
        %v9152 = vpop.permute.xlu0 %9151
        %v9153 = vperm.slane %v1999, 2
        %v9154 = vlaneseq
        %v9155 = vshrl.u32 %v9154, 7
        %9157 = vset.pattern.permute.xlu0 %v9155
        %9158 = vperm.xlu0 %9157, %v9153
        %v9159 = vpop.permute.xlu0 %9158
        %v9160 = vlaneseq
        %v9161 = vshrl.u32 %v9160, 7
        %v9162 = vadd.s32 %v9161, 8
        %9163 = vset.pattern.permute.xlu0 %v9162
        %9164 = vperm.xlu0 %9163, %v9153
        %v9165 = vpop.permute.xlu0 %9164
        %v9166 = vperm.slane %v1999, 3
        %v9167 = vlaneseq
        %v9168 = vshrl.u32 %v9167, 7
        %9170 = vset.pattern.permute.xlu0 %v9168
        %9171 = vperm.xlu0 %9170, %v9166
        %v9172 = vpop.permute.xlu0 %9171
        %v9173 = vlaneseq
        %v9174 = vshrl.u32 %v9173, 7
        %v9175 = vadd.s32 %v9174, 8
        %9176 = vset.pattern.permute.xlu0 %v9175
        %9177 = vperm.xlu0 %9176, %v9166
        %v9178 = vpop.permute.xlu0 %9177
        %v9179 = vperm.slane %v1999, 4
        %v9180 = vlaneseq
        %v9181 = vshrl.u32 %v9180, 7
        %9183 = vset.pattern.permute.xlu0 %v9181
        %9184 = vperm.xlu0 %9183, %v9179
        %v9185 = vpop.permute.xlu0 %9184
        %v9186 = vlaneseq
        %v9187 = vshrl.u32 %v9186, 7
        %v9188 = vadd.s32 %v9187, 8
        %9189 = vset.pattern.permute.xlu0 %v9188
        %9190 = vperm.xlu0 %9189, %v9179
        %v9191 = vpop.permute.xlu0 %9190
        %v9192 = vperm.slane %v1999, 5
        %v9193 = vlaneseq
        %v9194 = vshrl.u32 %v9193, 7
        %9196 = vset.pattern.permute.xlu0 %v9194
        %9197 = vperm.xlu0 %9196, %v9192
        %v9198 = vpop.permute.xlu0 %9197
        %v9199 = vlaneseq
        %v9200 = vshrl.u32 %v9199, 7
        %v9201 = vadd.s32 %v9200, 8
        %9202 = vset.pattern.permute.xlu0 %v9201
        %9203 = vperm.xlu0 %9202, %v9192
        %v9204 = vpop.permute.xlu0 %9203
        %v9205 = vperm.slane %v1999, 6
        %v9206 = vlaneseq
        %v9207 = vshrl.u32 %v9206, 7
        %9209 = vset.pattern.permute.xlu0 %v9207
        %9210 = vperm.xlu0 %9209, %v9205
        %v9211 = vpop.permute.xlu0 %9210
        %v9212 = vlaneseq
        %v9213 = vshrl.u32 %v9212, 7
        %v9214 = vadd.s32 %v9213, 8
        %9215 = vset.pattern.permute.xlu0 %v9214
        %9216 = vperm.xlu0 %9215, %v9205
        %v9217 = vpop.permute.xlu0 %9216
        %v9218 = vperm.slane %v1999, 7
        %v9219 = vlaneseq
        %v9220 = vshrl.u32 %v9219, 7
        %9222 = vset.pattern.permute.xlu0 %v9220
        %9223 = vperm.xlu0 %9222, %v9218
        %v9224 = vpop.permute.xlu0 %9223
        %v9225 = vlaneseq
        %v9226 = vshrl.u32 %v9225, 7
        %v9227 = vadd.s32 %v9226, 8
        %9228 = vset.pattern.permute.xlu0 %v9227
        %9229 = vperm.xlu0 %9228, %v9218
        %v9230 = vpop.permute.xlu0 %9229
        %v9231 = vperm.slane %v2000, 0
        %v9232 = vlaneseq
        %v9233 = vshrl.u32 %v9232, 7
        %9235 = vset.pattern.permute.xlu0 %v9233
        %9236 = vperm.xlu0 %9235, %v9231
        %v9237 = vpop.permute.xlu0 %9236
        %v9238 = vlaneseq
        %v9239 = vshrl.u32 %v9238, 7
        %v9240 = vadd.s32 %v9239, 8
        %9241 = vset.pattern.permute.xlu0 %v9240
        %9242 = vperm.xlu0 %9241, %v9231
        %v9243 = vpop.permute.xlu0 %9242
        %v9244 = vperm.slane %v2000, 1
        %v9245 = vlaneseq
        %v9246 = vshrl.u32 %v9245, 7
        %9248 = vset.pattern.permute.xlu0 %v9246
        %9249 = vperm.xlu0 %9248, %v9244
        %v9250 = vpop.permute.xlu0 %9249
        %v9251 = vlaneseq
        %v9252 = vshrl.u32 %v9251, 7
        %v9253 = vadd.s32 %v9252, 8
        %9254 = vset.pattern.permute.xlu0 %v9253
        %9255 = vperm.xlu0 %9254, %v9244
        %v9256 = vpop.permute.xlu0 %9255
        %v9257 = vperm.slane %v2000, 2
        %v9258 = vlaneseq
        %v9259 = vshrl.u32 %v9258, 7
        %9261 = vset.pattern.permute.xlu0 %v9259
        %9262 = vperm.xlu0 %9261, %v9257
        %v9263 = vpop.permute.xlu0 %9262
        %v9264 = vlaneseq
        %v9265 = vshrl.u32 %v9264, 7
        %v9266 = vadd.s32 %v9265, 8
        %9267 = vset.pattern.permute.xlu0 %v9266
        %9268 = vperm.xlu0 %9267, %v9257
        %v9269 = vpop.permute.xlu0 %9268
        %v9270 = vperm.slane %v2000, 3
        %v9271 = vlaneseq
        %v9272 = vshrl.u32 %v9271, 7
        %9274 = vset.pattern.permute.xlu0 %v9272
        %9275 = vperm.xlu0 %9274, %v9270
        %v9276 = vpop.permute.xlu0 %9275
        %v9277 = vlaneseq
        %v9278 = vshrl.u32 %v9277, 7
        %v9279 = vadd.s32 %v9278, 8
        %9280 = vset.pattern.permute.xlu0 %v9279
        %9281 = vperm.xlu0 %9280, %v9270
        %v9282 = vpop.permute.xlu0 %9281
        %v9283 = vperm.slane %v2000, 4
        %v9284 = vlaneseq
        %v9285 = vshrl.u32 %v9284, 7
        %9287 = vset.pattern.permute.xlu0 %v9285
        %9288 = vperm.xlu0 %9287, %v9283
        %v9289 = vpop.permute.xlu0 %9288
        %v9290 = vlaneseq
        %v9291 = vshrl.u32 %v9290, 7
        %v9292 = vadd.s32 %v9291, 8
        %9293 = vset.pattern.permute.xlu0 %v9292
        %9294 = vperm.xlu0 %9293, %v9283
        %v9295 = vpop.permute.xlu0 %9294
        %v9296 = vperm.slane %v2000, 5
        %v9297 = vlaneseq
        %v9298 = vshrl.u32 %v9297, 7
        %9300 = vset.pattern.permute.xlu0 %v9298
        %9301 = vperm.xlu0 %9300, %v9296
        %v9302 = vpop.permute.xlu0 %9301
        %v9303 = vlaneseq
        %v9304 = vshrl.u32 %v9303, 7
        %v9305 = vadd.s32 %v9304, 8
        %9306 = vset.pattern.permute.xlu0 %v9305
        %9307 = vperm.xlu0 %9306, %v9296
        %v9308 = vpop.permute.xlu0 %9307
        %v9309 = vperm.slane %v2000, 6
        %v9310 = vlaneseq
        %v9311 = vshrl.u32 %v9310, 7
        %9313 = vset.pattern.permute.xlu0 %v9311
        %9314 = vperm.xlu0 %9313, %v9309
        %v9315 = vpop.permute.xlu0 %9314
        %v9316 = vlaneseq
        %v9317 = vshrl.u32 %v9316, 7
        %v9318 = vadd.s32 %v9317, 8
        %9319 = vset.pattern.permute.xlu0 %v9318
        %9320 = vperm.xlu0 %9319, %v9309
        %v9321 = vpop.permute.xlu0 %9320
        %v9322 = vperm.slane %v2000, 7
        %v9323 = vlaneseq
        %v9324 = vshrl.u32 %v9323, 7
        %9326 = vset.pattern.permute.xlu0 %v9324
        %9327 = vperm.xlu0 %9326, %v9322
        %v9328 = vpop.permute.xlu0 %9327
        %v9329 = vlaneseq
        %v9330 = vshrl.u32 %v9329, 7
        %v9331 = vadd.s32 %v9330, 8
        %9332 = vset.pattern.permute.xlu0 %v9331
        %9333 = vperm.xlu0 %9332, %v9322
        %v9334 = vpop.permute.xlu0 %9333
        %v9335 = vperm.slane %v2001, 0
        %v9336 = vlaneseq
        %v9337 = vshrl.u32 %v9336, 7
        %9339 = vset.pattern.permute.xlu0 %v9337
        %9340 = vperm.xlu0 %9339, %v9335
        %v9341 = vpop.permute.xlu0 %9340
        %v9342 = vlaneseq
        %v9343 = vshrl.u32 %v9342, 7
        %v9344 = vadd.s32 %v9343, 8
        %9345 = vset.pattern.permute.xlu0 %v9344
        %9346 = vperm.xlu0 %9345, %v9335
        %v9347 = vpop.permute.xlu0 %9346
        %v9348 = vperm.slane %v2001, 1
        %v9349 = vlaneseq
        %v9350 = vshrl.u32 %v9349, 7
        %9352 = vset.pattern.permute.xlu0 %v9350
        %9353 = vperm.xlu0 %9352, %v9348
        %v9354 = vpop.permute.xlu0 %9353
        %v9355 = vlaneseq
        %v9356 = vshrl.u32 %v9355, 7
        %v9357 = vadd.s32 %v9356, 8
        %9358 = vset.pattern.permute.xlu0 %v9357
        %9359 = vperm.xlu0 %9358, %v9348
        %v9360 = vpop.permute.xlu0 %9359
        %v9361 = vperm.slane %v2001, 2
        %v9362 = vlaneseq
        %v9363 = vshrl.u32 %v9362, 7
        %9365 = vset.pattern.permute.xlu0 %v9363
        %9366 = vperm.xlu0 %9365, %v9361
        %v9367 = vpop.permute.xlu0 %9366
        %v9368 = vlaneseq
        %v9369 = vshrl.u32 %v9368, 7
        %v9370 = vadd.s32 %v9369, 8
        %9371 = vset.pattern.permute.xlu0 %v9370
        %9372 = vperm.xlu0 %9371, %v9361
        %v9373 = vpop.permute.xlu0 %9372
        %v9374 = vperm.slane %v2001, 3
        %v9375 = vlaneseq
        %v9376 = vshrl.u32 %v9375, 7
        %9378 = vset.pattern.permute.xlu0 %v9376
        %9379 = vperm.xlu0 %9378, %v9374
        %v9380 = vpop.permute.xlu0 %9379
        %v9381 = vlaneseq
        %v9382 = vshrl.u32 %v9381, 7
        %v9383 = vadd.s32 %v9382, 8
        %9384 = vset.pattern.permute.xlu0 %v9383
        %9385 = vperm.xlu0 %9384, %v9374
        %v9386 = vpop.permute.xlu0 %9385
        %v9387 = vperm.slane %v2001, 4
        %v9388 = vlaneseq
        %v9389 = vshrl.u32 %v9388, 7
        %9391 = vset.pattern.permute.xlu0 %v9389
        %9392 = vperm.xlu0 %9391, %v9387
        %v9393 = vpop.permute.xlu0 %9392
        %v9394 = vlaneseq
        %v9395 = vshrl.u32 %v9394, 7
        %v9396 = vadd.s32 %v9395, 8
        %9397 = vset.pattern.permute.xlu0 %v9396
        %9398 = vperm.xlu0 %9397, %v9387
        %v9399 = vpop.permute.xlu0 %9398
        %v9400 = vperm.slane %v2001, 5
        %v9401 = vlaneseq
        %v9402 = vshrl.u32 %v9401, 7
        %9404 = vset.pattern.permute.xlu0 %v9402
        %9405 = vperm.xlu0 %9404, %v9400
        %v9406 = vpop.permute.xlu0 %9405
        %v9407 = vlaneseq
        %v9408 = vshrl.u32 %v9407, 7
        %v9409 = vadd.s32 %v9408, 8
        %9410 = vset.pattern.permute.xlu0 %v9409
        %9411 = vperm.xlu0 %9410, %v9400
        %v9412 = vpop.permute.xlu0 %9411
        %v9413 = vperm.slane %v2001, 6
        %v9414 = vlaneseq
        %v9415 = vshrl.u32 %v9414, 7
        %9417 = vset.pattern.permute.xlu0 %v9415
        %9418 = vperm.xlu0 %9417, %v9413
        %v9419 = vpop.permute.xlu0 %9418
        %v9420 = vlaneseq
        %v9421 = vshrl.u32 %v9420, 7
        %v9422 = vadd.s32 %v9421, 8
        %9423 = vset.pattern.permute.xlu0 %v9422
        %9424 = vperm.xlu0 %9423, %v9413
        %v9425 = vpop.permute.xlu0 %9424
        %v9426 = vperm.slane %v2001, 7
        %v9427 = vlaneseq
        %v9428 = vshrl.u32 %v9427, 7
        %9430 = vset.pattern.permute.xlu0 %v9428
        %9431 = vperm.xlu0 %9430, %v9426
        %v9432 = vpop.permute.xlu0 %9431
        %v9433 = vlaneseq
        %v9434 = vshrl.u32 %v9433, 7
        %v9435 = vadd.s32 %v9434, 8
        %9436 = vset.pattern.permute.xlu0 %v9435
        %9437 = vperm.xlu0 %9436, %v9426
        %v9438 = vpop.permute.xlu0 %9437
        %v9439 = vperm.slane %v2002, 0
        %v9440 = vlaneseq
        %v9441 = vshrl.u32 %v9440, 7
        %9443 = vset.pattern.permute.xlu0 %v9441
        %9444 = vperm.xlu0 %9443, %v9439
        %v9445 = vpop.permute.xlu0 %9444
        %v9446 = vlaneseq
        %v9447 = vshrl.u32 %v9446, 7
        %v9448 = vadd.s32 %v9447, 8
        %9449 = vset.pattern.permute.xlu0 %v9448
        %9450 = vperm.xlu0 %9449, %v9439
        %v9451 = vpop.permute.xlu0 %9450
        %v9452 = vperm.slane %v2002, 1
        %v9453 = vlaneseq
        %v9454 = vshrl.u32 %v9453, 7
        %9456 = vset.pattern.permute.xlu0 %v9454
        %9457 = vperm.xlu0 %9456, %v9452
        %v9458 = vpop.permute.xlu0 %9457
        %v9459 = vlaneseq
        %v9460 = vshrl.u32 %v9459, 7
        %v9461 = vadd.s32 %v9460, 8
        %9462 = vset.pattern.permute.xlu0 %v9461
        %9463 = vperm.xlu0 %9462, %v9452
        %v9464 = vpop.permute.xlu0 %9463
        %v9465 = vperm.slane %v2002, 2
        %v9466 = vlaneseq
        %v9467 = vshrl.u32 %v9466, 7
        %9469 = vset.pattern.permute.xlu0 %v9467
        %9470 = vperm.xlu0 %9469, %v9465
        %v9471 = vpop.permute.xlu0 %9470
        %v9472 = vlaneseq
        %v9473 = vshrl.u32 %v9472, 7
        %v9474 = vadd.s32 %v9473, 8
        %9475 = vset.pattern.permute.xlu0 %v9474
        %9476 = vperm.xlu0 %9475, %v9465
        %v9477 = vpop.permute.xlu0 %9476
        %v9478 = vperm.slane %v2002, 3
        %v9479 = vlaneseq
        %v9480 = vshrl.u32 %v9479, 7
        %9482 = vset.pattern.permute.xlu0 %v9480
        %9483 = vperm.xlu0 %9482, %v9478
        %v9484 = vpop.permute.xlu0 %9483
        %v9485 = vlaneseq
        %v9486 = vshrl.u32 %v9485, 7
        %v9487 = vadd.s32 %v9486, 8
        %9488 = vset.pattern.permute.xlu0 %v9487
        %9489 = vperm.xlu0 %9488, %v9478
        %v9490 = vpop.permute.xlu0 %9489
        %v9491 = vperm.slane %v2002, 4
        %v9492 = vlaneseq
        %v9493 = vshrl.u32 %v9492, 7
        %9495 = vset.pattern.permute.xlu0 %v9493
        %9496 = vperm.xlu0 %9495, %v9491
        %v9497 = vpop.permute.xlu0 %9496
        %v9498 = vlaneseq
        %v9499 = vshrl.u32 %v9498, 7
        %v9500 = vadd.s32 %v9499, 8
        %9501 = vset.pattern.permute.xlu0 %v9500
        %9502 = vperm.xlu0 %9501, %v9491
        %v9503 = vpop.permute.xlu0 %9502
        %v9504 = vperm.slane %v2002, 5
        %v9505 = vlaneseq
        %v9506 = vshrl.u32 %v9505, 7
        %9508 = vset.pattern.permute.xlu0 %v9506
        %9509 = vperm.xlu0 %9508, %v9504
        %v9510 = vpop.permute.xlu0 %9509
        %v9511 = vlaneseq
        %v9512 = vshrl.u32 %v9511, 7
        %v9513 = vadd.s32 %v9512, 8
        %9514 = vset.pattern.permute.xlu0 %v9513
        %9515 = vperm.xlu0 %9514, %v9504
        %v9516 = vpop.permute.xlu0 %9515
        %v9517 = vperm.slane %v2002, 6
        %v9518 = vlaneseq
        %v9519 = vshrl.u32 %v9518, 7
        %9521 = vset.pattern.permute.xlu0 %v9519
        %9522 = vperm.xlu0 %9521, %v9517
        %v9523 = vpop.permute.xlu0 %9522
        %v9524 = vlaneseq
        %v9525 = vshrl.u32 %v9524, 7
        %v9526 = vadd.s32 %v9525, 8
        %9527 = vset.pattern.permute.xlu0 %v9526
        %9528 = vperm.xlu0 %9527, %v9517
        %v9529 = vpop.permute.xlu0 %9528
        %v9530 = vperm.slane %v2002, 7
        %v9531 = vlaneseq
        %v9532 = vshrl.u32 %v9531, 7
        %9534 = vset.pattern.permute.xlu0 %v9532
        %9535 = vperm.xlu0 %9534, %v9530
        %v9536 = vpop.permute.xlu0 %9535
        %v9537 = vlaneseq
        %v9538 = vshrl.u32 %v9537, 7
        %v9539 = vadd.s32 %v9538, 8
        %9540 = vset.pattern.permute.xlu0 %v9539
        %9541 = vperm.xlu0 %9540, %v9530
        %v9542 = vpop.permute.xlu0 %9541
        %v9543 = vperm.slane %v2003, 0
        %v9544 = vlaneseq
        %v9545 = vshrl.u32 %v9544, 7
        %9547 = vset.pattern.permute.xlu0 %v9545
        %9548 = vperm.xlu0 %9547, %v9543
        %v9549 = vpop.permute.xlu0 %9548
        %v9550 = vlaneseq
        %v9551 = vshrl.u32 %v9550, 7
        %v9552 = vadd.s32 %v9551, 8
        %9553 = vset.pattern.permute.xlu0 %v9552
        %9554 = vperm.xlu0 %9553, %v9543
        %v9555 = vpop.permute.xlu0 %9554
        %v9556 = vperm.slane %v2003, 1
        %v9557 = vlaneseq
        %v9558 = vshrl.u32 %v9557, 7
        %9560 = vset.pattern.permute.xlu0 %v9558
        %9561 = vperm.xlu0 %9560, %v9556
        %v9562 = vpop.permute.xlu0 %9561
        %v9563 = vlaneseq
        %v9564 = vshrl.u32 %v9563, 7
        %v9565 = vadd.s32 %v9564, 8
        %9566 = vset.pattern.permute.xlu0 %v9565
        %9567 = vperm.xlu0 %9566, %v9556
        %v9568 = vpop.permute.xlu0 %9567
        %v9569 = vperm.slane %v2003, 2
        %v9570 = vlaneseq
        %v9571 = vshrl.u32 %v9570, 7
        %9573 = vset.pattern.permute.xlu0 %v9571
        %9574 = vperm.xlu0 %9573, %v9569
        %v9575 = vpop.permute.xlu0 %9574
        %v9576 = vlaneseq
        %v9577 = vshrl.u32 %v9576, 7
        %v9578 = vadd.s32 %v9577, 8
        %9579 = vset.pattern.permute.xlu0 %v9578
        %9580 = vperm.xlu0 %9579, %v9569
        %v9581 = vpop.permute.xlu0 %9580
        %v9582 = vperm.slane %v2003, 3
        %v9583 = vlaneseq
        %v9584 = vshrl.u32 %v9583, 7
        %9586 = vset.pattern.permute.xlu0 %v9584
        %9587 = vperm.xlu0 %9586, %v9582
        %v9588 = vpop.permute.xlu0 %9587
        %v9589 = vlaneseq
        %v9590 = vshrl.u32 %v9589, 7
        %v9591 = vadd.s32 %v9590, 8
        %9592 = vset.pattern.permute.xlu0 %v9591
        %9593 = vperm.xlu0 %9592, %v9582
        %v9594 = vpop.permute.xlu0 %9593
        %v9595 = vperm.slane %v2003, 4
        %v9596 = vlaneseq
        %v9597 = vshrl.u32 %v9596, 7
        %9599 = vset.pattern.permute.xlu0 %v9597
        %9600 = vperm.xlu0 %9599, %v9595
        %v9601 = vpop.permute.xlu0 %9600
        %v9602 = vlaneseq
        %v9603 = vshrl.u32 %v9602, 7
        %v9604 = vadd.s32 %v9603, 8
        %9605 = vset.pattern.permute.xlu0 %v9604
        %9606 = vperm.xlu0 %9605, %v9595
        %v9607 = vpop.permute.xlu0 %9606
        %v9608 = vperm.slane %v2003, 5
        %v9609 = vlaneseq
        %v9610 = vshrl.u32 %v9609, 7
        %9612 = vset.pattern.permute.xlu0 %v9610
        %9613 = vperm.xlu0 %9612, %v9608
        %v9614 = vpop.permute.xlu0 %9613
        %v9615 = vlaneseq
        %v9616 = vshrl.u32 %v9615, 7
        %v9617 = vadd.s32 %v9616, 8
        %9618 = vset.pattern.permute.xlu0 %v9617
        %9619 = vperm.xlu0 %9618, %v9608
        %v9620 = vpop.permute.xlu0 %9619
        %v9621 = vperm.slane %v2003, 6
        %v9622 = vlaneseq
        %v9623 = vshrl.u32 %v9622, 7
        %9625 = vset.pattern.permute.xlu0 %v9623
        %9626 = vperm.xlu0 %9625, %v9621
        %v9627 = vpop.permute.xlu0 %9626
        %v9628 = vlaneseq
        %v9629 = vshrl.u32 %v9628, 7
        %v9630 = vadd.s32 %v9629, 8
        %9631 = vset.pattern.permute.xlu0 %v9630
        %9632 = vperm.xlu0 %9631, %v9621
        %v9633 = vpop.permute.xlu0 %9632
        %v9634 = vperm.slane %v2003, 7
        %v9635 = vlaneseq
        %v9636 = vshrl.u32 %v9635, 7
        %9638 = vset.pattern.permute.xlu0 %v9636
        %9639 = vperm.xlu0 %9638, %v9634
        %v9640 = vpop.permute.xlu0 %9639
        %v9641 = vlaneseq
        %v9642 = vshrl.u32 %v9641, 7
        %v9643 = vadd.s32 %v9642, 8
        %9644 = vset.pattern.permute.xlu0 %v9643
        %9645 = vperm.xlu0 %9644, %v9634
        %v9646 = vpop.permute.xlu0 %9645
        %v9647 = vperm.slane %v2004, 0
        %v9648 = vlaneseq
        %v9649 = vshrl.u32 %v9648, 7
        %9651 = vset.pattern.permute.xlu0 %v9649
        %9652 = vperm.xlu0 %9651, %v9647
        %v9653 = vpop.permute.xlu0 %9652
        %v9654 = vlaneseq
        %v9655 = vshrl.u32 %v9654, 7
        %v9656 = vadd.s32 %v9655, 8
        %9657 = vset.pattern.permute.xlu0 %v9656
        %9658 = vperm.xlu0 %9657, %v9647
        %v9659 = vpop.permute.xlu0 %9658
        %v9660 = vperm.slane %v2004, 1
        %v9661 = vlaneseq
        %v9662 = vshrl.u32 %v9661, 7
        %9664 = vset.pattern.permute.xlu0 %v9662
        %9665 = vperm.xlu0 %9664, %v9660
        %v9666 = vpop.permute.xlu0 %9665
        %v9667 = vlaneseq
        %v9668 = vshrl.u32 %v9667, 7
        %v9669 = vadd.s32 %v9668, 8
        %9670 = vset.pattern.permute.xlu0 %v9669
        %9671 = vperm.xlu0 %9670, %v9660
        %v9672 = vpop.permute.xlu0 %9671
        %v9673 = vperm.slane %v2004, 2
        %v9674 = vlaneseq
        %v9675 = vshrl.u32 %v9674, 7
        %9677 = vset.pattern.permute.xlu0 %v9675
        %9678 = vperm.xlu0 %9677, %v9673
        %v9679 = vpop.permute.xlu0 %9678
        %v9680 = vlaneseq
        %v9681 = vshrl.u32 %v9680, 7
        %v9682 = vadd.s32 %v9681, 8
        %9683 = vset.pattern.permute.xlu0 %v9682
        %9684 = vperm.xlu0 %9683, %v9673
        %v9685 = vpop.permute.xlu0 %9684
        %v9686 = vperm.slane %v2004, 3
        %v9687 = vlaneseq
        %v9688 = vshrl.u32 %v9687, 7
        %9690 = vset.pattern.permute.xlu0 %v9688
        %9691 = vperm.xlu0 %9690, %v9686
        %v9692 = vpop.permute.xlu0 %9691
        %v9693 = vlaneseq
        %v9694 = vshrl.u32 %v9693, 7
        %v9695 = vadd.s32 %v9694, 8
        %9696 = vset.pattern.permute.xlu0 %v9695
        %9697 = vperm.xlu0 %9696, %v9686
        %v9698 = vpop.permute.xlu0 %9697
        %v9699 = vperm.slane %v2004, 4
        %v9700 = vlaneseq
        %v9701 = vshrl.u32 %v9700, 7
        %9703 = vset.pattern.permute.xlu0 %v9701
        %9704 = vperm.xlu0 %9703, %v9699
        %v9705 = vpop.permute.xlu0 %9704
        %v9706 = vlaneseq
        %v9707 = vshrl.u32 %v9706, 7
        %v9708 = vadd.s32 %v9707, 8
        %9709 = vset.pattern.permute.xlu0 %v9708
        %9710 = vperm.xlu0 %9709, %v9699
        %v9711 = vpop.permute.xlu0 %9710
        %v9712 = vperm.slane %v2004, 5
        %v9713 = vlaneseq
        %v9714 = vshrl.u32 %v9713, 7
        %9716 = vset.pattern.permute.xlu0 %v9714
        %9717 = vperm.xlu0 %9716, %v9712
        %v9718 = vpop.permute.xlu0 %9717
        %v9719 = vlaneseq
        %v9720 = vshrl.u32 %v9719, 7
        %v9721 = vadd.s32 %v9720, 8
        %9722 = vset.pattern.permute.xlu0 %v9721
        %9723 = vperm.xlu0 %9722, %v9712
        %v9724 = vpop.permute.xlu0 %9723
        %v9725 = vperm.slane %v2004, 6
        %v9726 = vlaneseq
        %v9727 = vshrl.u32 %v9726, 7
        %9729 = vset.pattern.permute.xlu0 %v9727
        %9730 = vperm.xlu0 %9729, %v9725
        %v9731 = vpop.permute.xlu0 %9730
        %v9732 = vlaneseq
        %v9733 = vshrl.u32 %v9732, 7
        %v9734 = vadd.s32 %v9733, 8
        %9735 = vset.pattern.permute.xlu0 %v9734
        %9736 = vperm.xlu0 %9735, %v9725
        %v9737 = vpop.permute.xlu0 %9736
        %v9738 = vperm.slane %v2004, 7
        %v9739 = vlaneseq
        %v9740 = vshrl.u32 %v9739, 7
        %9742 = vset.pattern.permute.xlu0 %v9740
        %9743 = vperm.xlu0 %9742, %v9738
        %v9744 = vpop.permute.xlu0 %9743
        %v9745 = vlaneseq
        %v9746 = vshrl.u32 %v9745, 7
        %v9747 = vadd.s32 %v9746, 8
        %9748 = vset.pattern.permute.xlu0 %v9747
        %9749 = vperm.xlu0 %9748, %v9738
        %v9750 = vpop.permute.xlu0 %9749
        %v9879 = vmul.f32 %v7005, %v8925
        %v9880 = vmul.f32 %v7020, %v8931
        %v9881 = vmul.f32 %v7035, %v8938
        %v9882 = vmul.f32 %v7050, %v8944
        %v9883 = vmul.f32 %v7065, %v8951
        %v9884 = vmul.f32 %v7080, %v8957
        %v9885 = vmul.f32 %v7095, %v8964
        %v9886 = vmul.f32 %v7110, %v8970
        %v9887 = vmul.f32 %v7125, %v8977
        %v9888 = vmul.f32 %v7140, %v8983
        %v9889 = vmul.f32 %v7155, %v8990
        %v9890 = vmul.f32 %v7170, %v8996
        %v9891 = vmul.f32 %v7185, %v9003
        %v9892 = vmul.f32 %v7200, %v9009
        %v9893 = vmul.f32 %v7215, %v9016
        %v9894 = vmul.f32 %v7230, %v9022
        %v9895 = vmul.f32 %v7245, %v9029
        %v9896 = vmul.f32 %v7260, %v9035
        %v9897 = vmul.f32 %v7275, %v9042
        %v9898 = vmul.f32 %v7290, %v9048
        %v9899 = vmul.f32 %v7305, %v9055
        %v9900 = vmul.f32 %v7320, %v9061
        %v9901 = vmul.f32 %v7335, %v9068
        %v9902 = vmul.f32 %v7350, %v9074
        %v9903 = vmul.f32 %v7365, %v9081
        %v9904 = vmul.f32 %v7380, %v9087
        %v9905 = vmul.f32 %v7395, %v9094
        %v9906 = vmul.f32 %v7410, %v9100
        %v9907 = vmul.f32 %v7425, %v9107
        %v9908 = vmul.f32 %v7440, %v9113
        %v9909 = vmul.f32 %v7455, %v9120
        %v9910 = vmul.f32 %v7470, %v9126
        %v9911 = vmul.f32 %v7485, %v9133
        %v9912 = vmul.f32 %v7500, %v9139
        %v9913 = vmul.f32 %v7515, %v9146
        %v9914 = vmul.f32 %v7530, %v9152
        %v9915 = vmul.f32 %v7545, %v9159
        %v9916 = vmul.f32 %v7560, %v9165
        %v9917 = vmul.f32 %v7575, %v9172
        %v9918 = vmul.f32 %v7590, %v9178
        %v9919 = vmul.f32 %v7605, %v9185
        %v9920 = vmul.f32 %v7620, %v9191
        %v9921 = vmul.f32 %v7635, %v9198
        %v9922 = vmul.f32 %v7650, %v9204
        %v9923 = vmul.f32 %v7665, %v9211
        %v9924 = vmul.f32 %v7680, %v9217
        %v9925 = vmul.f32 %v7695, %v9224
        %v9926 = vmul.f32 %v7710, %v9230
        %v9927 = vmul.f32 %v7725, %v9237
        %v9928 = vmul.f32 %v7740, %v9243
        %v9929 = vmul.f32 %v7755, %v9250
        %v9930 = vmul.f32 %v7770, %v9256
        %v9931 = vmul.f32 %v7785, %v9263
        %v9932 = vmul.f32 %v7800, %v9269
        %v9933 = vmul.f32 %v7815, %v9276
        %v9934 = vmul.f32 %v7830, %v9282
        %v9935 = vmul.f32 %v7845, %v9289
        %v9936 = vmul.f32 %v7860, %v9295
        %v9937 = vmul.f32 %v7875, %v9302
        %v9938 = vmul.f32 %v7890, %v9308
        %v9939 = vmul.f32 %v7905, %v9315
        %v9940 = vmul.f32 %v7920, %v9321
        %v9941 = vmul.f32 %v7935, %v9328
        %v9942 = vmul.f32 %v7950, %v9334
        %v9943 = vmul.f32 %v7965, %v9341
        %v9944 = vmul.f32 %v7980, %v9347
        %v9945 = vmul.f32 %v7995, %v9354
        %v9946 = vmul.f32 %v8010, %v9360
        %v9947 = vmul.f32 %v8025, %v9367
        %v9948 = vmul.f32 %v8040, %v9373
        %v9949 = vmul.f32 %v8055, %v9380
        %v9950 = vmul.f32 %v8070, %v9386
        %v9951 = vmul.f32 %v8085, %v9393
        %v9952 = vmul.f32 %v8100, %v9399
        %v9953 = vmul.f32 %v8115, %v9406
        %v9954 = vmul.f32 %v8130, %v9412
        %v9955 = vmul.f32 %v8145, %v9419
        %v9956 = vmul.f32 %v8160, %v9425
        %v9957 = vmul.f32 %v8175, %v9432
        %v9958 = vmul.f32 %v8190, %v9438
        %v9959 = vmul.f32 %v8205, %v9445
        %v9960 = vmul.f32 %v8220, %v9451
        %v9961 = vmul.f32 %v8235, %v9458
        %v9962 = vmul.f32 %v8250, %v9464
        %v9963 = vmul.f32 %v8265, %v9471
        %v9964 = vmul.f32 %v8280, %v9477
        %v9965 = vmul.f32 %v8295, %v9484
        %v9966 = vmul.f32 %v8310, %v9490
        %v9967 = vmul.f32 %v8325, %v9497
        %v9968 = vmul.f32 %v8340, %v9503
        %v9969 = vmul.f32 %v8355, %v9510
        %v9970 = vmul.f32 %v8370, %v9516
        %v9971 = vmul.f32 %v8385, %v9523
        %v9972 = vmul.f32 %v8400, %v9529
        %v9973 = vmul.f32 %v8415, %v9536
        %v9974 = vmul.f32 %v8430, %v9542
        %v9975 = vmul.f32 %v8445, %v9549
        %v9976 = vmul.f32 %v8460, %v9555
        %v9977 = vmul.f32 %v8475, %v9562
        %v9978 = vmul.f32 %v8490, %v9568
        %v9979 = vmul.f32 %v8505, %v9575
        %v9980 = vmul.f32 %v8520, %v9581
        %v9981 = vmul.f32 %v8535, %v9588
        %v9982 = vmul.f32 %v8550, %v9594
        %v9983 = vmul.f32 %v8565, %v9601
        %v9984 = vmul.f32 %v8580, %v9607
        %v9985 = vmul.f32 %v8595, %v9614
        %v9986 = vmul.f32 %v8610, %v9620
        %v9987 = vmul.f32 %v8625, %v9627
        %v9988 = vmul.f32 %v8640, %v9633
        %v9989 = vmul.f32 %v8655, %v9640
        %v9990 = vmul.f32 %v8670, %v9646
        %v9991 = vmul.f32 %v8685, %v9653
        %v9992 = vmul.f32 %v8700, %v9659
        %v9993 = vmul.f32 %v8715, %v9666
        %v9994 = vmul.f32 %v8730, %v9672
        %v9995 = vmul.f32 %v8745, %v9679
        %v9996 = vmul.f32 %v8760, %v9685
        %v9997 = vmul.f32 %v8775, %v9692
        %v9998 = vmul.f32 %v8790, %v9698
        %v9999 = vmul.f32 %v8805, %v9705
        %v10000 = vmul.f32 %v8820, %v9711
        %v10001 = vmul.f32 %v8835, %v9718
        %v10002 = vmul.f32 %v8850, %v9724
        %v10003 = vmul.f32 %v8865, %v9731
        %v10004 = vmul.f32 %v8880, %v9737
        %v10005 = vmul.f32 %v8895, %v9744
        %v10006 = vmul.f32 %v8910, %v9750
        %10135 = vset.pattern.permute.xlu0 0
        %10136 = vperm.xlu0 %10135, %v9879
        %v10137 = vpop.permute.xlu0 %10136
        %10138 = vset.pattern.permute.xlu0 0
        %10139 = vperm.xlu0 %10138, %v9880
        %v10140 = vpop.permute.xlu0 %10139
        %10141 = vset.pattern.permute.xlu0 0
        %10142 = vperm.xlu0 %10141, %v9881
        %v10143 = vpop.permute.xlu0 %10142
        %10144 = vset.pattern.permute.xlu0 0
        %10145 = vperm.xlu0 %10144, %v9882
        %v10146 = vpop.permute.xlu0 %10145
        %10147 = vset.pattern.permute.xlu0 0
        %10148 = vperm.xlu0 %10147, %v9883
        %v10149 = vpop.permute.xlu0 %10148
        %10150 = vset.pattern.permute.xlu0 0
        %10151 = vperm.xlu0 %10150, %v9884
        %v10152 = vpop.permute.xlu0 %10151
        %10153 = vset.pattern.permute.xlu0 0
        %10154 = vperm.xlu0 %10153, %v9885
        %v10155 = vpop.permute.xlu0 %10154
        %10156 = vset.pattern.permute.xlu0 0
        %10157 = vperm.xlu0 %10156, %v9886
        %v10158 = vpop.permute.xlu0 %10157
        %10159 = vset.pattern.permute.xlu0 0
        %10160 = vperm.xlu0 %10159, %v9887
        %v10161 = vpop.permute.xlu0 %10160
        %10162 = vset.pattern.permute.xlu0 0
        %10163 = vperm.xlu0 %10162, %v9888
        %v10164 = vpop.permute.xlu0 %10163
        %10165 = vset.pattern.permute.xlu0 0
        %10166 = vperm.xlu0 %10165, %v9889
        %v10167 = vpop.permute.xlu0 %10166
        %10168 = vset.pattern.permute.xlu0 0
        %10169 = vperm.xlu0 %10168, %v9890
        %v10170 = vpop.permute.xlu0 %10169
        %10171 = vset.pattern.permute.xlu0 0
        %10172 = vperm.xlu0 %10171, %v9891
        %v10173 = vpop.permute.xlu0 %10172
        %10174 = vset.pattern.permute.xlu0 0
        %10175 = vperm.xlu0 %10174, %v9892
        %v10176 = vpop.permute.xlu0 %10175
        %10177 = vset.pattern.permute.xlu0 0
        %10178 = vperm.xlu0 %10177, %v9893
        %v10179 = vpop.permute.xlu0 %10178
        %10180 = vset.pattern.permute.xlu0 0
        %10181 = vperm.xlu0 %10180, %v9894
        %v10182 = vpop.permute.xlu0 %10181
        %10183 = vset.pattern.permute.xlu0 0
        %10184 = vperm.xlu0 %10183, %v9895
        %v10185 = vpop.permute.xlu0 %10184
        %10186 = vset.pattern.permute.xlu0 0
        %10187 = vperm.xlu0 %10186, %v9896
        %v10188 = vpop.permute.xlu0 %10187
        %10189 = vset.pattern.permute.xlu0 0
        %10190 = vperm.xlu0 %10189, %v9897
        %v10191 = vpop.permute.xlu0 %10190
        %10192 = vset.pattern.permute.xlu0 0
        %10193 = vperm.xlu0 %10192, %v9898
        %v10194 = vpop.permute.xlu0 %10193
        %10195 = vset.pattern.permute.xlu0 0
        %10196 = vperm.xlu0 %10195, %v9899
        %v10197 = vpop.permute.xlu0 %10196
        %10198 = vset.pattern.permute.xlu0 0
        %10199 = vperm.xlu0 %10198, %v9900
        %v10200 = vpop.permute.xlu0 %10199
        %10201 = vset.pattern.permute.xlu0 0
        %10202 = vperm.xlu0 %10201, %v9901
        %v10203 = vpop.permute.xlu0 %10202
        %10204 = vset.pattern.permute.xlu0 0
        %10205 = vperm.xlu0 %10204, %v9902
        %v10206 = vpop.permute.xlu0 %10205
        %10207 = vset.pattern.permute.xlu0 0
        %10208 = vperm.xlu0 %10207, %v9903
        %v10209 = vpop.permute.xlu0 %10208
        %10210 = vset.pattern.permute.xlu0 0
        %10211 = vperm.xlu0 %10210, %v9904
        %v10212 = vpop.permute.xlu0 %10211
        %10213 = vset.pattern.permute.xlu0 0
        %10214 = vperm.xlu0 %10213, %v9905
        %v10215 = vpop.permute.xlu0 %10214
        %10216 = vset.pattern.permute.xlu0 0
        %10217 = vperm.xlu0 %10216, %v9906
        %v10218 = vpop.permute.xlu0 %10217
        %10219 = vset.pattern.permute.xlu0 0
        %10220 = vperm.xlu0 %10219, %v9907
        %v10221 = vpop.permute.xlu0 %10220
        %10222 = vset.pattern.permute.xlu0 0
        %10223 = vperm.xlu0 %10222, %v9908
        %v10224 = vpop.permute.xlu0 %10223
        %10225 = vset.pattern.permute.xlu0 0
        %10226 = vperm.xlu0 %10225, %v9909
        %v10227 = vpop.permute.xlu0 %10226
        %10228 = vset.pattern.permute.xlu0 0
        %10229 = vperm.xlu0 %10228, %v9910
        %v10230 = vpop.permute.xlu0 %10229
        %10231 = vset.pattern.permute.xlu0 0
        %10232 = vperm.xlu0 %10231, %v9911
        %v10233 = vpop.permute.xlu0 %10232
        %10234 = vset.pattern.permute.xlu0 0
        %10235 = vperm.xlu0 %10234, %v9912
        %v10236 = vpop.permute.xlu0 %10235
        %10237 = vset.pattern.permute.xlu0 0
        %10238 = vperm.xlu0 %10237, %v9913
        %v10239 = vpop.permute.xlu0 %10238
        %10240 = vset.pattern.permute.xlu0 0
        %10241 = vperm.xlu0 %10240, %v9914
        %v10242 = vpop.permute.xlu0 %10241
        %10243 = vset.pattern.permute.xlu0 0
        %10244 = vperm.xlu0 %10243, %v9915
        %v10245 = vpop.permute.xlu0 %10244
        %10246 = vset.pattern.permute.xlu0 0
        %10247 = vperm.xlu0 %10246, %v9916
        %v10248 = vpop.permute.xlu0 %10247
        %10249 = vset.pattern.permute.xlu0 0
        %10250 = vperm.xlu0 %10249, %v9917
        %v10251 = vpop.permute.xlu0 %10250
        %10252 = vset.pattern.permute.xlu0 0
        %10253 = vperm.xlu0 %10252, %v9918
        %v10254 = vpop.permute.xlu0 %10253
        %10255 = vset.pattern.permute.xlu0 0
        %10256 = vperm.xlu0 %10255, %v9919
        %v10257 = vpop.permute.xlu0 %10256
        %10258 = vset.pattern.permute.xlu0 0
        %10259 = vperm.xlu0 %10258, %v9920
        %v10260 = vpop.permute.xlu0 %10259
        %10261 = vset.pattern.permute.xlu0 0
        %10262 = vperm.xlu0 %10261, %v9921
        %v10263 = vpop.permute.xlu0 %10262
        %10264 = vset.pattern.permute.xlu0 0
        %10265 = vperm.xlu0 %10264, %v9922
        %v10266 = vpop.permute.xlu0 %10265
        %10267 = vset.pattern.permute.xlu0 0
        %10268 = vperm.xlu0 %10267, %v9923
        %v10269 = vpop.permute.xlu0 %10268
        %10270 = vset.pattern.permute.xlu0 0
        %10271 = vperm.xlu0 %10270, %v9924
        %v10272 = vpop.permute.xlu0 %10271
        %10273 = vset.pattern.permute.xlu0 0
        %10274 = vperm.xlu0 %10273, %v9925
        %v10275 = vpop.permute.xlu0 %10274
        %10276 = vset.pattern.permute.xlu0 0
        %10277 = vperm.xlu0 %10276, %v9926
        %v10278 = vpop.permute.xlu0 %10277
        %10279 = vset.pattern.permute.xlu0 0
        %10280 = vperm.xlu0 %10279, %v9927
        %v10281 = vpop.permute.xlu0 %10280
        %10282 = vset.pattern.permute.xlu0 0
        %10283 = vperm.xlu0 %10282, %v9928
        %v10284 = vpop.permute.xlu0 %10283
        %10285 = vset.pattern.permute.xlu0 0
        %10286 = vperm.xlu0 %10285, %v9929
        %v10287 = vpop.permute.xlu0 %10286
        %10288 = vset.pattern.permute.xlu0 0
        %10289 = vperm.xlu0 %10288, %v9930
        %v10290 = vpop.permute.xlu0 %10289
        %10291 = vset.pattern.permute.xlu0 0
        %10292 = vperm.xlu0 %10291, %v9931
        %v10293 = vpop.permute.xlu0 %10292
        %10294 = vset.pattern.permute.xlu0 0
        %10295 = vperm.xlu0 %10294, %v9932
        %v10296 = vpop.permute.xlu0 %10295
        %10297 = vset.pattern.permute.xlu0 0
        %10298 = vperm.xlu0 %10297, %v9933
        %v10299 = vpop.permute.xlu0 %10298
        %10300 = vset.pattern.permute.xlu0 0
        %10301 = vperm.xlu0 %10300, %v9934
        %v10302 = vpop.permute.xlu0 %10301
        %10303 = vset.pattern.permute.xlu0 0
        %10304 = vperm.xlu0 %10303, %v9935
        %v10305 = vpop.permute.xlu0 %10304
        %10306 = vset.pattern.permute.xlu0 0
        %10307 = vperm.xlu0 %10306, %v9936
        %v10308 = vpop.permute.xlu0 %10307
        %10309 = vset.pattern.permute.xlu0 0
        %10310 = vperm.xlu0 %10309, %v9937
        %v10311 = vpop.permute.xlu0 %10310
        %10312 = vset.pattern.permute.xlu0 0
        %10313 = vperm.xlu0 %10312, %v9938
        %v10314 = vpop.permute.xlu0 %10313
        %10315 = vset.pattern.permute.xlu0 0
        %10316 = vperm.xlu0 %10315, %v9939
        %v10317 = vpop.permute.xlu0 %10316
        %10318 = vset.pattern.permute.xlu0 0
        %10319 = vperm.xlu0 %10318, %v9940
        %v10320 = vpop.permute.xlu0 %10319
        %10321 = vset.pattern.permute.xlu0 0
        %10322 = vperm.xlu0 %10321, %v9941
        %v10323 = vpop.permute.xlu0 %10322
        %10324 = vset.pattern.permute.xlu0 0
        %10325 = vperm.xlu0 %10324, %v9942
        %v10326 = vpop.permute.xlu0 %10325
        %10327 = vset.pattern.permute.xlu0 0
        %10328 = vperm.xlu0 %10327, %v9943
        %v10329 = vpop.permute.xlu0 %10328
        %10330 = vset.pattern.permute.xlu0 0
        %10331 = vperm.xlu0 %10330, %v9944
        %v10332 = vpop.permute.xlu0 %10331
        %10333 = vset.pattern.permute.xlu0 0
        %10334 = vperm.xlu0 %10333, %v9945
        %v10335 = vpop.permute.xlu0 %10334
        %10336 = vset.pattern.permute.xlu0 0
        %10337 = vperm.xlu0 %10336, %v9946
        %v10338 = vpop.permute.xlu0 %10337
        %10339 = vset.pattern.permute.xlu0 0
        %10340 = vperm.xlu0 %10339, %v9947
        %v10341 = vpop.permute.xlu0 %10340
        %10342 = vset.pattern.permute.xlu0 0
        %10343 = vperm.xlu0 %10342, %v9948
        %v10344 = vpop.permute.xlu0 %10343
        %10345 = vset.pattern.permute.xlu0 0
        %10346 = vperm.xlu0 %10345, %v9949
        %v10347 = vpop.permute.xlu0 %10346
        %10348 = vset.pattern.permute.xlu0 0
        %10349 = vperm.xlu0 %10348, %v9950
        %v10350 = vpop.permute.xlu0 %10349
        %10351 = vset.pattern.permute.xlu0 0
        %10352 = vperm.xlu0 %10351, %v9951
        %v10353 = vpop.permute.xlu0 %10352
        %10354 = vset.pattern.permute.xlu0 0
        %10355 = vperm.xlu0 %10354, %v9952
        %v10356 = vpop.permute.xlu0 %10355
        %10357 = vset.pattern.permute.xlu0 0
        %10358 = vperm.xlu0 %10357, %v9953
        %v10359 = vpop.permute.xlu0 %10358
        %10360 = vset.pattern.permute.xlu0 0
        %10361 = vperm.xlu0 %10360, %v9954
        %v10362 = vpop.permute.xlu0 %10361
        %10363 = vset.pattern.permute.xlu0 0
        %10364 = vperm.xlu0 %10363, %v9955
        %v10365 = vpop.permute.xlu0 %10364
        %10366 = vset.pattern.permute.xlu0 0
        %10367 = vperm.xlu0 %10366, %v9956
        %v10368 = vpop.permute.xlu0 %10367
        %10369 = vset.pattern.permute.xlu0 0
        %10370 = vperm.xlu0 %10369, %v9957
        %v10371 = vpop.permute.xlu0 %10370
        %10372 = vset.pattern.permute.xlu0 0
        %10373 = vperm.xlu0 %10372, %v9958
        %v10374 = vpop.permute.xlu0 %10373
        %10375 = vset.pattern.permute.xlu0 0
        %10376 = vperm.xlu0 %10375, %v9959
        %v10377 = vpop.permute.xlu0 %10376
        %10378 = vset.pattern.permute.xlu0 0
        %10379 = vperm.xlu0 %10378, %v9960
        %v10380 = vpop.permute.xlu0 %10379
        %10381 = vset.pattern.permute.xlu0 0
        %10382 = vperm.xlu0 %10381, %v9961
        %v10383 = vpop.permute.xlu0 %10382
        %10384 = vset.pattern.permute.xlu0 0
        %10385 = vperm.xlu0 %10384, %v9962
        %v10386 = vpop.permute.xlu0 %10385
        %10387 = vset.pattern.permute.xlu0 0
        %10388 = vperm.xlu0 %10387, %v9963
        %v10389 = vpop.permute.xlu0 %10388
        %10390 = vset.pattern.permute.xlu0 0
        %10391 = vperm.xlu0 %10390, %v9964
        %v10392 = vpop.permute.xlu0 %10391
        %10393 = vset.pattern.permute.xlu0 0
        %10394 = vperm.xlu0 %10393, %v9965
        %v10395 = vpop.permute.xlu0 %10394
        %10396 = vset.pattern.permute.xlu0 0
        %10397 = vperm.xlu0 %10396, %v9966
        %v10398 = vpop.permute.xlu0 %10397
        %10399 = vset.pattern.permute.xlu0 0
        %10400 = vperm.xlu0 %10399, %v9967
        %v10401 = vpop.permute.xlu0 %10400
        %10402 = vset.pattern.permute.xlu0 0
        %10403 = vperm.xlu0 %10402, %v9968
        %v10404 = vpop.permute.xlu0 %10403
        %10405 = vset.pattern.permute.xlu0 0
        %10406 = vperm.xlu0 %10405, %v9969
        %v10407 = vpop.permute.xlu0 %10406
        %10408 = vset.pattern.permute.xlu0 0
        %10409 = vperm.xlu0 %10408, %v9970
        %v10410 = vpop.permute.xlu0 %10409
        %10411 = vset.pattern.permute.xlu0 0
        %10412 = vperm.xlu0 %10411, %v9971
        %v10413 = vpop.permute.xlu0 %10412
        %10414 = vset.pattern.permute.xlu0 0
        %10415 = vperm.xlu0 %10414, %v9972
        %v10416 = vpop.permute.xlu0 %10415
        %10417 = vset.pattern.permute.xlu0 0
        %10418 = vperm.xlu0 %10417, %v9973
        %v10419 = vpop.permute.xlu0 %10418
        %10420 = vset.pattern.permute.xlu0 0
        %10421 = vperm.xlu0 %10420, %v9974
        %v10422 = vpop.permute.xlu0 %10421
        %10423 = vset.pattern.permute.xlu0 0
        %10424 = vperm.xlu0 %10423, %v9975
        %v10425 = vpop.permute.xlu0 %10424
        %10426 = vset.pattern.permute.xlu0 0
        %10427 = vperm.xlu0 %10426, %v9976
        %v10428 = vpop.permute.xlu0 %10427
        %10429 = vset.pattern.permute.xlu0 0
        %10430 = vperm.xlu0 %10429, %v9977
        %v10431 = vpop.permute.xlu0 %10430
        %10432 = vset.pattern.permute.xlu0 0
        %10433 = vperm.xlu0 %10432, %v9978
        %v10434 = vpop.permute.xlu0 %10433
        %10435 = vset.pattern.permute.xlu0 0
        %10436 = vperm.xlu0 %10435, %v9979
        %v10437 = vpop.permute.xlu0 %10436
        %10438 = vset.pattern.permute.xlu0 0
        %10439 = vperm.xlu0 %10438, %v9980
        %v10440 = vpop.permute.xlu0 %10439
        %10441 = vset.pattern.permute.xlu0 0
        %10442 = vperm.xlu0 %10441, %v9981
        %v10443 = vpop.permute.xlu0 %10442
        %10444 = vset.pattern.permute.xlu0 0
        %10445 = vperm.xlu0 %10444, %v9982
        %v10446 = vpop.permute.xlu0 %10445
        %10447 = vset.pattern.permute.xlu0 0
        %10448 = vperm.xlu0 %10447, %v9983
        %v10449 = vpop.permute.xlu0 %10448
        %10450 = vset.pattern.permute.xlu0 0
        %10451 = vperm.xlu0 %10450, %v9984
        %v10452 = vpop.permute.xlu0 %10451
        %10453 = vset.pattern.permute.xlu0 0
        %10454 = vperm.xlu0 %10453, %v9985
        %v10455 = vpop.permute.xlu0 %10454
        %10456 = vset.pattern.permute.xlu0 0
        %10457 = vperm.xlu0 %10456, %v9986
        %v10458 = vpop.permute.xlu0 %10457
        %10459 = vset.pattern.permute.xlu0 0
        %10460 = vperm.xlu0 %10459, %v9987
        %v10461 = vpop.permute.xlu0 %10460
        %10462 = vset.pattern.permute.xlu0 0
        %10463 = vperm.xlu0 %10462, %v9988
        %v10464 = vpop.permute.xlu0 %10463
        %10465 = vset.pattern.permute.xlu0 0
        %10466 = vperm.xlu0 %10465, %v9989
        %v10467 = vpop.permute.xlu0 %10466
        %10468 = vset.pattern.permute.xlu0 0
        %10469 = vperm.xlu0 %10468, %v9990
        %v10470 = vpop.permute.xlu0 %10469
        %10471 = vset.pattern.permute.xlu0 0
        %10472 = vperm.xlu0 %10471, %v9991
        %v10473 = vpop.permute.xlu0 %10472
        %10474 = vset.pattern.permute.xlu0 0
        %10475 = vperm.xlu0 %10474, %v9992
        %v10476 = vpop.permute.xlu0 %10475
        %10477 = vset.pattern.permute.xlu0 0
        %10478 = vperm.xlu0 %10477, %v9993
        %v10479 = vpop.permute.xlu0 %10478
        %10480 = vset.pattern.permute.xlu0 0
        %10481 = vperm.xlu0 %10480, %v9994
        %v10482 = vpop.permute.xlu0 %10481
        %10483 = vset.pattern.permute.xlu0 0
        %10484 = vperm.xlu0 %10483, %v9995
        %v10485 = vpop.permute.xlu0 %10484
        %10486 = vset.pattern.permute.xlu0 0
        %10487 = vperm.xlu0 %10486, %v9996
        %v10488 = vpop.permute.xlu0 %10487
        %10489 = vset.pattern.permute.xlu0 0
        %10490 = vperm.xlu0 %10489, %v9997
        %v10491 = vpop.permute.xlu0 %10490
        %10492 = vset.pattern.permute.xlu0 0
        %10493 = vperm.xlu0 %10492, %v9998
        %v10494 = vpop.permute.xlu0 %10493
        %10495 = vset.pattern.permute.xlu0 0
        %10496 = vperm.xlu0 %10495, %v9999
        %v10497 = vpop.permute.xlu0 %10496
        %10498 = vset.pattern.permute.xlu0 0
        %10499 = vperm.xlu0 %10498, %v10000
        %v10500 = vpop.permute.xlu0 %10499
        %10501 = vset.pattern.permute.xlu0 0
        %10502 = vperm.xlu0 %10501, %v10001
        %v10503 = vpop.permute.xlu0 %10502
        %10504 = vset.pattern.permute.xlu0 0
        %10505 = vperm.xlu0 %10504, %v10002
        %v10506 = vpop.permute.xlu0 %10505
        %10507 = vset.pattern.permute.xlu0 0
        %10508 = vperm.xlu0 %10507, %v10003
        %v10509 = vpop.permute.xlu0 %10508
        %10510 = vset.pattern.permute.xlu0 0
        %10511 = vperm.xlu0 %10510, %v10004
        %v10512 = vpop.permute.xlu0 %10511
        %10513 = vset.pattern.permute.xlu0 0
        %10514 = vperm.xlu0 %10513, %v10005
        %v10515 = vpop.permute.xlu0 %10514
        %10516 = vset.pattern.permute.xlu0 0
        %10517 = vperm.xlu0 %10516, %v10006
        %v10518 = vpop.permute.xlu0 %10517
        %v10519 = vlaneseq
        %v10520 = vand.u32 %v10519, 127
        %v10521 = vperm.slane %v10137, %v10520
        %v10522 = vadd.s32 %v10520, 4294967288
        %v10523 = vperm.slane %v10140, %v10522
        %vm10524 = vcmask 130112
        %v10525 = vsel %vm10524, %v10523, %v10521
        %v10526 = vperm.slane %v10143, %v10520
        %v10527 = vperm.slane %v10146, %v10522
        %v10528 = vsel %vm10524, %v10527, %v10526
        %v10529 = vperm.slane %v10149, %v10520
        %v10530 = vperm.slane %v10152, %v10522
        %v10531 = vsel %vm10524, %v10530, %v10529
        %v10532 = vperm.slane %v10155, %v10520
        %v10533 = vperm.slane %v10158, %v10522
        %v10534 = vsel %vm10524, %v10533, %v10532
        %v10535 = vperm.slane %v10161, %v10520
        %v10536 = vperm.slane %v10164, %v10522
        %v10537 = vsel %vm10524, %v10536, %v10535
        %v10538 = vperm.slane %v10167, %v10520
        %v10539 = vperm.slane %v10170, %v10522
        %v10540 = vsel %vm10524, %v10539, %v10538
        %v10541 = vperm.slane %v10173, %v10520
        %v10542 = vperm.slane %v10176, %v10522
        %v10543 = vsel %vm10524, %v10542, %v10541
        %v10544 = vperm.slane %v10179, %v10520
        %v10545 = vperm.slane %v10182, %v10522
        %v10546 = vsel %vm10524, %v10545, %v10544
        %v10547 = vperm.slane %v10185, %v10520
        %v10548 = vperm.slane %v10188, %v10522
        %v10549 = vsel %vm10524, %v10548, %v10547
        %v10550 = vperm.slane %v10191, %v10520
        %v10551 = vperm.slane %v10194, %v10522
        %v10552 = vsel %vm10524, %v10551, %v10550
        %v10553 = vperm.slane %v10197, %v10520
        %v10554 = vperm.slane %v10200, %v10522
        %v10555 = vsel %vm10524, %v10554, %v10553
        %v10556 = vperm.slane %v10203, %v10520
        %v10557 = vperm.slane %v10206, %v10522
        %v10558 = vsel %vm10524, %v10557, %v10556
        %v10559 = vperm.slane %v10209, %v10520
        %v10560 = vperm.slane %v10212, %v10522
        %v10561 = vsel %vm10524, %v10560, %v10559
        %v10562 = vperm.slane %v10215, %v10520
        %v10563 = vperm.slane %v10218, %v10522
        %v10564 = vsel %vm10524, %v10563, %v10562
        %v10565 = vperm.slane %v10221, %v10520
        %v10566 = vperm.slane %v10224, %v10522
        %v10567 = vsel %vm10524, %v10566, %v10565
        %v10568 = vperm.slane %v10227, %v10520
        %v10569 = vperm.slane %v10230, %v10522
        %v10570 = vsel %vm10524, %v10569, %v10568
        %v10571 = vperm.slane %v10233, %v10520
        %v10572 = vperm.slane %v10236, %v10522
        %v10573 = vsel %vm10524, %v10572, %v10571
        %v10574 = vperm.slane %v10239, %v10520
        %v10575 = vperm.slane %v10242, %v10522
        %v10576 = vsel %vm10524, %v10575, %v10574
        %v10577 = vperm.slane %v10245, %v10520
        %v10578 = vperm.slane %v10248, %v10522
        %v10579 = vsel %vm10524, %v10578, %v10577
        %v10580 = vperm.slane %v10251, %v10520
        %v10581 = vperm.slane %v10254, %v10522
        %v10582 = vsel %vm10524, %v10581, %v10580
        %v10583 = vperm.slane %v10257, %v10520
        %v10584 = vperm.slane %v10260, %v10522
        %v10585 = vsel %vm10524, %v10584, %v10583
        %v10586 = vperm.slane %v10263, %v10520
        %v10587 = vperm.slane %v10266, %v10522
        %v10588 = vsel %vm10524, %v10587, %v10586
        %v10589 = vperm.slane %v10269, %v10520
        %v10590 = vperm.slane %v10272, %v10522
        %v10591 = vsel %vm10524, %v10590, %v10589
        %v10592 = vperm.slane %v10275, %v10520
        %v10593 = vperm.slane %v10278, %v10522
        %v10594 = vsel %vm10524, %v10593, %v10592
        %v10595 = vperm.slane %v10281, %v10520
        %v10596 = vperm.slane %v10284, %v10522
        %v10597 = vsel %vm10524, %v10596, %v10595
        %v10598 = vperm.slane %v10287, %v10520
        %v10599 = vperm.slane %v10290, %v10522
        %v10600 = vsel %vm10524, %v10599, %v10598
        %v10601 = vperm.slane %v10293, %v10520
        %v10602 = vperm.slane %v10296, %v10522
        %v10603 = vsel %vm10524, %v10602, %v10601
        %v10604 = vperm.slane %v10299, %v10520
        %v10605 = vperm.slane %v10302, %v10522
        %v10606 = vsel %vm10524, %v10605, %v10604
        %v10607 = vperm.slane %v10305, %v10520
        %v10608 = vperm.slane %v10308, %v10522
        %v10609 = vsel %vm10524, %v10608, %v10607
        %v10610 = vperm.slane %v10311, %v10520
        %v10611 = vperm.slane %v10314, %v10522
        %v10612 = vsel %vm10524, %v10611, %v10610
        %v10613 = vperm.slane %v10317, %v10520
        %v10614 = vperm.slane %v10320, %v10522
        %v10615 = vsel %vm10524, %v10614, %v10613
        %v10616 = vperm.slane %v10323, %v10520
        %v10617 = vperm.slane %v10326, %v10522
        %v10618 = vsel %vm10524, %v10617, %v10616
        %v10619 = vperm.slane %v10329, %v10520
        %v10620 = vperm.slane %v10332, %v10522
        %v10621 = vsel %vm10524, %v10620, %v10619
        %v10622 = vperm.slane %v10335, %v10520
        %v10623 = vperm.slane %v10338, %v10522
        %v10624 = vsel %vm10524, %v10623, %v10622
        %v10625 = vperm.slane %v10341, %v10520
        %v10626 = vperm.slane %v10344, %v10522
        %v10627 = vsel %vm10524, %v10626, %v10625
        %v10628 = vperm.slane %v10347, %v10520
        %v10629 = vperm.slane %v10350, %v10522
        %v10630 = vsel %vm10524, %v10629, %v10628
        %v10631 = vperm.slane %v10353, %v10520
        %v10632 = vperm.slane %v10356, %v10522
        %v10633 = vsel %vm10524, %v10632, %v10631
        %v10634 = vperm.slane %v10359, %v10520
        %v10635 = vperm.slane %v10362, %v10522
        %v10636 = vsel %vm10524, %v10635, %v10634
        %v10637 = vperm.slane %v10365, %v10520
        %v10638 = vperm.slane %v10368, %v10522
        %v10639 = vsel %vm10524, %v10638, %v10637
        %v10640 = vperm.slane %v10371, %v10520
        %v10641 = vperm.slane %v10374, %v10522
        %v10642 = vsel %vm10524, %v10641, %v10640
        %v10643 = vperm.slane %v10377, %v10520
        %v10644 = vperm.slane %v10380, %v10522
        %v10645 = vsel %vm10524, %v10644, %v10643
        %v10646 = vperm.slane %v10383, %v10520
        %v10647 = vperm.slane %v10386, %v10522
        %v10648 = vsel %vm10524, %v10647, %v10646
        %v10649 = vperm.slane %v10389, %v10520
        %v10650 = vperm.slane %v10392, %v10522
        %v10651 = vsel %vm10524, %v10650, %v10649
        %v10652 = vperm.slane %v10395, %v10520
        %v10653 = vperm.slane %v10398, %v10522
        %v10654 = vsel %vm10524, %v10653, %v10652
        %v10655 = vperm.slane %v10401, %v10520
        %v10656 = vperm.slane %v10404, %v10522
        %v10657 = vsel %vm10524, %v10656, %v10655
        %v10658 = vperm.slane %v10407, %v10520
        %v10659 = vperm.slane %v10410, %v10522
        %v10660 = vsel %vm10524, %v10659, %v10658
        %v10661 = vperm.slane %v10413, %v10520
        %v10662 = vperm.slane %v10416, %v10522
        %v10663 = vsel %vm10524, %v10662, %v10661
        %v10664 = vperm.slane %v10419, %v10520
        %v10665 = vperm.slane %v10422, %v10522
        %v10666 = vsel %vm10524, %v10665, %v10664
        %v10667 = vperm.slane %v10425, %v10520
        %v10668 = vperm.slane %v10428, %v10522
        %v10669 = vsel %vm10524, %v10668, %v10667
        %v10670 = vperm.slane %v10431, %v10520
        %v10671 = vperm.slane %v10434, %v10522
        %v10672 = vsel %vm10524, %v10671, %v10670
        %v10673 = vperm.slane %v10437, %v10520
        %v10674 = vperm.slane %v10440, %v10522
        %v10675 = vsel %vm10524, %v10674, %v10673
        %v10676 = vperm.slane %v10443, %v10520
        %v10677 = vperm.slane %v10446, %v10522
        %v10678 = vsel %vm10524, %v10677, %v10676
        %v10679 = vperm.slane %v10449, %v10520
        %v10680 = vperm.slane %v10452, %v10522
        %v10681 = vsel %vm10524, %v10680, %v10679
        %v10682 = vperm.slane %v10455, %v10520
        %v10683 = vperm.slane %v10458, %v10522
        %v10684 = vsel %vm10524, %v10683, %v10682
        %v10685 = vperm.slane %v10461, %v10520
        %v10686 = vperm.slane %v10464, %v10522
        %v10687 = vsel %vm10524, %v10686, %v10685
        %v10688 = vperm.slane %v10467, %v10520
        %v10689 = vperm.slane %v10470, %v10522
        %v10690 = vsel %vm10524, %v10689, %v10688
        %v10691 = vperm.slane %v10473, %v10520
        %v10692 = vperm.slane %v10476, %v10522
        %v10693 = vsel %vm10524, %v10692, %v10691
        %v10694 = vperm.slane %v10479, %v10520
        %v10695 = vperm.slane %v10482, %v10522
        %v10696 = vsel %vm10524, %v10695, %v10694
        %v10697 = vperm.slane %v10485, %v10520
        %v10698 = vperm.slane %v10488, %v10522
        %v10699 = vsel %vm10524, %v10698, %v10697
        %v10700 = vperm.slane %v10491, %v10520
        %v10701 = vperm.slane %v10494, %v10522
        %v10702 = vsel %vm10524, %v10701, %v10700
        %v10703 = vperm.slane %v10497, %v10520
        %v10704 = vperm.slane %v10500, %v10522
        %v10705 = vsel %vm10524, %v10704, %v10703
        %v10706 = vperm.slane %v10503, %v10520
        %v10707 = vperm.slane %v10506, %v10522
        %v10708 = vsel %vm10524, %v10707, %v10706
        %v10709 = vperm.slane %v10509, %v10520
        %v10710 = vperm.slane %v10512, %v10522
        %v10711 = vsel %vm10524, %v10710, %v10709
        %v10712 = vperm.slane %v10515, %v10520
        %v10713 = vperm.slane %v10518, %v10522
        %v10714 = vsel %vm10524, %v10713, %v10712
        %vm10715 = vcmask 1041409
        %v10716 = vsel %vm10715, %v10528, %v10525
        %vm10717 = vcmask 1042434
        %v10718 = vsel %vm10717, %v10531, %v10716
        %vm10719 = vcmask 1043459
        %v10720 = vsel %vm10719, %v10534, %v10718
        %vm10721 = vcmask 1044484
        %v10722 = vsel %vm10721, %v10537, %v10720
        %vm10723 = vcmask 1045509
        %v10724 = vsel %vm10723, %v10540, %v10722
        %vm10725 = vcmask 1046534
        %v10726 = vsel %vm10725, %v10543, %v10724
        %vm10727 = vcmask 1047559
        %v10728 = vsel %vm10727, %v10546, %v10726
        %v10729 = vsel %vm10715, %v10552, %v10549
        %v10730 = vsel %vm10717, %v10555, %v10729
        %v10731 = vsel %vm10719, %v10558, %v10730
        %v10732 = vsel %vm10721, %v10561, %v10731
        %v10733 = vsel %vm10723, %v10564, %v10732
        %v10734 = vsel %vm10725, %v10567, %v10733
        %v10735 = vsel %vm10727, %v10570, %v10734
        %v10736 = vsel %vm10715, %v10576, %v10573
        %v10737 = vsel %vm10717, %v10579, %v10736
        %v10738 = vsel %vm10719, %v10582, %v10737
        %v10739 = vsel %vm10721, %v10585, %v10738
        %v10740 = vsel %vm10723, %v10588, %v10739
        %v10741 = vsel %vm10725, %v10591, %v10740
        %v10742 = vsel %vm10727, %v10594, %v10741
        %v10743 = vsel %vm10715, %v10600, %v10597
        %v10744 = vsel %vm10717, %v10603, %v10743
        %v10745 = vsel %vm10719, %v10606, %v10744
        %v10746 = vsel %vm10721, %v10609, %v10745
        %v10747 = vsel %vm10723, %v10612, %v10746
        %v10748 = vsel %vm10725, %v10615, %v10747
        %v10749 = vsel %vm10727, %v10618, %v10748
        %v10750 = vsel %vm10715, %v10624, %v10621
        %v10751 = vsel %vm10717, %v10627, %v10750
        %v10752 = vsel %vm10719, %v10630, %v10751
        %v10753 = vsel %vm10721, %v10633, %v10752
        %v10754 = vsel %vm10723, %v10636, %v10753
        %v10755 = vsel %vm10725, %v10639, %v10754
        %v10756 = vsel %vm10727, %v10642, %v10755
        %v10757 = vsel %vm10715, %v10648, %v10645
        %v10758 = vsel %vm10717, %v10651, %v10757
        %v10759 = vsel %vm10719, %v10654, %v10758
        %v10760 = vsel %vm10721, %v10657, %v10759
        %v10761 = vsel %vm10723, %v10660, %v10760
        %v10762 = vsel %vm10725, %v10663, %v10761
        %v10763 = vsel %vm10727, %v10666, %v10762
        %v10764 = vsel %vm10715, %v10672, %v10669
        %v10765 = vsel %vm10717, %v10675, %v10764
        %v10766 = vsel %vm10719, %v10678, %v10765
        %v10767 = vsel %vm10721, %v10681, %v10766
        %v10768 = vsel %vm10723, %v10684, %v10767
        %v10769 = vsel %vm10725, %v10687, %v10768
        %v10770 = vsel %vm10727, %v10690, %v10769
        %v10771 = vsel %vm10715, %v10696, %v10693
        %v10772 = vsel %vm10717, %v10699, %v10771
        %v10773 = vsel %vm10719, %v10702, %v10772
        %v10774 = vsel %vm10721, %v10705, %v10773
        %v10775 = vsel %vm10723, %v10708, %v10774
        %v10776 = vsel %vm10725, %v10711, %v10775
        %v10777 = vsel %vm10727, %v10714, %v10776
        %10786 = vst.msk [vmem:[%s376] sm:$0xff] %vm995, %v10728
        %10787 = vst.msk [vmem:[%s376 + $0x8] sm:$0xff] %vm995, %v10735
        %10788 = vst.msk [vmem:[%s376 + $0x10] sm:$0xff] %vm995, %v10742
        %10789 = vst.msk [vmem:[%s376 + $0x18] sm:$0xff] %vm995, %v10749
        %10790 = vst.msk [vmem:[%s376 + $0x20] sm:$0xff] %vm995, %v10756
        %10791 = vst.msk [vmem:[%s376 + $0x28] sm:$0xff] %vm995, %v10763
        %10792 = vst.msk [vmem:[%s376 + $0x30] sm:$0xff] %vm995, %v10770
        %10793 = vst.msk [vmem:[%s376 + $0x38] sm:$0xff] %vm995, %v10777
        %v10802 = vrot.slane %v479, 1
        %v10803 = vrot.slane %v479, 2
        %v10804 = vrot.slane %v479, 3
        %v10805 = vrot.slane %v479, 4
        %v10806 = vrot.slane %v479, 5
        %v10807 = vrot.slane %v479, 6
        %v10808 = vrot.slane %v479, 7
        %v10809 = vrot.slane %v481, 1
        %v10810 = vrot.slane %v481, 2
        %v10811 = vrot.slane %v481, 3
        %v10812 = vrot.slane %v481, 4
        %v10813 = vrot.slane %v481, 5
        %v10814 = vrot.slane %v481, 6
        %v10815 = vrot.slane %v481, 7
        %v10816 = vrot.slane %v484, 1
        %v10817 = vrot.slane %v484, 2
        %v10818 = vrot.slane %v484, 3
        %v10819 = vrot.slane %v484, 4
        %v10820 = vrot.slane %v484, 5
        %v10821 = vrot.slane %v484, 6
        %v10822 = vrot.slane %v484, 7
        %v10823 = vrot.slane %v486, 1
        %v10824 = vrot.slane %v486, 2
        %v10825 = vrot.slane %v486, 3
        %v10826 = vrot.slane %v486, 4
        %v10827 = vrot.slane %v486, 5
        %v10828 = vrot.slane %v486, 6
        %v10829 = vrot.slane %v486, 7
        %v10830 = vrot.slane %v489, 1
        %v10831 = vrot.slane %v489, 2
        %v10832 = vrot.slane %v489, 3
        %v10833 = vrot.slane %v489, 4
        %v10834 = vrot.slane %v489, 5
        %v10835 = vrot.slane %v489, 6
        %v10836 = vrot.slane %v489, 7
        %v10837 = vrot.slane %v491, 1
        %v10838 = vrot.slane %v491, 2
        %v10839 = vrot.slane %v491, 3
        %v10840 = vrot.slane %v491, 4
        %v10841 = vrot.slane %v491, 5
        %v10842 = vrot.slane %v491, 6
        %v10843 = vrot.slane %v491, 7
        %v10844 = vrot.slane %v494, 1
        %v10845 = vrot.slane %v494, 2
        %v10846 = vrot.slane %v494, 3
        %v10847 = vrot.slane %v494, 4
        %v10848 = vrot.slane %v494, 5
        %v10849 = vrot.slane %v494, 6
        %v10850 = vrot.slane %v494, 7
        %v10851 = vrot.slane %v496, 1
        %v10852 = vrot.slane %v496, 2
        %v10853 = vrot.slane %v496, 3
        %v10854 = vrot.slane %v496, 4
        %v10855 = vrot.slane %v496, 5
        %v10856 = vrot.slane %v496, 6
        %v10857 = vrot.slane %v496, 7
        %v10858 = vperm.slane %v479, 0
        %v10859 = vperm.slane %v10802, 0
        %v10860 = vperm.slane %v10803, 0
        %v10861 = vperm.slane %v10804, 0
        %v10862 = vperm.slane %v10805, 0
        %v10863 = vperm.slane %v10806, 0
        %v10864 = vperm.slane %v10807, 0
        %v10865 = vperm.slane %v10808, 0
        %v10866 = vperm.slane %v481, 0
        %v10867 = vperm.slane %v10809, 0
        %v10868 = vperm.slane %v10810, 0
        %v10869 = vperm.slane %v10811, 0
        %v10870 = vperm.slane %v10812, 0
        %v10871 = vperm.slane %v10813, 0
        %v10872 = vperm.slane %v10814, 0
        %v10873 = vperm.slane %v10815, 0
        %v10874 = vperm.slane %v484, 0
        %v10875 = vperm.slane %v10816, 0
        %v10876 = vperm.slane %v10817, 0
        %v10877 = vperm.slane %v10818, 0
        %v10878 = vperm.slane %v10819, 0
        %v10879 = vperm.slane %v10820, 0
        %v10880 = vperm.slane %v10821, 0
        %v10881 = vperm.slane %v10822, 0
        %v10882 = vperm.slane %v486, 0
        %v10883 = vperm.slane %v10823, 0
        %v10884 = vperm.slane %v10824, 0
        %v10885 = vperm.slane %v10825, 0
        %v10886 = vperm.slane %v10826, 0
        %v10887 = vperm.slane %v10827, 0
        %v10888 = vperm.slane %v10828, 0
        %v10889 = vperm.slane %v10829, 0
        %v10890 = vperm.slane %v489, 0
        %v10891 = vperm.slane %v10830, 0
        %v10892 = vperm.slane %v10831, 0
        %v10893 = vperm.slane %v10832, 0
        %v10894 = vperm.slane %v10833, 0
        %v10895 = vperm.slane %v10834, 0
        %v10896 = vperm.slane %v10835, 0
        %v10897 = vperm.slane %v10836, 0
        %v10898 = vperm.slane %v491, 0
        %v10899 = vperm.slane %v10837, 0
        %v10900 = vperm.slane %v10838, 0
        %v10901 = vperm.slane %v10839, 0
        %v10902 = vperm.slane %v10840, 0
        %v10903 = vperm.slane %v10841, 0
        %v10904 = vperm.slane %v10842, 0
        %v10905 = vperm.slane %v10843, 0
        %v10906 = vperm.slane %v494, 0
        %v10907 = vperm.slane %v10844, 0
        %v10908 = vperm.slane %v10845, 0
        %v10909 = vperm.slane %v10846, 0
        %v10910 = vperm.slane %v10847, 0
        %v10911 = vperm.slane %v10848, 0
        %v10912 = vperm.slane %v10849, 0
        %v10913 = vperm.slane %v10850, 0
        %v10914 = vperm.slane %v496, 0
        %v10915 = vperm.slane %v10851, 0
        %v10916 = vperm.slane %v10852, 0
        %v10917 = vperm.slane %v10853, 0
        %v10918 = vperm.slane %v10854, 0
        %v10919 = vperm.slane %v10855, 0
        %v10920 = vperm.slane %v10856, 0
        %v10921 = vperm.slane %v10857, 0
        %v10986 = vmul.f32 %v5967, %v10858
        %v10987 = vmul.f32 %v5968, %v10858
        %v10988 = vmul.f32 %v5969, %v10859
        %v10989 = vmul.f32 %v5970, %v10859
        %v10990 = vmul.f32 %v5971, %v10860
        %v10991 = vmul.f32 %v5972, %v10860
        %v10992 = vmul.f32 %v5973, %v10861
        %v10993 = vmul.f32 %v5974, %v10861
        %v10994 = vmul.f32 %v5975, %v10862
        %v10995 = vmul.f32 %v5976, %v10862
        %v10996 = vmul.f32 %v5977, %v10863
        %v10997 = vmul.f32 %v5978, %v10863
        %v10998 = vmul.f32 %v5979, %v10864
        %v10999 = vmul.f32 %v5980, %v10864
        %v11000 = vmul.f32 %v5981, %v10865
        %v11001 = vmul.f32 %v5982, %v10865
        %v11002 = vmul.f32 %v5983, %v10866
        %v11003 = vmul.f32 %v5984, %v10866
        %v11004 = vmul.f32 %v5985, %v10867
        %v11005 = vmul.f32 %v5986, %v10867
        %v11006 = vmul.f32 %v5987, %v10868
        %v11007 = vmul.f32 %v5988, %v10868
        %v11008 = vmul.f32 %v5989, %v10869
        %v11009 = vmul.f32 %v5990, %v10869
        %v11010 = vmul.f32 %v5991, %v10870
        %v11011 = vmul.f32 %v5992, %v10870
        %v11012 = vmul.f32 %v5993, %v10871
        %v11013 = vmul.f32 %v5994, %v10871
        %v11014 = vmul.f32 %v5995, %v10872
        %v11015 = vmul.f32 %v5996, %v10872
        %v11016 = vmul.f32 %v5997, %v10873
        %v11017 = vmul.f32 %v5998, %v10873
        %v11018 = vmul.f32 %v5999, %v10874
        %v11019 = vmul.f32 %v6000, %v10874
        %v11020 = vmul.f32 %v6001, %v10875
        %v11021 = vmul.f32 %v6002, %v10875
        %v11022 = vmul.f32 %v6003, %v10876
        %v11023 = vmul.f32 %v6004, %v10876
        %v11024 = vmul.f32 %v6005, %v10877
        %v11025 = vmul.f32 %v6006, %v10877
        %v11026 = vmul.f32 %v6007, %v10878
        %v11027 = vmul.f32 %v6008, %v10878
        %v11028 = vmul.f32 %v6009, %v10879
        %v11029 = vmul.f32 %v6010, %v10879
        %v11030 = vmul.f32 %v6011, %v10880
        %v11031 = vmul.f32 %v6012, %v10880
        %v11032 = vmul.f32 %v6013, %v10881
        %v11033 = vmul.f32 %v6014, %v10881
        %v11034 = vmul.f32 %v6015, %v10882
        %v11035 = vmul.f32 %v6016, %v10882
        %v11036 = vmul.f32 %v6017, %v10883
        %v11037 = vmul.f32 %v6018, %v10883
        %v11038 = vmul.f32 %v6019, %v10884
        %v11039 = vmul.f32 %v6020, %v10884
        %v11040 = vmul.f32 %v6021, %v10885
        %v11041 = vmul.f32 %v6022, %v10885
        %v11042 = vmul.f32 %v6023, %v10886
        %v11043 = vmul.f32 %v6024, %v10886
        %v11044 = vmul.f32 %v6025, %v10887
        %v11045 = vmul.f32 %v6026, %v10887
        %v11046 = vmul.f32 %v6027, %v10888
        %v11047 = vmul.f32 %v6028, %v10888
        %v11048 = vmul.f32 %v6029, %v10889
        %v11049 = vmul.f32 %v6030, %v10889
        %v11050 = vmul.f32 %v6031, %v10890
        %v11051 = vmul.f32 %v6032, %v10890
        %v11052 = vmul.f32 %v6033, %v10891
        %v11053 = vmul.f32 %v6034, %v10891
        %v11054 = vmul.f32 %v6035, %v10892
        %v11055 = vmul.f32 %v6036, %v10892
        %v11056 = vmul.f32 %v6037, %v10893
        %v11057 = vmul.f32 %v6038, %v10893
        %v11058 = vmul.f32 %v6039, %v10894
        %v11059 = vmul.f32 %v6040, %v10894
        %v11060 = vmul.f32 %v6041, %v10895
        %v11061 = vmul.f32 %v6042, %v10895
        %v11062 = vmul.f32 %v6043, %v10896
        %v11063 = vmul.f32 %v6044, %v10896
        %v11064 = vmul.f32 %v6045, %v10897
        %v11065 = vmul.f32 %v6046, %v10897
        %v11066 = vmul.f32 %v6047, %v10898
        %v11067 = vmul.f32 %v6048, %v10898
        %v11068 = vmul.f32 %v6049, %v10899
        %v11069 = vmul.f32 %v6050, %v10899
        %v11070 = vmul.f32 %v6051, %v10900
        %v11071 = vmul.f32 %v6052, %v10900
        %v11072 = vmul.f32 %v6053, %v10901
        %v11073 = vmul.f32 %v6054, %v10901
        %v11074 = vmul.f32 %v6055, %v10902
        %v11075 = vmul.f32 %v6056, %v10902
        %v11076 = vmul.f32 %v6057, %v10903
        %v11077 = vmul.f32 %v6058, %v10903
        %v11078 = vmul.f32 %v6059, %v10904
        %v11079 = vmul.f32 %v6060, %v10904
        %v11080 = vmul.f32 %v6061, %v10905
        %v11081 = vmul.f32 %v6062, %v10905
        %v11082 = vmul.f32 %v6063, %v10906
        %v11083 = vmul.f32 %v6064, %v10906
        %v11084 = vmul.f32 %v6065, %v10907
        %v11085 = vmul.f32 %v6066, %v10907
        %v11086 = vmul.f32 %v6067, %v10908
        %v11087 = vmul.f32 %v6068, %v10908
        %v11088 = vmul.f32 %v6069, %v10909
        %v11089 = vmul.f32 %v6070, %v10909
        %v11090 = vmul.f32 %v6071, %v10910
        %v11091 = vmul.f32 %v6072, %v10910
        %v11092 = vmul.f32 %v6073, %v10911
        %v11093 = vmul.f32 %v6074, %v10911
        %v11094 = vmul.f32 %v6075, %v10912
        %v11095 = vmul.f32 %v6076, %v10912
        %v11096 = vmul.f32 %v6077, %v10913
        %v11097 = vmul.f32 %v6078, %v10913
        %v11098 = vmul.f32 %v6079, %v10914
        %v11099 = vmul.f32 %v6080, %v10914
        %v11100 = vmul.f32 %v6081, %v10915
        %v11101 = vmul.f32 %v6082, %v10915
        %v11102 = vmul.f32 %v6083, %v10916
        %v11103 = vmul.f32 %v6084, %v10916
        %v11104 = vmul.f32 %v6085, %v10917
        %v11105 = vmul.f32 %v6086, %v10917
        %v11106 = vmul.f32 %v6087, %v10918
        %v11107 = vmul.f32 %v6088, %v10918
        %v11108 = vmul.f32 %v6089, %v10919
        %v11109 = vmul.f32 %v6090, %v10919
        %v11110 = vmul.f32 %v6091, %v10920
        %v11111 = vmul.f32 %v6092, %v10920
        %v11112 = vmul.f32 %v6093, %v10921
        %v11113 = vmul.f32 %v6094, %v10921
        %v11114 = vadd.f32 %v10986, %v10988
        %v11115 = vadd.f32 %v11114, %v10990
        %v11116 = vadd.f32 %v11115, %v10992
        %v11117 = vadd.f32 %v11116, %v10994
        %v11118 = vadd.f32 %v11117, %v10996
        %v11119 = vadd.f32 %v11118, %v10998
        %v11120 = vadd.f32 %v11119, %v11000
        %v11121 = vadd.f32 %v11120, %v11002
        %v11122 = vadd.f32 %v11121, %v11004
        %v11123 = vadd.f32 %v11122, %v11006
        %v11124 = vadd.f32 %v11123, %v11008
        %v11125 = vadd.f32 %v11124, %v11010
        %v11126 = vadd.f32 %v11125, %v11012
        %v11127 = vadd.f32 %v11126, %v11014
        %v11128 = vadd.f32 %v11127, %v11016
        %v11129 = vadd.f32 %v10987, %v10989
        %v11130 = vadd.f32 %v11129, %v10991
        %v11131 = vadd.f32 %v11130, %v10993
        %v11132 = vadd.f32 %v11131, %v10995
        %v11133 = vadd.f32 %v11132, %v10997
        %v11134 = vadd.f32 %v11133, %v10999
        %v11135 = vadd.f32 %v11134, %v11001
        %v11136 = vadd.f32 %v11135, %v11003
        %v11137 = vadd.f32 %v11136, %v11005
        %v11138 = vadd.f32 %v11137, %v11007
        %v11139 = vadd.f32 %v11138, %v11009
        %v11140 = vadd.f32 %v11139, %v11011
        %v11141 = vadd.f32 %v11140, %v11013
        %v11142 = vadd.f32 %v11141, %v11015
        %v11143 = vadd.f32 %v11142, %v11017
        %v11144 = vadd.f32 %v11018, %v11020
        %v11145 = vadd.f32 %v11144, %v11022
        %v11146 = vadd.f32 %v11145, %v11024
        %v11147 = vadd.f32 %v11146, %v11026
        %v11148 = vadd.f32 %v11147, %v11028
        %v11149 = vadd.f32 %v11148, %v11030
        %v11150 = vadd.f32 %v11149, %v11032
        %v11151 = vadd.f32 %v11150, %v11034
        %v11152 = vadd.f32 %v11151, %v11036
        %v11153 = vadd.f32 %v11152, %v11038
        %v11154 = vadd.f32 %v11153, %v11040
        %v11155 = vadd.f32 %v11154, %v11042
        %v11156 = vadd.f32 %v11155, %v11044
        %v11157 = vadd.f32 %v11156, %v11046
        %v11158 = vadd.f32 %v11157, %v11048
        %v11159 = vadd.f32 %v11019, %v11021
        %v11160 = vadd.f32 %v11159, %v11023
        %v11161 = vadd.f32 %v11160, %v11025
        %v11162 = vadd.f32 %v11161, %v11027
        %v11163 = vadd.f32 %v11162, %v11029
        %v11164 = vadd.f32 %v11163, %v11031
        %v11165 = vadd.f32 %v11164, %v11033
        %v11166 = vadd.f32 %v11165, %v11035
        %v11167 = vadd.f32 %v11166, %v11037
        %v11168 = vadd.f32 %v11167, %v11039
        %v11169 = vadd.f32 %v11168, %v11041
        %v11170 = vadd.f32 %v11169, %v11043
        %v11171 = vadd.f32 %v11170, %v11045
        %v11172 = vadd.f32 %v11171, %v11047
        %v11173 = vadd.f32 %v11172, %v11049
        %v11174 = vadd.f32 %v11050, %v11052
        %v11175 = vadd.f32 %v11174, %v11054
        %v11176 = vadd.f32 %v11175, %v11056
        %v11177 = vadd.f32 %v11176, %v11058
        %v11178 = vadd.f32 %v11177, %v11060
        %v11179 = vadd.f32 %v11178, %v11062
        %v11180 = vadd.f32 %v11179, %v11064
        %v11181 = vadd.f32 %v11180, %v11066
        %v11182 = vadd.f32 %v11181, %v11068
        %v11183 = vadd.f32 %v11182, %v11070
        %v11184 = vadd.f32 %v11183, %v11072
        %v11185 = vadd.f32 %v11184, %v11074
        %v11186 = vadd.f32 %v11185, %v11076
        %v11187 = vadd.f32 %v11186, %v11078
        %v11188 = vadd.f32 %v11187, %v11080
        %v11189 = vadd.f32 %v11051, %v11053
        %v11190 = vadd.f32 %v11189, %v11055
        %v11191 = vadd.f32 %v11190, %v11057
        %v11192 = vadd.f32 %v11191, %v11059
        %v11193 = vadd.f32 %v11192, %v11061
        %v11194 = vadd.f32 %v11193, %v11063
        %v11195 = vadd.f32 %v11194, %v11065
        %v11196 = vadd.f32 %v11195, %v11067
        %v11197 = vadd.f32 %v11196, %v11069
        %v11198 = vadd.f32 %v11197, %v11071
        %v11199 = vadd.f32 %v11198, %v11073
        %v11200 = vadd.f32 %v11199, %v11075
        %v11201 = vadd.f32 %v11200, %v11077
        %v11202 = vadd.f32 %v11201, %v11079
        %v11203 = vadd.f32 %v11202, %v11081
        %v11204 = vadd.f32 %v11082, %v11084
        %v11205 = vadd.f32 %v11204, %v11086
        %v11206 = vadd.f32 %v11205, %v11088
        %v11207 = vadd.f32 %v11206, %v11090
        %v11208 = vadd.f32 %v11207, %v11092
        %v11209 = vadd.f32 %v11208, %v11094
        %v11210 = vadd.f32 %v11209, %v11096
        %v11211 = vadd.f32 %v11210, %v11098
        %v11212 = vadd.f32 %v11211, %v11100
        %v11213 = vadd.f32 %v11212, %v11102
        %v11214 = vadd.f32 %v11213, %v11104
        %v11215 = vadd.f32 %v11214, %v11106
        %v11216 = vadd.f32 %v11215, %v11108
        %v11217 = vadd.f32 %v11216, %v11110
        %v11218 = vadd.f32 %v11217, %v11112
        %v11219 = vadd.f32 %v11083, %v11085
        %v11220 = vadd.f32 %v11219, %v11087
        %v11221 = vadd.f32 %v11220, %v11089
        %v11222 = vadd.f32 %v11221, %v11091
        %v11223 = vadd.f32 %v11222, %v11093
        %v11224 = vadd.f32 %v11223, %v11095
        %v11225 = vadd.f32 %v11224, %v11097
        %v11226 = vadd.f32 %v11225, %v11099
        %v11227 = vadd.f32 %v11226, %v11101
        %v11228 = vadd.f32 %v11227, %v11103
        %v11229 = vadd.f32 %v11228, %v11105
        %v11230 = vadd.f32 %v11229, %v11107
        %v11231 = vadd.f32 %v11230, %v11109
        %v11232 = vadd.f32 %v11231, %v11111
        %v11233 = vadd.f32 %v11232, %v11113
        %v11234 = vmax.f32 %v11128, 0.0
        %v11235 = vmax.f32 %v11143, 0.0
        %v11236 = vmax.f32 %v11158, 0.0
        %v11237 = vmax.f32 %v11173, 0.0
        %v11238 = vmax.f32 %v11188, 0.0
        %v11239 = vmax.f32 %v11203, 0.0
        %v11240 = vmax.f32 %v11218, 0.0
        %v11241 = vmax.f32 %v11233, 0.0
        %11242 = vst [vmem:[%s362] sm:$0xff] %v11234
        %11243 = vst [vmem:[%s362 + $0x8] sm:$0xff] %v11235
        %11244 = vst [vmem:[%s362 + $0x10] sm:$0xff] %v11236
        %11245 = vst [vmem:[%s362 + $0x18] sm:$0xff] %v11237
        %11246 = vst [vmem:[%s362 + $0x20] sm:$0xff] %v11238
        %11247 = vst [vmem:[%s362 + $0x28] sm:$0xff] %v11239
        %11248 = vst [vmem:[%s362 + $0x30] sm:$0xff] %v11240
        %11249 = vst [vmem:[%s362 + $0x38] sm:$0xff] %v11241
        %s11250 = sand.u32 %s197, 1
        %s11251 = scalar_lea.sflag [#allocation3], %s11250
        %s11252 = sand.u32 %s197, 1
        %s11253 = smul.addr %s11252, 64
        %s11254 = scalar_lea.vmem [#allocation2], %s11253
        %s11255 = smul.u32 128, %s27
        %p11256 = scmp.lt.s32.totalorder %s11255, 255
        %s11257 = scalar_select %p11256, %s11255, 255
        %s11258 = smul.addr %s11257, 8
        %s11259 = scalar_lea.vmem %s8, %s11258
        %s11260 = sand.u32 %s249, 1
        %s11261 = scalar_lea.sflag [#allocation5], %s11260
        %s11262 = sand.u32 %s249, 1
        %s11263 = smul.addr %s11262, 64
        %s11264 = scalar_lea.vmem [#allocation4], %s11263
        // Predicated region
        $region49: #{tpu_custom_call.1} parent=47 // pred_check
          %p11265 = pneg %p207
        $region50: #{tpu_custom_call.1} parent=47 // pred_check_branch
          %11267 = sbr.rel (%p11265) target = $region52
        $region51: #{tpu_custom_call.1} parent=47 // pred_region
          %s11268 = smul.u32 8, %s27
          %11270 = vsyncadd %s11251, 0
          %s11271 = smul.addr %s11268, 8
          %s11272 = scalar_lea.hbm %s7, %s11271
          %s11273 = sshll.u32 %s11254, 4
          %s11274 = int_to_ptr.vmem [resolvable:$true] %s11273
          %s11275 = sshll.u32 %s11272, 4
          %s11276 = int_to_ptr.hbm [resolvable:$true] %s11275
          %11281 = dma.vmem_to_hbm [thread:$0]  %s11274, 1024, %s11276, %s11251, 128, 128, 8
        $region52: #{tpu_custom_call.1} parent=47 // pred_fallthru
          _
        // Predicated region
        $region53: #{tpu_custom_call.1} parent=47 // pred_check
          %p11282 = pneg %p233
        $region54: #{tpu_custom_call.1} parent=47 // pred_check_branch
          %11284 = sbr.rel (%p11282) target = $region56
        $region55: #{tpu_custom_call.1} parent=47 // pred_region
          %s11285 = smul.u32 128, %s27
        $region56: #{tpu_custom_call.1} parent=47 // pred_fallthru
          _
        // Predicated region
        $region57: #{tpu_custom_call.1} parent=47 // pred_check
          %p11286 = pneg %p259
        $region58: #{tpu_custom_call.1} parent=47 // pred_check_branch
          %11288 = sbr.rel (%p11286) target = $region60
        $region59: #{tpu_custom_call.1} parent=47 // pred_region
          %s11289 = smul.u32 4, %s27
          %11291 = vsyncadd %s11261, 0
          %s11292 = smul.addr %s11289, 2
          %s11293 = smul.addr %s11292, 8
          %s11294 = scalar_lea.hbm %s9, %s11293
          %s11295 = sshll.u32 %s11264, 4
          %s11296 = int_to_ptr.vmem [resolvable:$true] %s11295
          %s11297 = sshll.u32 %s11294, 4
          %s11298 = int_to_ptr.hbm [resolvable:$true] %s11297
          %11303 = dma.vmem_to_hbm [thread:$0]  %s11296, 1024, %s11298, %s11261, 128, 128, 8
        $region60: #{tpu_custom_call.1} parent=47 // pred_fallthru
          _
      $region48: #{tpu_custom_call.1} parent=5 // pred_fallthru
        _
      %p11304 = scmp.le.s32.totalorder 2, %s22
      // Predicated region
      $region61: #{tpu_custom_call.1} parent=5 // pred_check
        %p11305 = pneg %p11304
      $region62: #{tpu_custom_call.1} parent=5 // pred_check_branch
        %11307 = sbr.rel (%p11305) target = $region64
      $region63: #{tpu_custom_call.1} parent=5 // pred_region
        %s11308 = ssub.s32 %s22, 2
        // Predicated region
        $region65: #{tpu_custom_call.1} parent=63 // pred_check
          %p11309 = pneg %p213
        $region66: #{tpu_custom_call.1} parent=63 // pred_check_branch
          %11311 = sbr.rel (%p11309) target = $region68
        $region67: #{tpu_custom_call.1} parent=63 // pred_region
          %s11312 = sand.u32 %s198, 1
          %s11313 = scalar_lea.sflag [#allocation3], %s11312
          %s11314 = sand.u32 %s198, 1
          %s11315 = smul.addr %s11314, 64
          %s11316 = scalar_lea.vmem [#allocation2], %s11315
          %11318 = dma.done %s11313, 1024
        $region68: #{tpu_custom_call.1} parent=63 // pred_fallthru
          _
        // Predicated region
        $region69: #{tpu_custom_call.1} parent=63 // pred_check
          %p11319 = pneg %p239
        $region70: #{tpu_custom_call.1} parent=63 // pred_check_branch
          %11321 = sbr.rel (%p11319) target = $region72
        $region71: #{tpu_custom_call.1} parent=63 // pred_region
          %s11322 = smul.u32 128, %s28
          %p11323 = scmp.lt.s32.totalorder %s11322, 255
          %s11324 = scalar_select %p11323, %s11322, 255
          %s11325 = smul.addr %s11324, 8
          %s11326 = scalar_lea.vmem %s8, %s11325
        $region72: #{tpu_custom_call.1} parent=63 // pred_fallthru
          _
        // Predicated region
        $region73: #{tpu_custom_call.1} parent=63 // pred_check
          %p11327 = pneg %p265
        $region74: #{tpu_custom_call.1} parent=63 // pred_check_branch
          %11329 = sbr.rel (%p11327) target = $region76
        $region75: #{tpu_custom_call.1} parent=63 // pred_region
          %s11330 = sand.u32 %s250, 1
          %s11331 = scalar_lea.sflag [#allocation5], %s11330
          %s11332 = sand.u32 %s250, 1
          %s11333 = smul.addr %s11332, 64
          %s11334 = scalar_lea.vmem [#allocation4], %s11333
          %11336 = dma.done %s11331, 1024
        $region76: #{tpu_custom_call.1} parent=63 // pred_fallthru
          _
      $region64: #{tpu_custom_call.1} parent=5 // pred_fallthru
        _
    $region6: #{tpu_custom_call.1} parent=1 // loop_footer
      %s26 = sadd.s32 1, %s22
    $region7: #{tpu_custom_call.1} parent=1 // loop_footer_branch
      %21 = sbr.rel target = $region3
    $region8: #{tpu_custom_call.1} parent=1 // loop_exit
      _
    %11337 = vsyncpa [#allocation3], 1
    %s11338 = scalar_lea.sflag [#allocation3], 1
    %11339 = vsyncpa %s11338, 1
    %11340 = vsyncpa [#allocation5], 1
    %s11341 = scalar_lea.sflag [#allocation5], 1
    %11342 = vsyncpa %s11341, 1

</llo_original>
